<compile_context>
chip_gen: v5e
topology: v5e:2x2
jax: 0.10.0
libtpu: 0.0.40
codegen_flags: <defaults>
</compile_context>

<pallas_src>
import functools

import numpy as np

import jax
import jax.numpy as jnp
from jax import lax
from jax.experimental import pallas as pl
from jax.experimental.pallas import tpu as pltpu


# ------------------------------ Pallas kernel -------------------------------

def _fused_resnet_kernel(m1_ref, ms_ref, x_ref,
                         ws_ref, bs_ref,
                         w11_ref, b11_ref, w12_ref, b12_ref,
                         w21_ref, b21_ref, w22_ref, b22_ref,
                         wd_ref, bd_ref,
                         o_ref, *, wp1, inv_area):
    """Whole MyResNet backbone for one batch element (grid axis 0 = batch)."""
    f32 = jnp.float32
    bf16 = jnp.bfloat16

    def conv3x3(x, w_ref, dil):
        # x: [R, Cin] zero-padded flat map (f32); w_ref: [9*Cin, Cout] bf16
        # with the eval-mode BN scale folded in.  The nine taps are static
        # slices of a zero-extended copy (explicit zeros make out-of-range
        # taps exact), lane-concatenated into one [R, 9*Cin] operand so the
        # whole conv is a single MXU matmul with contraction depth 9*Cin.
        r, c = x.shape
        off = dil * (wp1 + 1)
        z = jnp.zeros((off, c), f32)
        xext = jnp.concatenate([z, x, z], axis=0)
        taps = []
        for di in range(3):
            for dj in range(3):
                s = off + dil * ((di - 1) * wp1 + (dj - 1))
                taps.append(xext[s:s + r])
        x9 = jnp.concatenate(taps, axis=1).astype(bf16)
        return jnp.dot(x9, w_ref[...], preferred_element_type=f32)

    m1 = m1_ref[...]          # [R, 1] interior mask (full-res positions)
    ms = ms_ref[...]          # [R, 1] stride-2 "active" mask (odd i, odd j)
    x0 = x_ref[0]             # [R, Cin] padded-flat input (f32)

    # stem: conv3x3 + folded BN + ReLU
    x = jnp.maximum(conv3x3(x0, ws_ref, 1) + bs_ref[...], 0.0) * m1

    # BasicBlock 1 (identity shortcut)
    y = jnp.maximum(conv3x3(x, w11_ref, 1) + b11_ref[...], 0.0) * m1
    x = jnp.maximum(conv3x3(y, w12_ref, 1) + b12_ref[...] + x, 0.0) * m1

    # BasicBlock 2 (stride 2, 1x1 conv-BN downsample shortcut).  Half-res
    # feature maps stay in the full-res padded layout, non-zero only at the
    # active rows; the second (stride-1 at half res) conv is a dilation-2 conv
    # in this layout, and its half-res zero padding falls out of the masking.
    ident = (jnp.dot(x.astype(bf16), wd_ref[...], preferred_element_type=f32)
             + bd_ref[...]) * ms
    y = jnp.maximum(conv3x3(x, w21_ref, 1) + b21_ref[...], 0.0) * ms
    x = jnp.maximum(conv3x3(y, w22_ref, 2) + b22_ref[...] + ident, 0.0) * ms

    # AdaptiveAvgPool2d(1): mean over the h2*w2 active rows (rest are zero).
    o_ref[0] = jnp.sum(x, axis=0, keepdims=True) * inv_area


# ------------------------------ host-side glue ------------------------------

@functools.lru_cache(maxsize=None)
def _build_masks(h, w):
    """Per-batch interior mask and stride-2 'active' mask (padded-flat)."""
    assert h % 2 == 0 and w % 2 == 0, "even spatial size required"
    wp = w + 2
    p1 = (h + 2) * wp
    m1 = np.zeros((p1, 1), np.float32)
    ms = np.zeros((p1, 1), np.float32)
    for i in range(1, h + 1):
        m1[i * wp + 1:i * wp + 1 + w] = 1.0
        if i % 2 == 1:
            for j in range(1, w + 1, 2):
                ms[i * wp + j] = 1.0
    return m1, ms


def _fold(conv_bn):
    """Fold eval-mode BN scale into the conv weight (bf16); keep bias in f32."""
    w_hwio, scale, bias = conv_bn
    kh, kw, ci, co = w_hwio.shape
    wf = (w_hwio * scale.reshape(1, 1, 1, co)).reshape(kh * kw * ci, co)
    return wf.astype(jnp.bfloat16), bias.reshape(1, co).astype(jnp.float32)


def my_resnet_forward(x_nchw, params):
    """Equivalent of MyResNet(train=False).forward: backbone -> flatten()."""
    n, cin, h, w = x_nchw.shape
    c2 = params["b2c2"][0].shape[-1]
    wp1 = w + 2
    p1 = (h + 2) * wp1
    m1_np, ms_np = _build_masks(h, w)

    # NCHW -> NHWC -> per-batch zero-padded, flattened [n, p1, cin]
    x = jnp.transpose(x_nchw, (0, 2, 3, 1)).astype(jnp.float32)
    x = jnp.pad(x, ((0, 0), (1, 1), (1, 1), (0, 0)))
    x_flat = x.reshape(n, p1, cin)

    ws, bs = _fold(params["stem"])
    w11, b11 = _fold(params["b1c1"])
    w12, b12 = _fold(params["b1c2"])
    w21, b21 = _fold(params["b2c1"])
    w22, b22 = _fold(params["b2c2"])
    wd, bd = _fold(params["b2d"])

    kernel = functools.partial(_fused_resnet_kernel, wp1=wp1,
                               inv_area=1.0 / ((h // 2) * (w // 2)))

    def const_spec(a):
        # Same (full) block for every grid step -> broadcast across the batch.
        return pl.BlockSpec(a.shape, lambda b, _r=a.ndim: (0,) * _r)

    consts = [jnp.asarray(m1_np), jnp.asarray(ms_np)]
    weights = [ws, bs, w11, b11, w12, b12, w21, b21, w22, b22, wd, bd]

    in_specs = ([const_spec(c) for c in consts]
                + [pl.BlockSpec((1, p1, cin), lambda b: (b, 0, 0))]
                + [const_spec(wt) for wt in weights])

    pooled = pl.pallas_call(
        kernel,
        grid=(n,),
        in_specs=in_specs,
        out_specs=pl.BlockSpec((1, 1, c2), lambda b: (b, 0, 0)),
        out_shape=jax.ShapeDtypeStruct((n, 1, c2), jnp.float32),
        compiler_params=pltpu.CompilerParams(
            dimension_semantics=("parallel",)),
    )(*consts, x_flat, *weights)

    # AdaptiveAvgPool2d(1) gives [N, C, 1, 1]; the eval path flattens it.
    return pooled.reshape(-1)


# --------------------------- parameters / reference -------------------------

_BN_EPS = 1e-5


def _make_conv_bn_params(key, kh, kw, cin, cout):
    """Deterministic conv weight + eval-mode BN folded into (scale, bias)."""
    k_w, k_g, k_b, k_m, k_v = jax.random.split(key, 5)
    fan_in = kh * kw * cin
    w = jax.random.normal(k_w, (kh, kw, cin, cout), jnp.float32) * (2.0 / fan_in) ** 0.5
    gamma = jax.random.uniform(k_g, (cout,), jnp.float32, 0.5, 1.5)
    beta = jax.random.normal(k_b, (cout,), jnp.float32) * 0.1
    r_mean = jax.random.normal(k_m, (cout,), jnp.float32) * 0.1
    r_var = jax.random.uniform(k_v, (cout,), jnp.float32, 0.5, 1.5)
    scale = gamma / jnp.sqrt(r_var + _BN_EPS)
    bias = beta - r_mean * scale
    return w, scale, bias


def init_params(key, cin=4, c1=16, c2=32):
    keys = jax.random.split(key, 6)
    return {
        "stem": _make_conv_bn_params(keys[0], 3, 3, cin, c1),
        "b1c1": _make_conv_bn_params(keys[1], 3, 3, c1, c1),
        "b1c2": _make_conv_bn_params(keys[2], 3, 3, c1, c1),
        "b2c1": _make_conv_bn_params(keys[3], 3, 3, c1, c2),
        "b2c2": _make_conv_bn_params(keys[4], 3, 3, c2, c2),
        "b2d":  _make_conv_bn_params(keys[5], 1, 1, c1, c2),
    }


def _ref_forward(x_nchw, params):
    """Pure-JAX (XLA conv, full f32) reference for the same forward pass."""
    x = jnp.transpose(x_nchw, (0, 2, 3, 1)).astype(jnp.float32)

    def conv_bn(x, w, scale, bias, stride, pad, relu, residual=None):
        y = lax.conv_general_dilated(
            x, w, window_strides=(stride, stride),
            padding=[(pad, pad), (pad, pad)],
            dimension_numbers=("NHWC", "HWIO", "NHWC"),
            precision=lax.Precision.HIGHEST)
        y = y * scale + bias
        if residual is not None:
            y = y + residual
        if relu:
            y = jnp.maximum(y, 0.0)
        return y

    w, s, b = params["stem"]
    x = conv_bn(x, w, s, b, 1, 1, True)
    ident = x
    w, s, b = params["b1c1"]
    y = conv_bn(x, w, s, b, 1, 1, True)
    w, s, b = params["b1c2"]
    x = conv_bn(y, w, s, b, 1, 1, True, residual=ident)
    w, s, b = params["b2d"]
    ident = conv_bn(x, w, s, b, 2, 0, False)
    w, s, b = params["b2c1"]
    y = conv_bn(x, w, s, b, 2, 1, True)
    w, s, b = params["b2c2"]
    x = conv_bn(y, w, s, b, 1, 1, True, residual=ident)
    return jnp.mean(x, axis=(1, 2)).reshape(-1)


# --------------------------------- main --------------------------------------

if __name__ == "__main__":
    key = jax.random.PRNGKey(0)
    k_x, k_p = jax.random.split(key)
    x = jax.random.normal(k_x, (2, 4, 16, 16), jnp.float32)   # NCHW like torch
    params = init_params(k_p, cin=4, c1=16, c2=32)

    fwd = jax.jit(my_resnet_forward)
    out = jax.block_until_ready(fwd(x, params))

    assert out.shape == (2 * 32,), out.shape
    assert bool(jnp.all(jnp.isfinite(out)))

    # Numerical check against a pure-f32 XLA implementation of the same model.
    # The kernel uses bf16 MXU operands (f32 accumulation), so allow a slightly
    # looser tolerance than a pure-f32 comparison would need.
    ref = jax.block_until_ready(jax.jit(_ref_forward)(x, params))
    assert bool(jnp.allclose(out, ref, rtol=5e-2, atol=5e-2)), \
        float(jnp.max(jnp.abs(out - ref)))

    print("KERNEL_OK")
</pallas_src>

<mosaic_0001>
module attributes {stable_mosaic.version = 11 : i64} {
  func.func @_fused_resnet_kernel(%arg0: i32, %arg1: memref<324x1xf32, #tpu.memory_space<vmem>>, %arg2: memref<324x1xf32, #tpu.memory_space<vmem>>, %arg3: memref<1x324x4xf32, #tpu.memory_space<vmem>>, %arg4: memref<36x16xbf16, #tpu.memory_space<vmem>>, %arg5: memref<1x16xf32, #tpu.memory_space<vmem>>, %arg6: memref<144x16xbf16, #tpu.memory_space<vmem>>, %arg7: memref<1x16xf32, #tpu.memory_space<vmem>>, %arg8: memref<144x16xbf16, #tpu.memory_space<vmem>>, %arg9: memref<1x16xf32, #tpu.memory_space<vmem>>, %arg10: memref<144x32xbf16, #tpu.memory_space<vmem>>, %arg11: memref<1x32xf32, #tpu.memory_space<vmem>>, %arg12: memref<288x32xbf16, #tpu.memory_space<vmem>>, %arg13: memref<1x32xf32, #tpu.memory_space<vmem>>, %arg14: memref<16x32xbf16, #tpu.memory_space<vmem>>, %arg15: memref<1x32xf32, #tpu.memory_space<vmem>>, %arg16: memref<1x1x32xf32, #tpu.memory_space<vmem>>) attributes {dimension_semantics = [#tpu.dimension_semantics<parallel>], iteration_bounds = array<i64: 2>, scalar_prefetch = 0 : i64, scratch_operands = 0 : i64, tpu.core_type = #tpu.core_type<tc>, window_params = [{pipeline_mode = #tpu.pipeline_mode<synchronous>, transform_indices = @transform_0, window_bounds = array<i64: 324, 1>}, {pipeline_mode = #tpu.pipeline_mode<synchronous>, transform_indices = @transform_1, window_bounds = array<i64: 324, 1>}, {transform_indices = @transform_2, window_bounds = array<i64: 1, 324, 4>}, {pipeline_mode = #tpu.pipeline_mode<synchronous>, transform_indices = @transform_3, window_bounds = array<i64: 36, 16>}, {pipeline_mode = #tpu.pipeline_mode<synchronous>, transform_indices = @transform_4, window_bounds = array<i64: 1, 16>}, {pipeline_mode = #tpu.pipeline_mode<synchronous>, transform_indices = @transform_5, window_bounds = array<i64: 144, 16>}, {pipeline_mode = #tpu.pipeline_mode<synchronous>, transform_indices = @transform_6, window_bounds = array<i64: 1, 16>}, {pipeline_mode = #tpu.pipeline_mode<synchronous>, transform_indices = @transform_7, window_bounds = array<i64: 144, 16>}, {pipeline_mode = #tpu.pipeline_mode<synchronous>, transform_indices = @transform_8, window_bounds = array<i64: 1, 16>}, {pipeline_mode = #tpu.pipeline_mode<synchronous>, transform_indices = @transform_9, window_bounds = array<i64: 144, 32>}, {pipeline_mode = #tpu.pipeline_mode<synchronous>, transform_indices = @transform_10, window_bounds = array<i64: 1, 32>}, {pipeline_mode = #tpu.pipeline_mode<synchronous>, transform_indices = @transform_11, window_bounds = array<i64: 288, 32>}, {pipeline_mode = #tpu.pipeline_mode<synchronous>, transform_indices = @transform_12, window_bounds = array<i64: 1, 32>}, {pipeline_mode = #tpu.pipeline_mode<synchronous>, transform_indices = @transform_13, window_bounds = array<i64: 16, 32>}, {pipeline_mode = #tpu.pipeline_mode<synchronous>, transform_indices = @transform_14, window_bounds = array<i64: 1, 32>}, {transform_indices = @transform_15, window_bounds = array<i64: 1, 1, 32>}]} {
    %c0 = arith.constant 0 : index
    %c0_0 = arith.constant 0 : index
    %0 = vector.load %arg1[%c0, %c0_0] : memref<324x1xf32, #tpu.memory_space<vmem>>, vector<324x1xf32>
    %c0_1 = arith.constant 0 : index
    %c0_2 = arith.constant 0 : index
    %1 = vector.load %arg2[%c0_1, %c0_2] : memref<324x1xf32, #tpu.memory_space<vmem>>, vector<324x1xf32>
    %c0_3 = arith.constant 0 : index
    %c0_4 = arith.constant 0 : index
    %c0_5 = arith.constant 0 : index
    %2 = vector.load %arg3[%c0_3, %c0_4, %c0_5] : memref<1x324x4xf32, #tpu.memory_space<vmem>>, vector<1x324x4xf32>
    %3 = vector.shape_cast %2 : vector<1x324x4xf32> to vector<324x4xf32>
    %cst = arith.constant 0.000000e+00 : f32
    %4 = vector.broadcast %cst : f32 to vector<19x4xf32>
    %5 = tpu.concatenate %4, %3, %4 in 0 : vector<19x4xf32>, vector<324x4xf32>, vector<19x4xf32> -> vector<362x4xf32>
    %6 = vector.extract_strided_slice %5 {offsets = [0, 0], sizes = [324, 4], strides = [1, 1]} : vector<362x4xf32> to vector<324x4xf32>
    %7 = vector.extract_strided_slice %5 {offsets = [1, 0], sizes = [324, 4], strides = [1, 1]} : vector<362x4xf32> to vector<324x4xf32>
    %8 = vector.extract_strided_slice %5 {offsets = [2, 0], sizes = [324, 4], strides = [1, 1]} : vector<362x4xf32> to vector<324x4xf32>
    %9 = vector.extract_strided_slice %5 {offsets = [18, 0], sizes = [324, 4], strides = [1, 1]} : vector<362x4xf32> to vector<324x4xf32>
    %10 = vector.extract_strided_slice %5 {offsets = [19, 0], sizes = [324, 4], strides = [1, 1]} : vector<362x4xf32> to vector<324x4xf32>
    %11 = vector.extract_strided_slice %5 {offsets = [20, 0], sizes = [324, 4], strides = [1, 1]} : vector<362x4xf32> to vector<324x4xf32>
    %12 = vector.extract_strided_slice %5 {offsets = [36, 0], sizes = [324, 4], strides = [1, 1]} : vector<362x4xf32> to vector<324x4xf32>
    %13 = vector.extract_strided_slice %5 {offsets = [37, 0], sizes = [324, 4], strides = [1, 1]} : vector<362x4xf32> to vector<324x4xf32>
    %14 = vector.extract_strided_slice %5 {offsets = [38, 0], sizes = [324, 4], strides = [1, 1]} : vector<362x4xf32> to vector<324x4xf32>
    %15 = tpu.concatenate %6, %7, %8, %9, %10, %11, %12, %13, %14 in 1 : vector<324x4xf32>, vector<324x4xf32>, vector<324x4xf32>, vector<324x4xf32>, vector<324x4xf32>, vector<324x4xf32>, vector<324x4xf32>, vector<324x4xf32>, vector<324x4xf32> -> vector<324x36xf32>
    %16 = arith.truncf %15 : vector<324x36xf32> to vector<324x36xbf16>
    %c0_6 = arith.constant 0 : index
    %c0_7 = arith.constant 0 : index
    %17 = vector.load %arg4[%c0_6, %c0_7] : memref<36x16xbf16, #tpu.memory_space<vmem>>, vector<36x16xbf16>
    %cst_8 = arith.constant dense<0.000000e+00> : vector<324x16xf32>
    %18 = tpu.matmul %16, %17, %cst_8 {dimension_numbers = #tpu.dot_dimension_numbers<[1], [0], [0], [1], [0, 0, 1, 1], [], []>} : vector<324x36xbf16>, vector<36x16xbf16>, vector<324x16xf32> -> vector<324x16xf32>
    %c0_9 = arith.constant 0 : index
    %c0_10 = arith.constant 0 : index
    %19 = vector.load %arg5[%c0_9, %c0_10] : memref<1x16xf32, #tpu.memory_space<vmem>>, vector<1x16xf32>
    %20 = vector.broadcast %19 : vector<1x16xf32> to vector<324x16xf32>
    %21 = arith.addf %18, %20 : vector<324x16xf32>
    %cst_11 = arith.constant 0.000000e+00 : f32
    %22 = vector.broadcast %cst_11 : f32 to vector<324x16xf32>
    %23 = arith.maximumf %21, %22 : vector<324x16xf32>
    %24 = vector.broadcast %0 : vector<324x1xf32> to vector<324x16xf32>
    %25 = arith.mulf %23, %24 : vector<324x16xf32>
    %cst_12 = arith.constant 0.000000e+00 : f32
    %26 = vector.broadcast %cst_12 : f32 to vector<19x16xf32>
    %27 = tpu.concatenate %26, %25, %26 in 0 : vector<19x16xf32>, vector<324x16xf32>, vector<19x16xf32> -> vector<362x16xf32>
    %28 = vector.extract_strided_slice %27 {offsets = [0, 0], sizes = [324, 16], strides = [1, 1]} : vector<362x16xf32> to vector<324x16xf32>
    %29 = vector.extract_strided_slice %27 {offsets = [1, 0], sizes = [324, 16], strides = [1, 1]} : vector<362x16xf32> to vector<324x16xf32>
    %30 = vector.extract_strided_slice %27 {offsets = [2, 0], sizes = [324, 16], strides = [1, 1]} : vector<362x16xf32> to vector<324x16xf32>
    %31 = vector.extract_strided_slice %27 {offsets = [18, 0], sizes = [324, 16], strides = [1, 1]} : vector<362x16xf32> to vector<324x16xf32>
    %32 = vector.extract_strided_slice %27 {offsets = [19, 0], sizes = [324, 16], strides = [1, 1]} : vector<362x16xf32> to vector<324x16xf32>
    %33 = vector.extract_strided_slice %27 {offsets = [20, 0], sizes = [324, 16], strides = [1, 1]} : vector<362x16xf32> to vector<324x16xf32>
    %34 = vector.extract_strided_slice %27 {offsets = [36, 0], sizes = [324, 16], strides = [1, 1]} : vector<362x16xf32> to vector<324x16xf32>
    %35 = vector.extract_strided_slice %27 {offsets = [37, 0], sizes = [324, 16], strides = [1, 1]} : vector<362x16xf32> to vector<324x16xf32>
    %36 = vector.extract_strided_slice %27 {offsets = [38, 0], sizes = [324, 16], strides = [1, 1]} : vector<362x16xf32> to vector<324x16xf32>
    %37 = tpu.concatenate %28, %29, %30, %31, %32, %33, %34, %35, %36 in 1 : vector<324x16xf32>, vector<324x16xf32>, vector<324x16xf32>, vector<324x16xf32>, vector<324x16xf32>, vector<324x16xf32>, vector<324x16xf32>, vector<324x16xf32>, vector<324x16xf32> -> vector<324x144xf32>
    %38 = arith.truncf %37 : vector<324x144xf32> to vector<324x144xbf16>
    %c0_13 = arith.constant 0 : index
    %c0_14 = arith.constant 0 : index
    %39 = vector.load %arg6[%c0_13, %c0_14] : memref<144x16xbf16, #tpu.memory_space<vmem>>, vector<144x16xbf16>
    %cst_15 = arith.constant dense<0.000000e+00> : vector<324x16xf32>
    %40 = tpu.matmul %38, %39, %cst_15 {dimension_numbers = #tpu.dot_dimension_numbers<[1], [0], [0], [1], [0, 0, 1, 1], [], []>} : vector<324x144xbf16>, vector<144x16xbf16>, vector<324x16xf32> -> vector<324x16xf32>
    %c0_16 = arith.constant 0 : index
    %c0_17 = arith.constant 0 : index
    %41 = vector.load %arg7[%c0_16, %c0_17] : memref<1x16xf32, #tpu.memory_space<vmem>>, vector<1x16xf32>
    %42 = vector.broadcast %41 : vector<1x16xf32> to vector<324x16xf32>
    %43 = arith.addf %40, %42 : vector<324x16xf32>
    %cst_18 = arith.constant 0.000000e+00 : f32
    %44 = vector.broadcast %cst_18 : f32 to vector<324x16xf32>
    %45 = arith.maximumf %43, %44 : vector<324x16xf32>
    %46 = vector.broadcast %0 : vector<324x1xf32> to vector<324x16xf32>
    %47 = arith.mulf %45, %46 : vector<324x16xf32>
    %cst_19 = arith.constant 0.000000e+00 : f32
    %48 = vector.broadcast %cst_19 : f32 to vector<19x16xf32>
    %49 = tpu.concatenate %48, %47, %48 in 0 : vector<19x16xf32>, vector<324x16xf32>, vector<19x16xf32> -> vector<362x16xf32>
    %50 = vector.extract_strided_slice %49 {offsets = [0, 0], sizes = [324, 16], strides = [1, 1]} : vector<362x16xf32> to vector<324x16xf32>
    %51 = vector.extract_strided_slice %49 {offsets = [1, 0], sizes = [324, 16], strides = [1, 1]} : vector<362x16xf32> to vector<324x16xf32>
    %52 = vector.extract_strided_slice %49 {offsets = [2, 0], sizes = [324, 16], strides = [1, 1]} : vector<362x16xf32> to vector<324x16xf32>
    %53 = vector.extract_strided_slice %49 {offsets = [18, 0], sizes = [324, 16], strides = [1, 1]} : vector<362x16xf32> to vector<324x16xf32>
    %54 = vector.extract_strided_slice %49 {offsets = [19, 0], sizes = [324, 16], strides = [1, 1]} : vector<362x16xf32> to vector<324x16xf32>
    %55 = vector.extract_strided_slice %49 {offsets = [20, 0], sizes = [324, 16], strides = [1, 1]} : vector<362x16xf32> to vector<324x16xf32>
    %56 = vector.extract_strided_slice %49 {offsets = [36, 0], sizes = [324, 16], strides = [1, 1]} : vector<362x16xf32> to vector<324x16xf32>
    %57 = vector.extract_strided_slice %49 {offsets = [37, 0], sizes = [324, 16], strides = [1, 1]} : vector<362x16xf32> to vector<324x16xf32>
    %58 = vector.extract_strided_slice %49 {offsets = [38, 0], sizes = [324, 16], strides = [1, 1]} : vector<362x16xf32> to vector<324x16xf32>
    %59 = tpu.concatenate %50, %51, %52, %53, %54, %55, %56, %57, %58 in 1 : vector<324x16xf32>, vector<324x16xf32>, vector<324x16xf32>, vector<324x16xf32>, vector<324x16xf32>, vector<324x16xf32>, vector<324x16xf32>, vector<324x16xf32>, vector<324x16xf32> -> vector<324x144xf32>
    %60 = arith.truncf %59 : vector<324x144xf32> to vector<324x144xbf16>
    %c0_20 = arith.constant 0 : index
    %c0_21 = arith.constant 0 : index
    %61 = vector.load %arg8[%c0_20, %c0_21] : memref<144x16xbf16, #tpu.memory_space<vmem>>, vector<144x16xbf16>
    %cst_22 = arith.constant dense<0.000000e+00> : vector<324x16xf32>
    %62 = tpu.matmul %60, %61, %cst_22 {dimension_numbers = #tpu.dot_dimension_numbers<[1], [0], [0], [1], [0, 0, 1, 1], [], []>} : vector<324x144xbf16>, vector<144x16xbf16>, vector<324x16xf32> -> vector<324x16xf32>
    %c0_23 = arith.constant 0 : index
    %c0_24 = arith.constant 0 : index
    %63 = vector.load %arg9[%c0_23, %c0_24] : memref<1x16xf32, #tpu.memory_space<vmem>>, vector<1x16xf32>
    %64 = vector.broadcast %63 : vector<1x16xf32> to vector<324x16xf32>
    %65 = arith.addf %62, %64 : vector<324x16xf32>
    %66 = arith.addf %65, %25 : vector<324x16xf32>
    %cst_25 = arith.constant 0.000000e+00 : f32
    %67 = vector.broadcast %cst_25 : f32 to vector<324x16xf32>
    %68 = arith.maximumf %66, %67 : vector<324x16xf32>
    %69 = vector.broadcast %0 : vector<324x1xf32> to vector<324x16xf32>
    %70 = arith.mulf %68, %69 : vector<324x16xf32>
    %71 = arith.truncf %70 : vector<324x16xf32> to vector<324x16xbf16>
    %c0_26 = arith.constant 0 : index
    %c0_27 = arith.constant 0 : index
    %72 = vector.load %arg14[%c0_26, %c0_27] : memref<16x32xbf16, #tpu.memory_space<vmem>>, vector<16x32xbf16>
    %cst_28 = arith.constant dense<0.000000e+00> : vector<324x32xf32>
    %73 = tpu.matmul %71, %72, %cst_28 {dimension_numbers = #tpu.dot_dimension_numbers<[1], [0], [0], [1], [0, 0, 1, 1], [], []>} : vector<324x16xbf16>, vector<16x32xbf16>, vector<324x32xf32> -> vector<324x32xf32>
    %c0_29 = arith.constant 0 : index
    %c0_30 = arith.constant 0 : index
    %74 = vector.load %arg15[%c0_29, %c0_30] : memref<1x32xf32, #tpu.memory_space<vmem>>, vector<1x32xf32>
    %75 = vector.broadcast %74 : vector<1x32xf32> to vector<324x32xf32>
    %76 = arith.addf %73, %75 : vector<324x32xf32>
    %77 = vector.broadcast %1 : vector<324x1xf32> to vector<324x32xf32>
    %78 = arith.mulf %76, %77 : vector<324x32xf32>
    %cst_31 = arith.constant 0.000000e+00 : f32
    %79 = vector.broadcast %cst_31 : f32 to vector<19x16xf32>
    %80 = tpu.concatenate %79, %70, %79 in 0 : vector<19x16xf32>, vector<324x16xf32>, vector<19x16xf32> -> vector<362x16xf32>
    %81 = vector.extract_strided_slice %80 {offsets = [0, 0], sizes = [324, 16], strides = [1, 1]} : vector<362x16xf32> to vector<324x16xf32>
    %82 = vector.extract_strided_slice %80 {offsets = [1, 0], sizes = [324, 16], strides = [1, 1]} : vector<362x16xf32> to vector<324x16xf32>
    %83 = vector.extract_strided_slice %80 {offsets = [2, 0], sizes = [324, 16], strides = [1, 1]} : vector<362x16xf32> to vector<324x16xf32>
    %84 = vector.extract_strided_slice %80 {offsets = [18, 0], sizes = [324, 16], strides = [1, 1]} : vector<362x16xf32> to vector<324x16xf32>
    %85 = vector.extract_strided_slice %80 {offsets = [19, 0], sizes = [324, 16], strides = [1, 1]} : vector<362x16xf32> to vector<324x16xf32>
    %86 = vector.extract_strided_slice %80 {offsets = [20, 0], sizes = [324, 16], strides = [1, 1]} : vector<362x16xf32> to vector<324x16xf32>
    %87 = vector.extract_strided_slice %80 {offsets = [36, 0], sizes = [324, 16], strides = [1, 1]} : vector<362x16xf32> to vector<324x16xf32>
    %88 = vector.extract_strided_slice %80 {offsets = [37, 0], sizes = [324, 16], strides = [1, 1]} : vector<362x16xf32> to vector<324x16xf32>
    %89 = vector.extract_strided_slice %80 {offsets = [38, 0], sizes = [324, 16], strides = [1, 1]} : vector<362x16xf32> to vector<324x16xf32>
    %90 = tpu.concatenate %81, %82, %83, %84, %85, %86, %87, %88, %89 in 1 : vector<324x16xf32>, vector<324x16xf32>, vector<324x16xf32>, vector<324x16xf32>, vector<324x16xf32>, vector<324x16xf32>, vector<324x16xf32>, vector<324x16xf32>, vector<324x16xf32> -> vector<324x144xf32>
    %91 = arith.truncf %90 : vector<324x144xf32> to vector<324x144xbf16>
    %c0_32 = arith.constant 0 : index
    %c0_33 = arith.constant 0 : index
    %92 = vector.load %arg10[%c0_32, %c0_33] : memref<144x32xbf16, #tpu.memory_space<vmem>>, vector<144x32xbf16>
    %cst_34 = arith.constant dense<0.000000e+00> : vector<324x32xf32>
    %93 = tpu.matmul %91, %92, %cst_34 {dimension_numbers = #tpu.dot_dimension_numbers<[1], [0], [0], [1], [0, 0, 1, 1], [], []>} : vector<324x144xbf16>, vector<144x32xbf16>, vector<324x32xf32> -> vector<324x32xf32>
    %c0_35 = arith.constant 0 : index
    %c0_36 = arith.constant 0 : index
    %94 = vector.load %arg11[%c0_35, %c0_36] : memref<1x32xf32, #tpu.memory_space<vmem>>, vector<1x32xf32>
    %95 = vector.broadcast %94 : vector<1x32xf32> to vector<324x32xf32>
    %96 = arith.addf %93, %95 : vector<324x32xf32>
    %cst_37 = arith.constant 0.000000e+00 : f32
    %97 = vector.broadcast %cst_37 : f32 to vector<324x32xf32>
    %98 = arith.maximumf %96, %97 : vector<324x32xf32>
    %99 = vector.broadcast %1 : vector<324x1xf32> to vector<324x32xf32>
    %100 = arith.mulf %98, %99 : vector<324x32xf32>
    %cst_38 = arith.constant 0.000000e+00 : f32
    %101 = vector.broadcast %cst_38 : f32 to vector<38x32xf32>
    %102 = tpu.concatenate %101, %100, %101 in 0 : vector<38x32xf32>, vector<324x32xf32>, vector<38x32xf32> -> vector<400x32xf32>
    %103 = vector.extract_strided_slice %102 {offsets = [0, 0], sizes = [324, 32], strides = [1, 1]} : vector<400x32xf32> to vector<324x32xf32>
    %104 = vector.extract_strided_slice %102 {offsets = [2, 0], sizes = [324, 32], strides = [1, 1]} : vector<400x32xf32> to vector<324x32xf32>
    %105 = vector.extract_strided_slice %102 {offsets = [4, 0], sizes = [324, 32], strides = [1, 1]} : vector<400x32xf32> to vector<324x32xf32>
    %106 = vector.extract_strided_slice %102 {offsets = [36, 0], sizes = [324, 32], strides = [1, 1]} : vector<400x32xf32> to vector<324x32xf32>
    %107 = vector.extract_strided_slice %102 {offsets = [38, 0], sizes = [324, 32], strides = [1, 1]} : vector<400x32xf32> to vector<324x32xf32>
    %108 = vector.extract_strided_slice %102 {offsets = [40, 0], sizes = [324, 32], strides = [1, 1]} : vector<400x32xf32> to vector<324x32xf32>
    %109 = vector.extract_strided_slice %102 {offsets = [72, 0], sizes = [324, 32], strides = [1, 1]} : vector<400x32xf32> to vector<324x32xf32>
    %110 = vector.extract_strided_slice %102 {offsets = [74, 0], sizes = [324, 32], strides = [1, 1]} : vector<400x32xf32> to vector<324x32xf32>
    %111 = vector.extract_strided_slice %102 {offsets = [76, 0], sizes = [324, 32], strides = [1, 1]} : vector<400x32xf32> to vector<324x32xf32>
    %112 = tpu.concatenate %103, %104, %105, %106, %107, %108, %109, %110, %111 in 1 : vector<324x32xf32>, vector<324x32xf32>, vector<324x32xf32>, vector<324x32xf32>, vector<324x32xf32>, vector<324x32xf32>, vector<324x32xf32>, vector<324x32xf32>, vector<324x32xf32> -> vector<324x288xf32>
    %113 = arith.truncf %112 : vector<324x288xf32> to vector<324x288xbf16>
    %c0_39 = arith.constant 0 : index
    %c0_40 = arith.constant 0 : index
    %114 = vector.load %arg12[%c0_39, %c0_40] : memref<288x32xbf16, #tpu.memory_space<vmem>>, vector<288x32xbf16>
    %cst_41 = arith.constant dense<0.000000e+00> : vector<324x32xf32>
    %115 = tpu.matmul %113, %114, %cst_41 {dimension_numbers = #tpu.dot_dimension_numbers<[1], [0], [0], [1], [0, 0, 1, 1], [], []>} : vector<324x288xbf16>, vector<288x32xbf16>, vector<324x32xf32> -> vector<324x32xf32>
    %c0_42 = arith.constant 0 : index
    %c0_43 = arith.constant 0 : index
    %116 = vector.load %arg13[%c0_42, %c0_43] : memref<1x32xf32, #tpu.memory_space<vmem>>, vector<1x32xf32>
    %117 = vector.broadcast %116 : vector<1x32xf32> to vector<324x32xf32>
    %118 = arith.addf %115, %117 : vector<324x32xf32>
    %119 = arith.addf %118, %78 : vector<324x32xf32>
    %cst_44 = arith.constant 0.000000e+00 : f32
    %120 = vector.broadcast %cst_44 : f32 to vector<324x32xf32>
    %121 = arith.maximumf %119, %120 : vector<324x32xf32>
    %122 = vector.broadcast %1 : vector<324x1xf32> to vector<324x32xf32>
    %123 = arith.mulf %121, %122 : vector<324x32xf32>
    %cst_45 = arith.constant dense<0.000000e+00> : vector<32xf32>
    %124 = vector.multi_reduction <add>, %123, %cst_45 [0] : vector<324x32xf32> to vector<32xf32>
    %125 = vector.shape_cast %124 : vector<32xf32> to vector<1x32xf32>
    %cst_46 = arith.constant 1.562500e-02 : f32
    %126 = vector.broadcast %cst_46 : f32 to vector<1x32xf32>
    %127 = arith.mulf %125, %126 : vector<1x32xf32>
    %c0_47 = arith.constant 0 : index
    %c0_48 = arith.constant 0 : index
    %c0_49 = arith.constant 0 : index
    %128 = vector.load %arg16[%c0_47, %c0_48, %c0_49] : memref<1x1x32xf32, #tpu.memory_space<vmem>>, vector<1x1x32xf32>
    %129 = vector.shape_cast %128 : vector<1x1x32xf32> to vector<1x32xf32>
    %130 = vector.shape_cast %127 : vector<1x32xf32> to vector<1x1x32xf32>
    tpu.vector_store %arg16[%c0_47, %c0_48, %c0_49], %130 {strides = array<i32>} : memref<1x1x32xf32, #tpu.memory_space<vmem>>, vector<1x1x32xf32>,
    return
  }
  func.func @transform_0(%arg0: i32) -> (i32, i32) {
    %c0_i32 = arith.constant 0 : i32
    %c0_i32_0 = arith.constant 0 : i32
    %c0_i32_1 = arith.constant 0 : i32
    return %c0_i32, %c0_i32_0 : i32, i32
  }
  func.func @transform_1(%arg0: i32) -> (i32, i32) {
    %c0_i32 = arith.constant 0 : i32
    %c0_i32_0 = arith.constant 0 : i32
    %c0_i32_1 = arith.constant 0 : i32
    return %c0_i32, %c0_i32_0 : i32, i32
  }
  func.func @transform_2(%arg0: i32) -> (i32, i32, i32) {
    %c0_i32 = arith.constant 0 : i32
    %c0_i32_0 = arith.constant 0 : i32
    %c0_i32_1 = arith.constant 0 : i32
    return %arg0, %c0_i32, %c0_i32_0 : i32, i32, i32
  }
  func.func @transform_3(%arg0: i32) -> (i32, i32) {
    %c0_i32 = arith.constant 0 : i32
    %c0_i32_0 = arith.constant 0 : i32
    %c0_i32_1 = arith.constant 0 : i32
    return %c0_i32, %c0_i32_0 : i32, i32
  }
  func.func @transform_4(%arg0: i32) -> (i32, i32) {
    %c0_i32 = arith.constant 0 : i32
    %c0_i32_0 = arith.constant 0 : i32
    %c0_i32_1 = arith.constant 0 : i32
    return %c0_i32, %c0_i32_0 : i32, i32
  }
  func.func @transform_5(%arg0: i32) -> (i32, i32) {
    %c0_i32 = arith.constant 0 : i32
    %c0_i32_0 = arith.constant 0 : i32
    %c0_i32_1 = arith.constant 0 : i32
    return %c0_i32, %c0_i32_0 : i32, i32
  }
  func.func @transform_6(%arg0: i32) -> (i32, i32) {
    %c0_i32 = arith.constant 0 : i32
    %c0_i32_0 = arith.constant 0 : i32
    %c0_i32_1 = arith.constant 0 : i32
    return %c0_i32, %c0_i32_0 : i32, i32
  }
  func.func @transform_7(%arg0: i32) -> (i32, i32) {
    %c0_i32 = arith.constant 0 : i32
    %c0_i32_0 = arith.constant 0 : i32
    %c0_i32_1 = arith.constant 0 : i32
    return %c0_i32, %c0_i32_0 : i32, i32
  }
  func.func @transform_8(%arg0: i32) -> (i32, i32) {
    %c0_i32 = arith.constant 0 : i32
    %c0_i32_0 = arith.constant 0 : i32
    %c0_i32_1 = arith.constant 0 : i32
    return %c0_i32, %c0_i32_0 : i32, i32
  }
  func.func @transform_9(%arg0: i32) -> (i32, i32) {
    %c0_i32 = arith.constant 0 : i32
    %c0_i32_0 = arith.constant 0 : i32
    %c0_i32_1 = arith.constant 0 : i32
    return %c0_i32, %c0_i32_0 : i32, i32
  }
  func.func @transform_10(%arg0: i32) -> (i32, i32) {
    %c0_i32 = arith.constant 0 : i32
    %c0_i32_0 = arith.constant 0 : i32
    %c0_i32_1 = arith.constant 0 : i32
    return %c0_i32, %c0_i32_0 : i32, i32
  }
  func.func @transform_11(%arg0: i32) -> (i32, i32) {
    %c0_i32 = arith.constant 0 : i32
    %c0_i32_0 = arith.constant 0 : i32
    %c0_i32_1 = arith.constant 0 : i32
    return %c0_i32, %c0_i32_0 : i32, i32
  }
  func.func @transform_12(%arg0: i32) -> (i32, i32) {
    %c0_i32 = arith.constant 0 : i32
    %c0_i32_0 = arith.constant 0 : i32
    %c0_i32_1 = arith.constant 0 : i32
    return %c0_i32, %c0_i32_0 : i32, i32
  }
  func.func @transform_13(%arg0: i32) -> (i32, i32) {
    %c0_i32 = arith.constant 0 : i32
    %c0_i32_0 = arith.constant 0 : i32
    %c0_i32_1 = arith.constant 0 : i32
    return %c0_i32, %c0_i32_0 : i32, i32
  }
  func.func @transform_14(%arg0: i32) -> (i32, i32) {
    %c0_i32 = arith.constant 0 : i32
    %c0_i32_0 = arith.constant 0 : i32
    %c0_i32_1 = arith.constant 0 : i32
    return %c0_i32, %c0_i32_0 : i32, i32
  }
  func.func @transform_15(%arg0: i32) -> (i32, i32, i32) {
    %c0_i32 = arith.constant 0 : i32
    %c0_i32_0 = arith.constant 0 : i32
    %c0_i32_1 = arith.constant 0 : i32
    return %arg0, %c0_i32, %c0_i32_0 : i32, i32, i32
  }
}

</mosaic_0001>

<llo_original>
// kernel: my_resnet_forward.1
$region0: #{my_resnet_forward.1}
  #allocation0 [shape = 'u32[]', space=smem, size = 0x4, offset = 0x4, fixed_abs, tag = 'smem constant byte address 0x4 - core index']
  #allocation1 [shape = 'u32[72,128]{1,0:T(1,128)}', space=vmem, size = 0x9000, scoped, tag = 'internal scratch']
  %s0 = inlined_call_operand.vmem [shape: f32[324,1], index: 0, kind: input, shape index: {}]
  %s1 = inlined_call_operand.vmem [shape: f32[324,1], index: 1, kind: input, shape index: {}]
  %s2 = inlined_call_operand.vmem [shape: f32[2,324,4], index: 2, kind: input, shape index: {}]
  %s3 = inlined_call_operand.vmem [shape: bf16[36,16], index: 3, kind: input, shape index: {}]
  %s4 = inlined_call_operand.vmem [shape: f32[1,16], index: 4, kind: input, shape index: {}]
  %s5 = inlined_call_operand.vmem [shape: bf16[144,16], index: 5, kind: input, shape index: {}]
  %s6 = inlined_call_operand.vmem [shape: f32[1,16], index: 6, kind: input, shape index: {}]
  %s7 = inlined_call_operand.vmem [shape: bf16[144,16], index: 7, kind: input, shape index: {}]
  %s8 = inlined_call_operand.vmem [shape: f32[1,16], index: 8, kind: input, shape index: {}]
  %s9 = inlined_call_operand.vmem [shape: bf16[144,32], index: 9, kind: input, shape index: {}]
  %s10 = inlined_call_operand.vmem [shape: f32[1,32], index: 10, kind: input, shape index: {}]
  %s11 = inlined_call_operand.vmem [shape: bf16[288,32], index: 11, kind: input, shape index: {}]
  %s12 = inlined_call_operand.vmem [shape: f32[1,32], index: 12, kind: input, shape index: {}]
  %s13 = inlined_call_operand.vmem [shape: bf16[16,32], index: 13, kind: input, shape index: {}]
  %s14 = inlined_call_operand.vmem [shape: f32[1,32], index: 14, kind: input, shape index: {}]
  %s15 = inlined_call_operand.vmem [shape: f32[2,1,32], index: 15, kind: output, shape index: {}]
  %s16 = sld [smem:[#allocation0]]
  $region93: #{my_resnet_forward.1} parent=0
    _
  %s18 = ssub.s32 1, %s16
  %s19 = scalar_select 0, %s18, %s16
  loop: start=0, step=1, limit=4
  $region2: #{my_resnet_forward.1} parent=0 // loop_pre_header
    _
  $region3: #{my_resnet_forward.1} parent=0 // loop_header
    %s21 = sphi 0, %s25
    %p22 = scmp.ge.s32.totalorder %s21, 4
    %s29 = sphi 0, %s29
    %s31 = sphi 0, %s29
    %s32 = sphi 0, %s31
    %s46 = sphi 0, %s32
    %s50 = sphi 0, %s50
    %s52 = sphi 0, %s50
    %s53 = sphi 0, %s52
    %s67 = sphi 0, %s53
    %s73 = sphi 0, %s75
    %s76 = sphi 0, %s73
    %s77 = sphi 0, %s76
    %s93 = sphi 0, %s77
    %s97 = sphi 0, %s97
    %s99 = sphi 0, %s97
    %s100 = sphi 0, %s99
    %s114 = sphi 0, %s100
    %s118 = sphi 0, %s118
    %s120 = sphi 0, %s118
    %s121 = sphi 0, %s120
    %s135 = sphi 0, %s121
    %s139 = sphi 0, %s139
    %s141 = sphi 0, %s139
    %s142 = sphi 0, %s141
    %s156 = sphi 0, %s142
    %s160 = sphi 0, %s160
    %s162 = sphi 0, %s160
    %s163 = sphi 0, %s162
    %s177 = sphi 0, %s163
    %s181 = sphi 0, %s181
    %s183 = sphi 0, %s181
    %s184 = sphi 0, %s183
    %s198 = sphi 0, %s184
    %s202 = sphi 0, %s202
    %s204 = sphi 0, %s202
    %s205 = sphi 0, %s204
    %s219 = sphi 0, %s205
    %s223 = sphi 0, %s223
    %s225 = sphi 0, %s223
    %s226 = sphi 0, %s225
    %s240 = sphi 0, %s226
    %s244 = sphi 0, %s244
    %s246 = sphi 0, %s244
    %s247 = sphi 0, %s246
    %s261 = sphi 0, %s247
    %s265 = sphi 0, %s265
    %s267 = sphi 0, %s265
    %s268 = sphi 0, %s267
    %s282 = sphi 0, %s268
    %s286 = sphi 0, %s286
    %s288 = sphi 0, %s286
    %s289 = sphi 0, %s288
    %s303 = sphi 0, %s289
    %s307 = sphi 0, %s307
    %s309 = sphi 0, %s307
    %s310 = sphi 0, %s309
    %s324 = sphi 0, %s310
    %s328 = sphi 0, %s328
    %s330 = sphi 0, %s328
    %s331 = sphi 0, %s330
    %s345 = sphi 0, %s331
    %s351 = sphi 0, %s353
    %s354 = sphi 0, %s351
    %s355 = sphi 0, %s354
    %s371 = sphi 0, %s355
  $region4: #{my_resnet_forward.1} parent=0 // loop_header_branch
    %24 = sbr.rel (%p22) target = $region8
  $region5: #{my_resnet_forward.1} parent=0 // loop_body
    %s26 = ssub.s32 %s21, 1
    %s27 = ssub.s32 %s21, 2
    %s28 = sadd.s32 %s21, 1
    %s30 = sadd.s32 %s29, 1
    %p33 = scmp.eq.s32.totalorder %s21, 1
    %p34 = scmp.ne.s32.totalorder %s29, %s31
    %p35 = scmp.eq.s32.totalorder %s21, 0
    %p36 = por %p34, %p35
    %p37 = scmp.ne.s32.totalorder %s29, %s31
    %p38 = scmp.eq.s32.totalorder %s26, 1
    %p39 = por %p37, %p38
    %p40 = scmp.ne.s32.totalorder %s31, %s32
    %p41 = scmp.eq.s32.totalorder %s26, 0
    %p42 = por %p40, %p41
    %p43 = scmp.ne.s32.totalorder %s31, %s32
    %p44 = scmp.eq.s32.totalorder %s27, 1
    %p45 = por %p43, %p44
    %p47 = scmp.ne.s32.totalorder %s32, %s46
    %p48 = scmp.eq.s32.totalorder %s27, 0
    %p49 = por %p47, %p48
    %s51 = sadd.s32 %s50, 1
    %p54 = scmp.eq.s32.totalorder %s21, 1
    %p55 = scmp.ne.s32.totalorder %s50, %s52
    %p56 = scmp.eq.s32.totalorder %s21, 0
    %p57 = por %p55, %p56
    %p58 = scmp.ne.s32.totalorder %s50, %s52
    %p59 = scmp.eq.s32.totalorder %s26, 1
    %p60 = por %p58, %p59
    %p61 = scmp.ne.s32.totalorder %s52, %s53
    %p62 = scmp.eq.s32.totalorder %s26, 0
    %p63 = por %p61, %p62
    %p64 = scmp.ne.s32.totalorder %s52, %s53
    %p65 = scmp.eq.s32.totalorder %s27, 1
    %p66 = por %p64, %p65
    %p68 = scmp.ne.s32.totalorder %s53, %s67
    %p69 = scmp.eq.s32.totalorder %s27, 0
    %p70 = por %p68, %p69
    %s71 = ssub.s32 %s21, %s28
    %p72 = scmp.eq.s32.totalorder %s71, 0
    %s74 = sadd.s32 %s73, 1
    %s75 = scalar_select %p72, %s73, %s74
    %p78 = pneg %p72
    %p79 = scmp.eq.s32.totalorder %s21, 1
    %p80 = por %p78, %p79
    %p81 = scmp.ne.s32.totalorder %s73, %s76
    %p82 = scmp.eq.s32.totalorder %s21, 0
    %p83 = por %p81, %p82
    %p84 = scmp.ne.s32.totalorder %s73, %s76
    %p85 = scmp.eq.s32.totalorder %s26, 1
    %p86 = por %p84, %p85
    %p87 = scmp.ne.s32.totalorder %s76, %s77
    %p88 = scmp.eq.s32.totalorder %s26, 0
    %p89 = por %p87, %p88
    %p90 = scmp.ne.s32.totalorder %s76, %s77
    %p91 = scmp.eq.s32.totalorder %s27, 1
    %p92 = por %p90, %p91
    %p94 = scmp.ne.s32.totalorder %s77, %s93
    %p95 = scmp.eq.s32.totalorder %s27, 0
    %p96 = por %p94, %p95
    %s98 = sadd.s32 %s97, 1
    %p101 = scmp.eq.s32.totalorder %s21, 1
    %p102 = scmp.ne.s32.totalorder %s97, %s99
    %p103 = scmp.eq.s32.totalorder %s21, 0
    %p104 = por %p102, %p103
    %p105 = scmp.ne.s32.totalorder %s97, %s99
    %p106 = scmp.eq.s32.totalorder %s26, 1
    %p107 = por %p105, %p106
    %p108 = scmp.ne.s32.totalorder %s99, %s100
    %p109 = scmp.eq.s32.totalorder %s26, 0
    %p110 = por %p108, %p109
    %p111 = scmp.ne.s32.totalorder %s99, %s100
    %p112 = scmp.eq.s32.totalorder %s27, 1
    %p113 = por %p111, %p112
    %p115 = scmp.ne.s32.totalorder %s100, %s114
    %p116 = scmp.eq.s32.totalorder %s27, 0
    %p117 = por %p115, %p116
    %s119 = sadd.s32 %s118, 1
    %p122 = scmp.eq.s32.totalorder %s21, 1
    %p123 = scmp.ne.s32.totalorder %s118, %s120
    %p124 = scmp.eq.s32.totalorder %s21, 0
    %p125 = por %p123, %p124
    %p126 = scmp.ne.s32.totalorder %s118, %s120
    %p127 = scmp.eq.s32.totalorder %s26, 1
    %p128 = por %p126, %p127
    %p129 = scmp.ne.s32.totalorder %s120, %s121
    %p130 = scmp.eq.s32.totalorder %s26, 0
    %p131 = por %p129, %p130
    %p132 = scmp.ne.s32.totalorder %s120, %s121
    %p133 = scmp.eq.s32.totalorder %s27, 1
    %p134 = por %p132, %p133
    %p136 = scmp.ne.s32.totalorder %s121, %s135
    %p137 = scmp.eq.s32.totalorder %s27, 0
    %p138 = por %p136, %p137
    %s140 = sadd.s32 %s139, 1
    %p143 = scmp.eq.s32.totalorder %s21, 1
    %p144 = scmp.ne.s32.totalorder %s139, %s141
    %p145 = scmp.eq.s32.totalorder %s21, 0
    %p146 = por %p144, %p145
    %p147 = scmp.ne.s32.totalorder %s139, %s141
    %p148 = scmp.eq.s32.totalorder %s26, 1
    %p149 = por %p147, %p148
    %p150 = scmp.ne.s32.totalorder %s141, %s142
    %p151 = scmp.eq.s32.totalorder %s26, 0
    %p152 = por %p150, %p151
    %p153 = scmp.ne.s32.totalorder %s141, %s142
    %p154 = scmp.eq.s32.totalorder %s27, 1
    %p155 = por %p153, %p154
    %p157 = scmp.ne.s32.totalorder %s142, %s156
    %p158 = scmp.eq.s32.totalorder %s27, 0
    %p159 = por %p157, %p158
    %s161 = sadd.s32 %s160, 1
    %p164 = scmp.eq.s32.totalorder %s21, 1
    %p165 = scmp.ne.s32.totalorder %s160, %s162
    %p166 = scmp.eq.s32.totalorder %s21, 0
    %p167 = por %p165, %p166
    %p168 = scmp.ne.s32.totalorder %s160, %s162
    %p169 = scmp.eq.s32.totalorder %s26, 1
    %p170 = por %p168, %p169
    %p171 = scmp.ne.s32.totalorder %s162, %s163
    %p172 = scmp.eq.s32.totalorder %s26, 0
    %p173 = por %p171, %p172
    %p174 = scmp.ne.s32.totalorder %s162, %s163
    %p175 = scmp.eq.s32.totalorder %s27, 1
    %p176 = por %p174, %p175
    %p178 = scmp.ne.s32.totalorder %s163, %s177
    %p179 = scmp.eq.s32.totalorder %s27, 0
    %p180 = por %p178, %p179
    %s182 = sadd.s32 %s181, 1
    %p185 = scmp.eq.s32.totalorder %s21, 1
    %p186 = scmp.ne.s32.totalorder %s181, %s183
    %p187 = scmp.eq.s32.totalorder %s21, 0
    %p188 = por %p186, %p187
    %p189 = scmp.ne.s32.totalorder %s181, %s183
    %p190 = scmp.eq.s32.totalorder %s26, 1
    %p191 = por %p189, %p190
    %p192 = scmp.ne.s32.totalorder %s183, %s184
    %p193 = scmp.eq.s32.totalorder %s26, 0
    %p194 = por %p192, %p193
    %p195 = scmp.ne.s32.totalorder %s183, %s184
    %p196 = scmp.eq.s32.totalorder %s27, 1
    %p197 = por %p195, %p196
    %p199 = scmp.ne.s32.totalorder %s184, %s198
    %p200 = scmp.eq.s32.totalorder %s27, 0
    %p201 = por %p199, %p200
    %s203 = sadd.s32 %s202, 1
    %p206 = scmp.eq.s32.totalorder %s21, 1
    %p207 = scmp.ne.s32.totalorder %s202, %s204
    %p208 = scmp.eq.s32.totalorder %s21, 0
    %p209 = por %p207, %p208
    %p210 = scmp.ne.s32.totalorder %s202, %s204
    %p211 = scmp.eq.s32.totalorder %s26, 1
    %p212 = por %p210, %p211
    %p213 = scmp.ne.s32.totalorder %s204, %s205
    %p214 = scmp.eq.s32.totalorder %s26, 0
    %p215 = por %p213, %p214
    %p216 = scmp.ne.s32.totalorder %s204, %s205
    %p217 = scmp.eq.s32.totalorder %s27, 1
    %p218 = por %p216, %p217
    %p220 = scmp.ne.s32.totalorder %s205, %s219
    %p221 = scmp.eq.s32.totalorder %s27, 0
    %p222 = por %p220, %p221
    %s224 = sadd.s32 %s223, 1
    %p227 = scmp.eq.s32.totalorder %s21, 1
    %p228 = scmp.ne.s32.totalorder %s223, %s225
    %p229 = scmp.eq.s32.totalorder %s21, 0
    %p230 = por %p228, %p229
    %p231 = scmp.ne.s32.totalorder %s223, %s225
    %p232 = scmp.eq.s32.totalorder %s26, 1
    %p233 = por %p231, %p232
    %p234 = scmp.ne.s32.totalorder %s225, %s226
    %p235 = scmp.eq.s32.totalorder %s26, 0
    %p236 = por %p234, %p235
    %p237 = scmp.ne.s32.totalorder %s225, %s226
    %p238 = scmp.eq.s32.totalorder %s27, 1
    %p239 = por %p237, %p238
    %p241 = scmp.ne.s32.totalorder %s226, %s240
    %p242 = scmp.eq.s32.totalorder %s27, 0
    %p243 = por %p241, %p242
    %s245 = sadd.s32 %s244, 1
    %p248 = scmp.eq.s32.totalorder %s21, 1
    %p249 = scmp.ne.s32.totalorder %s244, %s246
    %p250 = scmp.eq.s32.totalorder %s21, 0
    %p251 = por %p249, %p250
    %p252 = scmp.ne.s32.totalorder %s244, %s246
    %p253 = scmp.eq.s32.totalorder %s26, 1
    %p254 = por %p252, %p253
    %p255 = scmp.ne.s32.totalorder %s246, %s247
    %p256 = scmp.eq.s32.totalorder %s26, 0
    %p257 = por %p255, %p256
    %p258 = scmp.ne.s32.totalorder %s246, %s247
    %p259 = scmp.eq.s32.totalorder %s27, 1
    %p260 = por %p258, %p259
    %p262 = scmp.ne.s32.totalorder %s247, %s261
    %p263 = scmp.eq.s32.totalorder %s27, 0
    %p264 = por %p262, %p263
    %s266 = sadd.s32 %s265, 1
    %p269 = scmp.eq.s32.totalorder %s21, 1
    %p270 = scmp.ne.s32.totalorder %s265, %s267
    %p271 = scmp.eq.s32.totalorder %s21, 0
    %p272 = por %p270, %p271
    %p273 = scmp.ne.s32.totalorder %s265, %s267
    %p274 = scmp.eq.s32.totalorder %s26, 1
    %p275 = por %p273, %p274
    %p276 = scmp.ne.s32.totalorder %s267, %s268
    %p277 = scmp.eq.s32.totalorder %s26, 0
    %p278 = por %p276, %p277
    %p279 = scmp.ne.s32.totalorder %s267, %s268
    %p280 = scmp.eq.s32.totalorder %s27, 1
    %p281 = por %p279, %p280
    %p283 = scmp.ne.s32.totalorder %s268, %s282
    %p284 = scmp.eq.s32.totalorder %s27, 0
    %p285 = por %p283, %p284
    %s287 = sadd.s32 %s286, 1
    %p290 = scmp.eq.s32.totalorder %s21, 1
    %p291 = scmp.ne.s32.totalorder %s286, %s288
    %p292 = scmp.eq.s32.totalorder %s21, 0
    %p293 = por %p291, %p292
    %p294 = scmp.ne.s32.totalorder %s286, %s288
    %p295 = scmp.eq.s32.totalorder %s26, 1
    %p296 = por %p294, %p295
    %p297 = scmp.ne.s32.totalorder %s288, %s289
    %p298 = scmp.eq.s32.totalorder %s26, 0
    %p299 = por %p297, %p298
    %p300 = scmp.ne.s32.totalorder %s288, %s289
    %p301 = scmp.eq.s32.totalorder %s27, 1
    %p302 = por %p300, %p301
    %p304 = scmp.ne.s32.totalorder %s289, %s303
    %p305 = scmp.eq.s32.totalorder %s27, 0
    %p306 = por %p304, %p305
    %s308 = sadd.s32 %s307, 1
    %p311 = scmp.eq.s32.totalorder %s21, 1
    %p312 = scmp.ne.s32.totalorder %s307, %s309
    %p313 = scmp.eq.s32.totalorder %s21, 0
    %p314 = por %p312, %p313
    %p315 = scmp.ne.s32.totalorder %s307, %s309
    %p316 = scmp.eq.s32.totalorder %s26, 1
    %p317 = por %p315, %p316
    %p318 = scmp.ne.s32.totalorder %s309, %s310
    %p319 = scmp.eq.s32.totalorder %s26, 0
    %p320 = por %p318, %p319
    %p321 = scmp.ne.s32.totalorder %s309, %s310
    %p322 = scmp.eq.s32.totalorder %s27, 1
    %p323 = por %p321, %p322
    %p325 = scmp.ne.s32.totalorder %s310, %s324
    %p326 = scmp.eq.s32.totalorder %s27, 0
    %p327 = por %p325, %p326
    %s329 = sadd.s32 %s328, 1
    %p332 = scmp.eq.s32.totalorder %s21, 1
    %p333 = scmp.ne.s32.totalorder %s328, %s330
    %p334 = scmp.eq.s32.totalorder %s21, 0
    %p335 = por %p333, %p334
    %p336 = scmp.ne.s32.totalorder %s328, %s330
    %p337 = scmp.eq.s32.totalorder %s26, 1
    %p338 = por %p336, %p337
    %p339 = scmp.ne.s32.totalorder %s330, %s331
    %p340 = scmp.eq.s32.totalorder %s26, 0
    %p341 = por %p339, %p340
    %p342 = scmp.ne.s32.totalorder %s330, %s331
    %p343 = scmp.eq.s32.totalorder %s27, 1
    %p344 = por %p342, %p343
    %p346 = scmp.ne.s32.totalorder %s331, %s345
    %p347 = scmp.eq.s32.totalorder %s27, 0
    %p348 = por %p346, %p347
    %s349 = ssub.s32 %s21, %s28
    %p350 = scmp.eq.s32.totalorder %s349, 0
    %s352 = sadd.s32 %s351, 1
    %s353 = scalar_select %p350, %s351, %s352
    %p356 = pneg %p350
    %p357 = scmp.eq.s32.totalorder %s21, 1
    %p358 = por %p356, %p357
    %p359 = scmp.ne.s32.totalorder %s351, %s354
    %p360 = scmp.eq.s32.totalorder %s21, 0
    %p361 = por %p359, %p360
    %p362 = scmp.ne.s32.totalorder %s351, %s354
    %p363 = scmp.eq.s32.totalorder %s26, 1
    %p364 = por %p362, %p363
    %p365 = scmp.ne.s32.totalorder %s354, %s355
    %p366 = scmp.eq.s32.totalorder %s26, 0
    %p367 = por %p365, %p366
    %p368 = scmp.ne.s32.totalorder %s354, %s355
    %p369 = scmp.eq.s32.totalorder %s27, 1
    %p370 = por %p368, %p369
    %p372 = scmp.ne.s32.totalorder %s355, %s371
    %p373 = scmp.eq.s32.totalorder %s27, 0
    %p374 = por %p372, %p373
    %p375 = scmp.le.s32.totalorder 1, %s21
    %p376 = scmp.lt.s32.totalorder %s21, 3
    %p377 = pnand %p375, %p376
    %p378 = pneg %p377
    // Predicated region
    $region9: #{my_resnet_forward.1} parent=5 // pred_check
      _
    $region10: #{my_resnet_forward.1} parent=5 // pred_check_branch
      %380 = sbr.rel (%p377) target = $region12
    $region11: #{my_resnet_forward.1} parent=5 // pred_region
      %s381 = ssub.s32 %s21, 1
      // Predicated region
      $region13: #{my_resnet_forward.1} parent=11 // pred_check
        %p382 = pneg %p42
      $region14: #{my_resnet_forward.1} parent=11 // pred_check_branch
        %384 = sbr.rel (%p382) target = $region16
      $region15: #{my_resnet_forward.1} parent=11 // pred_region
        _
      $region16: #{my_resnet_forward.1} parent=11 // pred_fallthru
        _
      // Predicated region
      $region17: #{my_resnet_forward.1} parent=11 // pred_check
        %p385 = pneg %p63
      $region18: #{my_resnet_forward.1} parent=11 // pred_check_branch
        %387 = sbr.rel (%p385) target = $region20
      $region19: #{my_resnet_forward.1} parent=11 // pred_region
        _
      $region20: #{my_resnet_forward.1} parent=11 // pred_fallthru
        _
      // Predicated region
      $region21: #{my_resnet_forward.1} parent=11 // pred_check
        %p388 = pneg %p110
      $region22: #{my_resnet_forward.1} parent=11 // pred_check_branch
        %390 = sbr.rel (%p388) target = $region24
      $region23: #{my_resnet_forward.1} parent=11 // pred_region
        _
      $region24: #{my_resnet_forward.1} parent=11 // pred_fallthru
        _
      // Predicated region
      $region25: #{my_resnet_forward.1} parent=11 // pred_check
        %p391 = pneg %p131
      $region26: #{my_resnet_forward.1} parent=11 // pred_check_branch
        %393 = sbr.rel (%p391) target = $region28
      $region27: #{my_resnet_forward.1} parent=11 // pred_region
        _
      $region28: #{my_resnet_forward.1} parent=11 // pred_fallthru
        _
      // Predicated region
      $region29: #{my_resnet_forward.1} parent=11 // pred_check
        %p394 = pneg %p152
      $region30: #{my_resnet_forward.1} parent=11 // pred_check_branch
        %396 = sbr.rel (%p394) target = $region32
      $region31: #{my_resnet_forward.1} parent=11 // pred_region
        _
      $region32: #{my_resnet_forward.1} parent=11 // pred_fallthru
        _
      // Predicated region
      $region33: #{my_resnet_forward.1} parent=11 // pred_check
        %p397 = pneg %p173
      $region34: #{my_resnet_forward.1} parent=11 // pred_check_branch
        %399 = sbr.rel (%p397) target = $region36
      $region35: #{my_resnet_forward.1} parent=11 // pred_region
        _
      $region36: #{my_resnet_forward.1} parent=11 // pred_fallthru
        _
      // Predicated region
      $region37: #{my_resnet_forward.1} parent=11 // pred_check
        %p400 = pneg %p194
      $region38: #{my_resnet_forward.1} parent=11 // pred_check_branch
        %402 = sbr.rel (%p400) target = $region40
      $region39: #{my_resnet_forward.1} parent=11 // pred_region
        _
      $region40: #{my_resnet_forward.1} parent=11 // pred_fallthru
        _
      // Predicated region
      $region41: #{my_resnet_forward.1} parent=11 // pred_check
        %p403 = pneg %p215
      $region42: #{my_resnet_forward.1} parent=11 // pred_check_branch
        %405 = sbr.rel (%p403) target = $region44
      $region43: #{my_resnet_forward.1} parent=11 // pred_region
        _
      $region44: #{my_resnet_forward.1} parent=11 // pred_fallthru
        _
      // Predicated region
      $region45: #{my_resnet_forward.1} parent=11 // pred_check
        %p406 = pneg %p236
      $region46: #{my_resnet_forward.1} parent=11 // pred_check_branch
        %408 = sbr.rel (%p406) target = $region48
      $region47: #{my_resnet_forward.1} parent=11 // pred_region
        _
      $region48: #{my_resnet_forward.1} parent=11 // pred_fallthru
        _
      // Predicated region
      $region49: #{my_resnet_forward.1} parent=11 // pred_check
        %p409 = pneg %p257
      $region50: #{my_resnet_forward.1} parent=11 // pred_check_branch
        %411 = sbr.rel (%p409) target = $region52
      $region51: #{my_resnet_forward.1} parent=11 // pred_region
        _
      $region52: #{my_resnet_forward.1} parent=11 // pred_fallthru
        _
      // Predicated region
      $region53: #{my_resnet_forward.1} parent=11 // pred_check
        %p412 = pneg %p278
      $region54: #{my_resnet_forward.1} parent=11 // pred_check_branch
        %414 = sbr.rel (%p412) target = $region56
      $region55: #{my_resnet_forward.1} parent=11 // pred_region
        _
      $region56: #{my_resnet_forward.1} parent=11 // pred_fallthru
        _
      // Predicated region
      $region57: #{my_resnet_forward.1} parent=11 // pred_check
        %p415 = pneg %p299
      $region58: #{my_resnet_forward.1} parent=11 // pred_check_branch
        %417 = sbr.rel (%p415) target = $region60
      $region59: #{my_resnet_forward.1} parent=11 // pred_region
        _
      $region60: #{my_resnet_forward.1} parent=11 // pred_fallthru
        _
      // Predicated region
      $region61: #{my_resnet_forward.1} parent=11 // pred_check
        %p418 = pneg %p320
      $region62: #{my_resnet_forward.1} parent=11 // pred_check_branch
        %420 = sbr.rel (%p418) target = $region64
      $region63: #{my_resnet_forward.1} parent=11 // pred_region
        _
      $region64: #{my_resnet_forward.1} parent=11 // pred_fallthru
        _
      // Predicated region
      $region65: #{my_resnet_forward.1} parent=11 // pred_check
        %p421 = pneg %p341
      $region66: #{my_resnet_forward.1} parent=11 // pred_check_branch
        %423 = sbr.rel (%p421) target = $region68
      $region67: #{my_resnet_forward.1} parent=11 // pred_region
        _
      $region68: #{my_resnet_forward.1} parent=11 // pred_fallthru
        _
    $region12: #{my_resnet_forward.1} parent=5 // pred_fallthru
      _
    %p424 = scmp.lt.s32.totalorder %s21, 2
    // Predicated region
    $region69: #{my_resnet_forward.1} parent=5 // pred_check
      %p425 = pneg %p424
    $region70: #{my_resnet_forward.1} parent=5 // pred_check_branch
      %427 = sbr.rel (%p425) target = $region72
    $region71: #{my_resnet_forward.1} parent=5 // pred_region
      // Predicated region
      $region73: #{my_resnet_forward.1} parent=71 // pred_check
        %p428 = pneg %p83
      $region74: #{my_resnet_forward.1} parent=71 // pred_check_branch
        %430 = sbr.rel (%p428) target = $region76
      $region75: #{my_resnet_forward.1} parent=71 // pred_region
        %p431 = scmp.lt.s32.totalorder %s21, 1
        %s432 = scalar_select %p431, %s21, 1
        %s433 = smul.addr %s432, 41
        %s434 = smul.addr %s433, 8
        %s435 = scalar_lea.vmem %s2, %s434
      $region76: #{my_resnet_forward.1} parent=71 // pred_fallthru
        _
    $region72: #{my_resnet_forward.1} parent=5 // pred_fallthru
      _
    %p436 = scmp.le.s32.totalorder 1, %s21
    %p437 = scmp.lt.s32.totalorder %s21, 3
    %p438 = pnand %p436, %p437
    %p439 = pneg %p438
    // Predicated region
    $region77: #{my_resnet_forward.1} parent=5 // pred_check
      _
    $region78: #{my_resnet_forward.1} parent=5 // pred_check_branch
      %441 = sbr.rel (%p438) target = $region80
    $region79: #{my_resnet_forward.1} parent=5 // pred_region
      %s442 = ssub.s32 %s21, 1
      %p443 = pneg %p42
      %p444 = pneg %p39
      %p445 = pneg %p63
      %p446 = pneg %p60
      %p447 = scmp.lt.s32.totalorder %s26, 1
      %s448 = scalar_select %p447, %s26, 1
      %s449 = smul.addr %s448, 41
      %s450 = smul.addr %s449, 8
      %s451 = scalar_lea.vmem %s2, %s450
      %p452 = pneg %p89
      %p453 = pneg %p86
      %p454 = pneg %p110
      %p455 = pneg %p107
      %p456 = pneg %p131
      %p457 = pneg %p128
      %p458 = pneg %p152
      %p459 = pneg %p149
      %p460 = pneg %p173
      %p461 = pneg %p170
      %p462 = pneg %p194
      %p463 = pneg %p191
      %p464 = pneg %p215
      %p465 = pneg %p212
      %p466 = pneg %p236
      %p467 = pneg %p233
      %p468 = pneg %p257
      %p469 = pneg %p254
      %p470 = pneg %p278
      %p471 = pneg %p275
      %p472 = pneg %p299
      %p473 = pneg %p296
      %p474 = pneg %p320
      %p475 = pneg %p317
      %p476 = pneg %p341
      %p477 = pneg %p338
      %p478 = pneg %p367
      %p479 = pneg %p364
      %p480 = scmp.lt.s32.totalorder %s26, 1
      %s481 = scalar_select %p480, %s26, 1
      %s482 = scalar_lea.vmem %s15, %s481
      %p483 = scmp.lt.s32.totalorder %s26, 1
      %s484 = scalar_select %p483, %s26, 1
      %s485 = smul.addr %s484, 41
      %s486 = smul.addr %s485, 8
      %s487 = scalar_lea.vmem %s2, %s486
      %p488 = scmp.lt.s32.totalorder %s26, 1
      %s489 = scalar_select %p488, %s26, 1
      %s490 = scalar_lea.vmem %s15, %s489
      %v492 = vld [vmem:[%s0] sm:$0xff]
      %v493 = vld [vmem:[%s0 + $0x8] sm:$0xff]
      %v494 = vld [vmem:[%s0 + $0x10] sm:$0xff]
      %v495 = vld [vmem:[%s0 + $0x18] sm:$0xff]
      %v496 = vld [vmem:[%s0 + $0x20] sm:$0xff]
      %v497 = vld [vmem:[%s0 + $0x28] sm:$0xff]
      %v498 = vld [vmem:[%s0 + $0x30] sm:$0xff]
      %v499 = vld [vmem:[%s0 + $0x38] sm:$0xff]
      %v500 = vld [vmem:[%s0 + $0x40] sm:$0xff]
      %v501 = vld [vmem:[%s0 + $0x48] sm:$0xff]
      %v502 = vld [vmem:[%s0 + $0x50] sm:$0xff]
      %v503 = vld [vmem:[%s0 + $0x58] sm:$0xff]
      %v504 = vld [vmem:[%s0 + $0x60] sm:$0xff]
      %v505 = vld [vmem:[%s0 + $0x68] sm:$0xff]
      %v506 = vld [vmem:[%s0 + $0x70] sm:$0xff]
      %v507 = vld [vmem:[%s0 + $0x78] sm:$0xff]
      %v508 = vld [vmem:[%s0 + $0x80] sm:$0xff]
      %v509 = vld [vmem:[%s0 + $0x88] sm:$0xff]
      %v510 = vld [vmem:[%s0 + $0x90] sm:$0xff]
      %v511 = vld [vmem:[%s0 + $0x98] sm:$0xff]
      %v512 = vld [vmem:[%s0 + $0xa0] sm:$0xff]
      %v513 = vld [vmem:[%s0 + $0xa8] sm:$0xff]
      %v514 = vld [vmem:[%s0 + $0xb0] sm:$0xff]
      %v515 = vld [vmem:[%s0 + $0xb8] sm:$0xff]
      %v516 = vld [vmem:[%s0 + $0xc0] sm:$0xff]
      %v517 = vld [vmem:[%s0 + $0xc8] sm:$0xff]
      %v518 = vld [vmem:[%s0 + $0xd0] sm:$0xff]
      %v519 = vld [vmem:[%s0 + $0xd8] sm:$0xff]
      %v520 = vld [vmem:[%s0 + $0xe0] sm:$0xff]
      %v521 = vld [vmem:[%s0 + $0xe8] sm:$0xff]
      %v522 = vld [vmem:[%s0 + $0xf0] sm:$0xff]
      %v523 = vld [vmem:[%s0 + $0xf8] sm:$0xff]
      %v524 = vld [vmem:[%s0 + $0x100] sm:$0xff]
      %v525 = vld [vmem:[%s0 + $0x108] sm:$0xff]
      %v526 = vld [vmem:[%s0 + $0x110] sm:$0xff]
      %v527 = vld [vmem:[%s0 + $0x118] sm:$0xff]
      %v528 = vld [vmem:[%s0 + $0x120] sm:$0xff]
      %v529 = vld [vmem:[%s0 + $0x128] sm:$0xff]
      %v530 = vld [vmem:[%s0 + $0x130] sm:$0xff]
      %v531 = vld [vmem:[%s0 + $0x138] sm:$0xff]
      %v532 = vld [vmem:[%s0 + $0x140] sm:$0xf]
      %v533 = vld [vmem:[%s1] sm:$0xff]
      %v534 = vld [vmem:[%s1 + $0x8] sm:$0xff]
      %v535 = vld [vmem:[%s1 + $0x10] sm:$0xff]
      %v536 = vld [vmem:[%s1 + $0x18] sm:$0xff]
      %v537 = vld [vmem:[%s1 + $0x20] sm:$0xff]
      %v538 = vld [vmem:[%s1 + $0x28] sm:$0xff]
      %v539 = vld [vmem:[%s1 + $0x30] sm:$0xff]
      %v540 = vld [vmem:[%s1 + $0x38] sm:$0xff]
      %v541 = vld [vmem:[%s1 + $0x40] sm:$0xff]
      %v542 = vld [vmem:[%s1 + $0x48] sm:$0xff]
      %v543 = vld [vmem:[%s1 + $0x50] sm:$0xff]
      %v544 = vld [vmem:[%s1 + $0x58] sm:$0xff]
      %v545 = vld [vmem:[%s1 + $0x60] sm:$0xff]
      %v546 = vld [vmem:[%s1 + $0x68] sm:$0xff]
      %v547 = vld [vmem:[%s1 + $0x70] sm:$0xff]
      %v548 = vld [vmem:[%s1 + $0x78] sm:$0xff]
      %v549 = vld [vmem:[%s1 + $0x80] sm:$0xff]
      %v550 = vld [vmem:[%s1 + $0x88] sm:$0xff]
      %v551 = vld [vmem:[%s1 + $0x90] sm:$0xff]
      %v552 = vld [vmem:[%s1 + $0x98] sm:$0xff]
      %v553 = vld [vmem:[%s1 + $0xa0] sm:$0xff]
      %v554 = vld [vmem:[%s1 + $0xa8] sm:$0xff]
      %v555 = vld [vmem:[%s1 + $0xb0] sm:$0xff]
      %v556 = vld [vmem:[%s1 + $0xb8] sm:$0xff]
      %v557 = vld [vmem:[%s1 + $0xc0] sm:$0xff]
      %v558 = vld [vmem:[%s1 + $0xc8] sm:$0xff]
      %v559 = vld [vmem:[%s1 + $0xd0] sm:$0xff]
      %v560 = vld [vmem:[%s1 + $0xd8] sm:$0xff]
      %v561 = vld [vmem:[%s1 + $0xe0] sm:$0xff]
      %v562 = vld [vmem:[%s1 + $0xe8] sm:$0xff]
      %v563 = vld [vmem:[%s1 + $0xf0] sm:$0xff]
      %v564 = vld [vmem:[%s1 + $0xf8] sm:$0xff]
      %v565 = vld [vmem:[%s1 + $0x100] sm:$0xff]
      %v566 = vld [vmem:[%s1 + $0x108] sm:$0xff]
      %v567 = vld [vmem:[%s1 + $0x110] sm:$0xff]
      %v568 = vld [vmem:[%s1 + $0x118] sm:$0xff]
      %v569 = vld [vmem:[%s1 + $0x120] sm:$0xff]
      %v570 = vld [vmem:[%s1 + $0x128] sm:$0xff]
      %v571 = vld [vmem:[%s1 + $0x130] sm:$0xff]
      %v572 = vld [vmem:[%s1 + $0x138] sm:$0xff]
      %v573 = vld [vmem:[%s1 + $0x140] sm:$0xf]
      %v574 = vld [vmem:[%s487] sm:$0xff]
      %v575 = vld [vmem:[%s487 + $0x8] sm:$0xff]
      %v576 = vld [vmem:[%s487 + $0x10] sm:$0xff]
      %v577 = vld [vmem:[%s487 + $0x18] sm:$0xff]
      %v578 = vld [vmem:[%s487 + $0x20] sm:$0xff]
      %v579 = vld [vmem:[%s487 + $0x28] sm:$0xff]
      %v580 = vld [vmem:[%s487 + $0x30] sm:$0xff]
      %v581 = vld [vmem:[%s487 + $0x38] sm:$0xff]
      %v582 = vld [vmem:[%s487 + $0x40] sm:$0xff]
      %v583 = vld [vmem:[%s487 + $0x48] sm:$0xff]
      %v584 = vld [vmem:[%s487 + $0x50] sm:$0xff]
      %v585 = vld [vmem:[%s487 + $0x58] sm:$0xff]
      %v586 = vld [vmem:[%s487 + $0x60] sm:$0xff]
      %v587 = vld [vmem:[%s487 + $0x68] sm:$0xff]
      %v588 = vld [vmem:[%s487 + $0x70] sm:$0xff]
      %v589 = vld [vmem:[%s487 + $0x78] sm:$0xff]
      %v590 = vld [vmem:[%s487 + $0x80] sm:$0xff]
      %v591 = vld [vmem:[%s487 + $0x88] sm:$0xff]
      %v592 = vld [vmem:[%s487 + $0x90] sm:$0xff]
      %v593 = vld [vmem:[%s487 + $0x98] sm:$0xff]
      %v594 = vld [vmem:[%s487 + $0xa0] sm:$0xff]
      %v595 = vld [vmem:[%s487 + $0xa8] sm:$0xff]
      %v596 = vld [vmem:[%s487 + $0xb0] sm:$0xff]
      %v597 = vld [vmem:[%s487 + $0xb8] sm:$0xff]
      %v598 = vld [vmem:[%s487 + $0xc0] sm:$0xff]
      %v599 = vld [vmem:[%s487 + $0xc8] sm:$0xff]
      %v600 = vld [vmem:[%s487 + $0xd0] sm:$0xff]
      %v601 = vld [vmem:[%s487 + $0xd8] sm:$0xff]
      %v602 = vld [vmem:[%s487 + $0xe0] sm:$0xff]
      %v603 = vld [vmem:[%s487 + $0xe8] sm:$0xff]
      %v604 = vld [vmem:[%s487 + $0xf0] sm:$0xff]
      %v605 = vld [vmem:[%s487 + $0xf8] sm:$0xff]
      %v606 = vld [vmem:[%s487 + $0x100] sm:$0xff]
      %v607 = vld [vmem:[%s487 + $0x108] sm:$0xff]
      %v608 = vld [vmem:[%s487 + $0x110] sm:$0xff]
      %v609 = vld [vmem:[%s487 + $0x118] sm:$0xff]
      %v610 = vld [vmem:[%s487 + $0x120] sm:$0xff]
      %v611 = vld [vmem:[%s487 + $0x128] sm:$0xff]
      %v612 = vld [vmem:[%s487 + $0x130] sm:$0xff]
      %v613 = vld [vmem:[%s487 + $0x138] sm:$0xff]
      %v614 = vld [vmem:[%s487 + $0x140] sm:$0xf]
      %vm656 = vcmask 1042432
      %v657 = vrot.slane %v574, 5
      %v658 = vrot.slane %v575, 5
      %v659 = vsel %vm656, %v657, %v658
      %v660 = vrot.slane %v576, 5
      %v661 = vsel %vm656, %v658, %v660
      %v662 = vrot.slane %v577, 5
      %v663 = vsel %vm656, %v660, %v662
      %v664 = vrot.slane %v578, 5
      %v665 = vsel %vm656, %v662, %v664
      %v666 = vrot.slane %v579, 5
      %v667 = vsel %vm656, %v664, %v666
      %v668 = vrot.slane %v580, 5
      %v669 = vsel %vm656, %v666, %v668
      %v670 = vrot.slane %v581, 5
      %v671 = vsel %vm656, %v668, %v670
      %v672 = vrot.slane %v582, 5
      %v673 = vsel %vm656, %v670, %v672
      %v674 = vrot.slane %v583, 5
      %v675 = vsel %vm656, %v672, %v674
      %v676 = vrot.slane %v584, 5
      %v677 = vsel %vm656, %v674, %v676
      %v678 = vrot.slane %v585, 5
      %v679 = vsel %vm656, %v676, %v678
      %v680 = vrot.slane %v586, 5
      %v681 = vsel %vm656, %v678, %v680
      %v682 = vrot.slane %v587, 5
      %v683 = vsel %vm656, %v680, %v682
      %v684 = vrot.slane %v588, 5
      %v685 = vsel %vm656, %v682, %v684
      %v686 = vrot.slane %v589, 5
      %v687 = vsel %vm656, %v684, %v686
      %v688 = vrot.slane %v590, 5
      %v689 = vsel %vm656, %v686, %v688
      %v690 = vrot.slane %v591, 5
      %v691 = vsel %vm656, %v688, %v690
      %v692 = vrot.slane %v592, 5
      %v693 = vsel %vm656, %v690, %v692
      %v694 = vrot.slane %v593, 5
      %v695 = vsel %vm656, %v692, %v694
      %v696 = vrot.slane %v594, 5
      %v697 = vsel %vm656, %v694, %v696
      %v698 = vrot.slane %v595, 5
      %v699 = vsel %vm656, %v696, %v698
      %v700 = vrot.slane %v596, 5
      %v701 = vsel %vm656, %v698, %v700
      %v702 = vrot.slane %v597, 5
      %v703 = vsel %vm656, %v700, %v702
      %v704 = vrot.slane %v598, 5
      %v705 = vsel %vm656, %v702, %v704
      %v706 = vrot.slane %v599, 5
      %v707 = vsel %vm656, %v704, %v706
      %v708 = vrot.slane %v600, 5
      %v709 = vsel %vm656, %v706, %v708
      %v710 = vrot.slane %v601, 5
      %v711 = vsel %vm656, %v708, %v710
      %v712 = vrot.slane %v602, 5
      %v713 = vsel %vm656, %v710, %v712
      %v714 = vrot.slane %v603, 5
      %v715 = vsel %vm656, %v712, %v714
      %v716 = vrot.slane %v604, 5
      %v717 = vsel %vm656, %v714, %v716
      %v718 = vrot.slane %v605, 5
      %v719 = vsel %vm656, %v716, %v718
      %v720 = vrot.slane %v606, 5
      %v721 = vsel %vm656, %v718, %v720
      %v722 = vrot.slane %v607, 5
      %v723 = vsel %vm656, %v720, %v722
      %v724 = vrot.slane %v608, 5
      %v725 = vsel %vm656, %v722, %v724
      %v726 = vrot.slane %v609, 5
      %v727 = vsel %vm656, %v724, %v726
      %v728 = vrot.slane %v610, 5
      %v729 = vsel %vm656, %v726, %v728
      %v730 = vrot.slane %v611, 5
      %v731 = vsel %vm656, %v728, %v730
      %v732 = vrot.slane %v612, 5
      %v733 = vsel %vm656, %v730, %v732
      %v734 = vrot.slane %v613, 5
      %v735 = vsel %vm656, %v732, %v734
      %v736 = vrot.slane %v614, 5
      %v737 = vsel %vm656, %v734, %v736
      %v778 = vsel %vm656, 0.0, %v657
      %vm779 = vcmask 1046528
      %v780 = vsel %vm779, %v737, 0.0
      %v783 = vrot.slane 0.0, 1
      %v784 = vsel %vm779, %v783, %v783
      %v785 = vrot.slane %v778, 1
      %v786 = vsel %vm779, %v783, %v785
      %v787 = vrot.slane %v659, 1
      %v788 = vsel %vm779, %v785, %v787
      %v789 = vrot.slane %v661, 1
      %v790 = vsel %vm779, %v787, %v789
      %v791 = vrot.slane %v663, 1
      %v792 = vsel %vm779, %v789, %v791
      %v793 = vrot.slane %v665, 1
      %v794 = vsel %vm779, %v791, %v793
      %v795 = vrot.slane %v667, 1
      %v796 = vsel %vm779, %v793, %v795
      %v797 = vrot.slane %v669, 1
      %v798 = vsel %vm779, %v795, %v797
      %v799 = vrot.slane %v671, 1
      %v800 = vsel %vm779, %v797, %v799
      %v801 = vrot.slane %v673, 1
      %v802 = vsel %vm779, %v799, %v801
      %v803 = vrot.slane %v675, 1
      %v804 = vsel %vm779, %v801, %v803
      %v805 = vrot.slane %v677, 1
      %v806 = vsel %vm779, %v803, %v805
      %v807 = vrot.slane %v679, 1
      %v808 = vsel %vm779, %v805, %v807
      %v809 = vrot.slane %v681, 1
      %v810 = vsel %vm779, %v807, %v809
      %v811 = vrot.slane %v683, 1
      %v812 = vsel %vm779, %v809, %v811
      %v813 = vrot.slane %v685, 1
      %v814 = vsel %vm779, %v811, %v813
      %v815 = vrot.slane %v687, 1
      %v816 = vsel %vm779, %v813, %v815
      %v817 = vrot.slane %v689, 1
      %v818 = vsel %vm779, %v815, %v817
      %v819 = vrot.slane %v691, 1
      %v820 = vsel %vm779, %v817, %v819
      %v821 = vrot.slane %v693, 1
      %v822 = vsel %vm779, %v819, %v821
      %v823 = vrot.slane %v695, 1
      %v824 = vsel %vm779, %v821, %v823
      %v825 = vrot.slane %v697, 1
      %v826 = vsel %vm779, %v823, %v825
      %v827 = vrot.slane %v699, 1
      %v828 = vsel %vm779, %v825, %v827
      %v829 = vrot.slane %v701, 1
      %v830 = vsel %vm779, %v827, %v829
      %v831 = vrot.slane %v703, 1
      %v832 = vsel %vm779, %v829, %v831
      %v833 = vrot.slane %v705, 1
      %v834 = vsel %vm779, %v831, %v833
      %v835 = vrot.slane %v707, 1
      %v836 = vsel %vm779, %v833, %v835
      %v837 = vrot.slane %v709, 1
      %v838 = vsel %vm779, %v835, %v837
      %v839 = vrot.slane %v711, 1
      %v840 = vsel %vm779, %v837, %v839
      %v841 = vrot.slane %v713, 1
      %v842 = vsel %vm779, %v839, %v841
      %v843 = vrot.slane %v715, 1
      %v844 = vsel %vm779, %v841, %v843
      %v845 = vrot.slane %v717, 1
      %v846 = vsel %vm779, %v843, %v845
      %v847 = vrot.slane %v719, 1
      %v848 = vsel %vm779, %v845, %v847
      %v849 = vrot.slane %v721, 1
      %v850 = vsel %vm779, %v847, %v849
      %v851 = vrot.slane %v723, 1
      %v852 = vsel %vm779, %v849, %v851
      %v853 = vrot.slane %v725, 1
      %v854 = vsel %vm779, %v851, %v853
      %v855 = vrot.slane %v727, 1
      %v856 = vsel %vm779, %v853, %v855
      %v857 = vrot.slane %v729, 1
      %v858 = vsel %vm779, %v855, %v857
      %v859 = vrot.slane %v731, 1
      %v860 = vsel %vm779, %v857, %v859
      %v861 = vrot.slane %v733, 1
      %v862 = vsel %vm779, %v859, %v861
      %863 = vrot.lane.b32.xlu0 %v784, 4
      %v864 = vpop.permute.xlu0 %863
      %865 = vrot.lane.b32.xlu0 %v786, 4
      %v866 = vpop.permute.xlu0 %865
      %867 = vrot.lane.b32.xlu0 %v788, 4
      %v868 = vpop.permute.xlu0 %867
      %869 = vrot.lane.b32.xlu0 %v790, 4
      %v870 = vpop.permute.xlu0 %869
      %871 = vrot.lane.b32.xlu0 %v792, 4
      %v872 = vpop.permute.xlu0 %871
      %873 = vrot.lane.b32.xlu0 %v794, 4
      %v874 = vpop.permute.xlu0 %873
      %875 = vrot.lane.b32.xlu0 %v796, 4
      %v876 = vpop.permute.xlu0 %875
      %877 = vrot.lane.b32.xlu0 %v798, 4
      %v878 = vpop.permute.xlu0 %877
      %879 = vrot.lane.b32.xlu0 %v800, 4
      %v880 = vpop.permute.xlu0 %879
      %881 = vrot.lane.b32.xlu0 %v802, 4
      %v882 = vpop.permute.xlu0 %881
      %883 = vrot.lane.b32.xlu0 %v804, 4
      %v884 = vpop.permute.xlu0 %883
      %885 = vrot.lane.b32.xlu0 %v806, 4
      %v886 = vpop.permute.xlu0 %885
      %887 = vrot.lane.b32.xlu0 %v808, 4
      %v888 = vpop.permute.xlu0 %887
      %889 = vrot.lane.b32.xlu0 %v810, 4
      %v890 = vpop.permute.xlu0 %889
      %891 = vrot.lane.b32.xlu0 %v812, 4
      %v892 = vpop.permute.xlu0 %891
      %893 = vrot.lane.b32.xlu0 %v814, 4
      %v894 = vpop.permute.xlu0 %893
      %895 = vrot.lane.b32.xlu0 %v816, 4
      %v896 = vpop.permute.xlu0 %895
      %897 = vrot.lane.b32.xlu0 %v818, 4
      %v898 = vpop.permute.xlu0 %897
      %899 = vrot.lane.b32.xlu0 %v820, 4
      %v900 = vpop.permute.xlu0 %899
      %901 = vrot.lane.b32.xlu0 %v822, 4
      %v902 = vpop.permute.xlu0 %901
      %903 = vrot.lane.b32.xlu0 %v824, 4
      %v904 = vpop.permute.xlu0 %903
      %905 = vrot.lane.b32.xlu0 %v826, 4
      %v906 = vpop.permute.xlu0 %905
      %907 = vrot.lane.b32.xlu0 %v828, 4
      %v908 = vpop.permute.xlu0 %907
      %909 = vrot.lane.b32.xlu0 %v830, 4
      %v910 = vpop.permute.xlu0 %909
      %911 = vrot.lane.b32.xlu0 %v832, 4
      %v912 = vpop.permute.xlu0 %911
      %913 = vrot.lane.b32.xlu0 %v834, 4
      %v914 = vpop.permute.xlu0 %913
      %915 = vrot.lane.b32.xlu0 %v836, 4
      %v916 = vpop.permute.xlu0 %915
      %917 = vrot.lane.b32.xlu0 %v838, 4
      %v918 = vpop.permute.xlu0 %917
      %919 = vrot.lane.b32.xlu0 %v840, 4
      %v920 = vpop.permute.xlu0 %919
      %921 = vrot.lane.b32.xlu0 %v842, 4
      %v922 = vpop.permute.xlu0 %921
      %923 = vrot.lane.b32.xlu0 %v844, 4
      %v924 = vpop.permute.xlu0 %923
      %925 = vrot.lane.b32.xlu0 %v846, 4
      %v926 = vpop.permute.xlu0 %925
      %927 = vrot.lane.b32.xlu0 %v848, 4
      %v928 = vpop.permute.xlu0 %927
      %929 = vrot.lane.b32.xlu0 %v850, 4
      %v930 = vpop.permute.xlu0 %929
      %931 = vrot.lane.b32.xlu0 %v852, 4
      %v932 = vpop.permute.xlu0 %931
      %933 = vrot.lane.b32.xlu0 %v854, 4
      %v934 = vpop.permute.xlu0 %933
      %935 = vrot.lane.b32.xlu0 %v856, 4
      %v936 = vpop.permute.xlu0 %935
      %937 = vrot.lane.b32.xlu0 %v858, 4
      %v938 = vpop.permute.xlu0 %937
      %939 = vrot.lane.b32.xlu0 %v860, 4
      %v940 = vpop.permute.xlu0 %939
      %941 = vrot.lane.b32.xlu0 %v862, 4
      %v942 = vpop.permute.xlu0 %941
      %943 = vrot.lane.b32.xlu0 %v861, 4
      %v944 = vpop.permute.xlu0 %943
      %vm986 = vcmask 1045504
      %v987 = vrot.slane 0.0, 2
      %v988 = vsel %vm986, %v987, %v987
      %v989 = vrot.slane %v778, 2
      %v990 = vsel %vm986, %v987, %v989
      %v991 = vrot.slane %v659, 2
      %v992 = vsel %vm986, %v989, %v991
      %v993 = vrot.slane %v661, 2
      %v994 = vsel %vm986, %v991, %v993
      %v995 = vrot.slane %v663, 2
      %v996 = vsel %vm986, %v993, %v995
      %v997 = vrot.slane %v665, 2
      %v998 = vsel %vm986, %v995, %v997
      %v999 = vrot.slane %v667, 2
      %v1000 = vsel %vm986, %v997, %v999
      %v1001 = vrot.slane %v669, 2
      %v1002 = vsel %vm986, %v999, %v1001
      %v1003 = vrot.slane %v671, 2
      %v1004 = vsel %vm986, %v1001, %v1003
      %v1005 = vrot.slane %v673, 2
      %v1006 = vsel %vm986, %v1003, %v1005
      %v1007 = vrot.slane %v675, 2
      %v1008 = vsel %vm986, %v1005, %v1007
      %v1009 = vrot.slane %v677, 2
      %v1010 = vsel %vm986, %v1007, %v1009
      %v1011 = vrot.slane %v679, 2
      %v1012 = vsel %vm986, %v1009, %v1011
      %v1013 = vrot.slane %v681, 2
      %v1014 = vsel %vm986, %v1011, %v1013
      %v1015 = vrot.slane %v683, 2
      %v1016 = vsel %vm986, %v1013, %v1015
      %v1017 = vrot.slane %v685, 2
      %v1018 = vsel %vm986, %v1015, %v1017
      %v1019 = vrot.slane %v687, 2
      %v1020 = vsel %vm986, %v1017, %v1019
      %v1021 = vrot.slane %v689, 2
      %v1022 = vsel %vm986, %v1019, %v1021
      %v1023 = vrot.slane %v691, 2
      %v1024 = vsel %vm986, %v1021, %v1023
      %v1025 = vrot.slane %v693, 2
      %v1026 = vsel %vm986, %v1023, %v1025
      %v1027 = vrot.slane %v695, 2
      %v1028 = vsel %vm986, %v1025, %v1027
      %v1029 = vrot.slane %v697, 2
      %v1030 = vsel %vm986, %v1027, %v1029
      %v1031 = vrot.slane %v699, 2
      %v1032 = vsel %vm986, %v1029, %v1031
      %v1033 = vrot.slane %v701, 2
      %v1034 = vsel %vm986, %v1031, %v1033
      %v1035 = vrot.slane %v703, 2
      %v1036 = vsel %vm986, %v1033, %v1035
      %v1037 = vrot.slane %v705, 2
      %v1038 = vsel %vm986, %v1035, %v1037
      %v1039 = vrot.slane %v707, 2
      %v1040 = vsel %vm986, %v1037, %v1039
      %v1041 = vrot.slane %v709, 2
      %v1042 = vsel %vm986, %v1039, %v1041
      %v1043 = vrot.slane %v711, 2
      %v1044 = vsel %vm986, %v1041, %v1043
      %v1045 = vrot.slane %v713, 2
      %v1046 = vsel %vm986, %v1043, %v1045
      %v1047 = vrot.slane %v715, 2
      %v1048 = vsel %vm986, %v1045, %v1047
      %v1049 = vrot.slane %v717, 2
      %v1050 = vsel %vm986, %v1047, %v1049
      %v1051 = vrot.slane %v719, 2
      %v1052 = vsel %vm986, %v1049, %v1051
      %v1053 = vrot.slane %v721, 2
      %v1054 = vsel %vm986, %v1051, %v1053
      %v1055 = vrot.slane %v723, 2
      %v1056 = vsel %vm986, %v1053, %v1055
      %v1057 = vrot.slane %v725, 2
      %v1058 = vsel %vm986, %v1055, %v1057
      %v1059 = vrot.slane %v727, 2
      %v1060 = vsel %vm986, %v1057, %v1059
      %v1061 = vrot.slane %v729, 2
      %v1062 = vsel %vm986, %v1059, %v1061
      %v1063 = vrot.slane %v731, 2
      %v1064 = vsel %vm986, %v1061, %v1063
      %v1065 = vrot.slane %v733, 2
      %v1066 = vsel %vm986, %v1063, %v1065
      %1067 = vrot.lane.b32.xlu0 %v988, 8
      %v1068 = vpop.permute.xlu0 %1067
      %1069 = vrot.lane.b32.xlu0 %v990, 8
      %v1070 = vpop.permute.xlu0 %1069
      %1071 = vrot.lane.b32.xlu0 %v992, 8
      %v1072 = vpop.permute.xlu0 %1071
      %1073 = vrot.lane.b32.xlu0 %v994, 8
      %v1074 = vpop.permute.xlu0 %1073
      %1075 = vrot.lane.b32.xlu0 %v996, 8
      %v1076 = vpop.permute.xlu0 %1075
      %1077 = vrot.lane.b32.xlu0 %v998, 8
      %v1078 = vpop.permute.xlu0 %1077
      %1079 = vrot.lane.b32.xlu0 %v1000, 8
      %v1080 = vpop.permute.xlu0 %1079
      %1081 = vrot.lane.b32.xlu0 %v1002, 8
      %v1082 = vpop.permute.xlu0 %1081
      %1083 = vrot.lane.b32.xlu0 %v1004, 8
      %v1084 = vpop.permute.xlu0 %1083
      %1085 = vrot.lane.b32.xlu0 %v1006, 8
      %v1086 = vpop.permute.xlu0 %1085
      %1087 = vrot.lane.b32.xlu0 %v1008, 8
      %v1088 = vpop.permute.xlu0 %1087
      %1089 = vrot.lane.b32.xlu0 %v1010, 8
      %v1090 = vpop.permute.xlu0 %1089
      %1091 = vrot.lane.b32.xlu0 %v1012, 8
      %v1092 = vpop.permute.xlu0 %1091
      %1093 = vrot.lane.b32.xlu0 %v1014, 8
      %v1094 = vpop.permute.xlu0 %1093
      %1095 = vrot.lane.b32.xlu0 %v1016, 8
      %v1096 = vpop.permute.xlu0 %1095
      %1097 = vrot.lane.b32.xlu0 %v1018, 8
      %v1098 = vpop.permute.xlu0 %1097
      %1099 = vrot.lane.b32.xlu0 %v1020, 8
      %v1100 = vpop.permute.xlu0 %1099
      %1101 = vrot.lane.b32.xlu0 %v1022, 8
      %v1102 = vpop.permute.xlu0 %1101
      %1103 = vrot.lane.b32.xlu0 %v1024, 8
      %v1104 = vpop.permute.xlu0 %1103
      %1105 = vrot.lane.b32.xlu0 %v1026, 8
      %v1106 = vpop.permute.xlu0 %1105
      %1107 = vrot.lane.b32.xlu0 %v1028, 8
      %v1108 = vpop.permute.xlu0 %1107
      %1109 = vrot.lane.b32.xlu0 %v1030, 8
      %v1110 = vpop.permute.xlu0 %1109
      %1111 = vrot.lane.b32.xlu0 %v1032, 8
      %v1112 = vpop.permute.xlu0 %1111
      %1113 = vrot.lane.b32.xlu0 %v1034, 8
      %v1114 = vpop.permute.xlu0 %1113
      %1115 = vrot.lane.b32.xlu0 %v1036, 8
      %v1116 = vpop.permute.xlu0 %1115
      %1117 = vrot.lane.b32.xlu0 %v1038, 8
      %v1118 = vpop.permute.xlu0 %1117
      %1119 = vrot.lane.b32.xlu0 %v1040, 8
      %v1120 = vpop.permute.xlu0 %1119
      %1121 = vrot.lane.b32.xlu0 %v1042, 8
      %v1122 = vpop.permute.xlu0 %1121
      %1123 = vrot.lane.b32.xlu0 %v1044, 8
      %v1124 = vpop.permute.xlu0 %1123
      %1125 = vrot.lane.b32.xlu0 %v1046, 8
      %v1126 = vpop.permute.xlu0 %1125
      %1127 = vrot.lane.b32.xlu0 %v1048, 8
      %v1128 = vpop.permute.xlu0 %1127
      %1129 = vrot.lane.b32.xlu0 %v1050, 8
      %v1130 = vpop.permute.xlu0 %1129
      %1131 = vrot.lane.b32.xlu0 %v1052, 8
      %v1132 = vpop.permute.xlu0 %1131
      %1133 = vrot.lane.b32.xlu0 %v1054, 8
      %v1134 = vpop.permute.xlu0 %1133
      %1135 = vrot.lane.b32.xlu0 %v1056, 8
      %v1136 = vpop.permute.xlu0 %1135
      %1137 = vrot.lane.b32.xlu0 %v1058, 8
      %v1138 = vpop.permute.xlu0 %1137
      %1139 = vrot.lane.b32.xlu0 %v1060, 8
      %v1140 = vpop.permute.xlu0 %1139
      %1141 = vrot.lane.b32.xlu0 %v1062, 8
      %v1142 = vpop.permute.xlu0 %1141
      %1143 = vrot.lane.b32.xlu0 %v1064, 8
      %v1144 = vpop.permute.xlu0 %1143
      %1145 = vrot.lane.b32.xlu0 %v1066, 8
      %v1146 = vpop.permute.xlu0 %1145
      %1147 = vrot.lane.b32.xlu0 %v1065, 8
      %v1148 = vpop.permute.xlu0 %1147
      %v1191 = vrot.slane %v735, 2
      %v1192 = vsel %vm986, %v1065, %v1191
      %v1193 = vrot.slane %v780, 2
      %v1194 = vsel %vm986, %v1191, %v1193
      %1195 = vrot.lane.b32.xlu0 %v992, 12
      %v1196 = vpop.permute.xlu0 %1195
      %1197 = vrot.lane.b32.xlu0 %v994, 12
      %v1198 = vpop.permute.xlu0 %1197
      %1199 = vrot.lane.b32.xlu0 %v996, 12
      %v1200 = vpop.permute.xlu0 %1199
      %1201 = vrot.lane.b32.xlu0 %v998, 12
      %v1202 = vpop.permute.xlu0 %1201
      %1203 = vrot.lane.b32.xlu0 %v1000, 12
      %v1204 = vpop.permute.xlu0 %1203
      %1205 = vrot.lane.b32.xlu0 %v1002, 12
      %v1206 = vpop.permute.xlu0 %1205
      %1207 = vrot.lane.b32.xlu0 %v1004, 12
      %v1208 = vpop.permute.xlu0 %1207
      %1209 = vrot.lane.b32.xlu0 %v1006, 12
      %v1210 = vpop.permute.xlu0 %1209
      %1211 = vrot.lane.b32.xlu0 %v1008, 12
      %v1212 = vpop.permute.xlu0 %1211
      %1213 = vrot.lane.b32.xlu0 %v1010, 12
      %v1214 = vpop.permute.xlu0 %1213
      %1215 = vrot.lane.b32.xlu0 %v1012, 12
      %v1216 = vpop.permute.xlu0 %1215
      %1217 = vrot.lane.b32.xlu0 %v1014, 12
      %v1218 = vpop.permute.xlu0 %1217
      %1219 = vrot.lane.b32.xlu0 %v1016, 12
      %v1220 = vpop.permute.xlu0 %1219
      %1221 = vrot.lane.b32.xlu0 %v1018, 12
      %v1222 = vpop.permute.xlu0 %1221
      %1223 = vrot.lane.b32.xlu0 %v1020, 12
      %v1224 = vpop.permute.xlu0 %1223
      %1225 = vrot.lane.b32.xlu0 %v1022, 12
      %v1226 = vpop.permute.xlu0 %1225
      %1227 = vrot.lane.b32.xlu0 %v1024, 12
      %v1228 = vpop.permute.xlu0 %1227
      %1229 = vrot.lane.b32.xlu0 %v1026, 12
      %v1230 = vpop.permute.xlu0 %1229
      %1231 = vrot.lane.b32.xlu0 %v1028, 12
      %v1232 = vpop.permute.xlu0 %1231
      %1233 = vrot.lane.b32.xlu0 %v1030, 12
      %v1234 = vpop.permute.xlu0 %1233
      %1235 = vrot.lane.b32.xlu0 %v1032, 12
      %v1236 = vpop.permute.xlu0 %1235
      %1237 = vrot.lane.b32.xlu0 %v1034, 12
      %v1238 = vpop.permute.xlu0 %1237
      %1239 = vrot.lane.b32.xlu0 %v1036, 12
      %v1240 = vpop.permute.xlu0 %1239
      %1241 = vrot.lane.b32.xlu0 %v1038, 12
      %v1242 = vpop.permute.xlu0 %1241
      %1243 = vrot.lane.b32.xlu0 %v1040, 12
      %v1244 = vpop.permute.xlu0 %1243
      %1245 = vrot.lane.b32.xlu0 %v1042, 12
      %v1246 = vpop.permute.xlu0 %1245
      %1247 = vrot.lane.b32.xlu0 %v1044, 12
      %v1248 = vpop.permute.xlu0 %1247
      %1249 = vrot.lane.b32.xlu0 %v1046, 12
      %v1250 = vpop.permute.xlu0 %1249
      %1251 = vrot.lane.b32.xlu0 %v1048, 12
      %v1252 = vpop.permute.xlu0 %1251
      %1253 = vrot.lane.b32.xlu0 %v1050, 12
      %v1254 = vpop.permute.xlu0 %1253
      %1255 = vrot.lane.b32.xlu0 %v1052, 12
      %v1256 = vpop.permute.xlu0 %1255
      %1257 = vrot.lane.b32.xlu0 %v1054, 12
      %v1258 = vpop.permute.xlu0 %1257
      %1259 = vrot.lane.b32.xlu0 %v1056, 12
      %v1260 = vpop.permute.xlu0 %1259
      %1261 = vrot.lane.b32.xlu0 %v1058, 12
      %v1262 = vpop.permute.xlu0 %1261
      %1263 = vrot.lane.b32.xlu0 %v1060, 12
      %v1264 = vpop.permute.xlu0 %1263
      %1265 = vrot.lane.b32.xlu0 %v1062, 12
      %v1266 = vpop.permute.xlu0 %1265
      %1267 = vrot.lane.b32.xlu0 %v1064, 12
      %v1268 = vpop.permute.xlu0 %1267
      %1269 = vrot.lane.b32.xlu0 %v1066, 12
      %v1270 = vpop.permute.xlu0 %1269
      %1271 = vrot.lane.b32.xlu0 %v1192, 12
      %v1272 = vpop.permute.xlu0 %1271
      %1273 = vrot.lane.b32.xlu0 %v1194, 12
      %v1274 = vpop.permute.xlu0 %1273
      %1275 = vrot.lane.b32.xlu0 %v1193, 12
      %v1276 = vpop.permute.xlu0 %1275
      %vm1318 = vcmask 1044480
      %v1319 = vrot.slane %v778, 3
      %v1320 = vrot.slane %v659, 3
      %v1321 = vsel %vm1318, %v1319, %v1320
      %v1322 = vrot.slane %v661, 3
      %v1323 = vsel %vm1318, %v1320, %v1322
      %v1324 = vrot.slane %v663, 3
      %v1325 = vsel %vm1318, %v1322, %v1324
      %v1326 = vrot.slane %v665, 3
      %v1327 = vsel %vm1318, %v1324, %v1326
      %v1328 = vrot.slane %v667, 3
      %v1329 = vsel %vm1318, %v1326, %v1328
      %v1330 = vrot.slane %v669, 3
      %v1331 = vsel %vm1318, %v1328, %v1330
      %v1332 = vrot.slane %v671, 3
      %v1333 = vsel %vm1318, %v1330, %v1332
      %v1334 = vrot.slane %v673, 3
      %v1335 = vsel %vm1318, %v1332, %v1334
      %v1336 = vrot.slane %v675, 3
      %v1337 = vsel %vm1318, %v1334, %v1336
      %v1338 = vrot.slane %v677, 3
      %v1339 = vsel %vm1318, %v1336, %v1338
      %v1340 = vrot.slane %v679, 3
      %v1341 = vsel %vm1318, %v1338, %v1340
      %v1342 = vrot.slane %v681, 3
      %v1343 = vsel %vm1318, %v1340, %v1342
      %v1344 = vrot.slane %v683, 3
      %v1345 = vsel %vm1318, %v1342, %v1344
      %v1346 = vrot.slane %v685, 3
      %v1347 = vsel %vm1318, %v1344, %v1346
      %v1348 = vrot.slane %v687, 3
      %v1349 = vsel %vm1318, %v1346, %v1348
      %v1350 = vrot.slane %v689, 3
      %v1351 = vsel %vm1318, %v1348, %v1350
      %v1352 = vrot.slane %v691, 3
      %v1353 = vsel %vm1318, %v1350, %v1352
      %v1354 = vrot.slane %v693, 3
      %v1355 = vsel %vm1318, %v1352, %v1354
      %v1356 = vrot.slane %v695, 3
      %v1357 = vsel %vm1318, %v1354, %v1356
      %v1358 = vrot.slane %v697, 3
      %v1359 = vsel %vm1318, %v1356, %v1358
      %v1360 = vrot.slane %v699, 3
      %v1361 = vsel %vm1318, %v1358, %v1360
      %v1362 = vrot.slane %v701, 3
      %v1363 = vsel %vm1318, %v1360, %v1362
      %v1364 = vrot.slane %v703, 3
      %v1365 = vsel %vm1318, %v1362, %v1364
      %v1366 = vrot.slane %v705, 3
      %v1367 = vsel %vm1318, %v1364, %v1366
      %v1368 = vrot.slane %v707, 3
      %v1369 = vsel %vm1318, %v1366, %v1368
      %v1370 = vrot.slane %v709, 3
      %v1371 = vsel %vm1318, %v1368, %v1370
      %v1372 = vrot.slane %v711, 3
      %v1373 = vsel %vm1318, %v1370, %v1372
      %v1374 = vrot.slane %v713, 3
      %v1375 = vsel %vm1318, %v1372, %v1374
      %v1376 = vrot.slane %v715, 3
      %v1377 = vsel %vm1318, %v1374, %v1376
      %v1378 = vrot.slane %v717, 3
      %v1379 = vsel %vm1318, %v1376, %v1378
      %v1380 = vrot.slane %v719, 3
      %v1381 = vsel %vm1318, %v1378, %v1380
      %v1382 = vrot.slane %v721, 3
      %v1383 = vsel %vm1318, %v1380, %v1382
      %v1384 = vrot.slane %v723, 3
      %v1385 = vsel %vm1318, %v1382, %v1384
      %v1386 = vrot.slane %v725, 3
      %v1387 = vsel %vm1318, %v1384, %v1386
      %v1388 = vrot.slane %v727, 3
      %v1389 = vsel %vm1318, %v1386, %v1388
      %v1390 = vrot.slane %v729, 3
      %v1391 = vsel %vm1318, %v1388, %v1390
      %v1392 = vrot.slane %v731, 3
      %v1393 = vsel %vm1318, %v1390, %v1392
      %v1394 = vrot.slane %v733, 3
      %v1395 = vsel %vm1318, %v1392, %v1394
      %v1396 = vrot.slane %v735, 3
      %v1397 = vsel %vm1318, %v1394, %v1396
      %v1398 = vrot.slane %v780, 3
      %v1399 = vsel %vm1318, %v1396, %v1398
      %1400 = vrot.lane.b32.xlu0 %v1321, 16
      %v1401 = vpop.permute.xlu0 %1400
      %1402 = vrot.lane.b32.xlu0 %v1323, 16
      %v1403 = vpop.permute.xlu0 %1402
      %1404 = vrot.lane.b32.xlu0 %v1325, 16
      %v1405 = vpop.permute.xlu0 %1404
      %1406 = vrot.lane.b32.xlu0 %v1327, 16
      %v1407 = vpop.permute.xlu0 %1406
      %1408 = vrot.lane.b32.xlu0 %v1329, 16
      %v1409 = vpop.permute.xlu0 %1408
      %1410 = vrot.lane.b32.xlu0 %v1331, 16
      %v1411 = vpop.permute.xlu0 %1410
      %1412 = vrot.lane.b32.xlu0 %v1333, 16
      %v1413 = vpop.permute.xlu0 %1412
      %1414 = vrot.lane.b32.xlu0 %v1335, 16
      %v1415 = vpop.permute.xlu0 %1414
      %1416 = vrot.lane.b32.xlu0 %v1337, 16
      %v1417 = vpop.permute.xlu0 %1416
      %1418 = vrot.lane.b32.xlu0 %v1339, 16
      %v1419 = vpop.permute.xlu0 %1418
      %1420 = vrot.lane.b32.xlu0 %v1341, 16
      %v1421 = vpop.permute.xlu0 %1420
      %1422 = vrot.lane.b32.xlu0 %v1343, 16
      %v1423 = vpop.permute.xlu0 %1422
      %1424 = vrot.lane.b32.xlu0 %v1345, 16
      %v1425 = vpop.permute.xlu0 %1424
      %1426 = vrot.lane.b32.xlu0 %v1347, 16
      %v1427 = vpop.permute.xlu0 %1426
      %1428 = vrot.lane.b32.xlu0 %v1349, 16
      %v1429 = vpop.permute.xlu0 %1428
      %1430 = vrot.lane.b32.xlu0 %v1351, 16
      %v1431 = vpop.permute.xlu0 %1430
      %1432 = vrot.lane.b32.xlu0 %v1353, 16
      %v1433 = vpop.permute.xlu0 %1432
      %1434 = vrot.lane.b32.xlu0 %v1355, 16
      %v1435 = vpop.permute.xlu0 %1434
      %1436 = vrot.lane.b32.xlu0 %v1357, 16
      %v1437 = vpop.permute.xlu0 %1436
      %1438 = vrot.lane.b32.xlu0 %v1359, 16
      %v1439 = vpop.permute.xlu0 %1438
      %1440 = vrot.lane.b32.xlu0 %v1361, 16
      %v1441 = vpop.permute.xlu0 %1440
      %1442 = vrot.lane.b32.xlu0 %v1363, 16
      %v1443 = vpop.permute.xlu0 %1442
      %1444 = vrot.lane.b32.xlu0 %v1365, 16
      %v1445 = vpop.permute.xlu0 %1444
      %1446 = vrot.lane.b32.xlu0 %v1367, 16
      %v1447 = vpop.permute.xlu0 %1446
      %1448 = vrot.lane.b32.xlu0 %v1369, 16
      %v1449 = vpop.permute.xlu0 %1448
      %1450 = vrot.lane.b32.xlu0 %v1371, 16
      %v1451 = vpop.permute.xlu0 %1450
      %1452 = vrot.lane.b32.xlu0 %v1373, 16
      %v1453 = vpop.permute.xlu0 %1452
      %1454 = vrot.lane.b32.xlu0 %v1375, 16
      %v1455 = vpop.permute.xlu0 %1454
      %1456 = vrot.lane.b32.xlu0 %v1377, 16
      %v1457 = vpop.permute.xlu0 %1456
      %1458 = vrot.lane.b32.xlu0 %v1379, 16
      %v1459 = vpop.permute.xlu0 %1458
      %1460 = vrot.lane.b32.xlu0 %v1381, 16
      %v1461 = vpop.permute.xlu0 %1460
      %1462 = vrot.lane.b32.xlu0 %v1383, 16
      %v1463 = vpop.permute.xlu0 %1462
      %1464 = vrot.lane.b32.xlu0 %v1385, 16
      %v1465 = vpop.permute.xlu0 %1464
      %1466 = vrot.lane.b32.xlu0 %v1387, 16
      %v1467 = vpop.permute.xlu0 %1466
      %1468 = vrot.lane.b32.xlu0 %v1389, 16
      %v1469 = vpop.permute.xlu0 %1468
      %1470 = vrot.lane.b32.xlu0 %v1391, 16
      %v1471 = vpop.permute.xlu0 %1470
      %1472 = vrot.lane.b32.xlu0 %v1393, 16
      %v1473 = vpop.permute.xlu0 %1472
      %1474 = vrot.lane.b32.xlu0 %v1395, 16
      %v1475 = vpop.permute.xlu0 %1474
      %1476 = vrot.lane.b32.xlu0 %v1397, 16
      %v1477 = vpop.permute.xlu0 %1476
      %1478 = vrot.lane.b32.xlu0 %v1399, 16
      %v1479 = vpop.permute.xlu0 %1478
      %1480 = vrot.lane.b32.xlu0 %v1398, 16
      %v1481 = vpop.permute.xlu0 %1480
      %vm1523 = vcmask 1043456
      %v1524 = vrot.slane %v778, 4
      %v1525 = vrot.slane %v659, 4
      %v1526 = vsel %vm1523, %v1524, %v1525
      %v1527 = vrot.slane %v661, 4
      %v1528 = vsel %vm1523, %v1525, %v1527
      %v1529 = vrot.slane %v663, 4
      %v1530 = vsel %vm1523, %v1527, %v1529
      %v1531 = vrot.slane %v665, 4
      %v1532 = vsel %vm1523, %v1529, %v1531
      %v1533 = vrot.slane %v667, 4
      %v1534 = vsel %vm1523, %v1531, %v1533
      %v1535 = vrot.slane %v669, 4
      %v1536 = vsel %vm1523, %v1533, %v1535
      %v1537 = vrot.slane %v671, 4
      %v1538 = vsel %vm1523, %v1535, %v1537
      %v1539 = vrot.slane %v673, 4
      %v1540 = vsel %vm1523, %v1537, %v1539
      %v1541 = vrot.slane %v675, 4
      %v1542 = vsel %vm1523, %v1539, %v1541
      %v1543 = vrot.slane %v677, 4
      %v1544 = vsel %vm1523, %v1541, %v1543
      %v1545 = vrot.slane %v679, 4
      %v1546 = vsel %vm1523, %v1543, %v1545
      %v1547 = vrot.slane %v681, 4
      %v1548 = vsel %vm1523, %v1545, %v1547
      %v1549 = vrot.slane %v683, 4
      %v1550 = vsel %vm1523, %v1547, %v1549
      %v1551 = vrot.slane %v685, 4
      %v1552 = vsel %vm1523, %v1549, %v1551
      %v1553 = vrot.slane %v687, 4
      %v1554 = vsel %vm1523, %v1551, %v1553
      %v1555 = vrot.slane %v689, 4
      %v1556 = vsel %vm1523, %v1553, %v1555
      %v1557 = vrot.slane %v691, 4
      %v1558 = vsel %vm1523, %v1555, %v1557
      %v1559 = vrot.slane %v693, 4
      %v1560 = vsel %vm1523, %v1557, %v1559
      %v1561 = vrot.slane %v695, 4
      %v1562 = vsel %vm1523, %v1559, %v1561
      %v1563 = vrot.slane %v697, 4
      %v1564 = vsel %vm1523, %v1561, %v1563
      %v1565 = vrot.slane %v699, 4
      %v1566 = vsel %vm1523, %v1563, %v1565
      %v1567 = vrot.slane %v701, 4
      %v1568 = vsel %vm1523, %v1565, %v1567
      %v1569 = vrot.slane %v703, 4
      %v1570 = vsel %vm1523, %v1567, %v1569
      %v1571 = vrot.slane %v705, 4
      %v1572 = vsel %vm1523, %v1569, %v1571
      %v1573 = vrot.slane %v707, 4
      %v1574 = vsel %vm1523, %v1571, %v1573
      %v1575 = vrot.slane %v709, 4
      %v1576 = vsel %vm1523, %v1573, %v1575
      %v1577 = vrot.slane %v711, 4
      %v1578 = vsel %vm1523, %v1575, %v1577
      %v1579 = vrot.slane %v713, 4
      %v1580 = vsel %vm1523, %v1577, %v1579
      %v1581 = vrot.slane %v715, 4
      %v1582 = vsel %vm1523, %v1579, %v1581
      %v1583 = vrot.slane %v717, 4
      %v1584 = vsel %vm1523, %v1581, %v1583
      %v1585 = vrot.slane %v719, 4
      %v1586 = vsel %vm1523, %v1583, %v1585
      %v1587 = vrot.slane %v721, 4
      %v1588 = vsel %vm1523, %v1585, %v1587
      %v1589 = vrot.slane %v723, 4
      %v1590 = vsel %vm1523, %v1587, %v1589
      %v1591 = vrot.slane %v725, 4
      %v1592 = vsel %vm1523, %v1589, %v1591
      %v1593 = vrot.slane %v727, 4
      %v1594 = vsel %vm1523, %v1591, %v1593
      %v1595 = vrot.slane %v729, 4
      %v1596 = vsel %vm1523, %v1593, %v1595
      %v1597 = vrot.slane %v731, 4
      %v1598 = vsel %vm1523, %v1595, %v1597
      %v1599 = vrot.slane %v733, 4
      %v1600 = vsel %vm1523, %v1597, %v1599
      %v1601 = vrot.slane %v735, 4
      %v1602 = vsel %vm1523, %v1599, %v1601
      %v1603 = vrot.slane %v780, 4
      %v1604 = vsel %vm1523, %v1601, %v1603
      %1605 = vrot.lane.b32.xlu0 %v1526, 20
      %v1606 = vpop.permute.xlu0 %1605
      %1607 = vrot.lane.b32.xlu0 %v1528, 20
      %v1608 = vpop.permute.xlu0 %1607
      %1609 = vrot.lane.b32.xlu0 %v1530, 20
      %v1610 = vpop.permute.xlu0 %1609
      %1611 = vrot.lane.b32.xlu0 %v1532, 20
      %v1612 = vpop.permute.xlu0 %1611
      %1613 = vrot.lane.b32.xlu0 %v1534, 20
      %v1614 = vpop.permute.xlu0 %1613
      %1615 = vrot.lane.b32.xlu0 %v1536, 20
      %v1616 = vpop.permute.xlu0 %1615
      %1617 = vrot.lane.b32.xlu0 %v1538, 20
      %v1618 = vpop.permute.xlu0 %1617
      %1619 = vrot.lane.b32.xlu0 %v1540, 20
      %v1620 = vpop.permute.xlu0 %1619
      %1621 = vrot.lane.b32.xlu0 %v1542, 20
      %v1622 = vpop.permute.xlu0 %1621
      %1623 = vrot.lane.b32.xlu0 %v1544, 20
      %v1624 = vpop.permute.xlu0 %1623
      %1625 = vrot.lane.b32.xlu0 %v1546, 20
      %v1626 = vpop.permute.xlu0 %1625
      %1627 = vrot.lane.b32.xlu0 %v1548, 20
      %v1628 = vpop.permute.xlu0 %1627
      %1629 = vrot.lane.b32.xlu0 %v1550, 20
      %v1630 = vpop.permute.xlu0 %1629
      %1631 = vrot.lane.b32.xlu0 %v1552, 20
      %v1632 = vpop.permute.xlu0 %1631
      %1633 = vrot.lane.b32.xlu0 %v1554, 20
      %v1634 = vpop.permute.xlu0 %1633
      %1635 = vrot.lane.b32.xlu0 %v1556, 20
      %v1636 = vpop.permute.xlu0 %1635
      %1637 = vrot.lane.b32.xlu0 %v1558, 20
      %v1638 = vpop.permute.xlu0 %1637
      %1639 = vrot.lane.b32.xlu0 %v1560, 20
      %v1640 = vpop.permute.xlu0 %1639
      %1641 = vrot.lane.b32.xlu0 %v1562, 20
      %v1642 = vpop.permute.xlu0 %1641
      %1643 = vrot.lane.b32.xlu0 %v1564, 20
      %v1644 = vpop.permute.xlu0 %1643
      %1645 = vrot.lane.b32.xlu0 %v1566, 20
      %v1646 = vpop.permute.xlu0 %1645
      %1647 = vrot.lane.b32.xlu0 %v1568, 20
      %v1648 = vpop.permute.xlu0 %1647
      %1649 = vrot.lane.b32.xlu0 %v1570, 20
      %v1650 = vpop.permute.xlu0 %1649
      %1651 = vrot.lane.b32.xlu0 %v1572, 20
      %v1652 = vpop.permute.xlu0 %1651
      %1653 = vrot.lane.b32.xlu0 %v1574, 20
      %v1654 = vpop.permute.xlu0 %1653
      %1655 = vrot.lane.b32.xlu0 %v1576, 20
      %v1656 = vpop.permute.xlu0 %1655
      %1657 = vrot.lane.b32.xlu0 %v1578, 20
      %v1658 = vpop.permute.xlu0 %1657
      %1659 = vrot.lane.b32.xlu0 %v1580, 20
      %v1660 = vpop.permute.xlu0 %1659
      %1661 = vrot.lane.b32.xlu0 %v1582, 20
      %v1662 = vpop.permute.xlu0 %1661
      %1663 = vrot.lane.b32.xlu0 %v1584, 20
      %v1664 = vpop.permute.xlu0 %1663
      %1665 = vrot.lane.b32.xlu0 %v1586, 20
      %v1666 = vpop.permute.xlu0 %1665
      %1667 = vrot.lane.b32.xlu0 %v1588, 20
      %v1668 = vpop.permute.xlu0 %1667
      %1669 = vrot.lane.b32.xlu0 %v1590, 20
      %v1670 = vpop.permute.xlu0 %1669
      %1671 = vrot.lane.b32.xlu0 %v1592, 20
      %v1672 = vpop.permute.xlu0 %1671
      %1673 = vrot.lane.b32.xlu0 %v1594, 20
      %v1674 = vpop.permute.xlu0 %1673
      %1675 = vrot.lane.b32.xlu0 %v1596, 20
      %v1676 = vpop.permute.xlu0 %1675
      %1677 = vrot.lane.b32.xlu0 %v1598, 20
      %v1678 = vpop.permute.xlu0 %1677
      %1679 = vrot.lane.b32.xlu0 %v1600, 20
      %v1680 = vpop.permute.xlu0 %1679
      %1681 = vrot.lane.b32.xlu0 %v1602, 20
      %v1682 = vpop.permute.xlu0 %1681
      %1683 = vrot.lane.b32.xlu0 %v1604, 20
      %v1684 = vpop.permute.xlu0 %1683
      %1685 = vrot.lane.b32.xlu0 %v1603, 20
      %v1686 = vpop.permute.xlu0 %1685
      %v1728 = vrot.slane 0.0, 4
      %v1729 = vsel %vm1523, %v1603, %v1728
      %v1730 = vsel %vm1523, %v1728, %v1728
      %1731 = vrot.lane.b32.xlu0 %v1530, 24
      %v1732 = vpop.permute.xlu0 %1731
      %1733 = vrot.lane.b32.xlu0 %v1532, 24
      %v1734 = vpop.permute.xlu0 %1733
      %1735 = vrot.lane.b32.xlu0 %v1534, 24
      %v1736 = vpop.permute.xlu0 %1735
      %1737 = vrot.lane.b32.xlu0 %v1536, 24
      %v1738 = vpop.permute.xlu0 %1737
      %1739 = vrot.lane.b32.xlu0 %v1538, 24
      %v1740 = vpop.permute.xlu0 %1739
      %1741 = vrot.lane.b32.xlu0 %v1540, 24
      %v1742 = vpop.permute.xlu0 %1741
      %1743 = vrot.lane.b32.xlu0 %v1542, 24
      %v1744 = vpop.permute.xlu0 %1743
      %1745 = vrot.lane.b32.xlu0 %v1544, 24
      %v1746 = vpop.permute.xlu0 %1745
      %1747 = vrot.lane.b32.xlu0 %v1546, 24
      %v1748 = vpop.permute.xlu0 %1747
      %1749 = vrot.lane.b32.xlu0 %v1548, 24
      %v1750 = vpop.permute.xlu0 %1749
      %1751 = vrot.lane.b32.xlu0 %v1550, 24
      %v1752 = vpop.permute.xlu0 %1751
      %1753 = vrot.lane.b32.xlu0 %v1552, 24
      %v1754 = vpop.permute.xlu0 %1753
      %1755 = vrot.lane.b32.xlu0 %v1554, 24
      %v1756 = vpop.permute.xlu0 %1755
      %1757 = vrot.lane.b32.xlu0 %v1556, 24
      %v1758 = vpop.permute.xlu0 %1757
      %1759 = vrot.lane.b32.xlu0 %v1558, 24
      %v1760 = vpop.permute.xlu0 %1759
      %1761 = vrot.lane.b32.xlu0 %v1560, 24
      %v1762 = vpop.permute.xlu0 %1761
      %1763 = vrot.lane.b32.xlu0 %v1562, 24
      %v1764 = vpop.permute.xlu0 %1763
      %1765 = vrot.lane.b32.xlu0 %v1564, 24
      %v1766 = vpop.permute.xlu0 %1765
      %1767 = vrot.lane.b32.xlu0 %v1566, 24
      %v1768 = vpop.permute.xlu0 %1767
      %1769 = vrot.lane.b32.xlu0 %v1568, 24
      %v1770 = vpop.permute.xlu0 %1769
      %1771 = vrot.lane.b32.xlu0 %v1570, 24
      %v1772 = vpop.permute.xlu0 %1771
      %1773 = vrot.lane.b32.xlu0 %v1572, 24
      %v1774 = vpop.permute.xlu0 %1773
      %1775 = vrot.lane.b32.xlu0 %v1574, 24
      %v1776 = vpop.permute.xlu0 %1775
      %1777 = vrot.lane.b32.xlu0 %v1576, 24
      %v1778 = vpop.permute.xlu0 %1777
      %1779 = vrot.lane.b32.xlu0 %v1578, 24
      %v1780 = vpop.permute.xlu0 %1779
      %1781 = vrot.lane.b32.xlu0 %v1580, 24
      %v1782 = vpop.permute.xlu0 %1781
      %1783 = vrot.lane.b32.xlu0 %v1582, 24
      %v1784 = vpop.permute.xlu0 %1783
      %1785 = vrot.lane.b32.xlu0 %v1584, 24
      %v1786 = vpop.permute.xlu0 %1785
      %1787 = vrot.lane.b32.xlu0 %v1586, 24
      %v1788 = vpop.permute.xlu0 %1787
      %1789 = vrot.lane.b32.xlu0 %v1588, 24
      %v1790 = vpop.permute.xlu0 %1789
      %1791 = vrot.lane.b32.xlu0 %v1590, 24
      %v1792 = vpop.permute.xlu0 %1791
      %1793 = vrot.lane.b32.xlu0 %v1592, 24
      %v1794 = vpop.permute.xlu0 %1793
      %1795 = vrot.lane.b32.xlu0 %v1594, 24
      %v1796 = vpop.permute.xlu0 %1795
      %1797 = vrot.lane.b32.xlu0 %v1596, 24
      %v1798 = vpop.permute.xlu0 %1797
      %1799 = vrot.lane.b32.xlu0 %v1598, 24
      %v1800 = vpop.permute.xlu0 %1799
      %1801 = vrot.lane.b32.xlu0 %v1600, 24
      %v1802 = vpop.permute.xlu0 %1801
      %1803 = vrot.lane.b32.xlu0 %v1602, 24
      %v1804 = vpop.permute.xlu0 %1803
      %1805 = vrot.lane.b32.xlu0 %v1604, 24
      %v1806 = vpop.permute.xlu0 %1805
      %1807 = vrot.lane.b32.xlu0 %v1729, 24
      %v1808 = vpop.permute.xlu0 %1807
      %1809 = vrot.lane.b32.xlu0 %v1730, 24
      %v1810 = vpop.permute.xlu0 %1809
      %1811 = vrot.lane.b32.xlu0 %v1728, 24
      %v1812 = vpop.permute.xlu0 %1811
      %v1854 = vrot.slane %v661, 5
      %v1855 = vrot.slane %v663, 5
      %v1856 = vsel %vm656, %v1854, %v1855
      %v1857 = vrot.slane %v665, 5
      %v1858 = vsel %vm656, %v1855, %v1857
      %v1859 = vrot.slane %v667, 5
      %v1860 = vsel %vm656, %v1857, %v1859
      %v1861 = vrot.slane %v669, 5
      %v1862 = vsel %vm656, %v1859, %v1861
      %v1863 = vrot.slane %v671, 5
      %v1864 = vsel %vm656, %v1861, %v1863
      %v1865 = vrot.slane %v673, 5
      %v1866 = vsel %vm656, %v1863, %v1865
      %v1867 = vrot.slane %v675, 5
      %v1868 = vsel %vm656, %v1865, %v1867
      %v1869 = vrot.slane %v677, 5
      %v1870 = vsel %vm656, %v1867, %v1869
      %v1871 = vrot.slane %v679, 5
      %v1872 = vsel %vm656, %v1869, %v1871
      %v1873 = vrot.slane %v681, 5
      %v1874 = vsel %vm656, %v1871, %v1873
      %v1875 = vrot.slane %v683, 5
      %v1876 = vsel %vm656, %v1873, %v1875
      %v1877 = vrot.slane %v685, 5
      %v1878 = vsel %vm656, %v1875, %v1877
      %v1879 = vrot.slane %v687, 5
      %v1880 = vsel %vm656, %v1877, %v1879
      %v1881 = vrot.slane %v689, 5
      %v1882 = vsel %vm656, %v1879, %v1881
      %v1883 = vrot.slane %v691, 5
      %v1884 = vsel %vm656, %v1881, %v1883
      %v1885 = vrot.slane %v693, 5
      %v1886 = vsel %vm656, %v1883, %v1885
      %v1887 = vrot.slane %v695, 5
      %v1888 = vsel %vm656, %v1885, %v1887
      %v1889 = vrot.slane %v697, 5
      %v1890 = vsel %vm656, %v1887, %v1889
      %v1891 = vrot.slane %v699, 5
      %v1892 = vsel %vm656, %v1889, %v1891
      %v1893 = vrot.slane %v701, 5
      %v1894 = vsel %vm656, %v1891, %v1893
      %v1895 = vrot.slane %v703, 5
      %v1896 = vsel %vm656, %v1893, %v1895
      %v1897 = vrot.slane %v705, 5
      %v1898 = vsel %vm656, %v1895, %v1897
      %v1899 = vrot.slane %v707, 5
      %v1900 = vsel %vm656, %v1897, %v1899
      %v1901 = vrot.slane %v709, 5
      %v1902 = vsel %vm656, %v1899, %v1901
      %v1903 = vrot.slane %v711, 5
      %v1904 = vsel %vm656, %v1901, %v1903
      %v1905 = vrot.slane %v713, 5
      %v1906 = vsel %vm656, %v1903, %v1905
      %v1907 = vrot.slane %v715, 5
      %v1908 = vsel %vm656, %v1905, %v1907
      %v1909 = vrot.slane %v717, 5
      %v1910 = vsel %vm656, %v1907, %v1909
      %v1911 = vrot.slane %v719, 5
      %v1912 = vsel %vm656, %v1909, %v1911
      %v1913 = vrot.slane %v721, 5
      %v1914 = vsel %vm656, %v1911, %v1913
      %v1915 = vrot.slane %v723, 5
      %v1916 = vsel %vm656, %v1913, %v1915
      %v1917 = vrot.slane %v725, 5
      %v1918 = vsel %vm656, %v1915, %v1917
      %v1919 = vrot.slane %v727, 5
      %v1920 = vsel %vm656, %v1917, %v1919
      %v1921 = vrot.slane %v729, 5
      %v1922 = vsel %vm656, %v1919, %v1921
      %v1923 = vrot.slane %v731, 5
      %v1924 = vsel %vm656, %v1921, %v1923
      %v1925 = vrot.slane %v733, 5
      %v1926 = vsel %vm656, %v1923, %v1925
      %v1927 = vrot.slane %v735, 5
      %v1928 = vsel %vm656, %v1925, %v1927
      %v1929 = vrot.slane %v780, 5
      %v1930 = vsel %vm656, %v1927, %v1929
      %v1931 = vrot.slane 0.0, 5
      %v1932 = vsel %vm656, %v1929, %v1931
      %v1933 = vsel %vm656, %v1931, %v1931
      %1934 = vrot.lane.b32.xlu0 %v1856, 28
      %v1935 = vpop.permute.xlu0 %1934
      %1936 = vrot.lane.b32.xlu0 %v1858, 28
      %v1937 = vpop.permute.xlu0 %1936
      %1938 = vrot.lane.b32.xlu0 %v1860, 28
      %v1939 = vpop.permute.xlu0 %1938
      %1940 = vrot.lane.b32.xlu0 %v1862, 28
      %v1941 = vpop.permute.xlu0 %1940
      %1942 = vrot.lane.b32.xlu0 %v1864, 28
      %v1943 = vpop.permute.xlu0 %1942
      %1944 = vrot.lane.b32.xlu0 %v1866, 28
      %v1945 = vpop.permute.xlu0 %1944
      %1946 = vrot.lane.b32.xlu0 %v1868, 28
      %v1947 = vpop.permute.xlu0 %1946
      %1948 = vrot.lane.b32.xlu0 %v1870, 28
      %v1949 = vpop.permute.xlu0 %1948
      %1950 = vrot.lane.b32.xlu0 %v1872, 28
      %v1951 = vpop.permute.xlu0 %1950
      %1952 = vrot.lane.b32.xlu0 %v1874, 28
      %v1953 = vpop.permute.xlu0 %1952
      %1954 = vrot.lane.b32.xlu0 %v1876, 28
      %v1955 = vpop.permute.xlu0 %1954
      %1956 = vrot.lane.b32.xlu0 %v1878, 28
      %v1957 = vpop.permute.xlu0 %1956
      %1958 = vrot.lane.b32.xlu0 %v1880, 28
      %v1959 = vpop.permute.xlu0 %1958
      %1960 = vrot.lane.b32.xlu0 %v1882, 28
      %v1961 = vpop.permute.xlu0 %1960
      %1962 = vrot.lane.b32.xlu0 %v1884, 28
      %v1963 = vpop.permute.xlu0 %1962
      %1964 = vrot.lane.b32.xlu0 %v1886, 28
      %v1965 = vpop.permute.xlu0 %1964
      %1966 = vrot.lane.b32.xlu0 %v1888, 28
      %v1967 = vpop.permute.xlu0 %1966
      %1968 = vrot.lane.b32.xlu0 %v1890, 28
      %v1969 = vpop.permute.xlu0 %1968
      %1970 = vrot.lane.b32.xlu0 %v1892, 28
      %v1971 = vpop.permute.xlu0 %1970
      %1972 = vrot.lane.b32.xlu0 %v1894, 28
      %v1973 = vpop.permute.xlu0 %1972
      %1974 = vrot.lane.b32.xlu0 %v1896, 28
      %v1975 = vpop.permute.xlu0 %1974
      %1976 = vrot.lane.b32.xlu0 %v1898, 28
      %v1977 = vpop.permute.xlu0 %1976
      %1978 = vrot.lane.b32.xlu0 %v1900, 28
      %v1979 = vpop.permute.xlu0 %1978
      %1980 = vrot.lane.b32.xlu0 %v1902, 28
      %v1981 = vpop.permute.xlu0 %1980
      %1982 = vrot.lane.b32.xlu0 %v1904, 28
      %v1983 = vpop.permute.xlu0 %1982
      %1984 = vrot.lane.b32.xlu0 %v1906, 28
      %v1985 = vpop.permute.xlu0 %1984
      %1986 = vrot.lane.b32.xlu0 %v1908, 28
      %v1987 = vpop.permute.xlu0 %1986
      %1988 = vrot.lane.b32.xlu0 %v1910, 28
      %v1989 = vpop.permute.xlu0 %1988
      %1990 = vrot.lane.b32.xlu0 %v1912, 28
      %v1991 = vpop.permute.xlu0 %1990
      %1992 = vrot.lane.b32.xlu0 %v1914, 28
      %v1993 = vpop.permute.xlu0 %1992
      %1994 = vrot.lane.b32.xlu0 %v1916, 28
      %v1995 = vpop.permute.xlu0 %1994
      %1996 = vrot.lane.b32.xlu0 %v1918, 28
      %v1997 = vpop.permute.xlu0 %1996
      %1998 = vrot.lane.b32.xlu0 %v1920, 28
      %v1999 = vpop.permute.xlu0 %1998
      %2000 = vrot.lane.b32.xlu0 %v1922, 28
      %v2001 = vpop.permute.xlu0 %2000
      %2002 = vrot.lane.b32.xlu0 %v1924, 28
      %v2003 = vpop.permute.xlu0 %2002
      %2004 = vrot.lane.b32.xlu0 %v1926, 28
      %v2005 = vpop.permute.xlu0 %2004
      %2006 = vrot.lane.b32.xlu0 %v1928, 28
      %v2007 = vpop.permute.xlu0 %2006
      %2008 = vrot.lane.b32.xlu0 %v1930, 28
      %v2009 = vpop.permute.xlu0 %2008
      %2010 = vrot.lane.b32.xlu0 %v1932, 28
      %v2011 = vpop.permute.xlu0 %2010
      %2012 = vrot.lane.b32.xlu0 %v1933, 28
      %v2013 = vpop.permute.xlu0 %2012
      %vm2054 = vcmask 1041408
      %v2055 = vrot.slane %v661, 6
      %v2056 = vrot.slane %v663, 6
      %v2057 = vsel %vm2054, %v2055, %v2056
      %v2058 = vrot.slane %v665, 6
      %v2059 = vsel %vm2054, %v2056, %v2058
      %v2060 = vrot.slane %v667, 6
      %v2061 = vsel %vm2054, %v2058, %v2060
      %v2062 = vrot.slane %v669, 6
      %v2063 = vsel %vm2054, %v2060, %v2062
      %v2064 = vrot.slane %v671, 6
      %v2065 = vsel %vm2054, %v2062, %v2064
      %v2066 = vrot.slane %v673, 6
      %v2067 = vsel %vm2054, %v2064, %v2066
      %v2068 = vrot.slane %v675, 6
      %v2069 = vsel %vm2054, %v2066, %v2068
      %v2070 = vrot.slane %v677, 6
      %v2071 = vsel %vm2054, %v2068, %v2070
      %v2072 = vrot.slane %v679, 6
      %v2073 = vsel %vm2054, %v2070, %v2072
      %v2074 = vrot.slane %v681, 6
      %v2075 = vsel %vm2054, %v2072, %v2074
      %v2076 = vrot.slane %v683, 6
      %v2077 = vsel %vm2054, %v2074, %v2076
      %v2078 = vrot.slane %v685, 6
      %v2079 = vsel %vm2054, %v2076, %v2078
      %v2080 = vrot.slane %v687, 6
      %v2081 = vsel %vm2054, %v2078, %v2080
      %v2082 = vrot.slane %v689, 6
      %v2083 = vsel %vm2054, %v2080, %v2082
      %v2084 = vrot.slane %v691, 6
      %v2085 = vsel %vm2054, %v2082, %v2084
      %v2086 = vrot.slane %v693, 6
      %v2087 = vsel %vm2054, %v2084, %v2086
      %v2088 = vrot.slane %v695, 6
      %v2089 = vsel %vm2054, %v2086, %v2088
      %v2090 = vrot.slane %v697, 6
      %v2091 = vsel %vm2054, %v2088, %v2090
      %v2092 = vrot.slane %v699, 6
      %v2093 = vsel %vm2054, %v2090, %v2092
      %v2094 = vrot.slane %v701, 6
      %v2095 = vsel %vm2054, %v2092, %v2094
      %v2096 = vrot.slane %v703, 6
      %v2097 = vsel %vm2054, %v2094, %v2096
      %v2098 = vrot.slane %v705, 6
      %v2099 = vsel %vm2054, %v2096, %v2098
      %v2100 = vrot.slane %v707, 6
      %v2101 = vsel %vm2054, %v2098, %v2100
      %v2102 = vrot.slane %v709, 6
      %v2103 = vsel %vm2054, %v2100, %v2102
      %v2104 = vrot.slane %v711, 6
      %v2105 = vsel %vm2054, %v2102, %v2104
      %v2106 = vrot.slane %v713, 6
      %v2107 = vsel %vm2054, %v2104, %v2106
      %v2108 = vrot.slane %v715, 6
      %v2109 = vsel %vm2054, %v2106, %v2108
      %v2110 = vrot.slane %v717, 6
      %v2111 = vsel %vm2054, %v2108, %v2110
      %v2112 = vrot.slane %v719, 6
      %v2113 = vsel %vm2054, %v2110, %v2112
      %v2114 = vrot.slane %v721, 6
      %v2115 = vsel %vm2054, %v2112, %v2114
      %v2116 = vrot.slane %v723, 6
      %v2117 = vsel %vm2054, %v2114, %v2116
      %v2118 = vrot.slane %v725, 6
      %v2119 = vsel %vm2054, %v2116, %v2118
      %v2120 = vrot.slane %v727, 6
      %v2121 = vsel %vm2054, %v2118, %v2120
      %v2122 = vrot.slane %v729, 6
      %v2123 = vsel %vm2054, %v2120, %v2122
      %v2124 = vrot.slane %v731, 6
      %v2125 = vsel %vm2054, %v2122, %v2124
      %v2126 = vrot.slane %v733, 6
      %v2127 = vsel %vm2054, %v2124, %v2126
      %v2128 = vrot.slane %v735, 6
      %v2129 = vsel %vm2054, %v2126, %v2128
      %v2130 = vrot.slane %v780, 6
      %v2131 = vsel %vm2054, %v2128, %v2130
      %v2132 = vrot.slane 0.0, 6
      %v2133 = vsel %vm2054, %v2130, %v2132
      %v2134 = vsel %vm2054, %v2132, %v2132
      %2135 = vrot.lane.b32.xlu0 %v2057, 32
      %v2136 = vpop.permute.xlu0 %2135
      %2137 = vrot.lane.b32.xlu0 %v2059, 32
      %v2138 = vpop.permute.xlu0 %2137
      %2139 = vrot.lane.b32.xlu0 %v2061, 32
      %v2140 = vpop.permute.xlu0 %2139
      %2141 = vrot.lane.b32.xlu0 %v2063, 32
      %v2142 = vpop.permute.xlu0 %2141
      %2143 = vrot.lane.b32.xlu0 %v2065, 32
      %v2144 = vpop.permute.xlu0 %2143
      %2145 = vrot.lane.b32.xlu0 %v2067, 32
      %v2146 = vpop.permute.xlu0 %2145
      %2147 = vrot.lane.b32.xlu0 %v2069, 32
      %v2148 = vpop.permute.xlu0 %2147
      %2149 = vrot.lane.b32.xlu0 %v2071, 32
      %v2150 = vpop.permute.xlu0 %2149
      %2151 = vrot.lane.b32.xlu0 %v2073, 32
      %v2152 = vpop.permute.xlu0 %2151
      %2153 = vrot.lane.b32.xlu0 %v2075, 32
      %v2154 = vpop.permute.xlu0 %2153
      %2155 = vrot.lane.b32.xlu0 %v2077, 32
      %v2156 = vpop.permute.xlu0 %2155
      %2157 = vrot.lane.b32.xlu0 %v2079, 32
      %v2158 = vpop.permute.xlu0 %2157
      %2159 = vrot.lane.b32.xlu0 %v2081, 32
      %v2160 = vpop.permute.xlu0 %2159
      %2161 = vrot.lane.b32.xlu0 %v2083, 32
      %v2162 = vpop.permute.xlu0 %2161
      %2163 = vrot.lane.b32.xlu0 %v2085, 32
      %v2164 = vpop.permute.xlu0 %2163
      %2165 = vrot.lane.b32.xlu0 %v2087, 32
      %v2166 = vpop.permute.xlu0 %2165
      %2167 = vrot.lane.b32.xlu0 %v2089, 32
      %v2168 = vpop.permute.xlu0 %2167
      %2169 = vrot.lane.b32.xlu0 %v2091, 32
      %v2170 = vpop.permute.xlu0 %2169
      %2171 = vrot.lane.b32.xlu0 %v2093, 32
      %v2172 = vpop.permute.xlu0 %2171
      %2173 = vrot.lane.b32.xlu0 %v2095, 32
      %v2174 = vpop.permute.xlu0 %2173
      %2175 = vrot.lane.b32.xlu0 %v2097, 32
      %v2176 = vpop.permute.xlu0 %2175
      %2177 = vrot.lane.b32.xlu0 %v2099, 32
      %v2178 = vpop.permute.xlu0 %2177
      %2179 = vrot.lane.b32.xlu0 %v2101, 32
      %v2180 = vpop.permute.xlu0 %2179
      %2181 = vrot.lane.b32.xlu0 %v2103, 32
      %v2182 = vpop.permute.xlu0 %2181
      %2183 = vrot.lane.b32.xlu0 %v2105, 32
      %v2184 = vpop.permute.xlu0 %2183
      %2185 = vrot.lane.b32.xlu0 %v2107, 32
      %v2186 = vpop.permute.xlu0 %2185
      %2187 = vrot.lane.b32.xlu0 %v2109, 32
      %v2188 = vpop.permute.xlu0 %2187
      %2189 = vrot.lane.b32.xlu0 %v2111, 32
      %v2190 = vpop.permute.xlu0 %2189
      %2191 = vrot.lane.b32.xlu0 %v2113, 32
      %v2192 = vpop.permute.xlu0 %2191
      %2193 = vrot.lane.b32.xlu0 %v2115, 32
      %v2194 = vpop.permute.xlu0 %2193
      %2195 = vrot.lane.b32.xlu0 %v2117, 32
      %v2196 = vpop.permute.xlu0 %2195
      %2197 = vrot.lane.b32.xlu0 %v2119, 32
      %v2198 = vpop.permute.xlu0 %2197
      %2199 = vrot.lane.b32.xlu0 %v2121, 32
      %v2200 = vpop.permute.xlu0 %2199
      %2201 = vrot.lane.b32.xlu0 %v2123, 32
      %v2202 = vpop.permute.xlu0 %2201
      %2203 = vrot.lane.b32.xlu0 %v2125, 32
      %v2204 = vpop.permute.xlu0 %2203
      %2205 = vrot.lane.b32.xlu0 %v2127, 32
      %v2206 = vpop.permute.xlu0 %2205
      %2207 = vrot.lane.b32.xlu0 %v2129, 32
      %v2208 = vpop.permute.xlu0 %2207
      %2209 = vrot.lane.b32.xlu0 %v2131, 32
      %v2210 = vpop.permute.xlu0 %2209
      %2211 = vrot.lane.b32.xlu0 %v2133, 32
      %v2212 = vpop.permute.xlu0 %2211
      %2213 = vrot.lane.b32.xlu0 %v2134, 32
      %v2214 = vpop.permute.xlu0 %2213
      %vm2255 = vcmask 31744
      %v2256 = vsel %vm2255, 0.0, %v864
      %v2257 = vsel %vm2255, 0.0, %v866
      %v2258 = vsel %vm2255, %v778, %v868
      %v2259 = vsel %vm2255, %v659, %v870
      %v2260 = vsel %vm2255, %v661, %v872
      %v2261 = vsel %vm2255, %v663, %v874
      %v2262 = vsel %vm2255, %v665, %v876
      %v2263 = vsel %vm2255, %v667, %v878
      %v2264 = vsel %vm2255, %v669, %v880
      %v2265 = vsel %vm2255, %v671, %v882
      %v2266 = vsel %vm2255, %v673, %v884
      %v2267 = vsel %vm2255, %v675, %v886
      %v2268 = vsel %vm2255, %v677, %v888
      %v2269 = vsel %vm2255, %v679, %v890
      %v2270 = vsel %vm2255, %v681, %v892
      %v2271 = vsel %vm2255, %v683, %v894
      %v2272 = vsel %vm2255, %v685, %v896
      %v2273 = vsel %vm2255, %v687, %v898
      %v2274 = vsel %vm2255, %v689, %v900
      %v2275 = vsel %vm2255, %v691, %v902
      %v2276 = vsel %vm2255, %v693, %v904
      %v2277 = vsel %vm2255, %v695, %v906
      %v2278 = vsel %vm2255, %v697, %v908
      %v2279 = vsel %vm2255, %v699, %v910
      %v2280 = vsel %vm2255, %v701, %v912
      %v2281 = vsel %vm2255, %v703, %v914
      %v2282 = vsel %vm2255, %v705, %v916
      %v2283 = vsel %vm2255, %v707, %v918
      %v2284 = vsel %vm2255, %v709, %v920
      %v2285 = vsel %vm2255, %v711, %v922
      %v2286 = vsel %vm2255, %v713, %v924
      %v2287 = vsel %vm2255, %v715, %v926
      %v2288 = vsel %vm2255, %v717, %v928
      %v2289 = vsel %vm2255, %v719, %v930
      %v2290 = vsel %vm2255, %v721, %v932
      %v2291 = vsel %vm2255, %v723, %v934
      %v2292 = vsel %vm2255, %v725, %v936
      %v2293 = vsel %vm2255, %v727, %v938
      %v2294 = vsel %vm2255, %v729, %v940
      %v2295 = vsel %vm2255, %v731, %v942
      %v2296 = vsel %vm2255, %v733, %v944
      %vm2297 = vcmask 64512
      %v2298 = vsel %vm2297, %v2256, %v1068
      %v2299 = vsel %vm2297, %v2257, %v1070
      %v2300 = vsel %vm2297, %v2258, %v1072
      %v2301 = vsel %vm2297, %v2259, %v1074
      %v2302 = vsel %vm2297, %v2260, %v1076
      %v2303 = vsel %vm2297, %v2261, %v1078
      %v2304 = vsel %vm2297, %v2262, %v1080
      %v2305 = vsel %vm2297, %v2263, %v1082
      %v2306 = vsel %vm2297, %v2264, %v1084
      %v2307 = vsel %vm2297, %v2265, %v1086
      %v2308 = vsel %vm2297, %v2266, %v1088
      %v2309 = vsel %vm2297, %v2267, %v1090
      %v2310 = vsel %vm2297, %v2268, %v1092
      %v2311 = vsel %vm2297, %v2269, %v1094
      %v2312 = vsel %vm2297, %v2270, %v1096
      %v2313 = vsel %vm2297, %v2271, %v1098
      %v2314 = vsel %vm2297, %v2272, %v1100
      %v2315 = vsel %vm2297, %v2273, %v1102
      %v2316 = vsel %vm2297, %v2274, %v1104
      %v2317 = vsel %vm2297, %v2275, %v1106
      %v2318 = vsel %vm2297, %v2276, %v1108
      %v2319 = vsel %vm2297, %v2277, %v1110
      %v2320 = vsel %vm2297, %v2278, %v1112
      %v2321 = vsel %vm2297, %v2279, %v1114
      %v2322 = vsel %vm2297, %v2280, %v1116
      %v2323 = vsel %vm2297, %v2281, %v1118
      %v2324 = vsel %vm2297, %v2282, %v1120
      %v2325 = vsel %vm2297, %v2283, %v1122
      %v2326 = vsel %vm2297, %v2284, %v1124
      %v2327 = vsel %vm2297, %v2285, %v1126
      %v2328 = vsel %vm2297, %v2286, %v1128
      %v2329 = vsel %vm2297, %v2287, %v1130
      %v2330 = vsel %vm2297, %v2288, %v1132
      %v2331 = vsel %vm2297, %v2289, %v1134
      %v2332 = vsel %vm2297, %v2290, %v1136
      %v2333 = vsel %vm2297, %v2291, %v1138
      %v2334 = vsel %vm2297, %v2292, %v1140
      %v2335 = vsel %vm2297, %v2293, %v1142
      %v2336 = vsel %vm2297, %v2294, %v1144
      %v2337 = vsel %vm2297, %v2295, %v1146
      %v2338 = vsel %vm2297, %v2296, %v1148
      %vm2339 = vcmask 97280
      %v2340 = vsel %vm2339, %v2298, %v1196
      %v2341 = vsel %vm2339, %v2299, %v1198
      %v2342 = vsel %vm2339, %v2300, %v1200
      %v2343 = vsel %vm2339, %v2301, %v1202
      %v2344 = vsel %vm2339, %v2302, %v1204
      %v2345 = vsel %vm2339, %v2303, %v1206
      %v2346 = vsel %vm2339, %v2304, %v1208
      %v2347 = vsel %vm2339, %v2305, %v1210
      %v2348 = vsel %vm2339, %v2306, %v1212
      %v2349 = vsel %vm2339, %v2307, %v1214
      %v2350 = vsel %vm2339, %v2308, %v1216
      %v2351 = vsel %vm2339, %v2309, %v1218
      %v2352 = vsel %vm2339, %v2310, %v1220
      %v2353 = vsel %vm2339, %v2311, %v1222
      %v2354 = vsel %vm2339, %v2312, %v1224
      %v2355 = vsel %vm2339, %v2313, %v1226
      %v2356 = vsel %vm2339, %v2314, %v1228
      %v2357 = vsel %vm2339, %v2315, %v1230
      %v2358 = vsel %vm2339, %v2316, %v1232
      %v2359 = vsel %vm2339, %v2317, %v1234
      %v2360 = vsel %vm2339, %v2318, %v1236
      %v2361 = vsel %vm2339, %v2319, %v1238
      %v2362 = vsel %vm2339, %v2320, %v1240
      %v2363 = vsel %vm2339, %v2321, %v1242
      %v2364 = vsel %vm2339, %v2322, %v1244
      %v2365 = vsel %vm2339, %v2323, %v1246
      %v2366 = vsel %vm2339, %v2324, %v1248
      %v2367 = vsel %vm2339, %v2325, %v1250
      %v2368 = vsel %vm2339, %v2326, %v1252
      %v2369 = vsel %vm2339, %v2327, %v1254
      %v2370 = vsel %vm2339, %v2328, %v1256
      %v2371 = vsel %vm2339, %v2329, %v1258
      %v2372 = vsel %vm2339, %v2330, %v1260
      %v2373 = vsel %vm2339, %v2331, %v1262
      %v2374 = vsel %vm2339, %v2332, %v1264
      %v2375 = vsel %vm2339, %v2333, %v1266
      %v2376 = vsel %vm2339, %v2334, %v1268
      %v2377 = vsel %vm2339, %v2335, %v1270
      %v2378 = vsel %vm2339, %v2336, %v1272
      %v2379 = vsel %vm2339, %v2337, %v1274
      %v2380 = vsel %vm2339, %v2338, %v1276
      %vm2381 = vcmask 130048
      %v2382 = vsel %vm2381, %v2340, %v1401
      %v2383 = vsel %vm2381, %v2341, %v1403
      %v2384 = vsel %vm2381, %v2342, %v1405
      %v2385 = vsel %vm2381, %v2343, %v1407
      %v2386 = vsel %vm2381, %v2344, %v1409
      %v2387 = vsel %vm2381, %v2345, %v1411
      %v2388 = vsel %vm2381, %v2346, %v1413
      %v2389 = vsel %vm2381, %v2347, %v1415
      %v2390 = vsel %vm2381, %v2348, %v1417
      %v2391 = vsel %vm2381, %v2349, %v1419
      %v2392 = vsel %vm2381, %v2350, %v1421
      %v2393 = vsel %vm2381, %v2351, %v1423
      %v2394 = vsel %vm2381, %v2352, %v1425
      %v2395 = vsel %vm2381, %v2353, %v1427
      %v2396 = vsel %vm2381, %v2354, %v1429
      %v2397 = vsel %vm2381, %v2355, %v1431
      %v2398 = vsel %vm2381, %v2356, %v1433
      %v2399 = vsel %vm2381, %v2357, %v1435
      %v2400 = vsel %vm2381, %v2358, %v1437
      %v2401 = vsel %vm2381, %v2359, %v1439
      %v2402 = vsel %vm2381, %v2360, %v1441
      %v2403 = vsel %vm2381, %v2361, %v1443
      %v2404 = vsel %vm2381, %v2362, %v1445
      %v2405 = vsel %vm2381, %v2363, %v1447
      %v2406 = vsel %vm2381, %v2364, %v1449
      %v2407 = vsel %vm2381, %v2365, %v1451
      %v2408 = vsel %vm2381, %v2366, %v1453
      %v2409 = vsel %vm2381, %v2367, %v1455
      %v2410 = vsel %vm2381, %v2368, %v1457
      %v2411 = vsel %vm2381, %v2369, %v1459
      %v2412 = vsel %vm2381, %v2370, %v1461
      %v2413 = vsel %vm2381, %v2371, %v1463
      %v2414 = vsel %vm2381, %v2372, %v1465
      %v2415 = vsel %vm2381, %v2373, %v1467
      %v2416 = vsel %vm2381, %v2374, %v1469
      %v2417 = vsel %vm2381, %v2375, %v1471
      %v2418 = vsel %vm2381, %v2376, %v1473
      %v2419 = vsel %vm2381, %v2377, %v1475
      %v2420 = vsel %vm2381, %v2378, %v1477
      %v2421 = vsel %vm2381, %v2379, %v1479
      %v2422 = vsel %vm2381, %v2380, %v1481
      %vm2423 = vcmask 162816
      %v2424 = vsel %vm2423, %v2382, %v1606
      %v2425 = vsel %vm2423, %v2383, %v1608
      %v2426 = vsel %vm2423, %v2384, %v1610
      %v2427 = vsel %vm2423, %v2385, %v1612
      %v2428 = vsel %vm2423, %v2386, %v1614
      %v2429 = vsel %vm2423, %v2387, %v1616
      %v2430 = vsel %vm2423, %v2388, %v1618
      %v2431 = vsel %vm2423, %v2389, %v1620
      %v2432 = vsel %vm2423, %v2390, %v1622
      %v2433 = vsel %vm2423, %v2391, %v1624
      %v2434 = vsel %vm2423, %v2392, %v1626
      %v2435 = vsel %vm2423, %v2393, %v1628
      %v2436 = vsel %vm2423, %v2394, %v1630
      %v2437 = vsel %vm2423, %v2395, %v1632
      %v2438 = vsel %vm2423, %v2396, %v1634
      %v2439 = vsel %vm2423, %v2397, %v1636
      %v2440 = vsel %vm2423, %v2398, %v1638
      %v2441 = vsel %vm2423, %v2399, %v1640
      %v2442 = vsel %vm2423, %v2400, %v1642
      %v2443 = vsel %vm2423, %v2401, %v1644
      %v2444 = vsel %vm2423, %v2402, %v1646
      %v2445 = vsel %vm2423, %v2403, %v1648
      %v2446 = vsel %vm2423, %v2404, %v1650
      %v2447 = vsel %vm2423, %v2405, %v1652
      %v2448 = vsel %vm2423, %v2406, %v1654
      %v2449 = vsel %vm2423, %v2407, %v1656
      %v2450 = vsel %vm2423, %v2408, %v1658
      %v2451 = vsel %vm2423, %v2409, %v1660
      %v2452 = vsel %vm2423, %v2410, %v1662
      %v2453 = vsel %vm2423, %v2411, %v1664
      %v2454 = vsel %vm2423, %v2412, %v1666
      %v2455 = vsel %vm2423, %v2413, %v1668
      %v2456 = vsel %vm2423, %v2414, %v1670
      %v2457 = vsel %vm2423, %v2415, %v1672
      %v2458 = vsel %vm2423, %v2416, %v1674
      %v2459 = vsel %vm2423, %v2417, %v1676
      %v2460 = vsel %vm2423, %v2418, %v1678
      %v2461 = vsel %vm2423, %v2419, %v1680
      %v2462 = vsel %vm2423, %v2420, %v1682
      %v2463 = vsel %vm2423, %v2421, %v1684
      %v2464 = vsel %vm2423, %v2422, %v1686
      %vm2465 = vcmask 195584
      %v2466 = vsel %vm2465, %v2424, %v1732
      %v2467 = vsel %vm2465, %v2425, %v1734
      %v2468 = vsel %vm2465, %v2426, %v1736
      %v2469 = vsel %vm2465, %v2427, %v1738
      %v2470 = vsel %vm2465, %v2428, %v1740
      %v2471 = vsel %vm2465, %v2429, %v1742
      %v2472 = vsel %vm2465, %v2430, %v1744
      %v2473 = vsel %vm2465, %v2431, %v1746
      %v2474 = vsel %vm2465, %v2432, %v1748
      %v2475 = vsel %vm2465, %v2433, %v1750
      %v2476 = vsel %vm2465, %v2434, %v1752
      %v2477 = vsel %vm2465, %v2435, %v1754
      %v2478 = vsel %vm2465, %v2436, %v1756
      %v2479 = vsel %vm2465, %v2437, %v1758
      %v2480 = vsel %vm2465, %v2438, %v1760
      %v2481 = vsel %vm2465, %v2439, %v1762
      %v2482 = vsel %vm2465, %v2440, %v1764
      %v2483 = vsel %vm2465, %v2441, %v1766
      %v2484 = vsel %vm2465, %v2442, %v1768
      %v2485 = vsel %vm2465, %v2443, %v1770
      %v2486 = vsel %vm2465, %v2444, %v1772
      %v2487 = vsel %vm2465, %v2445, %v1774
      %v2488 = vsel %vm2465, %v2446, %v1776
      %v2489 = vsel %vm2465, %v2447, %v1778
      %v2490 = vsel %vm2465, %v2448, %v1780
      %v2491 = vsel %vm2465, %v2449, %v1782
      %v2492 = vsel %vm2465, %v2450, %v1784
      %v2493 = vsel %vm2465, %v2451, %v1786
      %v2494 = vsel %vm2465, %v2452, %v1788
      %v2495 = vsel %vm2465, %v2453, %v1790
      %v2496 = vsel %vm2465, %v2454, %v1792
      %v2497 = vsel %vm2465, %v2455, %v1794
      %v2498 = vsel %vm2465, %v2456, %v1796
      %v2499 = vsel %vm2465, %v2457, %v1798
      %v2500 = vsel %vm2465, %v2458, %v1800
      %v2501 = vsel %vm2465, %v2459, %v1802
      %v2502 = vsel %vm2465, %v2460, %v1804
      %v2503 = vsel %vm2465, %v2461, %v1806
      %v2504 = vsel %vm2465, %v2462, %v1808
      %v2505 = vsel %vm2465, %v2463, %v1810
      %v2506 = vsel %vm2465, %v2464, %v1812
      %vm2507 = vcmask 228352
      %v2508 = vsel %vm2507, %v2466, %v1935
      %v2509 = vsel %vm2507, %v2467, %v1937
      %v2510 = vsel %vm2507, %v2468, %v1939
      %v2511 = vsel %vm2507, %v2469, %v1941
      %v2512 = vsel %vm2507, %v2470, %v1943
      %v2513 = vsel %vm2507, %v2471, %v1945
      %v2514 = vsel %vm2507, %v2472, %v1947
      %v2515 = vsel %vm2507, %v2473, %v1949
      %v2516 = vsel %vm2507, %v2474, %v1951
      %v2517 = vsel %vm2507, %v2475, %v1953
      %v2518 = vsel %vm2507, %v2476, %v1955
      %v2519 = vsel %vm2507, %v2477, %v1957
      %v2520 = vsel %vm2507, %v2478, %v1959
      %v2521 = vsel %vm2507, %v2479, %v1961
      %v2522 = vsel %vm2507, %v2480, %v1963
      %v2523 = vsel %vm2507, %v2481, %v1965
      %v2524 = vsel %vm2507, %v2482, %v1967
      %v2525 = vsel %vm2507, %v2483, %v1969
      %v2526 = vsel %vm2507, %v2484, %v1971
      %v2527 = vsel %vm2507, %v2485, %v1973
      %v2528 = vsel %vm2507, %v2486, %v1975
      %v2529 = vsel %vm2507, %v2487, %v1977
      %v2530 = vsel %vm2507, %v2488, %v1979
      %v2531 = vsel %vm2507, %v2489, %v1981
      %v2532 = vsel %vm2507, %v2490, %v1983
      %v2533 = vsel %vm2507, %v2491, %v1985
      %v2534 = vsel %vm2507, %v2492, %v1987
      %v2535 = vsel %vm2507, %v2493, %v1989
      %v2536 = vsel %vm2507, %v2494, %v1991
      %v2537 = vsel %vm2507, %v2495, %v1993
      %v2538 = vsel %vm2507, %v2496, %v1995
      %v2539 = vsel %vm2507, %v2497, %v1997
      %v2540 = vsel %vm2507, %v2498, %v1999
      %v2541 = vsel %vm2507, %v2499, %v2001
      %v2542 = vsel %vm2507, %v2500, %v2003
      %v2543 = vsel %vm2507, %v2501, %v2005
      %v2544 = vsel %vm2507, %v2502, %v2007
      %v2545 = vsel %vm2507, %v2503, %v2009
      %v2546 = vsel %vm2507, %v2504, %v2011
      %v2547 = vsel %vm2507, %v2505, %v2013
      %v2548 = vsel %vm2507, %v2506, %v2013
      %vm2549 = vcmask 261120
      %v2550 = vsel %vm2549, %v2508, %v2136
      %v2551 = vsel %vm2549, %v2509, %v2138
      %v2552 = vsel %vm2549, %v2510, %v2140
      %v2553 = vsel %vm2549, %v2511, %v2142
      %v2554 = vsel %vm2549, %v2512, %v2144
      %v2555 = vsel %vm2549, %v2513, %v2146
      %v2556 = vsel %vm2549, %v2514, %v2148
      %v2557 = vsel %vm2549, %v2515, %v2150
      %v2558 = vsel %vm2549, %v2516, %v2152
      %v2559 = vsel %vm2549, %v2517, %v2154
      %v2560 = vsel %vm2549, %v2518, %v2156
      %v2561 = vsel %vm2549, %v2519, %v2158
      %v2562 = vsel %vm2549, %v2520, %v2160
      %v2563 = vsel %vm2549, %v2521, %v2162
      %v2564 = vsel %vm2549, %v2522, %v2164
      %v2565 = vsel %vm2549, %v2523, %v2166
      %v2566 = vsel %vm2549, %v2524, %v2168
      %v2567 = vsel %vm2549, %v2525, %v2170
      %v2568 = vsel %vm2549, %v2526, %v2172
      %v2569 = vsel %vm2549, %v2527, %v2174
      %v2570 = vsel %vm2549, %v2528, %v2176
      %v2571 = vsel %vm2549, %v2529, %v2178
      %v2572 = vsel %vm2549, %v2530, %v2180
      %v2573 = vsel %vm2549, %v2531, %v2182
      %v2574 = vsel %vm2549, %v2532, %v2184
      %v2575 = vsel %vm2549, %v2533, %v2186
      %v2576 = vsel %vm2549, %v2534, %v2188
      %v2577 = vsel %vm2549, %v2535, %v2190
      %v2578 = vsel %vm2549, %v2536, %v2192
      %v2579 = vsel %vm2549, %v2537, %v2194
      %v2580 = vsel %vm2549, %v2538, %v2196
      %v2581 = vsel %vm2549, %v2539, %v2198
      %v2582 = vsel %vm2549, %v2540, %v2200
      %v2583 = vsel %vm2549, %v2541, %v2202
      %v2584 = vsel %vm2549, %v2542, %v2204
      %v2585 = vsel %vm2549, %v2543, %v2206
      %v2586 = vsel %vm2549, %v2544, %v2208
      %v2587 = vsel %vm2549, %v2545, %v2210
      %v2588 = vsel %vm2549, %v2546, %v2212
      %v2589 = vsel %vm2549, %v2547, %v2214
      %v2590 = vsel %vm2549, %v2548, %v2214
      %v2591 = vpack.c.bf16 %v2551, %v2550
      %v2592 = vpack.c.bf16 %v2553, %v2552
      %v2593 = vpack.c.bf16 %v2555, %v2554
      %v2594 = vpack.c.bf16 %v2557, %v2556
      %v2595 = vpack.c.bf16 %v2559, %v2558
      %v2596 = vpack.c.bf16 %v2561, %v2560
      %v2597 = vpack.c.bf16 %v2563, %v2562
      %v2598 = vpack.c.bf16 %v2565, %v2564
      %v2599 = vpack.c.bf16 %v2567, %v2566
      %v2600 = vpack.c.bf16 %v2569, %v2568
      %v2601 = vpack.c.bf16 %v2571, %v2570
      %v2602 = vpack.c.bf16 %v2573, %v2572
      %v2603 = vpack.c.bf16 %v2575, %v2574
      %v2604 = vpack.c.bf16 %v2577, %v2576
      %v2605 = vpack.c.bf16 %v2579, %v2578
      %v2606 = vpack.c.bf16 %v2581, %v2580
      %v2607 = vpack.c.bf16 %v2583, %v2582
      %v2608 = vpack.c.bf16 %v2585, %v2584
      %v2609 = vpack.c.bf16 %v2587, %v2586
      %v2610 = vpack.c.bf16 %v2589, %v2588
      %v2611 = vpack.c.bf16 %v2590, %v2590
      %v2612 = vld [vmem:[%s3] sm:$0xf]
      %v2613 = vld [vmem:[%s3 + $0x4] sm:$0xf]
      %v2614 = vld [vmem:[%s3 + $0x8] sm:$0xf]
      %v2615 = vld [vmem:[%s3 + $0xc] sm:$0xf]
      %v2616 = vld [vmem:[%s3 + $0x10] sm:$0x3]
      %v2617 = vld [vmem:[%s4] sm:$0x1]
      %v2619 = vperm.slane %v2617, 0
      %v2626 = vunpack.c.l.b16 %v2612
      %v2627 = vunpack.c.l.b16 %v2613
      %v2628 = vunpack.c.l.b16 %v2614
      %v2629 = vunpack.c.l.b16 %v2615
      %v2630 = vunpack.c.l.b16 %v2616
      %v2631 = vpack.c.b16 %v2627, %v2626
      %v2632 = vpack.c.b16 %v2629, %v2628
      %v2633 = vpack.c.b16 %v2630, %v2630
      %vm2636 = vcmask 293888
      %v2638 = vsel %vm2636, %v2591, 0
      %v2641 = vsel %vm2636, %v2592, 0
      %v2644 = vsel %vm2636, %v2593, 0
      %v2647 = vsel %vm2636, %v2594, 0
      %v2650 = vsel %vm2636, %v2595, 0
      %v2653 = vsel %vm2636, %v2596, 0
      %v2656 = vsel %vm2636, %v2597, 0
      %v2659 = vsel %vm2636, %v2598, 0
      %v2662 = vsel %vm2636, %v2599, 0
      %v2665 = vsel %vm2636, %v2600, 0
      %v2668 = vsel %vm2636, %v2601, 0
      %v2671 = vsel %vm2636, %v2602, 0
      %v2674 = vsel %vm2636, %v2603, 0
      %v2677 = vsel %vm2636, %v2604, 0
      %v2680 = vsel %vm2636, %v2605, 0
      %v2683 = vsel %vm2636, %v2606, 0
      %v2686 = vsel %vm2636, %v2607, 0
      %v2689 = vsel %vm2636, %v2608, 0
      %v2692 = vsel %vm2636, %v2609, 0
      %v2695 = vsel %vm2636, %v2610, 0
      %v2698 = vsel %vm2636, %v2611, 0
      %v2701 = vsel %vm2054, %v2633, 0
      %2703 = vmatpush.bf16.msra.mxu0 0
      %2704 = vmatpush.bf16.msra.mxu0 0
      %2705 = vmatpush.bf16.msra.mxu0 0
      %2706 = vmatpush.bf16.msra.mxu0 0
      %2707 = vmatpush.bf16.msra.mxu0 0
      %2708 = vmatpush.bf16.msra.mxu0 %v2701
      %2709 = vmatpush.bf16.msra.mxu0 %v2632
      %2710 = vmatpush.bf16.msra.mxu0 %v2631
      %2711 = vmatmul.bf16.gmra.mxu0 %v2638
      %v2712 = vpop.f32.mrf.mxu0
      %v2713 = vadd.f32 %v2619, %v2712
      %v2714 = vpop.f32.mrf.mxu0
      %v2715 = vadd.f32 %v2619, %v2714
      %2716 = vmatmul.bf16.gmra.mxu0 %v2641
      %v2717 = vpop.f32.mrf.mxu0
      %v2718 = vadd.f32 %v2619, %v2717
      %v2719 = vpop.f32.mrf.mxu0
      %v2720 = vadd.f32 %v2619, %v2719
      %2721 = vmatmul.bf16.gmra.mxu0 %v2644
      %v2722 = vpop.f32.mrf.mxu0
      %v2723 = vadd.f32 %v2619, %v2722
      %v2724 = vpop.f32.mrf.mxu0
      %v2725 = vadd.f32 %v2619, %v2724
      %2726 = vmatmul.bf16.gmra.mxu0 %v2647
      %v2727 = vpop.f32.mrf.mxu0
      %v2728 = vadd.f32 %v2619, %v2727
      %v2729 = vpop.f32.mrf.mxu0
      %v2730 = vadd.f32 %v2619, %v2729
      %2731 = vmatmul.bf16.gmra.mxu0 %v2650
      %v2732 = vpop.f32.mrf.mxu0
      %v2733 = vadd.f32 %v2619, %v2732
      %v2734 = vpop.f32.mrf.mxu0
      %v2735 = vadd.f32 %v2619, %v2734
      %2736 = vmatmul.bf16.gmra.mxu0 %v2653
      %v2737 = vpop.f32.mrf.mxu0
      %v2738 = vadd.f32 %v2619, %v2737
      %v2739 = vpop.f32.mrf.mxu0
      %v2740 = vadd.f32 %v2619, %v2739
      %2741 = vmatmul.bf16.gmra.mxu0 %v2656
      %v2742 = vpop.f32.mrf.mxu0
      %v2743 = vadd.f32 %v2619, %v2742
      %v2744 = vpop.f32.mrf.mxu0
      %v2745 = vadd.f32 %v2619, %v2744
      %2746 = vmatmul.bf16.gmra.mxu0 %v2659
      %v2747 = vpop.f32.mrf.mxu0
      %v2748 = vadd.f32 %v2619, %v2747
      %v2749 = vpop.f32.mrf.mxu0
      %v2750 = vadd.f32 %v2619, %v2749
      %2751 = vmatmul.bf16.gmra.mxu0 %v2662
      %v2752 = vpop.f32.mrf.mxu0
      %v2753 = vadd.f32 %v2619, %v2752
      %v2754 = vpop.f32.mrf.mxu0
      %v2755 = vadd.f32 %v2619, %v2754
      %2756 = vmatmul.bf16.gmra.mxu0 %v2665
      %v2757 = vpop.f32.mrf.mxu0
      %v2758 = vadd.f32 %v2619, %v2757
      %v2759 = vpop.f32.mrf.mxu0
      %v2760 = vadd.f32 %v2619, %v2759
      %2761 = vmatmul.bf16.gmra.mxu0 %v2668
      %v2762 = vpop.f32.mrf.mxu0
      %v2763 = vadd.f32 %v2619, %v2762
      %v2764 = vpop.f32.mrf.mxu0
      %v2765 = vadd.f32 %v2619, %v2764
      %2766 = vmatmul.bf16.gmra.mxu0 %v2671
      %v2767 = vpop.f32.mrf.mxu0
      %v2768 = vadd.f32 %v2619, %v2767
      %v2769 = vpop.f32.mrf.mxu0
      %v2770 = vadd.f32 %v2619, %v2769
      %2771 = vmatmul.bf16.gmra.mxu0 %v2674
      %v2772 = vpop.f32.mrf.mxu0
      %v2773 = vadd.f32 %v2619, %v2772
      %v2774 = vpop.f32.mrf.mxu0
      %v2775 = vadd.f32 %v2619, %v2774
      %2776 = vmatmul.bf16.gmra.mxu0 %v2677
      %v2777 = vpop.f32.mrf.mxu0
      %v2778 = vadd.f32 %v2619, %v2777
      %v2779 = vpop.f32.mrf.mxu0
      %v2780 = vadd.f32 %v2619, %v2779
      %2781 = vmatmul.bf16.gmra.mxu0 %v2680
      %v2782 = vpop.f32.mrf.mxu0
      %v2783 = vadd.f32 %v2619, %v2782
      %v2784 = vpop.f32.mrf.mxu0
      %v2785 = vadd.f32 %v2619, %v2784
      %2786 = vmatmul.bf16.gmra.mxu0 %v2683
      %v2787 = vpop.f32.mrf.mxu0
      %v2788 = vadd.f32 %v2619, %v2787
      %v2789 = vpop.f32.mrf.mxu0
      %v2790 = vadd.f32 %v2619, %v2789
      %2791 = vmatmul.bf16.gmra.mxu0 %v2686
      %v2792 = vpop.f32.mrf.mxu0
      %v2793 = vadd.f32 %v2619, %v2792
      %v2794 = vpop.f32.mrf.mxu0
      %v2795 = vadd.f32 %v2619, %v2794
      %2796 = vmatmul.bf16.gmra.mxu0 %v2689
      %v2797 = vpop.f32.mrf.mxu0
      %v2798 = vadd.f32 %v2619, %v2797
      %v2799 = vpop.f32.mrf.mxu0
      %v2800 = vadd.f32 %v2619, %v2799
      %2801 = vmatmul.bf16.gmra.mxu0 %v2692
      %v2802 = vpop.f32.mrf.mxu0
      %v2803 = vadd.f32 %v2619, %v2802
      %v2804 = vpop.f32.mrf.mxu0
      %v2805 = vadd.f32 %v2619, %v2804
      %2806 = vmatmul.bf16.gmra.mxu0 %v2695
      %v2807 = vpop.f32.mrf.mxu0
      %v2808 = vadd.f32 %v2619, %v2807
      %v2809 = vpop.f32.mrf.mxu0
      %v2810 = vadd.f32 %v2619, %v2809
      %2811 = vmatmul.bf16.gmra.mxu0 %v2698
      %v2812 = vpop.f32.mrf.mxu0
      %v2813 = vadd.f32 %v2619, %v2812
      %v2814 = vpop.f32.mrf.mxu0
      %2815 = vdwg.mxu0
      %v2816 = vmax.f32 %v2713, 0.0
      %v2817 = vmax.f32 %v2715, 0.0
      %v2818 = vmax.f32 %v2718, 0.0
      %v2819 = vmax.f32 %v2720, 0.0
      %v2820 = vmax.f32 %v2723, 0.0
      %v2821 = vmax.f32 %v2725, 0.0
      %v2822 = vmax.f32 %v2728, 0.0
      %v2823 = vmax.f32 %v2730, 0.0
      %v2824 = vmax.f32 %v2733, 0.0
      %v2825 = vmax.f32 %v2735, 0.0
      %v2826 = vmax.f32 %v2738, 0.0
      %v2827 = vmax.f32 %v2740, 0.0
      %v2828 = vmax.f32 %v2743, 0.0
      %v2829 = vmax.f32 %v2745, 0.0
      %v2830 = vmax.f32 %v2748, 0.0
      %v2831 = vmax.f32 %v2750, 0.0
      %v2832 = vmax.f32 %v2753, 0.0
      %v2833 = vmax.f32 %v2755, 0.0
      %v2834 = vmax.f32 %v2758, 0.0
      %v2835 = vmax.f32 %v2760, 0.0
      %v2836 = vmax.f32 %v2763, 0.0
      %v2837 = vmax.f32 %v2765, 0.0
      %v2838 = vmax.f32 %v2768, 0.0
      %v2839 = vmax.f32 %v2770, 0.0
      %v2840 = vmax.f32 %v2773, 0.0
      %v2841 = vmax.f32 %v2775, 0.0
      %v2842 = vmax.f32 %v2778, 0.0
      %v2843 = vmax.f32 %v2780, 0.0
      %v2844 = vmax.f32 %v2783, 0.0
      %v2845 = vmax.f32 %v2785, 0.0
      %v2846 = vmax.f32 %v2788, 0.0
      %v2847 = vmax.f32 %v2790, 0.0
      %v2848 = vmax.f32 %v2793, 0.0
      %v2849 = vmax.f32 %v2795, 0.0
      %v2850 = vmax.f32 %v2798, 0.0
      %v2851 = vmax.f32 %v2800, 0.0
      %v2852 = vmax.f32 %v2803, 0.0
      %v2853 = vmax.f32 %v2805, 0.0
      %v2854 = vmax.f32 %v2808, 0.0
      %v2855 = vmax.f32 %v2810, 0.0
      %v2856 = vmax.f32 %v2813, 0.0
      %2858 = vset.pattern.permute.xlu0 0
      %2859 = vperm.xlu0 %2858, %v492
      %v2860 = vpop.permute.xlu0 %2859
      %2863 = vset.pattern.permute.xlu0 0
      %2864 = vperm.xlu0 %2863, %v493
      %v2865 = vpop.permute.xlu0 %2864
      %2868 = vset.pattern.permute.xlu0 0
      %2869 = vperm.xlu0 %2868, %v494
      %v2870 = vpop.permute.xlu0 %2869
      %2873 = vset.pattern.permute.xlu0 0
      %2874 = vperm.xlu0 %2873, %v495
      %v2875 = vpop.permute.xlu0 %2874
      %2878 = vset.pattern.permute.xlu0 0
      %2879 = vperm.xlu0 %2878, %v496
      %v2880 = vpop.permute.xlu0 %2879
      %2883 = vset.pattern.permute.xlu0 0
      %2884 = vperm.xlu0 %2883, %v497
      %v2885 = vpop.permute.xlu0 %2884
      %2888 = vset.pattern.permute.xlu0 0
      %2889 = vperm.xlu0 %2888, %v498
      %v2890 = vpop.permute.xlu0 %2889
      %2893 = vset.pattern.permute.xlu0 0
      %2894 = vperm.xlu0 %2893, %v499
      %v2895 = vpop.permute.xlu0 %2894
      %2898 = vset.pattern.permute.xlu0 0
      %2899 = vperm.xlu0 %2898, %v500
      %v2900 = vpop.permute.xlu0 %2899
      %2903 = vset.pattern.permute.xlu0 0
      %2904 = vperm.xlu0 %2903, %v501
      %v2905 = vpop.permute.xlu0 %2904
      %2908 = vset.pattern.permute.xlu0 0
      %2909 = vperm.xlu0 %2908, %v502
      %v2910 = vpop.permute.xlu0 %2909
      %2913 = vset.pattern.permute.xlu0 0
      %2914 = vperm.xlu0 %2913, %v503
      %v2915 = vpop.permute.xlu0 %2914
      %2918 = vset.pattern.permute.xlu0 0
      %2919 = vperm.xlu0 %2918, %v504
      %v2920 = vpop.permute.xlu0 %2919
      %2923 = vset.pattern.permute.xlu0 0
      %2924 = vperm.xlu0 %2923, %v505
      %v2925 = vpop.permute.xlu0 %2924
      %2928 = vset.pattern.permute.xlu0 0
      %2929 = vperm.xlu0 %2928, %v506
      %v2930 = vpop.permute.xlu0 %2929
      %2933 = vset.pattern.permute.xlu0 0
      %2934 = vperm.xlu0 %2933, %v507
      %v2935 = vpop.permute.xlu0 %2934
      %2938 = vset.pattern.permute.xlu0 0
      %2939 = vperm.xlu0 %2938, %v508
      %v2940 = vpop.permute.xlu0 %2939
      %2943 = vset.pattern.permute.xlu0 0
      %2944 = vperm.xlu0 %2943, %v509
      %v2945 = vpop.permute.xlu0 %2944
      %2948 = vset.pattern.permute.xlu0 0
      %2949 = vperm.xlu0 %2948, %v510
      %v2950 = vpop.permute.xlu0 %2949
      %2953 = vset.pattern.permute.xlu0 0
      %2954 = vperm.xlu0 %2953, %v511
      %v2955 = vpop.permute.xlu0 %2954
      %2958 = vset.pattern.permute.xlu0 0
      %2959 = vperm.xlu0 %2958, %v512
      %v2960 = vpop.permute.xlu0 %2959
      %2963 = vset.pattern.permute.xlu0 0
      %2964 = vperm.xlu0 %2963, %v513
      %v2965 = vpop.permute.xlu0 %2964
      %2968 = vset.pattern.permute.xlu0 0
      %2969 = vperm.xlu0 %2968, %v514
      %v2970 = vpop.permute.xlu0 %2969
      %2973 = vset.pattern.permute.xlu0 0
      %2974 = vperm.xlu0 %2973, %v515
      %v2975 = vpop.permute.xlu0 %2974
      %2978 = vset.pattern.permute.xlu0 0
      %2979 = vperm.xlu0 %2978, %v516
      %v2980 = vpop.permute.xlu0 %2979
      %2983 = vset.pattern.permute.xlu0 0
      %2984 = vperm.xlu0 %2983, %v517
      %v2985 = vpop.permute.xlu0 %2984
      %2988 = vset.pattern.permute.xlu0 0
      %2989 = vperm.xlu0 %2988, %v518
      %v2990 = vpop.permute.xlu0 %2989
      %2993 = vset.pattern.permute.xlu0 0
      %2994 = vperm.xlu0 %2993, %v519
      %v2995 = vpop.permute.xlu0 %2994
      %2998 = vset.pattern.permute.xlu0 0
      %2999 = vperm.xlu0 %2998, %v520
      %v3000 = vpop.permute.xlu0 %2999
      %3003 = vset.pattern.permute.xlu0 0
      %3004 = vperm.xlu0 %3003, %v521
      %v3005 = vpop.permute.xlu0 %3004
      %3008 = vset.pattern.permute.xlu0 0
      %3009 = vperm.xlu0 %3008, %v522
      %v3010 = vpop.permute.xlu0 %3009
      %3013 = vset.pattern.permute.xlu0 0
      %3014 = vperm.xlu0 %3013, %v523
      %v3015 = vpop.permute.xlu0 %3014
      %3018 = vset.pattern.permute.xlu0 0
      %3019 = vperm.xlu0 %3018, %v524
      %v3020 = vpop.permute.xlu0 %3019
      %3023 = vset.pattern.permute.xlu0 0
      %3024 = vperm.xlu0 %3023, %v525
      %v3025 = vpop.permute.xlu0 %3024
      %3028 = vset.pattern.permute.xlu0 0
      %3029 = vperm.xlu0 %3028, %v526
      %v3030 = vpop.permute.xlu0 %3029
      %3033 = vset.pattern.permute.xlu0 0
      %3034 = vperm.xlu0 %3033, %v527
      %v3035 = vpop.permute.xlu0 %3034
      %3038 = vset.pattern.permute.xlu0 0
      %3039 = vperm.xlu0 %3038, %v528
      %v3040 = vpop.permute.xlu0 %3039
      %3043 = vset.pattern.permute.xlu0 0
      %3044 = vperm.xlu0 %3043, %v529
      %v3045 = vpop.permute.xlu0 %3044
      %3048 = vset.pattern.permute.xlu0 0
      %3049 = vperm.xlu0 %3048, %v530
      %v3050 = vpop.permute.xlu0 %3049
      %3053 = vset.pattern.permute.xlu0 0
      %3054 = vperm.xlu0 %3053, %v531
      %v3055 = vpop.permute.xlu0 %3054
      %3058 = vset.pattern.permute.xlu0 0
      %3059 = vperm.xlu0 %3058, %v532
      %v3060 = vpop.permute.xlu0 %3059
      %v3062 = vmul.f32 %v2816, %v2860
      %v3063 = vmul.f32 %v2817, %v2865
      %v3064 = vmul.f32 %v2818, %v2870
      %v3065 = vmul.f32 %v2819, %v2875
      %v3066 = vmul.f32 %v2820, %v2880
      %v3067 = vmul.f32 %v2821, %v2885
      %v3068 = vmul.f32 %v2822, %v2890
      %v3069 = vmul.f32 %v2823, %v2895
      %v3070 = vmul.f32 %v2824, %v2900
      %v3071 = vmul.f32 %v2825, %v2905
      %v3072 = vmul.f32 %v2826, %v2910
      %v3073 = vmul.f32 %v2827, %v2915
      %v3074 = vmul.f32 %v2828, %v2920
      %v3075 = vmul.f32 %v2829, %v2925
      %v3076 = vmul.f32 %v2830, %v2930
      %v3077 = vmul.f32 %v2831, %v2935
      %v3078 = vmul.f32 %v2832, %v2940
      %v3079 = vmul.f32 %v2833, %v2945
      %v3080 = vmul.f32 %v2834, %v2950
      %v3081 = vmul.f32 %v2835, %v2955
      %v3082 = vmul.f32 %v2836, %v2960
      %v3083 = vmul.f32 %v2837, %v2965
      %v3084 = vmul.f32 %v2838, %v2970
      %v3085 = vmul.f32 %v2839, %v2975
      %v3086 = vmul.f32 %v2840, %v2980
      %v3087 = vmul.f32 %v2841, %v2985
      %v3088 = vmul.f32 %v2842, %v2990
      %v3089 = vmul.f32 %v2843, %v2995
      %v3090 = vmul.f32 %v2844, %v3000
      %v3091 = vmul.f32 %v2845, %v3005
      %v3092 = vmul.f32 %v2846, %v3010
      %v3093 = vmul.f32 %v2847, %v3015
      %v3094 = vmul.f32 %v2848, %v3020
      %v3095 = vmul.f32 %v2849, %v3025
      %v3096 = vmul.f32 %v2850, %v3030
      %v3097 = vmul.f32 %v2851, %v3035
      %v3098 = vmul.f32 %v2852, %v3040
      %v3099 = vmul.f32 %v2853, %v3045
      %v3100 = vmul.f32 %v2854, %v3050
      %v3101 = vmul.f32 %v2855, %v3055
      %v3102 = vmul.f32 %v2856, %v3060
      %v3144 = vrot.slane %v3062, 5
      %v3145 = vrot.slane %v3063, 5
      %v3146 = vsel %vm656, %v3144, %v3145
      %v3147 = vrot.slane %v3064, 5
      %v3148 = vsel %vm656, %v3145, %v3147
      %v3149 = vrot.slane %v3065, 5
      %v3150 = vsel %vm656, %v3147, %v3149
      %v3151 = vrot.slane %v3066, 5
      %v3152 = vsel %vm656, %v3149, %v3151
      %v3153 = vrot.slane %v3067, 5
      %v3154 = vsel %vm656, %v3151, %v3153
      %v3155 = vrot.slane %v3068, 5
      %v3156 = vsel %vm656, %v3153, %v3155
      %v3157 = vrot.slane %v3069, 5
      %v3158 = vsel %vm656, %v3155, %v3157
      %v3159 = vrot.slane %v3070, 5
      %v3160 = vsel %vm656, %v3157, %v3159
      %v3161 = vrot.slane %v3071, 5
      %v3162 = vsel %vm656, %v3159, %v3161
      %v3163 = vrot.slane %v3072, 5
      %v3164 = vsel %vm656, %v3161, %v3163
      %v3165 = vrot.slane %v3073, 5
      %v3166 = vsel %vm656, %v3163, %v3165
      %v3167 = vrot.slane %v3074, 5
      %v3168 = vsel %vm656, %v3165, %v3167
      %v3169 = vrot.slane %v3075, 5
      %v3170 = vsel %vm656, %v3167, %v3169
      %v3171 = vrot.slane %v3076, 5
      %v3172 = vsel %vm656, %v3169, %v3171
      %v3173 = vrot.slane %v3077, 5
      %v3174 = vsel %vm656, %v3171, %v3173
      %v3175 = vrot.slane %v3078, 5
      %v3176 = vsel %vm656, %v3173, %v3175
      %v3177 = vrot.slane %v3079, 5
      %v3178 = vsel %vm656, %v3175, %v3177
      %v3179 = vrot.slane %v3080, 5
      %v3180 = vsel %vm656, %v3177, %v3179
      %v3181 = vrot.slane %v3081, 5
      %v3182 = vsel %vm656, %v3179, %v3181
      %v3183 = vrot.slane %v3082, 5
      %v3184 = vsel %vm656, %v3181, %v3183
      %v3185 = vrot.slane %v3083, 5
      %v3186 = vsel %vm656, %v3183, %v3185
      %v3187 = vrot.slane %v3084, 5
      %v3188 = vsel %vm656, %v3185, %v3187
      %v3189 = vrot.slane %v3085, 5
      %v3190 = vsel %vm656, %v3187, %v3189
      %v3191 = vrot.slane %v3086, 5
      %v3192 = vsel %vm656, %v3189, %v3191
      %v3193 = vrot.slane %v3087, 5
      %v3194 = vsel %vm656, %v3191, %v3193
      %v3195 = vrot.slane %v3088, 5
      %v3196 = vsel %vm656, %v3193, %v3195
      %v3197 = vrot.slane %v3089, 5
      %v3198 = vsel %vm656, %v3195, %v3197
      %v3199 = vrot.slane %v3090, 5
      %v3200 = vsel %vm656, %v3197, %v3199
      %v3201 = vrot.slane %v3091, 5
      %v3202 = vsel %vm656, %v3199, %v3201
      %v3203 = vrot.slane %v3092, 5
      %v3204 = vsel %vm656, %v3201, %v3203
      %v3205 = vrot.slane %v3093, 5
      %v3206 = vsel %vm656, %v3203, %v3205
      %v3207 = vrot.slane %v3094, 5
      %v3208 = vsel %vm656, %v3205, %v3207
      %v3209 = vrot.slane %v3095, 5
      %v3210 = vsel %vm656, %v3207, %v3209
      %v3211 = vrot.slane %v3096, 5
      %v3212 = vsel %vm656, %v3209, %v3211
      %v3213 = vrot.slane %v3097, 5
      %v3214 = vsel %vm656, %v3211, %v3213
      %v3215 = vrot.slane %v3098, 5
      %v3216 = vsel %vm656, %v3213, %v3215
      %v3217 = vrot.slane %v3099, 5
      %v3218 = vsel %vm656, %v3215, %v3217
      %v3219 = vrot.slane %v3100, 5
      %v3220 = vsel %vm656, %v3217, %v3219
      %v3221 = vrot.slane %v3101, 5
      %v3222 = vsel %vm656, %v3219, %v3221
      %v3223 = vrot.slane %v3102, 5
      %v3224 = vsel %vm656, %v3221, %v3223
      %v3265 = vsel %vm656, 0.0, %v3144
      %v3266 = vsel %vm779, %v3224, 0.0
      %v3268 = vrot.slane %v3265, 1
      %v3269 = vsel %vm779, %v783, %v3268
      %v3270 = vrot.slane %v3146, 1
      %v3271 = vsel %vm779, %v3268, %v3270
      %v3272 = vrot.slane %v3148, 1
      %v3273 = vsel %vm779, %v3270, %v3272
      %v3274 = vrot.slane %v3150, 1
      %v3275 = vsel %vm779, %v3272, %v3274
      %v3276 = vrot.slane %v3152, 1
      %v3277 = vsel %vm779, %v3274, %v3276
      %v3278 = vrot.slane %v3154, 1
      %v3279 = vsel %vm779, %v3276, %v3278
      %v3280 = vrot.slane %v3156, 1
      %v3281 = vsel %vm779, %v3278, %v3280
      %v3282 = vrot.slane %v3158, 1
      %v3283 = vsel %vm779, %v3280, %v3282
      %v3284 = vrot.slane %v3160, 1
      %v3285 = vsel %vm779, %v3282, %v3284
      %v3286 = vrot.slane %v3162, 1
      %v3287 = vsel %vm779, %v3284, %v3286
      %v3288 = vrot.slane %v3164, 1
      %v3289 = vsel %vm779, %v3286, %v3288
      %v3290 = vrot.slane %v3166, 1
      %v3291 = vsel %vm779, %v3288, %v3290
      %v3292 = vrot.slane %v3168, 1
      %v3293 = vsel %vm779, %v3290, %v3292
      %v3294 = vrot.slane %v3170, 1
      %v3295 = vsel %vm779, %v3292, %v3294
      %v3296 = vrot.slane %v3172, 1
      %v3297 = vsel %vm779, %v3294, %v3296
      %v3298 = vrot.slane %v3174, 1
      %v3299 = vsel %vm779, %v3296, %v3298
      %v3300 = vrot.slane %v3176, 1
      %v3301 = vsel %vm779, %v3298, %v3300
      %v3302 = vrot.slane %v3178, 1
      %v3303 = vsel %vm779, %v3300, %v3302
      %v3304 = vrot.slane %v3180, 1
      %v3305 = vsel %vm779, %v3302, %v3304
      %v3306 = vrot.slane %v3182, 1
      %v3307 = vsel %vm779, %v3304, %v3306
      %v3308 = vrot.slane %v3184, 1
      %v3309 = vsel %vm779, %v3306, %v3308
      %v3310 = vrot.slane %v3186, 1
      %v3311 = vsel %vm779, %v3308, %v3310
      %v3312 = vrot.slane %v3188, 1
      %v3313 = vsel %vm779, %v3310, %v3312
      %v3314 = vrot.slane %v3190, 1
      %v3315 = vsel %vm779, %v3312, %v3314
      %v3316 = vrot.slane %v3192, 1
      %v3317 = vsel %vm779, %v3314, %v3316
      %v3318 = vrot.slane %v3194, 1
      %v3319 = vsel %vm779, %v3316, %v3318
      %v3320 = vrot.slane %v3196, 1
      %v3321 = vsel %vm779, %v3318, %v3320
      %v3322 = vrot.slane %v3198, 1
      %v3323 = vsel %vm779, %v3320, %v3322
      %v3324 = vrot.slane %v3200, 1
      %v3325 = vsel %vm779, %v3322, %v3324
      %v3326 = vrot.slane %v3202, 1
      %v3327 = vsel %vm779, %v3324, %v3326
      %v3328 = vrot.slane %v3204, 1
      %v3329 = vsel %vm779, %v3326, %v3328
      %v3330 = vrot.slane %v3206, 1
      %v3331 = vsel %vm779, %v3328, %v3330
      %v3332 = vrot.slane %v3208, 1
      %v3333 = vsel %vm779, %v3330, %v3332
      %v3334 = vrot.slane %v3210, 1
      %v3335 = vsel %vm779, %v3332, %v3334
      %v3336 = vrot.slane %v3212, 1
      %v3337 = vsel %vm779, %v3334, %v3336
      %v3338 = vrot.slane %v3214, 1
      %v3339 = vsel %vm779, %v3336, %v3338
      %v3340 = vrot.slane %v3216, 1
      %v3341 = vsel %vm779, %v3338, %v3340
      %v3342 = vrot.slane %v3218, 1
      %v3343 = vsel %vm779, %v3340, %v3342
      %v3344 = vrot.slane %v3220, 1
      %v3345 = vsel %vm779, %v3342, %v3344
      %3346 = vrot.lane.b32.xlu0 %v784, 16
      %v3347 = vpop.permute.xlu0 %3346
      %3348 = vrot.lane.b32.xlu0 %v3269, 16
      %v3349 = vpop.permute.xlu0 %3348
      %3350 = vrot.lane.b32.xlu0 %v3271, 16
      %v3351 = vpop.permute.xlu0 %3350
      %3352 = vrot.lane.b32.xlu0 %v3273, 16
      %v3353 = vpop.permute.xlu0 %3352
      %3354 = vrot.lane.b32.xlu0 %v3275, 16
      %v3355 = vpop.permute.xlu0 %3354
      %3356 = vrot.lane.b32.xlu0 %v3277, 16
      %v3357 = vpop.permute.xlu0 %3356
      %3358 = vrot.lane.b32.xlu0 %v3279, 16
      %v3359 = vpop.permute.xlu0 %3358
      %3360 = vrot.lane.b32.xlu0 %v3281, 16
      %v3361 = vpop.permute.xlu0 %3360
      %3362 = vrot.lane.b32.xlu0 %v3283, 16
      %v3363 = vpop.permute.xlu0 %3362
      %3364 = vrot.lane.b32.xlu0 %v3285, 16
      %v3365 = vpop.permute.xlu0 %3364
      %3366 = vrot.lane.b32.xlu0 %v3287, 16
      %v3367 = vpop.permute.xlu0 %3366
      %3368 = vrot.lane.b32.xlu0 %v3289, 16
      %v3369 = vpop.permute.xlu0 %3368
      %3370 = vrot.lane.b32.xlu0 %v3291, 16
      %v3371 = vpop.permute.xlu0 %3370
      %3372 = vrot.lane.b32.xlu0 %v3293, 16
      %v3373 = vpop.permute.xlu0 %3372
      %3374 = vrot.lane.b32.xlu0 %v3295, 16
      %v3375 = vpop.permute.xlu0 %3374
      %3376 = vrot.lane.b32.xlu0 %v3297, 16
      %v3377 = vpop.permute.xlu0 %3376
      %3378 = vrot.lane.b32.xlu0 %v3299, 16
      %v3379 = vpop.permute.xlu0 %3378
      %3380 = vrot.lane.b32.xlu0 %v3301, 16
      %v3381 = vpop.permute.xlu0 %3380
      %3382 = vrot.lane.b32.xlu0 %v3303, 16
      %v3383 = vpop.permute.xlu0 %3382
      %3384 = vrot.lane.b32.xlu0 %v3305, 16
      %v3385 = vpop.permute.xlu0 %3384
      %3386 = vrot.lane.b32.xlu0 %v3307, 16
      %v3387 = vpop.permute.xlu0 %3386
      %3388 = vrot.lane.b32.xlu0 %v3309, 16
      %v3389 = vpop.permute.xlu0 %3388
      %3390 = vrot.lane.b32.xlu0 %v3311, 16
      %v3391 = vpop.permute.xlu0 %3390
      %3392 = vrot.lane.b32.xlu0 %v3313, 16
      %v3393 = vpop.permute.xlu0 %3392
      %3394 = vrot.lane.b32.xlu0 %v3315, 16
      %v3395 = vpop.permute.xlu0 %3394
      %3396 = vrot.lane.b32.xlu0 %v3317, 16
      %v3397 = vpop.permute.xlu0 %3396
      %3398 = vrot.lane.b32.xlu0 %v3319, 16
      %v3399 = vpop.permute.xlu0 %3398
      %3400 = vrot.lane.b32.xlu0 %v3321, 16
      %v3401 = vpop.permute.xlu0 %3400
      %3402 = vrot.lane.b32.xlu0 %v3323, 16
      %v3403 = vpop.permute.xlu0 %3402
      %3404 = vrot.lane.b32.xlu0 %v3325, 16
      %v3405 = vpop.permute.xlu0 %3404
      %3406 = vrot.lane.b32.xlu0 %v3327, 16
      %v3407 = vpop.permute.xlu0 %3406
      %3408 = vrot.lane.b32.xlu0 %v3329, 16
      %v3409 = vpop.permute.xlu0 %3408
      %3410 = vrot.lane.b32.xlu0 %v3331, 16
      %v3411 = vpop.permute.xlu0 %3410
      %3412 = vrot.lane.b32.xlu0 %v3333, 16
      %v3413 = vpop.permute.xlu0 %3412
      %3414 = vrot.lane.b32.xlu0 %v3335, 16
      %v3415 = vpop.permute.xlu0 %3414
      %3416 = vrot.lane.b32.xlu0 %v3337, 16
      %v3417 = vpop.permute.xlu0 %3416
      %3418 = vrot.lane.b32.xlu0 %v3339, 16
      %v3419 = vpop.permute.xlu0 %3418
      %3420 = vrot.lane.b32.xlu0 %v3341, 16
      %v3421 = vpop.permute.xlu0 %3420
      %3422 = vrot.lane.b32.xlu0 %v3343, 16
      %v3423 = vpop.permute.xlu0 %3422
      %3424 = vrot.lane.b32.xlu0 %v3345, 16
      %v3425 = vpop.permute.xlu0 %3424
      %3426 = vrot.lane.b32.xlu0 %v3344, 16
      %v3427 = vpop.permute.xlu0 %3426
      %v3469 = vrot.slane %v3265, 2
      %v3470 = vsel %vm986, %v987, %v3469
      %v3471 = vrot.slane %v3146, 2
      %v3472 = vsel %vm986, %v3469, %v3471
      %v3473 = vrot.slane %v3148, 2
      %v3474 = vsel %vm986, %v3471, %v3473
      %v3475 = vrot.slane %v3150, 2
      %v3476 = vsel %vm986, %v3473, %v3475
      %v3477 = vrot.slane %v3152, 2
      %v3478 = vsel %vm986, %v3475, %v3477
      %v3479 = vrot.slane %v3154, 2
      %v3480 = vsel %vm986, %v3477, %v3479
      %v3481 = vrot.slane %v3156, 2
      %v3482 = vsel %vm986, %v3479, %v3481
      %v3483 = vrot.slane %v3158, 2
      %v3484 = vsel %vm986, %v3481, %v3483
      %v3485 = vrot.slane %v3160, 2
      %v3486 = vsel %vm986, %v3483, %v3485
      %v3487 = vrot.slane %v3162, 2
      %v3488 = vsel %vm986, %v3485, %v3487
      %v3489 = vrot.slane %v3164, 2
      %v3490 = vsel %vm986, %v3487, %v3489
      %v3491 = vrot.slane %v3166, 2
      %v3492 = vsel %vm986, %v3489, %v3491
      %v3493 = vrot.slane %v3168, 2
      %v3494 = vsel %vm986, %v3491, %v3493
      %v3495 = vrot.slane %v3170, 2
      %v3496 = vsel %vm986, %v3493, %v3495
      %v3497 = vrot.slane %v3172, 2
      %v3498 = vsel %vm986, %v3495, %v3497
      %v3499 = vrot.slane %v3174, 2
      %v3500 = vsel %vm986, %v3497, %v3499
      %v3501 = vrot.slane %v3176, 2
      %v3502 = vsel %vm986, %v3499, %v3501
      %v3503 = vrot.slane %v3178, 2
      %v3504 = vsel %vm986, %v3501, %v3503
      %v3505 = vrot.slane %v3180, 2
      %v3506 = vsel %vm986, %v3503, %v3505
      %v3507 = vrot.slane %v3182, 2
      %v3508 = vsel %vm986, %v3505, %v3507
      %v3509 = vrot.slane %v3184, 2
      %v3510 = vsel %vm986, %v3507, %v3509
      %v3511 = vrot.slane %v3186, 2
      %v3512 = vsel %vm986, %v3509, %v3511
      %v3513 = vrot.slane %v3188, 2
      %v3514 = vsel %vm986, %v3511, %v3513
      %v3515 = vrot.slane %v3190, 2
      %v3516 = vsel %vm986, %v3513, %v3515
      %v3517 = vrot.slane %v3192, 2
      %v3518 = vsel %vm986, %v3515, %v3517
      %v3519 = vrot.slane %v3194, 2
      %v3520 = vsel %vm986, %v3517, %v3519
      %v3521 = vrot.slane %v3196, 2
      %v3522 = vsel %vm986, %v3519, %v3521
      %v3523 = vrot.slane %v3198, 2
      %v3524 = vsel %vm986, %v3521, %v3523
      %v3525 = vrot.slane %v3200, 2
      %v3526 = vsel %vm986, %v3523, %v3525
      %v3527 = vrot.slane %v3202, 2
      %v3528 = vsel %vm986, %v3525, %v3527
      %v3529 = vrot.slane %v3204, 2
      %v3530 = vsel %vm986, %v3527, %v3529
      %v3531 = vrot.slane %v3206, 2
      %v3532 = vsel %vm986, %v3529, %v3531
      %v3533 = vrot.slane %v3208, 2
      %v3534 = vsel %vm986, %v3531, %v3533
      %v3535 = vrot.slane %v3210, 2
      %v3536 = vsel %vm986, %v3533, %v3535
      %v3537 = vrot.slane %v3212, 2
      %v3538 = vsel %vm986, %v3535, %v3537
      %v3539 = vrot.slane %v3214, 2
      %v3540 = vsel %vm986, %v3537, %v3539
      %v3541 = vrot.slane %v3216, 2
      %v3542 = vsel %vm986, %v3539, %v3541
      %v3543 = vrot.slane %v3218, 2
      %v3544 = vsel %vm986, %v3541, %v3543
      %v3545 = vrot.slane %v3220, 2
      %v3546 = vsel %vm986, %v3543, %v3545
      %3547 = vrot.lane.b32.xlu0 %v988, 32
      %v3548 = vpop.permute.xlu0 %3547
      %3549 = vrot.lane.b32.xlu0 %v3470, 32
      %v3550 = vpop.permute.xlu0 %3549
      %3551 = vrot.lane.b32.xlu0 %v3472, 32
      %v3552 = vpop.permute.xlu0 %3551
      %3553 = vrot.lane.b32.xlu0 %v3474, 32
      %v3554 = vpop.permute.xlu0 %3553
      %3555 = vrot.lane.b32.xlu0 %v3476, 32
      %v3556 = vpop.permute.xlu0 %3555
      %3557 = vrot.lane.b32.xlu0 %v3478, 32
      %v3558 = vpop.permute.xlu0 %3557
      %3559 = vrot.lane.b32.xlu0 %v3480, 32
      %v3560 = vpop.permute.xlu0 %3559
      %3561 = vrot.lane.b32.xlu0 %v3482, 32
      %v3562 = vpop.permute.xlu0 %3561
      %3563 = vrot.lane.b32.xlu0 %v3484, 32
      %v3564 = vpop.permute.xlu0 %3563
      %3565 = vrot.lane.b32.xlu0 %v3486, 32
      %v3566 = vpop.permute.xlu0 %3565
      %3567 = vrot.lane.b32.xlu0 %v3488, 32
      %v3568 = vpop.permute.xlu0 %3567
      %3569 = vrot.lane.b32.xlu0 %v3490, 32
      %v3570 = vpop.permute.xlu0 %3569
      %3571 = vrot.lane.b32.xlu0 %v3492, 32
      %v3572 = vpop.permute.xlu0 %3571
      %3573 = vrot.lane.b32.xlu0 %v3494, 32
      %v3574 = vpop.permute.xlu0 %3573
      %3575 = vrot.lane.b32.xlu0 %v3496, 32
      %v3576 = vpop.permute.xlu0 %3575
      %3577 = vrot.lane.b32.xlu0 %v3498, 32
      %v3578 = vpop.permute.xlu0 %3577
      %3579 = vrot.lane.b32.xlu0 %v3500, 32
      %v3580 = vpop.permute.xlu0 %3579
      %3581 = vrot.lane.b32.xlu0 %v3502, 32
      %v3582 = vpop.permute.xlu0 %3581
      %3583 = vrot.lane.b32.xlu0 %v3504, 32
      %v3584 = vpop.permute.xlu0 %3583
      %3585 = vrot.lane.b32.xlu0 %v3506, 32
      %v3586 = vpop.permute.xlu0 %3585
      %3587 = vrot.lane.b32.xlu0 %v3508, 32
      %v3588 = vpop.permute.xlu0 %3587
      %3589 = vrot.lane.b32.xlu0 %v3510, 32
      %v3590 = vpop.permute.xlu0 %3589
      %3591 = vrot.lane.b32.xlu0 %v3512, 32
      %v3592 = vpop.permute.xlu0 %3591
      %3593 = vrot.lane.b32.xlu0 %v3514, 32
      %v3594 = vpop.permute.xlu0 %3593
      %3595 = vrot.lane.b32.xlu0 %v3516, 32
      %v3596 = vpop.permute.xlu0 %3595
      %3597 = vrot.lane.b32.xlu0 %v3518, 32
      %v3598 = vpop.permute.xlu0 %3597
      %3599 = vrot.lane.b32.xlu0 %v3520, 32
      %v3600 = vpop.permute.xlu0 %3599
      %3601 = vrot.lane.b32.xlu0 %v3522, 32
      %v3602 = vpop.permute.xlu0 %3601
      %3603 = vrot.lane.b32.xlu0 %v3524, 32
      %v3604 = vpop.permute.xlu0 %3603
      %3605 = vrot.lane.b32.xlu0 %v3526, 32
      %v3606 = vpop.permute.xlu0 %3605
      %3607 = vrot.lane.b32.xlu0 %v3528, 32
      %v3608 = vpop.permute.xlu0 %3607
      %3609 = vrot.lane.b32.xlu0 %v3530, 32
      %v3610 = vpop.permute.xlu0 %3609
      %3611 = vrot.lane.b32.xlu0 %v3532, 32
      %v3612 = vpop.permute.xlu0 %3611
      %3613 = vrot.lane.b32.xlu0 %v3534, 32
      %v3614 = vpop.permute.xlu0 %3613
      %3615 = vrot.lane.b32.xlu0 %v3536, 32
      %v3616 = vpop.permute.xlu0 %3615
      %3617 = vrot.lane.b32.xlu0 %v3538, 32
      %v3618 = vpop.permute.xlu0 %3617
      %3619 = vrot.lane.b32.xlu0 %v3540, 32
      %v3620 = vpop.permute.xlu0 %3619
      %3621 = vrot.lane.b32.xlu0 %v3542, 32
      %v3622 = vpop.permute.xlu0 %3621
      %3623 = vrot.lane.b32.xlu0 %v3544, 32
      %v3624 = vpop.permute.xlu0 %3623
      %3625 = vrot.lane.b32.xlu0 %v3546, 32
      %v3626 = vpop.permute.xlu0 %3625
      %3627 = vrot.lane.b32.xlu0 %v3545, 32
      %v3628 = vpop.permute.xlu0 %3627
      %v3671 = vrot.slane %v3222, 2
      %v3672 = vsel %vm986, %v3545, %v3671
      %v3673 = vrot.slane %v3266, 2
      %v3674 = vsel %vm986, %v3671, %v3673
      %3675 = vrot.lane.b32.xlu0 %v3472, 48
      %v3676 = vpop.permute.xlu0 %3675
      %3677 = vrot.lane.b32.xlu0 %v3474, 48
      %v3678 = vpop.permute.xlu0 %3677
      %3679 = vrot.lane.b32.xlu0 %v3476, 48
      %v3680 = vpop.permute.xlu0 %3679
      %3681 = vrot.lane.b32.xlu0 %v3478, 48
      %v3682 = vpop.permute.xlu0 %3681
      %3683 = vrot.lane.b32.xlu0 %v3480, 48
      %v3684 = vpop.permute.xlu0 %3683
      %3685 = vrot.lane.b32.xlu0 %v3482, 48
      %v3686 = vpop.permute.xlu0 %3685
      %3687 = vrot.lane.b32.xlu0 %v3484, 48
      %v3688 = vpop.permute.xlu0 %3687
      %3689 = vrot.lane.b32.xlu0 %v3486, 48
      %v3690 = vpop.permute.xlu0 %3689
      %3691 = vrot.lane.b32.xlu0 %v3488, 48
      %v3692 = vpop.permute.xlu0 %3691
      %3693 = vrot.lane.b32.xlu0 %v3490, 48
      %v3694 = vpop.permute.xlu0 %3693
      %3695 = vrot.lane.b32.xlu0 %v3492, 48
      %v3696 = vpop.permute.xlu0 %3695
      %3697 = vrot.lane.b32.xlu0 %v3494, 48
      %v3698 = vpop.permute.xlu0 %3697
      %3699 = vrot.lane.b32.xlu0 %v3496, 48
      %v3700 = vpop.permute.xlu0 %3699
      %3701 = vrot.lane.b32.xlu0 %v3498, 48
      %v3702 = vpop.permute.xlu0 %3701
      %3703 = vrot.lane.b32.xlu0 %v3500, 48
      %v3704 = vpop.permute.xlu0 %3703
      %3705 = vrot.lane.b32.xlu0 %v3502, 48
      %v3706 = vpop.permute.xlu0 %3705
      %3707 = vrot.lane.b32.xlu0 %v3504, 48
      %v3708 = vpop.permute.xlu0 %3707
      %3709 = vrot.lane.b32.xlu0 %v3506, 48
      %v3710 = vpop.permute.xlu0 %3709
      %3711 = vrot.lane.b32.xlu0 %v3508, 48
      %v3712 = vpop.permute.xlu0 %3711
      %3713 = vrot.lane.b32.xlu0 %v3510, 48
      %v3714 = vpop.permute.xlu0 %3713
      %3715 = vrot.lane.b32.xlu0 %v3512, 48
      %v3716 = vpop.permute.xlu0 %3715
      %3717 = vrot.lane.b32.xlu0 %v3514, 48
      %v3718 = vpop.permute.xlu0 %3717
      %3719 = vrot.lane.b32.xlu0 %v3516, 48
      %v3720 = vpop.permute.xlu0 %3719
      %3721 = vrot.lane.b32.xlu0 %v3518, 48
      %v3722 = vpop.permute.xlu0 %3721
      %3723 = vrot.lane.b32.xlu0 %v3520, 48
      %v3724 = vpop.permute.xlu0 %3723
      %3725 = vrot.lane.b32.xlu0 %v3522, 48
      %v3726 = vpop.permute.xlu0 %3725
      %3727 = vrot.lane.b32.xlu0 %v3524, 48
      %v3728 = vpop.permute.xlu0 %3727
      %3729 = vrot.lane.b32.xlu0 %v3526, 48
      %v3730 = vpop.permute.xlu0 %3729
      %3731 = vrot.lane.b32.xlu0 %v3528, 48
      %v3732 = vpop.permute.xlu0 %3731
      %3733 = vrot.lane.b32.xlu0 %v3530, 48
      %v3734 = vpop.permute.xlu0 %3733
      %3735 = vrot.lane.b32.xlu0 %v3532, 48
      %v3736 = vpop.permute.xlu0 %3735
      %3737 = vrot.lane.b32.xlu0 %v3534, 48
      %v3738 = vpop.permute.xlu0 %3737
      %3739 = vrot.lane.b32.xlu0 %v3536, 48
      %v3740 = vpop.permute.xlu0 %3739
      %3741 = vrot.lane.b32.xlu0 %v3538, 48
      %v3742 = vpop.permute.xlu0 %3741
      %3743 = vrot.lane.b32.xlu0 %v3540, 48
      %v3744 = vpop.permute.xlu0 %3743
      %3745 = vrot.lane.b32.xlu0 %v3542, 48
      %v3746 = vpop.permute.xlu0 %3745
      %3747 = vrot.lane.b32.xlu0 %v3544, 48
      %v3748 = vpop.permute.xlu0 %3747
      %3749 = vrot.lane.b32.xlu0 %v3546, 48
      %v3750 = vpop.permute.xlu0 %3749
      %3751 = vrot.lane.b32.xlu0 %v3672, 48
      %v3752 = vpop.permute.xlu0 %3751
      %3753 = vrot.lane.b32.xlu0 %v3674, 48
      %v3754 = vpop.permute.xlu0 %3753
      %3755 = vrot.lane.b32.xlu0 %v3673, 48
      %v3756 = vpop.permute.xlu0 %3755
      %v3798 = vrot.slane %v3265, 3
      %v3799 = vrot.slane %v3146, 3
      %v3800 = vsel %vm1318, %v3798, %v3799
      %v3801 = vrot.slane %v3148, 3
      %v3802 = vsel %vm1318, %v3799, %v3801
      %v3803 = vrot.slane %v3150, 3
      %v3804 = vsel %vm1318, %v3801, %v3803
      %v3805 = vrot.slane %v3152, 3
      %v3806 = vsel %vm1318, %v3803, %v3805
      %v3807 = vrot.slane %v3154, 3
      %v3808 = vsel %vm1318, %v3805, %v3807
      %v3809 = vrot.slane %v3156, 3
      %v3810 = vsel %vm1318, %v3807, %v3809
      %v3811 = vrot.slane %v3158, 3
      %v3812 = vsel %vm1318, %v3809, %v3811
      %v3813 = vrot.slane %v3160, 3
      %v3814 = vsel %vm1318, %v3811, %v3813
      %v3815 = vrot.slane %v3162, 3
      %v3816 = vsel %vm1318, %v3813, %v3815
      %v3817 = vrot.slane %v3164, 3
      %v3818 = vsel %vm1318, %v3815, %v3817
      %v3819 = vrot.slane %v3166, 3
      %v3820 = vsel %vm1318, %v3817, %v3819
      %v3821 = vrot.slane %v3168, 3
      %v3822 = vsel %vm1318, %v3819, %v3821
      %v3823 = vrot.slane %v3170, 3
      %v3824 = vsel %vm1318, %v3821, %v3823
      %v3825 = vrot.slane %v3172, 3
      %v3826 = vsel %vm1318, %v3823, %v3825
      %v3827 = vrot.slane %v3174, 3
      %v3828 = vsel %vm1318, %v3825, %v3827
      %v3829 = vrot.slane %v3176, 3
      %v3830 = vsel %vm1318, %v3827, %v3829
      %v3831 = vrot.slane %v3178, 3
      %v3832 = vsel %vm1318, %v3829, %v3831
      %v3833 = vrot.slane %v3180, 3
      %v3834 = vsel %vm1318, %v3831, %v3833
      %v3835 = vrot.slane %v3182, 3
      %v3836 = vsel %vm1318, %v3833, %v3835
      %v3837 = vrot.slane %v3184, 3
      %v3838 = vsel %vm1318, %v3835, %v3837
      %v3839 = vrot.slane %v3186, 3
      %v3840 = vsel %vm1318, %v3837, %v3839
      %v3841 = vrot.slane %v3188, 3
      %v3842 = vsel %vm1318, %v3839, %v3841
      %v3843 = vrot.slane %v3190, 3
      %v3844 = vsel %vm1318, %v3841, %v3843
      %v3845 = vrot.slane %v3192, 3
      %v3846 = vsel %vm1318, %v3843, %v3845
      %v3847 = vrot.slane %v3194, 3
      %v3848 = vsel %vm1318, %v3845, %v3847
      %v3849 = vrot.slane %v3196, 3
      %v3850 = vsel %vm1318, %v3847, %v3849
      %v3851 = vrot.slane %v3198, 3
      %v3852 = vsel %vm1318, %v3849, %v3851
      %v3853 = vrot.slane %v3200, 3
      %v3854 = vsel %vm1318, %v3851, %v3853
      %v3855 = vrot.slane %v3202, 3
      %v3856 = vsel %vm1318, %v3853, %v3855
      %v3857 = vrot.slane %v3204, 3
      %v3858 = vsel %vm1318, %v3855, %v3857
      %v3859 = vrot.slane %v3206, 3
      %v3860 = vsel %vm1318, %v3857, %v3859
      %v3861 = vrot.slane %v3208, 3
      %v3862 = vsel %vm1318, %v3859, %v3861
      %v3863 = vrot.slane %v3210, 3
      %v3864 = vsel %vm1318, %v3861, %v3863
      %v3865 = vrot.slane %v3212, 3
      %v3866 = vsel %vm1318, %v3863, %v3865
      %v3867 = vrot.slane %v3214, 3
      %v3868 = vsel %vm1318, %v3865, %v3867
      %v3869 = vrot.slane %v3216, 3
      %v3870 = vsel %vm1318, %v3867, %v3869
      %v3871 = vrot.slane %v3218, 3
      %v3872 = vsel %vm1318, %v3869, %v3871
      %v3873 = vrot.slane %v3220, 3
      %v3874 = vsel %vm1318, %v3871, %v3873
      %v3875 = vrot.slane %v3222, 3
      %v3876 = vsel %vm1318, %v3873, %v3875
      %v3877 = vrot.slane %v3266, 3
      %v3878 = vsel %vm1318, %v3875, %v3877
      %3879 = vrot.lane.b32.xlu0 %v3800, 64
      %v3880 = vpop.permute.xlu0 %3879
      %3881 = vrot.lane.b32.xlu0 %v3802, 64
      %v3882 = vpop.permute.xlu0 %3881
      %3883 = vrot.lane.b32.xlu0 %v3804, 64
      %v3884 = vpop.permute.xlu0 %3883
      %3885 = vrot.lane.b32.xlu0 %v3806, 64
      %v3886 = vpop.permute.xlu0 %3885
      %3887 = vrot.lane.b32.xlu0 %v3808, 64
      %v3888 = vpop.permute.xlu0 %3887
      %3889 = vrot.lane.b32.xlu0 %v3810, 64
      %v3890 = vpop.permute.xlu0 %3889
      %3891 = vrot.lane.b32.xlu0 %v3812, 64
      %v3892 = vpop.permute.xlu0 %3891
      %3893 = vrot.lane.b32.xlu0 %v3814, 64
      %v3894 = vpop.permute.xlu0 %3893
      %3895 = vrot.lane.b32.xlu0 %v3816, 64
      %v3896 = vpop.permute.xlu0 %3895
      %3897 = vrot.lane.b32.xlu0 %v3818, 64
      %v3898 = vpop.permute.xlu0 %3897
      %3899 = vrot.lane.b32.xlu0 %v3820, 64
      %v3900 = vpop.permute.xlu0 %3899
      %3901 = vrot.lane.b32.xlu0 %v3822, 64
      %v3902 = vpop.permute.xlu0 %3901
      %3903 = vrot.lane.b32.xlu0 %v3824, 64
      %v3904 = vpop.permute.xlu0 %3903
      %3905 = vrot.lane.b32.xlu0 %v3826, 64
      %v3906 = vpop.permute.xlu0 %3905
      %3907 = vrot.lane.b32.xlu0 %v3828, 64
      %v3908 = vpop.permute.xlu0 %3907
      %3909 = vrot.lane.b32.xlu0 %v3830, 64
      %v3910 = vpop.permute.xlu0 %3909
      %3911 = vrot.lane.b32.xlu0 %v3832, 64
      %v3912 = vpop.permute.xlu0 %3911
      %3913 = vrot.lane.b32.xlu0 %v3834, 64
      %v3914 = vpop.permute.xlu0 %3913
      %3915 = vrot.lane.b32.xlu0 %v3836, 64
      %v3916 = vpop.permute.xlu0 %3915
      %3917 = vrot.lane.b32.xlu0 %v3838, 64
      %v3918 = vpop.permute.xlu0 %3917
      %3919 = vrot.lane.b32.xlu0 %v3840, 64
      %v3920 = vpop.permute.xlu0 %3919
      %3921 = vrot.lane.b32.xlu0 %v3842, 64
      %v3922 = vpop.permute.xlu0 %3921
      %3923 = vrot.lane.b32.xlu0 %v3844, 64
      %v3924 = vpop.permute.xlu0 %3923
      %3925 = vrot.lane.b32.xlu0 %v3846, 64
      %v3926 = vpop.permute.xlu0 %3925
      %3927 = vrot.lane.b32.xlu0 %v3848, 64
      %v3928 = vpop.permute.xlu0 %3927
      %3929 = vrot.lane.b32.xlu0 %v3850, 64
      %v3930 = vpop.permute.xlu0 %3929
      %3931 = vrot.lane.b32.xlu0 %v3852, 64
      %v3932 = vpop.permute.xlu0 %3931
      %3933 = vrot.lane.b32.xlu0 %v3854, 64
      %v3934 = vpop.permute.xlu0 %3933
      %3935 = vrot.lane.b32.xlu0 %v3856, 64
      %v3936 = vpop.permute.xlu0 %3935
      %3937 = vrot.lane.b32.xlu0 %v3858, 64
      %v3938 = vpop.permute.xlu0 %3937
      %3939 = vrot.lane.b32.xlu0 %v3860, 64
      %v3940 = vpop.permute.xlu0 %3939
      %3941 = vrot.lane.b32.xlu0 %v3862, 64
      %v3942 = vpop.permute.xlu0 %3941
      %3943 = vrot.lane.b32.xlu0 %v3864, 64
      %v3944 = vpop.permute.xlu0 %3943
      %3945 = vrot.lane.b32.xlu0 %v3866, 64
      %v3946 = vpop.permute.xlu0 %3945
      %3947 = vrot.lane.b32.xlu0 %v3868, 64
      %v3948 = vpop.permute.xlu0 %3947
      %3949 = vrot.lane.b32.xlu0 %v3870, 64
      %v3950 = vpop.permute.xlu0 %3949
      %3951 = vrot.lane.b32.xlu0 %v3872, 64
      %v3952 = vpop.permute.xlu0 %3951
      %3953 = vrot.lane.b32.xlu0 %v3874, 64
      %v3954 = vpop.permute.xlu0 %3953
      %3955 = vrot.lane.b32.xlu0 %v3876, 64
      %v3956 = vpop.permute.xlu0 %3955
      %3957 = vrot.lane.b32.xlu0 %v3878, 64
      %v3958 = vpop.permute.xlu0 %3957
      %3959 = vrot.lane.b32.xlu0 %v3877, 64
      %v3960 = vpop.permute.xlu0 %3959
      %v4002 = vrot.slane %v3265, 4
      %v4003 = vrot.slane %v3146, 4
      %v4004 = vsel %vm1523, %v4002, %v4003
      %v4005 = vrot.slane %v3148, 4
      %v4006 = vsel %vm1523, %v4003, %v4005
      %v4007 = vrot.slane %v3150, 4
      %v4008 = vsel %vm1523, %v4005, %v4007
      %v4009 = vrot.slane %v3152, 4
      %v4010 = vsel %vm1523, %v4007, %v4009
      %v4011 = vrot.slane %v3154, 4
      %v4012 = vsel %vm1523, %v4009, %v4011
      %v4013 = vrot.slane %v3156, 4
      %v4014 = vsel %vm1523, %v4011, %v4013
      %v4015 = vrot.slane %v3158, 4
      %v4016 = vsel %vm1523, %v4013, %v4015
      %v4017 = vrot.slane %v3160, 4
      %v4018 = vsel %vm1523, %v4015, %v4017
      %v4019 = vrot.slane %v3162, 4
      %v4020 = vsel %vm1523, %v4017, %v4019
      %v4021 = vrot.slane %v3164, 4
      %v4022 = vsel %vm1523, %v4019, %v4021
      %v4023 = vrot.slane %v3166, 4
      %v4024 = vsel %vm1523, %v4021, %v4023
      %v4025 = vrot.slane %v3168, 4
      %v4026 = vsel %vm1523, %v4023, %v4025
      %v4027 = vrot.slane %v3170, 4
      %v4028 = vsel %vm1523, %v4025, %v4027
      %v4029 = vrot.slane %v3172, 4
      %v4030 = vsel %vm1523, %v4027, %v4029
      %v4031 = vrot.slane %v3174, 4
      %v4032 = vsel %vm1523, %v4029, %v4031
      %v4033 = vrot.slane %v3176, 4
      %v4034 = vsel %vm1523, %v4031, %v4033
      %v4035 = vrot.slane %v3178, 4
      %v4036 = vsel %vm1523, %v4033, %v4035
      %v4037 = vrot.slane %v3180, 4
      %v4038 = vsel %vm1523, %v4035, %v4037
      %v4039 = vrot.slane %v3182, 4
      %v4040 = vsel %vm1523, %v4037, %v4039
      %v4041 = vrot.slane %v3184, 4
      %v4042 = vsel %vm1523, %v4039, %v4041
      %v4043 = vrot.slane %v3186, 4
      %v4044 = vsel %vm1523, %v4041, %v4043
      %v4045 = vrot.slane %v3188, 4
      %v4046 = vsel %vm1523, %v4043, %v4045
      %v4047 = vrot.slane %v3190, 4
      %v4048 = vsel %vm1523, %v4045, %v4047
      %v4049 = vrot.slane %v3192, 4
      %v4050 = vsel %vm1523, %v4047, %v4049
      %v4051 = vrot.slane %v3194, 4
      %v4052 = vsel %vm1523, %v4049, %v4051
      %v4053 = vrot.slane %v3196, 4
      %v4054 = vsel %vm1523, %v4051, %v4053
      %v4055 = vrot.slane %v3198, 4
      %v4056 = vsel %vm1523, %v4053, %v4055
      %v4057 = vrot.slane %v3200, 4
      %v4058 = vsel %vm1523, %v4055, %v4057
      %v4059 = vrot.slane %v3202, 4
      %v4060 = vsel %vm1523, %v4057, %v4059
      %v4061 = vrot.slane %v3204, 4
      %v4062 = vsel %vm1523, %v4059, %v4061
      %v4063 = vrot.slane %v3206, 4
      %v4064 = vsel %vm1523, %v4061, %v4063
      %v4065 = vrot.slane %v3208, 4
      %v4066 = vsel %vm1523, %v4063, %v4065
      %v4067 = vrot.slane %v3210, 4
      %v4068 = vsel %vm1523, %v4065, %v4067
      %v4069 = vrot.slane %v3212, 4
      %v4070 = vsel %vm1523, %v4067, %v4069
      %v4071 = vrot.slane %v3214, 4
      %v4072 = vsel %vm1523, %v4069, %v4071
      %v4073 = vrot.slane %v3216, 4
      %v4074 = vsel %vm1523, %v4071, %v4073
      %v4075 = vrot.slane %v3218, 4
      %v4076 = vsel %vm1523, %v4073, %v4075
      %v4077 = vrot.slane %v3220, 4
      %v4078 = vsel %vm1523, %v4075, %v4077
      %v4079 = vrot.slane %v3222, 4
      %v4080 = vsel %vm1523, %v4077, %v4079
      %v4081 = vrot.slane %v3266, 4
      %v4082 = vsel %vm1523, %v4079, %v4081
      %4083 = vrot.lane.b32.xlu0 %v4004, 80
      %v4084 = vpop.permute.xlu0 %4083
      %4085 = vrot.lane.b32.xlu0 %v4006, 80
      %v4086 = vpop.permute.xlu0 %4085
      %4087 = vrot.lane.b32.xlu0 %v4008, 80
      %v4088 = vpop.permute.xlu0 %4087
      %4089 = vrot.lane.b32.xlu0 %v4010, 80
      %v4090 = vpop.permute.xlu0 %4089
      %4091 = vrot.lane.b32.xlu0 %v4012, 80
      %v4092 = vpop.permute.xlu0 %4091
      %4093 = vrot.lane.b32.xlu0 %v4014, 80
      %v4094 = vpop.permute.xlu0 %4093
      %4095 = vrot.lane.b32.xlu0 %v4016, 80
      %v4096 = vpop.permute.xlu0 %4095
      %4097 = vrot.lane.b32.xlu0 %v4018, 80
      %v4098 = vpop.permute.xlu0 %4097
      %4099 = vrot.lane.b32.xlu0 %v4020, 80
      %v4100 = vpop.permute.xlu0 %4099
      %4101 = vrot.lane.b32.xlu0 %v4022, 80
      %v4102 = vpop.permute.xlu0 %4101
      %4103 = vrot.lane.b32.xlu0 %v4024, 80
      %v4104 = vpop.permute.xlu0 %4103
      %4105 = vrot.lane.b32.xlu0 %v4026, 80
      %v4106 = vpop.permute.xlu0 %4105
      %4107 = vrot.lane.b32.xlu0 %v4028, 80
      %v4108 = vpop.permute.xlu0 %4107
      %4109 = vrot.lane.b32.xlu0 %v4030, 80
      %v4110 = vpop.permute.xlu0 %4109
      %4111 = vrot.lane.b32.xlu0 %v4032, 80
      %v4112 = vpop.permute.xlu0 %4111
      %4113 = vrot.lane.b32.xlu0 %v4034, 80
      %v4114 = vpop.permute.xlu0 %4113
      %4115 = vrot.lane.b32.xlu0 %v4036, 80
      %v4116 = vpop.permute.xlu0 %4115
      %4117 = vrot.lane.b32.xlu0 %v4038, 80
      %v4118 = vpop.permute.xlu0 %4117
      %4119 = vrot.lane.b32.xlu0 %v4040, 80
      %v4120 = vpop.permute.xlu0 %4119
      %4121 = vrot.lane.b32.xlu0 %v4042, 80
      %v4122 = vpop.permute.xlu0 %4121
      %4123 = vrot.lane.b32.xlu0 %v4044, 80
      %v4124 = vpop.permute.xlu0 %4123
      %4125 = vrot.lane.b32.xlu0 %v4046, 80
      %v4126 = vpop.permute.xlu0 %4125
      %4127 = vrot.lane.b32.xlu0 %v4048, 80
      %v4128 = vpop.permute.xlu0 %4127
      %4129 = vrot.lane.b32.xlu0 %v4050, 80
      %v4130 = vpop.permute.xlu0 %4129
      %4131 = vrot.lane.b32.xlu0 %v4052, 80
      %v4132 = vpop.permute.xlu0 %4131
      %4133 = vrot.lane.b32.xlu0 %v4054, 80
      %v4134 = vpop.permute.xlu0 %4133
      %4135 = vrot.lane.b32.xlu0 %v4056, 80
      %v4136 = vpop.permute.xlu0 %4135
      %4137 = vrot.lane.b32.xlu0 %v4058, 80
      %v4138 = vpop.permute.xlu0 %4137
      %4139 = vrot.lane.b32.xlu0 %v4060, 80
      %v4140 = vpop.permute.xlu0 %4139
      %4141 = vrot.lane.b32.xlu0 %v4062, 80
      %v4142 = vpop.permute.xlu0 %4141
      %4143 = vrot.lane.b32.xlu0 %v4064, 80
      %v4144 = vpop.permute.xlu0 %4143
      %4145 = vrot.lane.b32.xlu0 %v4066, 80
      %v4146 = vpop.permute.xlu0 %4145
      %4147 = vrot.lane.b32.xlu0 %v4068, 80
      %v4148 = vpop.permute.xlu0 %4147
      %4149 = vrot.lane.b32.xlu0 %v4070, 80
      %v4150 = vpop.permute.xlu0 %4149
      %4151 = vrot.lane.b32.xlu0 %v4072, 80
      %v4152 = vpop.permute.xlu0 %4151
      %4153 = vrot.lane.b32.xlu0 %v4074, 80
      %v4154 = vpop.permute.xlu0 %4153
      %4155 = vrot.lane.b32.xlu0 %v4076, 80
      %v4156 = vpop.permute.xlu0 %4155
      %4157 = vrot.lane.b32.xlu0 %v4078, 80
      %v4158 = vpop.permute.xlu0 %4157
      %4159 = vrot.lane.b32.xlu0 %v4080, 80
      %v4160 = vpop.permute.xlu0 %4159
      %4161 = vrot.lane.b32.xlu0 %v4082, 80
      %v4162 = vpop.permute.xlu0 %4161
      %4163 = vrot.lane.b32.xlu0 %v4081, 80
      %v4164 = vpop.permute.xlu0 %4163
      %v4206 = vsel %vm1523, %v4081, %v1728
      %4207 = vrot.lane.b32.xlu0 %v4008, 96
      %v4208 = vpop.permute.xlu0 %4207
      %4209 = vrot.lane.b32.xlu0 %v4010, 96
      %v4210 = vpop.permute.xlu0 %4209
      %4211 = vrot.lane.b32.xlu0 %v4012, 96
      %v4212 = vpop.permute.xlu0 %4211
      %4213 = vrot.lane.b32.xlu0 %v4014, 96
      %v4214 = vpop.permute.xlu0 %4213
      %4215 = vrot.lane.b32.xlu0 %v4016, 96
      %v4216 = vpop.permute.xlu0 %4215
      %4217 = vrot.lane.b32.xlu0 %v4018, 96
      %v4218 = vpop.permute.xlu0 %4217
      %4219 = vrot.lane.b32.xlu0 %v4020, 96
      %v4220 = vpop.permute.xlu0 %4219
      %4221 = vrot.lane.b32.xlu0 %v4022, 96
      %v4222 = vpop.permute.xlu0 %4221
      %4223 = vrot.lane.b32.xlu0 %v4024, 96
      %v4224 = vpop.permute.xlu0 %4223
      %4225 = vrot.lane.b32.xlu0 %v4026, 96
      %v4226 = vpop.permute.xlu0 %4225
      %4227 = vrot.lane.b32.xlu0 %v4028, 96
      %v4228 = vpop.permute.xlu0 %4227
      %4229 = vrot.lane.b32.xlu0 %v4030, 96
      %v4230 = vpop.permute.xlu0 %4229
      %4231 = vrot.lane.b32.xlu0 %v4032, 96
      %v4232 = vpop.permute.xlu0 %4231
      %4233 = vrot.lane.b32.xlu0 %v4034, 96
      %v4234 = vpop.permute.xlu0 %4233
      %4235 = vrot.lane.b32.xlu0 %v4036, 96
      %v4236 = vpop.permute.xlu0 %4235
      %4237 = vrot.lane.b32.xlu0 %v4038, 96
      %v4238 = vpop.permute.xlu0 %4237
      %4239 = vrot.lane.b32.xlu0 %v4040, 96
      %v4240 = vpop.permute.xlu0 %4239
      %4241 = vrot.lane.b32.xlu0 %v4042, 96
      %v4242 = vpop.permute.xlu0 %4241
      %4243 = vrot.lane.b32.xlu0 %v4044, 96
      %v4244 = vpop.permute.xlu0 %4243
      %4245 = vrot.lane.b32.xlu0 %v4046, 96
      %v4246 = vpop.permute.xlu0 %4245
      %4247 = vrot.lane.b32.xlu0 %v4048, 96
      %v4248 = vpop.permute.xlu0 %4247
      %4249 = vrot.lane.b32.xlu0 %v4050, 96
      %v4250 = vpop.permute.xlu0 %4249
      %4251 = vrot.lane.b32.xlu0 %v4052, 96
      %v4252 = vpop.permute.xlu0 %4251
      %4253 = vrot.lane.b32.xlu0 %v4054, 96
      %v4254 = vpop.permute.xlu0 %4253
      %4255 = vrot.lane.b32.xlu0 %v4056, 96
      %v4256 = vpop.permute.xlu0 %4255
      %4257 = vrot.lane.b32.xlu0 %v4058, 96
      %v4258 = vpop.permute.xlu0 %4257
      %4259 = vrot.lane.b32.xlu0 %v4060, 96
      %v4260 = vpop.permute.xlu0 %4259
      %4261 = vrot.lane.b32.xlu0 %v4062, 96
      %v4262 = vpop.permute.xlu0 %4261
      %4263 = vrot.lane.b32.xlu0 %v4064, 96
      %v4264 = vpop.permute.xlu0 %4263
      %4265 = vrot.lane.b32.xlu0 %v4066, 96
      %v4266 = vpop.permute.xlu0 %4265
      %4267 = vrot.lane.b32.xlu0 %v4068, 96
      %v4268 = vpop.permute.xlu0 %4267
      %4269 = vrot.lane.b32.xlu0 %v4070, 96
      %v4270 = vpop.permute.xlu0 %4269
      %4271 = vrot.lane.b32.xlu0 %v4072, 96
      %v4272 = vpop.permute.xlu0 %4271
      %4273 = vrot.lane.b32.xlu0 %v4074, 96
      %v4274 = vpop.permute.xlu0 %4273
      %4275 = vrot.lane.b32.xlu0 %v4076, 96
      %v4276 = vpop.permute.xlu0 %4275
      %4277 = vrot.lane.b32.xlu0 %v4078, 96
      %v4278 = vpop.permute.xlu0 %4277
      %4279 = vrot.lane.b32.xlu0 %v4080, 96
      %v4280 = vpop.permute.xlu0 %4279
      %4281 = vrot.lane.b32.xlu0 %v4082, 96
      %v4282 = vpop.permute.xlu0 %4281
      %4283 = vrot.lane.b32.xlu0 %v4206, 96
      %v4284 = vpop.permute.xlu0 %4283
      %4285 = vrot.lane.b32.xlu0 %v1730, 96
      %v4286 = vpop.permute.xlu0 %4285
      %4287 = vrot.lane.b32.xlu0 %v1728, 96
      %v4288 = vpop.permute.xlu0 %4287
      %v4330 = vrot.slane %v3148, 5
      %v4331 = vrot.slane %v3150, 5
      %v4332 = vsel %vm656, %v4330, %v4331
      %v4333 = vrot.slane %v3152, 5
      %v4334 = vsel %vm656, %v4331, %v4333
      %v4335 = vrot.slane %v3154, 5
      %v4336 = vsel %vm656, %v4333, %v4335
      %v4337 = vrot.slane %v3156, 5
      %v4338 = vsel %vm656, %v4335, %v4337
      %v4339 = vrot.slane %v3158, 5
      %v4340 = vsel %vm656, %v4337, %v4339
      %v4341 = vrot.slane %v3160, 5
      %v4342 = vsel %vm656, %v4339, %v4341
      %v4343 = vrot.slane %v3162, 5
      %v4344 = vsel %vm656, %v4341, %v4343
      %v4345 = vrot.slane %v3164, 5
      %v4346 = vsel %vm656, %v4343, %v4345
      %v4347 = vrot.slane %v3166, 5
      %v4348 = vsel %vm656, %v4345, %v4347
      %v4349 = vrot.slane %v3168, 5
      %v4350 = vsel %vm656, %v4347, %v4349
      %v4351 = vrot.slane %v3170, 5
      %v4352 = vsel %vm656, %v4349, %v4351
      %v4353 = vrot.slane %v3172, 5
      %v4354 = vsel %vm656, %v4351, %v4353
      %v4355 = vrot.slane %v3174, 5
      %v4356 = vsel %vm656, %v4353, %v4355
      %v4357 = vrot.slane %v3176, 5
      %v4358 = vsel %vm656, %v4355, %v4357
      %v4359 = vrot.slane %v3178, 5
      %v4360 = vsel %vm656, %v4357, %v4359
      %v4361 = vrot.slane %v3180, 5
      %v4362 = vsel %vm656, %v4359, %v4361
      %v4363 = vrot.slane %v3182, 5
      %v4364 = vsel %vm656, %v4361, %v4363
      %v4365 = vrot.slane %v3184, 5
      %v4366 = vsel %vm656, %v4363, %v4365
      %v4367 = vrot.slane %v3186, 5
      %v4368 = vsel %vm656, %v4365, %v4367
      %v4369 = vrot.slane %v3188, 5
      %v4370 = vsel %vm656, %v4367, %v4369
      %v4371 = vrot.slane %v3190, 5
      %v4372 = vsel %vm656, %v4369, %v4371
      %v4373 = vrot.slane %v3192, 5
      %v4374 = vsel %vm656, %v4371, %v4373
      %v4375 = vrot.slane %v3194, 5
      %v4376 = vsel %vm656, %v4373, %v4375
      %v4377 = vrot.slane %v3196, 5
      %v4378 = vsel %vm656, %v4375, %v4377
      %v4379 = vrot.slane %v3198, 5
      %v4380 = vsel %vm656, %v4377, %v4379
      %v4381 = vrot.slane %v3200, 5
      %v4382 = vsel %vm656, %v4379, %v4381
      %v4383 = vrot.slane %v3202, 5
      %v4384 = vsel %vm656, %v4381, %v4383
      %v4385 = vrot.slane %v3204, 5
      %v4386 = vsel %vm656, %v4383, %v4385
      %v4387 = vrot.slane %v3206, 5
      %v4388 = vsel %vm656, %v4385, %v4387
      %v4389 = vrot.slane %v3208, 5
      %v4390 = vsel %vm656, %v4387, %v4389
      %v4391 = vrot.slane %v3210, 5
      %v4392 = vsel %vm656, %v4389, %v4391
      %v4393 = vrot.slane %v3212, 5
      %v4394 = vsel %vm656, %v4391, %v4393
      %v4395 = vrot.slane %v3214, 5
      %v4396 = vsel %vm656, %v4393, %v4395
      %v4397 = vrot.slane %v3216, 5
      %v4398 = vsel %vm656, %v4395, %v4397
      %v4399 = vrot.slane %v3218, 5
      %v4400 = vsel %vm656, %v4397, %v4399
      %v4401 = vrot.slane %v3220, 5
      %v4402 = vsel %vm656, %v4399, %v4401
      %v4403 = vrot.slane %v3222, 5
      %v4404 = vsel %vm656, %v4401, %v4403
      %v4405 = vrot.slane %v3266, 5
      %v4406 = vsel %vm656, %v4403, %v4405
      %v4407 = vsel %vm656, %v4405, %v1931
      %4408 = vrot.lane.b32.xlu0 %v4332, 112
      %v4409 = vpop.permute.xlu0 %4408
      %4410 = vrot.lane.b32.xlu0 %v4334, 112
      %v4411 = vpop.permute.xlu0 %4410
      %4412 = vrot.lane.b32.xlu0 %v4336, 112
      %v4413 = vpop.permute.xlu0 %4412
      %4414 = vrot.lane.b32.xlu0 %v4338, 112
      %v4415 = vpop.permute.xlu0 %4414
      %4416 = vrot.lane.b32.xlu0 %v4340, 112
      %v4417 = vpop.permute.xlu0 %4416
      %4418 = vrot.lane.b32.xlu0 %v4342, 112
      %v4419 = vpop.permute.xlu0 %4418
      %4420 = vrot.lane.b32.xlu0 %v4344, 112
      %v4421 = vpop.permute.xlu0 %4420
      %4422 = vrot.lane.b32.xlu0 %v4346, 112
      %v4423 = vpop.permute.xlu0 %4422
      %4424 = vrot.lane.b32.xlu0 %v4348, 112
      %v4425 = vpop.permute.xlu0 %4424
      %4426 = vrot.lane.b32.xlu0 %v4350, 112
      %v4427 = vpop.permute.xlu0 %4426
      %4428 = vrot.lane.b32.xlu0 %v4352, 112
      %v4429 = vpop.permute.xlu0 %4428
      %4430 = vrot.lane.b32.xlu0 %v4354, 112
      %v4431 = vpop.permute.xlu0 %4430
      %4432 = vrot.lane.b32.xlu0 %v4356, 112
      %v4433 = vpop.permute.xlu0 %4432
      %4434 = vrot.lane.b32.xlu0 %v4358, 112
      %v4435 = vpop.permute.xlu0 %4434
      %4436 = vrot.lane.b32.xlu0 %v4360, 112
      %v4437 = vpop.permute.xlu0 %4436
      %4438 = vrot.lane.b32.xlu0 %v4362, 112
      %v4439 = vpop.permute.xlu0 %4438
      %4440 = vrot.lane.b32.xlu0 %v4364, 112
      %v4441 = vpop.permute.xlu0 %4440
      %4442 = vrot.lane.b32.xlu0 %v4366, 112
      %v4443 = vpop.permute.xlu0 %4442
      %4444 = vrot.lane.b32.xlu0 %v4368, 112
      %v4445 = vpop.permute.xlu0 %4444
      %4446 = vrot.lane.b32.xlu0 %v4370, 112
      %v4447 = vpop.permute.xlu0 %4446
      %4448 = vrot.lane.b32.xlu0 %v4372, 112
      %v4449 = vpop.permute.xlu0 %4448
      %4450 = vrot.lane.b32.xlu0 %v4374, 112
      %v4451 = vpop.permute.xlu0 %4450
      %4452 = vrot.lane.b32.xlu0 %v4376, 112
      %v4453 = vpop.permute.xlu0 %4452
      %4454 = vrot.lane.b32.xlu0 %v4378, 112
      %v4455 = vpop.permute.xlu0 %4454
      %4456 = vrot.lane.b32.xlu0 %v4380, 112
      %v4457 = vpop.permute.xlu0 %4456
      %4458 = vrot.lane.b32.xlu0 %v4382, 112
      %v4459 = vpop.permute.xlu0 %4458
      %4460 = vrot.lane.b32.xlu0 %v4384, 112
      %v4461 = vpop.permute.xlu0 %4460
      %4462 = vrot.lane.b32.xlu0 %v4386, 112
      %v4463 = vpop.permute.xlu0 %4462
      %4464 = vrot.lane.b32.xlu0 %v4388, 112
      %v4465 = vpop.permute.xlu0 %4464
      %4466 = vrot.lane.b32.xlu0 %v4390, 112
      %v4467 = vpop.permute.xlu0 %4466
      %4468 = vrot.lane.b32.xlu0 %v4392, 112
      %v4469 = vpop.permute.xlu0 %4468
      %4470 = vrot.lane.b32.xlu0 %v4394, 112
      %v4471 = vpop.permute.xlu0 %4470
      %4472 = vrot.lane.b32.xlu0 %v4396, 112
      %v4473 = vpop.permute.xlu0 %4472
      %4474 = vrot.lane.b32.xlu0 %v4398, 112
      %v4475 = vpop.permute.xlu0 %4474
      %4476 = vrot.lane.b32.xlu0 %v4400, 112
      %v4477 = vpop.permute.xlu0 %4476
      %4478 = vrot.lane.b32.xlu0 %v4402, 112
      %v4479 = vpop.permute.xlu0 %4478
      %4480 = vrot.lane.b32.xlu0 %v4404, 112
      %v4481 = vpop.permute.xlu0 %4480
      %4482 = vrot.lane.b32.xlu0 %v4406, 112
      %v4483 = vpop.permute.xlu0 %4482
      %4484 = vrot.lane.b32.xlu0 %v4407, 112
      %v4485 = vpop.permute.xlu0 %4484
      %4486 = vrot.lane.b32.xlu0 %v1933, 112
      %v4487 = vpop.permute.xlu0 %4486
      %v4528 = vrot.slane %v3148, 6
      %v4529 = vrot.slane %v3150, 6
      %v4530 = vsel %vm2054, %v4528, %v4529
      %v4531 = vrot.slane %v3152, 6
      %v4532 = vsel %vm2054, %v4529, %v4531
      %v4533 = vrot.slane %v3154, 6
      %v4534 = vsel %vm2054, %v4531, %v4533
      %v4535 = vrot.slane %v3156, 6
      %v4536 = vsel %vm2054, %v4533, %v4535
      %v4537 = vrot.slane %v3158, 6
      %v4538 = vsel %vm2054, %v4535, %v4537
      %v4539 = vrot.slane %v3160, 6
      %v4540 = vsel %vm2054, %v4537, %v4539
      %v4541 = vrot.slane %v3162, 6
      %v4542 = vsel %vm2054, %v4539, %v4541
      %v4543 = vrot.slane %v3164, 6
      %v4544 = vsel %vm2054, %v4541, %v4543
      %v4545 = vrot.slane %v3166, 6
      %v4546 = vsel %vm2054, %v4543, %v4545
      %v4547 = vrot.slane %v3168, 6
      %v4548 = vsel %vm2054, %v4545, %v4547
      %v4549 = vrot.slane %v3170, 6
      %v4550 = vsel %vm2054, %v4547, %v4549
      %v4551 = vrot.slane %v3172, 6
      %v4552 = vsel %vm2054, %v4549, %v4551
      %v4553 = vrot.slane %v3174, 6
      %v4554 = vsel %vm2054, %v4551, %v4553
      %v4555 = vrot.slane %v3176, 6
      %v4556 = vsel %vm2054, %v4553, %v4555
      %v4557 = vrot.slane %v3178, 6
      %v4558 = vsel %vm2054, %v4555, %v4557
      %v4559 = vrot.slane %v3180, 6
      %v4560 = vsel %vm2054, %v4557, %v4559
      %v4561 = vrot.slane %v3182, 6
      %v4562 = vsel %vm2054, %v4559, %v4561
      %v4563 = vrot.slane %v3184, 6
      %v4564 = vsel %vm2054, %v4561, %v4563
      %v4565 = vrot.slane %v3186, 6
      %v4566 = vsel %vm2054, %v4563, %v4565
      %v4567 = vrot.slane %v3188, 6
      %v4568 = vsel %vm2054, %v4565, %v4567
      %v4569 = vrot.slane %v3190, 6
      %v4570 = vsel %vm2054, %v4567, %v4569
      %v4571 = vrot.slane %v3192, 6
      %v4572 = vsel %vm2054, %v4569, %v4571
      %v4573 = vrot.slane %v3194, 6
      %v4574 = vsel %vm2054, %v4571, %v4573
      %v4575 = vrot.slane %v3196, 6
      %v4576 = vsel %vm2054, %v4573, %v4575
      %v4577 = vrot.slane %v3198, 6
      %v4578 = vsel %vm2054, %v4575, %v4577
      %v4579 = vrot.slane %v3200, 6
      %v4580 = vsel %vm2054, %v4577, %v4579
      %v4581 = vrot.slane %v3202, 6
      %v4582 = vsel %vm2054, %v4579, %v4581
      %v4583 = vrot.slane %v3204, 6
      %v4584 = vsel %vm2054, %v4581, %v4583
      %v4585 = vrot.slane %v3206, 6
      %v4586 = vsel %vm2054, %v4583, %v4585
      %v4587 = vrot.slane %v3208, 6
      %v4588 = vsel %vm2054, %v4585, %v4587
      %v4589 = vrot.slane %v3210, 6
      %v4590 = vsel %vm2054, %v4587, %v4589
      %v4591 = vrot.slane %v3212, 6
      %v4592 = vsel %vm2054, %v4589, %v4591
      %v4593 = vrot.slane %v3214, 6
      %v4594 = vsel %vm2054, %v4591, %v4593
      %v4595 = vrot.slane %v3216, 6
      %v4596 = vsel %vm2054, %v4593, %v4595
      %v4597 = vrot.slane %v3218, 6
      %v4598 = vsel %vm2054, %v4595, %v4597
      %v4599 = vrot.slane %v3220, 6
      %v4600 = vsel %vm2054, %v4597, %v4599
      %v4601 = vrot.slane %v3222, 6
      %v4602 = vsel %vm2054, %v4599, %v4601
      %v4603 = vrot.slane %v3266, 6
      %v4604 = vsel %vm2054, %v4601, %v4603
      %v4605 = vsel %vm2054, %v4603, %v2132
      %v4646 = vsel %vm2381, 0.0, %v3347
      %v4647 = vsel %vm2381, 0.0, %v3349
      %v4648 = vsel %vm2381, %v3265, %v3351
      %v4649 = vsel %vm2381, %v3146, %v3353
      %v4650 = vsel %vm2381, %v3148, %v3355
      %v4651 = vsel %vm2381, %v3150, %v3357
      %v4652 = vsel %vm2381, %v3152, %v3359
      %v4653 = vsel %vm2381, %v3154, %v3361
      %v4654 = vsel %vm2381, %v3156, %v3363
      %v4655 = vsel %vm2381, %v3158, %v3365
      %v4656 = vsel %vm2381, %v3160, %v3367
      %v4657 = vsel %vm2381, %v3162, %v3369
      %v4658 = vsel %vm2381, %v3164, %v3371
      %v4659 = vsel %vm2381, %v3166, %v3373
      %v4660 = vsel %vm2381, %v3168, %v3375
      %v4661 = vsel %vm2381, %v3170, %v3377
      %v4662 = vsel %vm2381, %v3172, %v3379
      %v4663 = vsel %vm2381, %v3174, %v3381
      %v4664 = vsel %vm2381, %v3176, %v3383
      %v4665 = vsel %vm2381, %v3178, %v3385
      %v4666 = vsel %vm2381, %v3180, %v3387
      %v4667 = vsel %vm2381, %v3182, %v3389
      %v4668 = vsel %vm2381, %v3184, %v3391
      %v4669 = vsel %vm2381, %v3186, %v3393
      %v4670 = vsel %vm2381, %v3188, %v3395
      %v4671 = vsel %vm2381, %v3190, %v3397
      %v4672 = vsel %vm2381, %v3192, %v3399
      %v4673 = vsel %vm2381, %v3194, %v3401
      %v4674 = vsel %vm2381, %v3196, %v3403
      %v4675 = vsel %vm2381, %v3198, %v3405
      %v4676 = vsel %vm2381, %v3200, %v3407
      %v4677 = vsel %vm2381, %v3202, %v3409
      %v4678 = vsel %vm2381, %v3204, %v3411
      %v4679 = vsel %vm2381, %v3206, %v3413
      %v4680 = vsel %vm2381, %v3208, %v3415
      %v4681 = vsel %vm2381, %v3210, %v3417
      %v4682 = vsel %vm2381, %v3212, %v3419
      %v4683 = vsel %vm2381, %v3214, %v3421
      %v4684 = vsel %vm2381, %v3216, %v3423
      %v4685 = vsel %vm2381, %v3218, %v3425
      %v4686 = vsel %vm2381, %v3220, %v3427
      %v4687 = vsel %vm2549, %v4646, %v3548
      %v4688 = vsel %vm2549, %v4647, %v3550
      %v4689 = vsel %vm2549, %v4648, %v3552
      %v4690 = vsel %vm2549, %v4649, %v3554
      %v4691 = vsel %vm2549, %v4650, %v3556
      %v4692 = vsel %vm2549, %v4651, %v3558
      %v4693 = vsel %vm2549, %v4652, %v3560
      %v4694 = vsel %vm2549, %v4653, %v3562
      %v4695 = vsel %vm2549, %v4654, %v3564
      %v4696 = vsel %vm2549, %v4655, %v3566
      %v4697 = vsel %vm2549, %v4656, %v3568
      %v4698 = vsel %vm2549, %v4657, %v3570
      %v4699 = vsel %vm2549, %v4658, %v3572
      %v4700 = vsel %vm2549, %v4659, %v3574
      %v4701 = vsel %vm2549, %v4660, %v3576
      %v4702 = vsel %vm2549, %v4661, %v3578
      %v4703 = vsel %vm2549, %v4662, %v3580
      %v4704 = vsel %vm2549, %v4663, %v3582
      %v4705 = vsel %vm2549, %v4664, %v3584
      %v4706 = vsel %vm2549, %v4665, %v3586
      %v4707 = vsel %vm2549, %v4666, %v3588
      %v4708 = vsel %vm2549, %v4667, %v3590
      %v4709 = vsel %vm2549, %v4668, %v3592
      %v4710 = vsel %vm2549, %v4669, %v3594
      %v4711 = vsel %vm2549, %v4670, %v3596
      %v4712 = vsel %vm2549, %v4671, %v3598
      %v4713 = vsel %vm2549, %v4672, %v3600
      %v4714 = vsel %vm2549, %v4673, %v3602
      %v4715 = vsel %vm2549, %v4674, %v3604
      %v4716 = vsel %vm2549, %v4675, %v3606
      %v4717 = vsel %vm2549, %v4676, %v3608
      %v4718 = vsel %vm2549, %v4677, %v3610
      %v4719 = vsel %vm2549, %v4678, %v3612
      %v4720 = vsel %vm2549, %v4679, %v3614
      %v4721 = vsel %vm2549, %v4680, %v3616
      %v4722 = vsel %vm2549, %v4681, %v3618
      %v4723 = vsel %vm2549, %v4682, %v3620
      %v4724 = vsel %vm2549, %v4683, %v3622
      %v4725 = vsel %vm2549, %v4684, %v3624
      %v4726 = vsel %vm2549, %v4685, %v3626
      %v4727 = vsel %vm2549, %v4686, %v3628
      %vm4728 = vcmask 392192
      %v4729 = vsel %vm4728, %v4687, %v3676
      %v4730 = vsel %vm4728, %v4688, %v3678
      %v4731 = vsel %vm4728, %v4689, %v3680
      %v4732 = vsel %vm4728, %v4690, %v3682
      %v4733 = vsel %vm4728, %v4691, %v3684
      %v4734 = vsel %vm4728, %v4692, %v3686
      %v4735 = vsel %vm4728, %v4693, %v3688
      %v4736 = vsel %vm4728, %v4694, %v3690
      %v4737 = vsel %vm4728, %v4695, %v3692
      %v4738 = vsel %vm4728, %v4696, %v3694
      %v4739 = vsel %vm4728, %v4697, %v3696
      %v4740 = vsel %vm4728, %v4698, %v3698
      %v4741 = vsel %vm4728, %v4699, %v3700
      %v4742 = vsel %vm4728, %v4700, %v3702
      %v4743 = vsel %vm4728, %v4701, %v3704
      %v4744 = vsel %vm4728, %v4702, %v3706
      %v4745 = vsel %vm4728, %v4703, %v3708
      %v4746 = vsel %vm4728, %v4704, %v3710
      %v4747 = vsel %vm4728, %v4705, %v3712
      %v4748 = vsel %vm4728, %v4706, %v3714
      %v4749 = vsel %vm4728, %v4707, %v3716
      %v4750 = vsel %vm4728, %v4708, %v3718
      %v4751 = vsel %vm4728, %v4709, %v3720
      %v4752 = vsel %vm4728, %v4710, %v3722
      %v4753 = vsel %vm4728, %v4711, %v3724
      %v4754 = vsel %vm4728, %v4712, %v3726
      %v4755 = vsel %vm4728, %v4713, %v3728
      %v4756 = vsel %vm4728, %v4714, %v3730
      %v4757 = vsel %vm4728, %v4715, %v3732
      %v4758 = vsel %vm4728, %v4716, %v3734
      %v4759 = vsel %vm4728, %v4717, %v3736
      %v4760 = vsel %vm4728, %v4718, %v3738
      %v4761 = vsel %vm4728, %v4719, %v3740
      %v4762 = vsel %vm4728, %v4720, %v3742
      %v4763 = vsel %vm4728, %v4721, %v3744
      %v4764 = vsel %vm4728, %v4722, %v3746
      %v4765 = vsel %vm4728, %v4723, %v3748
      %v4766 = vsel %vm4728, %v4724, %v3750
      %v4767 = vsel %vm4728, %v4725, %v3752
      %v4768 = vsel %vm4728, %v4726, %v3754
      %v4769 = vsel %vm4728, %v4727, %v3756
      %vm4770 = vcmask 523264
      %v4771 = vsel %vm4770, %v4729, %v3880
      %v4772 = vsel %vm4770, %v4730, %v3882
      %v4773 = vsel %vm4770, %v4731, %v3884
      %v4774 = vsel %vm4770, %v4732, %v3886
      %v4775 = vsel %vm4770, %v4733, %v3888
      %v4776 = vsel %vm4770, %v4734, %v3890
      %v4777 = vsel %vm4770, %v4735, %v3892
      %v4778 = vsel %vm4770, %v4736, %v3894
      %v4779 = vsel %vm4770, %v4737, %v3896
      %v4780 = vsel %vm4770, %v4738, %v3898
      %v4781 = vsel %vm4770, %v4739, %v3900
      %v4782 = vsel %vm4770, %v4740, %v3902
      %v4783 = vsel %vm4770, %v4741, %v3904
      %v4784 = vsel %vm4770, %v4742, %v3906
      %v4785 = vsel %vm4770, %v4743, %v3908
      %v4786 = vsel %vm4770, %v4744, %v3910
      %v4787 = vsel %vm4770, %v4745, %v3912
      %v4788 = vsel %vm4770, %v4746, %v3914
      %v4789 = vsel %vm4770, %v4747, %v3916
      %v4790 = vsel %vm4770, %v4748, %v3918
      %v4791 = vsel %vm4770, %v4749, %v3920
      %v4792 = vsel %vm4770, %v4750, %v3922
      %v4793 = vsel %vm4770, %v4751, %v3924
      %v4794 = vsel %vm4770, %v4752, %v3926
      %v4795 = vsel %vm4770, %v4753, %v3928
      %v4796 = vsel %vm4770, %v4754, %v3930
      %v4797 = vsel %vm4770, %v4755, %v3932
      %v4798 = vsel %vm4770, %v4756, %v3934
      %v4799 = vsel %vm4770, %v4757, %v3936
      %v4800 = vsel %vm4770, %v4758, %v3938
      %v4801 = vsel %vm4770, %v4759, %v3940
      %v4802 = vsel %vm4770, %v4760, %v3942
      %v4803 = vsel %vm4770, %v4761, %v3944
      %v4804 = vsel %vm4770, %v4762, %v3946
      %v4805 = vsel %vm4770, %v4763, %v3948
      %v4806 = vsel %vm4770, %v4764, %v3950
      %v4807 = vsel %vm4770, %v4765, %v3952
      %v4808 = vsel %vm4770, %v4766, %v3954
      %v4809 = vsel %vm4770, %v4767, %v3956
      %v4810 = vsel %vm4770, %v4768, %v3958
      %v4811 = vsel %vm4770, %v4769, %v3960
      %vm4812 = vcmask 654336
      %v4813 = vsel %vm4812, %v4771, %v4084
      %v4814 = vsel %vm4812, %v4772, %v4086
      %v4815 = vsel %vm4812, %v4773, %v4088
      %v4816 = vsel %vm4812, %v4774, %v4090
      %v4817 = vsel %vm4812, %v4775, %v4092
      %v4818 = vsel %vm4812, %v4776, %v4094
      %v4819 = vsel %vm4812, %v4777, %v4096
      %v4820 = vsel %vm4812, %v4778, %v4098
      %v4821 = vsel %vm4812, %v4779, %v4100
      %v4822 = vsel %vm4812, %v4780, %v4102
      %v4823 = vsel %vm4812, %v4781, %v4104
      %v4824 = vsel %vm4812, %v4782, %v4106
      %v4825 = vsel %vm4812, %v4783, %v4108
      %v4826 = vsel %vm4812, %v4784, %v4110
      %v4827 = vsel %vm4812, %v4785, %v4112
      %v4828 = vsel %vm4812, %v4786, %v4114
      %v4829 = vsel %vm4812, %v4787, %v4116
      %v4830 = vsel %vm4812, %v4788, %v4118
      %v4831 = vsel %vm4812, %v4789, %v4120
      %v4832 = vsel %vm4812, %v4790, %v4122
      %v4833 = vsel %vm4812, %v4791, %v4124
      %v4834 = vsel %vm4812, %v4792, %v4126
      %v4835 = vsel %vm4812, %v4793, %v4128
      %v4836 = vsel %vm4812, %v4794, %v4130
      %v4837 = vsel %vm4812, %v4795, %v4132
      %v4838 = vsel %vm4812, %v4796, %v4134
      %v4839 = vsel %vm4812, %v4797, %v4136
      %v4840 = vsel %vm4812, %v4798, %v4138
      %v4841 = vsel %vm4812, %v4799, %v4140
      %v4842 = vsel %vm4812, %v4800, %v4142
      %v4843 = vsel %vm4812, %v4801, %v4144
      %v4844 = vsel %vm4812, %v4802, %v4146
      %v4845 = vsel %vm4812, %v4803, %v4148
      %v4846 = vsel %vm4812, %v4804, %v4150
      %v4847 = vsel %vm4812, %v4805, %v4152
      %v4848 = vsel %vm4812, %v4806, %v4154
      %v4849 = vsel %vm4812, %v4807, %v4156
      %v4850 = vsel %vm4812, %v4808, %v4158
      %v4851 = vsel %vm4812, %v4809, %v4160
      %v4852 = vsel %vm4812, %v4810, %v4162
      %v4853 = vsel %vm4812, %v4811, %v4164
      %vm4854 = vcmask 785408
      %v4855 = vsel %vm4854, %v4813, %v4208
      %v4856 = vsel %vm4854, %v4814, %v4210
      %v4857 = vsel %vm4854, %v4815, %v4212
      %v4858 = vsel %vm4854, %v4816, %v4214
      %v4859 = vsel %vm4854, %v4817, %v4216
      %v4860 = vsel %vm4854, %v4818, %v4218
      %v4861 = vsel %vm4854, %v4819, %v4220
      %v4862 = vsel %vm4854, %v4820, %v4222
      %v4863 = vsel %vm4854, %v4821, %v4224
      %v4864 = vsel %vm4854, %v4822, %v4226
      %v4865 = vsel %vm4854, %v4823, %v4228
      %v4866 = vsel %vm4854, %v4824, %v4230
      %v4867 = vsel %vm4854, %v4825, %v4232
      %v4868 = vsel %vm4854, %v4826, %v4234
      %v4869 = vsel %vm4854, %v4827, %v4236
      %v4870 = vsel %vm4854, %v4828, %v4238
      %v4871 = vsel %vm4854, %v4829, %v4240
      %v4872 = vsel %vm4854, %v4830, %v4242
      %v4873 = vsel %vm4854, %v4831, %v4244
      %v4874 = vsel %vm4854, %v4832, %v4246
      %v4875 = vsel %vm4854, %v4833, %v4248
      %v4876 = vsel %vm4854, %v4834, %v4250
      %v4877 = vsel %vm4854, %v4835, %v4252
      %v4878 = vsel %vm4854, %v4836, %v4254
      %v4879 = vsel %vm4854, %v4837, %v4256
      %v4880 = vsel %vm4854, %v4838, %v4258
      %v4881 = vsel %vm4854, %v4839, %v4260
      %v4882 = vsel %vm4854, %v4840, %v4262
      %v4883 = vsel %vm4854, %v4841, %v4264
      %v4884 = vsel %vm4854, %v4842, %v4266
      %v4885 = vsel %vm4854, %v4843, %v4268
      %v4886 = vsel %vm4854, %v4844, %v4270
      %v4887 = vsel %vm4854, %v4845, %v4272
      %v4888 = vsel %vm4854, %v4846, %v4274
      %v4889 = vsel %vm4854, %v4847, %v4276
      %v4890 = vsel %vm4854, %v4848, %v4278
      %v4891 = vsel %vm4854, %v4849, %v4280
      %v4892 = vsel %vm4854, %v4850, %v4282
      %v4893 = vsel %vm4854, %v4851, %v4284
      %v4894 = vsel %vm4854, %v4852, %v4286
      %v4895 = vsel %vm4854, %v4853, %v4288
      %vm4896 = vcmask 916480
      %v4897 = vsel %vm4896, %v4855, %v4409
      %v4898 = vsel %vm4896, %v4856, %v4411
      %v4899 = vsel %vm4896, %v4857, %v4413
      %v4900 = vsel %vm4896, %v4858, %v4415
      %v4901 = vsel %vm4896, %v4859, %v4417
      %v4902 = vsel %vm4896, %v4860, %v4419
      %v4903 = vsel %vm4896, %v4861, %v4421
      %v4904 = vsel %vm4896, %v4862, %v4423
      %v4905 = vsel %vm4896, %v4863, %v4425
      %v4906 = vsel %vm4896, %v4864, %v4427
      %v4907 = vsel %vm4896, %v4865, %v4429
      %v4908 = vsel %vm4896, %v4866, %v4431
      %v4909 = vsel %vm4896, %v4867, %v4433
      %v4910 = vsel %vm4896, %v4868, %v4435
      %v4911 = vsel %vm4896, %v4869, %v4437
      %v4912 = vsel %vm4896, %v4870, %v4439
      %v4913 = vsel %vm4896, %v4871, %v4441
      %v4914 = vsel %vm4896, %v4872, %v4443
      %v4915 = vsel %vm4896, %v4873, %v4445
      %v4916 = vsel %vm4896, %v4874, %v4447
      %v4917 = vsel %vm4896, %v4875, %v4449
      %v4918 = vsel %vm4896, %v4876, %v4451
      %v4919 = vsel %vm4896, %v4877, %v4453
      %v4920 = vsel %vm4896, %v4878, %v4455
      %v4921 = vsel %vm4896, %v4879, %v4457
      %v4922 = vsel %vm4896, %v4880, %v4459
      %v4923 = vsel %vm4896, %v4881, %v4461
      %v4924 = vsel %vm4896, %v4882, %v4463
      %v4925 = vsel %vm4896, %v4883, %v4465
      %v4926 = vsel %vm4896, %v4884, %v4467
      %v4927 = vsel %vm4896, %v4885, %v4469
      %v4928 = vsel %vm4896, %v4886, %v4471
      %v4929 = vsel %vm4896, %v4887, %v4473
      %v4930 = vsel %vm4896, %v4888, %v4475
      %v4931 = vsel %vm4896, %v4889, %v4477
      %v4932 = vsel %vm4896, %v4890, %v4479
      %v4933 = vsel %vm4896, %v4891, %v4481
      %v4934 = vsel %vm4896, %v4892, %v4483
      %v4935 = vsel %vm4896, %v4893, %v4485
      %v4936 = vsel %vm4896, %v4894, %v4487
      %v4937 = vsel %vm4896, %v4895, %v4487
      %v4938 = vpack.c.bf16 %v4898, %v4897
      %v4939 = vpack.c.bf16 %v4532, %v4530
      %v4940 = vpack.c.bf16 %v4900, %v4899
      %v4941 = vpack.c.bf16 %v4536, %v4534
      %v4942 = vpack.c.bf16 %v4902, %v4901
      %v4943 = vpack.c.bf16 %v4540, %v4538
      %v4944 = vpack.c.bf16 %v4904, %v4903
      %v4945 = vpack.c.bf16 %v4544, %v4542
      %v4946 = vpack.c.bf16 %v4906, %v4905
      %v4947 = vpack.c.bf16 %v4548, %v4546
      %v4948 = vpack.c.bf16 %v4908, %v4907
      %v4949 = vpack.c.bf16 %v4552, %v4550
      %v4950 = vpack.c.bf16 %v4910, %v4909
      %v4951 = vpack.c.bf16 %v4556, %v4554
      %v4952 = vpack.c.bf16 %v4912, %v4911
      %v4953 = vpack.c.bf16 %v4560, %v4558
      %v4954 = vpack.c.bf16 %v4914, %v4913
      %v4955 = vpack.c.bf16 %v4564, %v4562
      %v4956 = vpack.c.bf16 %v4916, %v4915
      %v4957 = vpack.c.bf16 %v4568, %v4566
      %v4958 = vpack.c.bf16 %v4918, %v4917
      %v4959 = vpack.c.bf16 %v4572, %v4570
      %v4960 = vpack.c.bf16 %v4920, %v4919
      %v4961 = vpack.c.bf16 %v4576, %v4574
      %v4962 = vpack.c.bf16 %v4922, %v4921
      %v4963 = vpack.c.bf16 %v4580, %v4578
      %v4964 = vpack.c.bf16 %v4924, %v4923
      %v4965 = vpack.c.bf16 %v4584, %v4582
      %v4966 = vpack.c.bf16 %v4926, %v4925
      %v4967 = vpack.c.bf16 %v4588, %v4586
      %v4968 = vpack.c.bf16 %v4928, %v4927
      %v4969 = vpack.c.bf16 %v4592, %v4590
      %v4970 = vpack.c.bf16 %v4930, %v4929
      %v4971 = vpack.c.bf16 %v4596, %v4594
      %v4972 = vpack.c.bf16 %v4932, %v4931
      %v4973 = vpack.c.bf16 %v4600, %v4598
      %v4974 = vpack.c.bf16 %v4934, %v4933
      %v4975 = vpack.c.bf16 %v4604, %v4602
      %v4976 = vpack.c.bf16 %v4936, %v4935
      %v4977 = vpack.c.bf16 %v2134, %v4605
      %v4978 = vpack.c.bf16 %v4937, %v4937
      %v4979 = vpack.c.bf16 %v2134, %v2134
      %v4980 = vld [vmem:[%s5] sm:$0xf]
      %v4981 = vld [vmem:[%s5 + $0x4] sm:$0xf]
      %v4982 = vld [vmem:[%s5 + $0x8] sm:$0xf]
      %v4983 = vld [vmem:[%s5 + $0xc] sm:$0xf]
      %v4984 = vld [vmem:[%s5 + $0x10] sm:$0xf]
      %v4985 = vld [vmem:[%s5 + $0x14] sm:$0xf]
      %v4986 = vld [vmem:[%s5 + $0x18] sm:$0xf]
      %v4987 = vld [vmem:[%s5 + $0x1c] sm:$0xf]
      %v4988 = vld [vmem:[%s5 + $0x20] sm:$0xf]
      %v4989 = vld [vmem:[%s5 + $0x24] sm:$0xf]
      %v4990 = vld [vmem:[%s5 + $0x28] sm:$0xf]
      %v4991 = vld [vmem:[%s5 + $0x2c] sm:$0xf]
      %v4992 = vld [vmem:[%s5 + $0x30] sm:$0xf]
      %v4993 = vld [vmem:[%s5 + $0x34] sm:$0xf]
      %v4994 = vld [vmem:[%s5 + $0x38] sm:$0xf]
      %v4995 = vld [vmem:[%s5 + $0x3c] sm:$0xf]
      %v4996 = vld [vmem:[%s5 + $0x40] sm:$0xf]
      %v4997 = vld [vmem:[%s5 + $0x44] sm:$0xf]
      %v4998 = vld [vmem:[%s6] sm:$0x1]
      %v5000 = vperm.slane %v4998, 0
      %v5020 = vunpack.c.l.b16 %v4980
      %v5021 = vunpack.c.l.b16 %v4981
      %v5022 = vunpack.c.l.b16 %v4982
      %v5023 = vunpack.c.l.b16 %v4983
      %v5024 = vunpack.c.l.b16 %v4984
      %v5025 = vunpack.c.l.b16 %v4985
      %v5026 = vunpack.c.l.b16 %v4986
      %v5027 = vunpack.c.l.b16 %v4987
      %v5028 = vunpack.c.l.b16 %v4988
      %v5029 = vunpack.c.l.b16 %v4989
      %v5030 = vunpack.c.l.b16 %v4990
      %v5031 = vunpack.c.l.b16 %v4991
      %v5032 = vunpack.c.l.b16 %v4992
      %v5033 = vunpack.c.l.b16 %v4993
      %v5034 = vunpack.c.l.b16 %v4994
      %v5035 = vunpack.c.l.b16 %v4995
      %v5036 = vunpack.c.l.b16 %v4996
      %v5037 = vunpack.c.l.b16 %v4997
      %v5038 = vpack.c.b16 %v5021, %v5020
      %v5039 = vpack.c.b16 %v5023, %v5022
      %v5040 = vpack.c.b16 %v5025, %v5024
      %v5041 = vpack.c.b16 %v5027, %v5026
      %v5042 = vpack.c.b16 %v5029, %v5028
      %v5043 = vpack.c.b16 %v5031, %v5030
      %v5044 = vpack.c.b16 %v5033, %v5032
      %v5045 = vpack.c.b16 %v5035, %v5034
      %v5046 = vpack.c.b16 %v5037, %v5036
      %v5057 = vsel %vm2381, %v4939, 0
      %v5060 = vsel %vm2381, %v4941, 0
      %v5063 = vsel %vm2381, %v4943, 0
      %v5066 = vsel %vm2381, %v4945, 0
      %v5069 = vsel %vm2381, %v4947, 0
      %v5072 = vsel %vm2381, %v4949, 0
      %v5075 = vsel %vm2381, %v4951, 0
      %v5078 = vsel %vm2381, %v4953, 0
      %v5081 = vsel %vm2381, %v4955, 0
      %v5084 = vsel %vm2381, %v4957, 0
      %v5087 = vsel %vm2381, %v4959, 0
      %v5090 = vsel %vm2381, %v4961, 0
      %v5093 = vsel %vm2381, %v4963, 0
      %v5096 = vsel %vm2381, %v4965, 0
      %v5099 = vsel %vm2381, %v4967, 0
      %v5102 = vsel %vm2381, %v4969, 0
      %v5105 = vsel %vm2381, %v4971, 0
      %v5108 = vsel %vm2381, %v4973, 0
      %v5111 = vsel %vm2381, %v4975, 0
      %v5114 = vsel %vm2381, %v4977, 0
      %v5117 = vsel %vm2381, %v4979, 0
      %5119 = vmatpush.bf16.msra.mxu0 %v5045
      %5120 = vmatpush.bf16.msra.mxu0 %v5044
      %5121 = vmatpush.bf16.msra.mxu0 %v5043
      %5122 = vmatpush.bf16.msra.mxu0 %v5042
      %5123 = vmatpush.bf16.msra.mxu0 %v5041
      %5124 = vmatpush.bf16.msra.mxu0 %v5040
      %5125 = vmatpush.bf16.msra.mxu0 %v5039
      %5126 = vmatpush.bf16.msra.mxu0 %v5038
      %5127 = vmatmul.bf16.gmra.mxu0 %v4938
      %v5128 = vpop.f32.mrf.mxu0
      %v5129 = vadd.f32 %v5000, %v5128
      %v5130 = vpop.f32.mrf.mxu0
      %v5131 = vadd.f32 %v5000, %v5130
      %5132 = vmatmul.bf16.gmra.mxu0 %v4940
      %v5133 = vpop.f32.mrf.mxu0
      %v5134 = vadd.f32 %v5000, %v5133
      %v5135 = vpop.f32.mrf.mxu0
      %v5136 = vadd.f32 %v5000, %v5135
      %5137 = vmatmul.bf16.gmra.mxu0 %v4942
      %v5138 = vpop.f32.mrf.mxu0
      %v5139 = vadd.f32 %v5000, %v5138
      %v5140 = vpop.f32.mrf.mxu0
      %v5141 = vadd.f32 %v5000, %v5140
      %5142 = vmatmul.bf16.gmra.mxu0 %v4944
      %v5143 = vpop.f32.mrf.mxu0
      %v5144 = vadd.f32 %v5000, %v5143
      %v5145 = vpop.f32.mrf.mxu0
      %v5146 = vadd.f32 %v5000, %v5145
      %5147 = vmatmul.bf16.gmra.mxu0 %v4946
      %v5148 = vpop.f32.mrf.mxu0
      %v5149 = vadd.f32 %v5000, %v5148
      %v5150 = vpop.f32.mrf.mxu0
      %v5151 = vadd.f32 %v5000, %v5150
      %5152 = vmatmul.bf16.gmra.mxu0 %v4948
      %v5153 = vpop.f32.mrf.mxu0
      %v5154 = vadd.f32 %v5000, %v5153
      %v5155 = vpop.f32.mrf.mxu0
      %v5156 = vadd.f32 %v5000, %v5155
      %5157 = vmatmul.bf16.gmra.mxu0 %v4950
      %v5158 = vpop.f32.mrf.mxu0
      %v5159 = vadd.f32 %v5000, %v5158
      %v5160 = vpop.f32.mrf.mxu0
      %v5161 = vadd.f32 %v5000, %v5160
      %5162 = vmatmul.bf16.gmra.mxu0 %v4952
      %v5163 = vpop.f32.mrf.mxu0
      %v5164 = vadd.f32 %v5000, %v5163
      %v5165 = vpop.f32.mrf.mxu0
      %v5166 = vadd.f32 %v5000, %v5165
      %5167 = vmatmul.bf16.gmra.mxu0 %v4954
      %v5168 = vpop.f32.mrf.mxu0
      %v5169 = vadd.f32 %v5000, %v5168
      %v5170 = vpop.f32.mrf.mxu0
      %v5171 = vadd.f32 %v5000, %v5170
      %5172 = vmatmul.bf16.gmra.mxu0 %v4956
      %v5173 = vpop.f32.mrf.mxu0
      %v5174 = vadd.f32 %v5000, %v5173
      %v5175 = vpop.f32.mrf.mxu0
      %v5176 = vadd.f32 %v5000, %v5175
      %5177 = vmatmul.bf16.gmra.mxu0 %v4958
      %v5178 = vpop.f32.mrf.mxu0
      %v5179 = vadd.f32 %v5000, %v5178
      %v5180 = vpop.f32.mrf.mxu0
      %v5181 = vadd.f32 %v5000, %v5180
      %5182 = vmatmul.bf16.gmra.mxu0 %v4960
      %v5183 = vpop.f32.mrf.mxu0
      %v5184 = vadd.f32 %v5000, %v5183
      %v5185 = vpop.f32.mrf.mxu0
      %v5186 = vadd.f32 %v5000, %v5185
      %5187 = vmatmul.bf16.gmra.mxu0 %v4962
      %v5188 = vpop.f32.mrf.mxu0
      %v5189 = vadd.f32 %v5000, %v5188
      %v5190 = vpop.f32.mrf.mxu0
      %v5191 = vadd.f32 %v5000, %v5190
      %5192 = vmatmul.bf16.gmra.mxu0 %v4964
      %v5193 = vpop.f32.mrf.mxu0
      %v5194 = vadd.f32 %v5000, %v5193
      %v5195 = vpop.f32.mrf.mxu0
      %v5196 = vadd.f32 %v5000, %v5195
      %5197 = vmatmul.bf16.gmra.mxu0 %v4966
      %v5198 = vpop.f32.mrf.mxu0
      %v5199 = vadd.f32 %v5000, %v5198
      %v5200 = vpop.f32.mrf.mxu0
      %v5201 = vadd.f32 %v5000, %v5200
      %5202 = vmatmul.bf16.gmra.mxu0 %v4968
      %v5203 = vpop.f32.mrf.mxu0
      %v5204 = vadd.f32 %v5000, %v5203
      %v5205 = vpop.f32.mrf.mxu0
      %v5206 = vadd.f32 %v5000, %v5205
      %5207 = vmatmul.bf16.gmra.mxu0 %v4970
      %v5208 = vpop.f32.mrf.mxu0
      %v5209 = vadd.f32 %v5000, %v5208
      %v5210 = vpop.f32.mrf.mxu0
      %v5211 = vadd.f32 %v5000, %v5210
      %5212 = vmatmul.bf16.gmra.mxu0 %v4972
      %v5213 = vpop.f32.mrf.mxu0
      %v5214 = vadd.f32 %v5000, %v5213
      %v5215 = vpop.f32.mrf.mxu0
      %v5216 = vadd.f32 %v5000, %v5215
      %5217 = vmatmul.bf16.gmra.mxu0 %v4974
      %v5218 = vpop.f32.mrf.mxu0
      %v5219 = vadd.f32 %v5000, %v5218
      %v5220 = vpop.f32.mrf.mxu0
      %v5221 = vadd.f32 %v5000, %v5220
      %5222 = vmatmul.bf16.gmra.mxu0 %v4976
      %v5223 = vpop.f32.mrf.mxu0
      %v5224 = vadd.f32 %v5000, %v5223
      %v5225 = vpop.f32.mrf.mxu0
      %v5226 = vadd.f32 %v5000, %v5225
      %5227 = vmatmul.bf16.gmra.mxu0 %v4978
      %v5228 = vpop.f32.mrf.mxu0
      %v5229 = vadd.f32 %v5000, %v5228
      %v5230 = vpop.f32.mrf.mxu0
      %5231 = vdwg.mxu0
      %5232 = vmatpush.bf16.msra.mxu0 0
      %5233 = vmatpush.bf16.msra.mxu0 0
      %5234 = vmatpush.bf16.msra.mxu0 0
      %5235 = vmatpush.bf16.msra.mxu0 0
      %5236 = vmatpush.bf16.msra.mxu0 0
      %5237 = vmatpush.bf16.msra.mxu0 0
      %5238 = vmatpush.bf16.msra.mxu0 0
      %5239 = vmatpush.bf16.msra.mxu0 %v5046
      %5240 = vmatmul.bf16.gmra.mxu0 %v5057
      %v5241 = vpop.f32.mrf.mxu0
      %v5242 = vadd.f32 %v5129, %v5241
      %v5243 = vpop.f32.mrf.mxu0
      %v5244 = vadd.f32 %v5131, %v5243
      %5245 = vmatmul.bf16.gmra.mxu0 %v5060
      %v5246 = vpop.f32.mrf.mxu0
      %v5247 = vadd.f32 %v5134, %v5246
      %v5248 = vpop.f32.mrf.mxu0
      %v5249 = vadd.f32 %v5136, %v5248
      %5250 = vmatmul.bf16.gmra.mxu0 %v5063
      %v5251 = vpop.f32.mrf.mxu0
      %v5252 = vadd.f32 %v5139, %v5251
      %v5253 = vpop.f32.mrf.mxu0
      %v5254 = vadd.f32 %v5141, %v5253
      %5255 = vmatmul.bf16.gmra.mxu0 %v5066
      %v5256 = vpop.f32.mrf.mxu0
      %v5257 = vadd.f32 %v5144, %v5256
      %v5258 = vpop.f32.mrf.mxu0
      %v5259 = vadd.f32 %v5146, %v5258
      %5260 = vmatmul.bf16.gmra.mxu0 %v5069
      %v5261 = vpop.f32.mrf.mxu0
      %v5262 = vadd.f32 %v5149, %v5261
      %v5263 = vpop.f32.mrf.mxu0
      %v5264 = vadd.f32 %v5151, %v5263
      %5265 = vmatmul.bf16.gmra.mxu0 %v5072
      %v5266 = vpop.f32.mrf.mxu0
      %v5267 = vadd.f32 %v5154, %v5266
      %v5268 = vpop.f32.mrf.mxu0
      %v5269 = vadd.f32 %v5156, %v5268
      %5270 = vmatmul.bf16.gmra.mxu0 %v5075
      %v5271 = vpop.f32.mrf.mxu0
      %v5272 = vadd.f32 %v5159, %v5271
      %v5273 = vpop.f32.mrf.mxu0
      %v5274 = vadd.f32 %v5161, %v5273
      %5275 = vmatmul.bf16.gmra.mxu0 %v5078
      %v5276 = vpop.f32.mrf.mxu0
      %v5277 = vadd.f32 %v5164, %v5276
      %v5278 = vpop.f32.mrf.mxu0
      %v5279 = vadd.f32 %v5166, %v5278
      %5280 = vmatmul.bf16.gmra.mxu0 %v5081
      %v5281 = vpop.f32.mrf.mxu0
      %v5282 = vadd.f32 %v5169, %v5281
      %v5283 = vpop.f32.mrf.mxu0
      %v5284 = vadd.f32 %v5171, %v5283
      %5285 = vmatmul.bf16.gmra.mxu0 %v5084
      %v5286 = vpop.f32.mrf.mxu0
      %v5287 = vadd.f32 %v5174, %v5286
      %v5288 = vpop.f32.mrf.mxu0
      %v5289 = vadd.f32 %v5176, %v5288
      %5290 = vmatmul.bf16.gmra.mxu0 %v5087
      %v5291 = vpop.f32.mrf.mxu0
      %v5292 = vadd.f32 %v5179, %v5291
      %v5293 = vpop.f32.mrf.mxu0
      %v5294 = vadd.f32 %v5181, %v5293
      %5295 = vmatmul.bf16.gmra.mxu0 %v5090
      %v5296 = vpop.f32.mrf.mxu0
      %v5297 = vadd.f32 %v5184, %v5296
      %v5298 = vpop.f32.mrf.mxu0
      %v5299 = vadd.f32 %v5186, %v5298
      %5300 = vmatmul.bf16.gmra.mxu0 %v5093
      %v5301 = vpop.f32.mrf.mxu0
      %v5302 = vadd.f32 %v5189, %v5301
      %v5303 = vpop.f32.mrf.mxu0
      %v5304 = vadd.f32 %v5191, %v5303
      %5305 = vmatmul.bf16.gmra.mxu0 %v5096
      %v5306 = vpop.f32.mrf.mxu0
      %v5307 = vadd.f32 %v5194, %v5306
      %v5308 = vpop.f32.mrf.mxu0
      %v5309 = vadd.f32 %v5196, %v5308
      %5310 = vmatmul.bf16.gmra.mxu0 %v5099
      %v5311 = vpop.f32.mrf.mxu0
      %v5312 = vadd.f32 %v5199, %v5311
      %v5313 = vpop.f32.mrf.mxu0
      %v5314 = vadd.f32 %v5201, %v5313
      %5315 = vmatmul.bf16.gmra.mxu0 %v5102
      %v5316 = vpop.f32.mrf.mxu0
      %v5317 = vadd.f32 %v5204, %v5316
      %v5318 = vpop.f32.mrf.mxu0
      %v5319 = vadd.f32 %v5206, %v5318
      %5320 = vmatmul.bf16.gmra.mxu0 %v5105
      %v5321 = vpop.f32.mrf.mxu0
      %v5322 = vadd.f32 %v5209, %v5321
      %v5323 = vpop.f32.mrf.mxu0
      %v5324 = vadd.f32 %v5211, %v5323
      %5325 = vmatmul.bf16.gmra.mxu0 %v5108
      %v5326 = vpop.f32.mrf.mxu0
      %v5327 = vadd.f32 %v5214, %v5326
      %v5328 = vpop.f32.mrf.mxu0
      %v5329 = vadd.f32 %v5216, %v5328
      %5330 = vmatmul.bf16.gmra.mxu0 %v5111
      %v5331 = vpop.f32.mrf.mxu0
      %v5332 = vadd.f32 %v5219, %v5331
      %v5333 = vpop.f32.mrf.mxu0
      %v5334 = vadd.f32 %v5221, %v5333
      %5335 = vmatmul.bf16.gmra.mxu0 %v5114
      %v5336 = vpop.f32.mrf.mxu0
      %v5337 = vadd.f32 %v5224, %v5336
      %v5338 = vpop.f32.mrf.mxu0
      %v5339 = vadd.f32 %v5226, %v5338
      %5340 = vmatmul.bf16.gmra.mxu0 %v5117
      %v5341 = vpop.f32.mrf.mxu0
      %v5342 = vadd.f32 %v5229, %v5341
      %v5343 = vpop.f32.mrf.mxu0
      %5344 = vdwg.mxu0
      %v5345 = vmax.f32 %v5242, 0.0
      %v5346 = vmax.f32 %v5244, 0.0
      %v5347 = vmax.f32 %v5247, 0.0
      %v5348 = vmax.f32 %v5249, 0.0
      %v5349 = vmax.f32 %v5252, 0.0
      %v5350 = vmax.f32 %v5254, 0.0
      %v5351 = vmax.f32 %v5257, 0.0
      %v5352 = vmax.f32 %v5259, 0.0
      %v5353 = vmax.f32 %v5262, 0.0
      %v5354 = vmax.f32 %v5264, 0.0
      %v5355 = vmax.f32 %v5267, 0.0
      %v5356 = vmax.f32 %v5269, 0.0
      %v5357 = vmax.f32 %v5272, 0.0
      %v5358 = vmax.f32 %v5274, 0.0
      %v5359 = vmax.f32 %v5277, 0.0
      %v5360 = vmax.f32 %v5279, 0.0
      %v5361 = vmax.f32 %v5282, 0.0
      %v5362 = vmax.f32 %v5284, 0.0
      %v5363 = vmax.f32 %v5287, 0.0
      %v5364 = vmax.f32 %v5289, 0.0
      %v5365 = vmax.f32 %v5292, 0.0
      %v5366 = vmax.f32 %v5294, 0.0
      %v5367 = vmax.f32 %v5297, 0.0
      %v5368 = vmax.f32 %v5299, 0.0
      %v5369 = vmax.f32 %v5302, 0.0
      %v5370 = vmax.f32 %v5304, 0.0
      %v5371 = vmax.f32 %v5307, 0.0
      %v5372 = vmax.f32 %v5309, 0.0
      %v5373 = vmax.f32 %v5312, 0.0
      %v5374 = vmax.f32 %v5314, 0.0
      %v5375 = vmax.f32 %v5317, 0.0
      %v5376 = vmax.f32 %v5319, 0.0
      %v5377 = vmax.f32 %v5322, 0.0
      %v5378 = vmax.f32 %v5324, 0.0
      %v5379 = vmax.f32 %v5327, 0.0
      %v5380 = vmax.f32 %v5329, 0.0
      %v5381 = vmax.f32 %v5332, 0.0
      %v5382 = vmax.f32 %v5334, 0.0
      %v5383 = vmax.f32 %v5337, 0.0
      %v5384 = vmax.f32 %v5339, 0.0
      %v5385 = vmax.f32 %v5342, 0.0
      %v5386 = vmul.f32 %v5345, %v2860
      %v5387 = vmul.f32 %v5346, %v2865
      %v5388 = vmul.f32 %v5347, %v2870
      %v5389 = vmul.f32 %v5348, %v2875
      %v5390 = vmul.f32 %v5349, %v2880
      %v5391 = vmul.f32 %v5350, %v2885
      %v5392 = vmul.f32 %v5351, %v2890
      %v5393 = vmul.f32 %v5352, %v2895
      %v5394 = vmul.f32 %v5353, %v2900
      %v5395 = vmul.f32 %v5354, %v2905
      %v5396 = vmul.f32 %v5355, %v2910
      %v5397 = vmul.f32 %v5356, %v2915
      %v5398 = vmul.f32 %v5357, %v2920
      %v5399 = vmul.f32 %v5358, %v2925
      %v5400 = vmul.f32 %v5359, %v2930
      %v5401 = vmul.f32 %v5360, %v2935
      %v5402 = vmul.f32 %v5361, %v2940
      %v5403 = vmul.f32 %v5362, %v2945
      %v5404 = vmul.f32 %v5363, %v2950
      %v5405 = vmul.f32 %v5364, %v2955
      %v5406 = vmul.f32 %v5365, %v2960
      %v5407 = vmul.f32 %v5366, %v2965
      %v5408 = vmul.f32 %v5367, %v2970
      %v5409 = vmul.f32 %v5368, %v2975
      %v5410 = vmul.f32 %v5369, %v2980
      %v5411 = vmul.f32 %v5370, %v2985
      %v5412 = vmul.f32 %v5371, %v2990
      %v5413 = vmul.f32 %v5372, %v2995
      %v5414 = vmul.f32 %v5373, %v3000
      %v5415 = vmul.f32 %v5374, %v3005
      %v5416 = vmul.f32 %v5375, %v3010
      %v5417 = vmul.f32 %v5376, %v3015
      %v5418 = vmul.f32 %v5377, %v3020
      %v5419 = vmul.f32 %v5378, %v3025
      %v5420 = vmul.f32 %v5379, %v3030
      %v5421 = vmul.f32 %v5380, %v3035
      %v5422 = vmul.f32 %v5381, %v3040
      %v5423 = vmul.f32 %v5382, %v3045
      %v5424 = vmul.f32 %v5383, %v3050
      %v5425 = vmul.f32 %v5384, %v3055
      %v5426 = vmul.f32 %v5385, %v3060
      %v5468 = vrot.slane %v5386, 5
      %v5469 = vrot.slane %v5387, 5
      %v5470 = vsel %vm656, %v5468, %v5469
      %v5471 = vrot.slane %v5388, 5
      %v5472 = vsel %vm656, %v5469, %v5471
      %v5473 = vrot.slane %v5389, 5
      %v5474 = vsel %vm656, %v5471, %v5473
      %v5475 = vrot.slane %v5390, 5
      %v5476 = vsel %vm656, %v5473, %v5475
      %v5477 = vrot.slane %v5391, 5
      %v5478 = vsel %vm656, %v5475, %v5477
      %v5479 = vrot.slane %v5392, 5
      %v5480 = vsel %vm656, %v5477, %v5479
      %v5481 = vrot.slane %v5393, 5
      %v5482 = vsel %vm656, %v5479, %v5481
      %v5483 = vrot.slane %v5394, 5
      %v5484 = vsel %vm656, %v5481, %v5483
      %v5485 = vrot.slane %v5395, 5
      %v5486 = vsel %vm656, %v5483, %v5485
      %v5487 = vrot.slane %v5396, 5
      %v5488 = vsel %vm656, %v5485, %v5487
      %v5489 = vrot.slane %v5397, 5
      %v5490 = vsel %vm656, %v5487, %v5489
      %v5491 = vrot.slane %v5398, 5
      %v5492 = vsel %vm656, %v5489, %v5491
      %v5493 = vrot.slane %v5399, 5
      %v5494 = vsel %vm656, %v5491, %v5493
      %v5495 = vrot.slane %v5400, 5
      %v5496 = vsel %vm656, %v5493, %v5495
      %v5497 = vrot.slane %v5401, 5
      %v5498 = vsel %vm656, %v5495, %v5497
      %v5499 = vrot.slane %v5402, 5
      %v5500 = vsel %vm656, %v5497, %v5499
      %v5501 = vrot.slane %v5403, 5
      %v5502 = vsel %vm656, %v5499, %v5501
      %v5503 = vrot.slane %v5404, 5
      %v5504 = vsel %vm656, %v5501, %v5503
      %v5505 = vrot.slane %v5405, 5
      %v5506 = vsel %vm656, %v5503, %v5505
      %v5507 = vrot.slane %v5406, 5
      %v5508 = vsel %vm656, %v5505, %v5507
      %v5509 = vrot.slane %v5407, 5
      %v5510 = vsel %vm656, %v5507, %v5509
      %v5511 = vrot.slane %v5408, 5
      %v5512 = vsel %vm656, %v5509, %v5511
      %v5513 = vrot.slane %v5409, 5
      %v5514 = vsel %vm656, %v5511, %v5513
      %v5515 = vrot.slane %v5410, 5
      %v5516 = vsel %vm656, %v5513, %v5515
      %v5517 = vrot.slane %v5411, 5
      %v5518 = vsel %vm656, %v5515, %v5517
      %v5519 = vrot.slane %v5412, 5
      %v5520 = vsel %vm656, %v5517, %v5519
      %v5521 = vrot.slane %v5413, 5
      %v5522 = vsel %vm656, %v5519, %v5521
      %v5523 = vrot.slane %v5414, 5
      %v5524 = vsel %vm656, %v5521, %v5523
      %v5525 = vrot.slane %v5415, 5
      %v5526 = vsel %vm656, %v5523, %v5525
      %v5527 = vrot.slane %v5416, 5
      %v5528 = vsel %vm656, %v5525, %v5527
      %v5529 = vrot.slane %v5417, 5
      %v5530 = vsel %vm656, %v5527, %v5529
      %v5531 = vrot.slane %v5418, 5
      %v5532 = vsel %vm656, %v5529, %v5531
      %v5533 = vrot.slane %v5419, 5
      %v5534 = vsel %vm656, %v5531, %v5533
      %v5535 = vrot.slane %v5420, 5
      %v5536 = vsel %vm656, %v5533, %v5535
      %v5537 = vrot.slane %v5421, 5
      %v5538 = vsel %vm656, %v5535, %v5537
      %v5539 = vrot.slane %v5422, 5
      %v5540 = vsel %vm656, %v5537, %v5539
      %v5541 = vrot.slane %v5423, 5
      %v5542 = vsel %vm656, %v5539, %v5541
      %v5543 = vrot.slane %v5424, 5
      %v5544 = vsel %vm656, %v5541, %v5543
      %v5545 = vrot.slane %v5425, 5
      %v5546 = vsel %vm656, %v5543, %v5545
      %v5547 = vrot.slane %v5426, 5
      %v5548 = vsel %vm656, %v5545, %v5547
      %v5589 = vsel %vm656, 0.0, %v5468
      %v5590 = vsel %vm779, %v5548, 0.0
      %v5592 = vrot.slane %v5589, 1
      %v5593 = vsel %vm779, %v783, %v5592
      %v5594 = vrot.slane %v5470, 1
      %v5595 = vsel %vm779, %v5592, %v5594
      %v5596 = vrot.slane %v5472, 1
      %v5597 = vsel %vm779, %v5594, %v5596
      %v5598 = vrot.slane %v5474, 1
      %v5599 = vsel %vm779, %v5596, %v5598
      %v5600 = vrot.slane %v5476, 1
      %v5601 = vsel %vm779, %v5598, %v5600
      %v5602 = vrot.slane %v5478, 1
      %v5603 = vsel %vm779, %v5600, %v5602
      %v5604 = vrot.slane %v5480, 1
      %v5605 = vsel %vm779, %v5602, %v5604
      %v5606 = vrot.slane %v5482, 1
      %v5607 = vsel %vm779, %v5604, %v5606
      %v5608 = vrot.slane %v5484, 1
      %v5609 = vsel %vm779, %v5606, %v5608
      %v5610 = vrot.slane %v5486, 1
      %v5611 = vsel %vm779, %v5608, %v5610
      %v5612 = vrot.slane %v5488, 1
      %v5613 = vsel %vm779, %v5610, %v5612
      %v5614 = vrot.slane %v5490, 1
      %v5615 = vsel %vm779, %v5612, %v5614
      %v5616 = vrot.slane %v5492, 1
      %v5617 = vsel %vm779, %v5614, %v5616
      %v5618 = vrot.slane %v5494, 1
      %v5619 = vsel %vm779, %v5616, %v5618
      %v5620 = vrot.slane %v5496, 1
      %v5621 = vsel %vm779, %v5618, %v5620
      %v5622 = vrot.slane %v5498, 1
      %v5623 = vsel %vm779, %v5620, %v5622
      %v5624 = vrot.slane %v5500, 1
      %v5625 = vsel %vm779, %v5622, %v5624
      %v5626 = vrot.slane %v5502, 1
      %v5627 = vsel %vm779, %v5624, %v5626
      %v5628 = vrot.slane %v5504, 1
      %v5629 = vsel %vm779, %v5626, %v5628
      %v5630 = vrot.slane %v5506, 1
      %v5631 = vsel %vm779, %v5628, %v5630
      %v5632 = vrot.slane %v5508, 1
      %v5633 = vsel %vm779, %v5630, %v5632
      %v5634 = vrot.slane %v5510, 1
      %v5635 = vsel %vm779, %v5632, %v5634
      %v5636 = vrot.slane %v5512, 1
      %v5637 = vsel %vm779, %v5634, %v5636
      %v5638 = vrot.slane %v5514, 1
      %v5639 = vsel %vm779, %v5636, %v5638
      %v5640 = vrot.slane %v5516, 1
      %v5641 = vsel %vm779, %v5638, %v5640
      %v5642 = vrot.slane %v5518, 1
      %v5643 = vsel %vm779, %v5640, %v5642
      %v5644 = vrot.slane %v5520, 1
      %v5645 = vsel %vm779, %v5642, %v5644
      %v5646 = vrot.slane %v5522, 1
      %v5647 = vsel %vm779, %v5644, %v5646
      %v5648 = vrot.slane %v5524, 1
      %v5649 = vsel %vm779, %v5646, %v5648
      %v5650 = vrot.slane %v5526, 1
      %v5651 = vsel %vm779, %v5648, %v5650
      %v5652 = vrot.slane %v5528, 1
      %v5653 = vsel %vm779, %v5650, %v5652
      %v5654 = vrot.slane %v5530, 1
      %v5655 = vsel %vm779, %v5652, %v5654
      %v5656 = vrot.slane %v5532, 1
      %v5657 = vsel %vm779, %v5654, %v5656
      %v5658 = vrot.slane %v5534, 1
      %v5659 = vsel %vm779, %v5656, %v5658
      %v5660 = vrot.slane %v5536, 1
      %v5661 = vsel %vm779, %v5658, %v5660
      %v5662 = vrot.slane %v5538, 1
      %v5663 = vsel %vm779, %v5660, %v5662
      %v5664 = vrot.slane %v5540, 1
      %v5665 = vsel %vm779, %v5662, %v5664
      %v5666 = vrot.slane %v5542, 1
      %v5667 = vsel %vm779, %v5664, %v5666
      %v5668 = vrot.slane %v5544, 1
      %v5669 = vsel %vm779, %v5666, %v5668
      %5670 = vrot.lane.b32.xlu0 %v5593, 16
      %v5671 = vpop.permute.xlu0 %5670
      %5672 = vrot.lane.b32.xlu0 %v5595, 16
      %v5673 = vpop.permute.xlu0 %5672
      %5674 = vrot.lane.b32.xlu0 %v5597, 16
      %v5675 = vpop.permute.xlu0 %5674
      %5676 = vrot.lane.b32.xlu0 %v5599, 16
      %v5677 = vpop.permute.xlu0 %5676
      %5678 = vrot.lane.b32.xlu0 %v5601, 16
      %v5679 = vpop.permute.xlu0 %5678
      %5680 = vrot.lane.b32.xlu0 %v5603, 16
      %v5681 = vpop.permute.xlu0 %5680
      %5682 = vrot.lane.b32.xlu0 %v5605, 16
      %v5683 = vpop.permute.xlu0 %5682
      %5684 = vrot.lane.b32.xlu0 %v5607, 16
      %v5685 = vpop.permute.xlu0 %5684
      %5686 = vrot.lane.b32.xlu0 %v5609, 16
      %v5687 = vpop.permute.xlu0 %5686
      %5688 = vrot.lane.b32.xlu0 %v5611, 16
      %v5689 = vpop.permute.xlu0 %5688
      %5690 = vrot.lane.b32.xlu0 %v5613, 16
      %v5691 = vpop.permute.xlu0 %5690
      %5692 = vrot.lane.b32.xlu0 %v5615, 16
      %v5693 = vpop.permute.xlu0 %5692
      %5694 = vrot.lane.b32.xlu0 %v5617, 16
      %v5695 = vpop.permute.xlu0 %5694
      %5696 = vrot.lane.b32.xlu0 %v5619, 16
      %v5697 = vpop.permute.xlu0 %5696
      %5698 = vrot.lane.b32.xlu0 %v5621, 16
      %v5699 = vpop.permute.xlu0 %5698
      %5700 = vrot.lane.b32.xlu0 %v5623, 16
      %v5701 = vpop.permute.xlu0 %5700
      %5702 = vrot.lane.b32.xlu0 %v5625, 16
      %v5703 = vpop.permute.xlu0 %5702
      %5704 = vrot.lane.b32.xlu0 %v5627, 16
      %v5705 = vpop.permute.xlu0 %5704
      %5706 = vrot.lane.b32.xlu0 %v5629, 16
      %v5707 = vpop.permute.xlu0 %5706
      %5708 = vrot.lane.b32.xlu0 %v5631, 16
      %v5709 = vpop.permute.xlu0 %5708
      %5710 = vrot.lane.b32.xlu0 %v5633, 16
      %v5711 = vpop.permute.xlu0 %5710
      %5712 = vrot.lane.b32.xlu0 %v5635, 16
      %v5713 = vpop.permute.xlu0 %5712
      %5714 = vrot.lane.b32.xlu0 %v5637, 16
      %v5715 = vpop.permute.xlu0 %5714
      %5716 = vrot.lane.b32.xlu0 %v5639, 16
      %v5717 = vpop.permute.xlu0 %5716
      %5718 = vrot.lane.b32.xlu0 %v5641, 16
      %v5719 = vpop.permute.xlu0 %5718
      %5720 = vrot.lane.b32.xlu0 %v5643, 16
      %v5721 = vpop.permute.xlu0 %5720
      %5722 = vrot.lane.b32.xlu0 %v5645, 16
      %v5723 = vpop.permute.xlu0 %5722
      %5724 = vrot.lane.b32.xlu0 %v5647, 16
      %v5725 = vpop.permute.xlu0 %5724
      %5726 = vrot.lane.b32.xlu0 %v5649, 16
      %v5727 = vpop.permute.xlu0 %5726
      %5728 = vrot.lane.b32.xlu0 %v5651, 16
      %v5729 = vpop.permute.xlu0 %5728
      %5730 = vrot.lane.b32.xlu0 %v5653, 16
      %v5731 = vpop.permute.xlu0 %5730
      %5732 = vrot.lane.b32.xlu0 %v5655, 16
      %v5733 = vpop.permute.xlu0 %5732
      %5734 = vrot.lane.b32.xlu0 %v5657, 16
      %v5735 = vpop.permute.xlu0 %5734
      %5736 = vrot.lane.b32.xlu0 %v5659, 16
      %v5737 = vpop.permute.xlu0 %5736
      %5738 = vrot.lane.b32.xlu0 %v5661, 16
      %v5739 = vpop.permute.xlu0 %5738
      %5740 = vrot.lane.b32.xlu0 %v5663, 16
      %v5741 = vpop.permute.xlu0 %5740
      %5742 = vrot.lane.b32.xlu0 %v5665, 16
      %v5743 = vpop.permute.xlu0 %5742
      %5744 = vrot.lane.b32.xlu0 %v5667, 16
      %v5745 = vpop.permute.xlu0 %5744
      %5746 = vrot.lane.b32.xlu0 %v5669, 16
      %v5747 = vpop.permute.xlu0 %5746
      %5748 = vrot.lane.b32.xlu0 %v5668, 16
      %v5749 = vpop.permute.xlu0 %5748
      %v5790 = vrot.slane %v5589, 2
      %v5791 = vsel %vm986, %v987, %v5790
      %v5792 = vrot.slane %v5470, 2
      %v5793 = vsel %vm986, %v5790, %v5792
      %v5794 = vrot.slane %v5472, 2
      %v5795 = vsel %vm986, %v5792, %v5794
      %v5796 = vrot.slane %v5474, 2
      %v5797 = vsel %vm986, %v5794, %v5796
      %v5798 = vrot.slane %v5476, 2
      %v5799 = vsel %vm986, %v5796, %v5798
      %v5800 = vrot.slane %v5478, 2
      %v5801 = vsel %vm986, %v5798, %v5800
      %v5802 = vrot.slane %v5480, 2
      %v5803 = vsel %vm986, %v5800, %v5802
      %v5804 = vrot.slane %v5482, 2
      %v5805 = vsel %vm986, %v5802, %v5804
      %v5806 = vrot.slane %v5484, 2
      %v5807 = vsel %vm986, %v5804, %v5806
      %v5808 = vrot.slane %v5486, 2
      %v5809 = vsel %vm986, %v5806, %v5808
      %v5810 = vrot.slane %v5488, 2
      %v5811 = vsel %vm986, %v5808, %v5810
      %v5812 = vrot.slane %v5490, 2
      %v5813 = vsel %vm986, %v5810, %v5812
      %v5814 = vrot.slane %v5492, 2
      %v5815 = vsel %vm986, %v5812, %v5814
      %v5816 = vrot.slane %v5494, 2
      %v5817 = vsel %vm986, %v5814, %v5816
      %v5818 = vrot.slane %v5496, 2
      %v5819 = vsel %vm986, %v5816, %v5818
      %v5820 = vrot.slane %v5498, 2
      %v5821 = vsel %vm986, %v5818, %v5820
      %v5822 = vrot.slane %v5500, 2
      %v5823 = vsel %vm986, %v5820, %v5822
      %v5824 = vrot.slane %v5502, 2
      %v5825 = vsel %vm986, %v5822, %v5824
      %v5826 = vrot.slane %v5504, 2
      %v5827 = vsel %vm986, %v5824, %v5826
      %v5828 = vrot.slane %v5506, 2
      %v5829 = vsel %vm986, %v5826, %v5828
      %v5830 = vrot.slane %v5508, 2
      %v5831 = vsel %vm986, %v5828, %v5830
      %v5832 = vrot.slane %v5510, 2
      %v5833 = vsel %vm986, %v5830, %v5832
      %v5834 = vrot.slane %v5512, 2
      %v5835 = vsel %vm986, %v5832, %v5834
      %v5836 = vrot.slane %v5514, 2
      %v5837 = vsel %vm986, %v5834, %v5836
      %v5838 = vrot.slane %v5516, 2
      %v5839 = vsel %vm986, %v5836, %v5838
      %v5840 = vrot.slane %v5518, 2
      %v5841 = vsel %vm986, %v5838, %v5840
      %v5842 = vrot.slane %v5520, 2
      %v5843 = vsel %vm986, %v5840, %v5842
      %v5844 = vrot.slane %v5522, 2
      %v5845 = vsel %vm986, %v5842, %v5844
      %v5846 = vrot.slane %v5524, 2
      %v5847 = vsel %vm986, %v5844, %v5846
      %v5848 = vrot.slane %v5526, 2
      %v5849 = vsel %vm986, %v5846, %v5848
      %v5850 = vrot.slane %v5528, 2
      %v5851 = vsel %vm986, %v5848, %v5850
      %v5852 = vrot.slane %v5530, 2
      %v5853 = vsel %vm986, %v5850, %v5852
      %v5854 = vrot.slane %v5532, 2
      %v5855 = vsel %vm986, %v5852, %v5854
      %v5856 = vrot.slane %v5534, 2
      %v5857 = vsel %vm986, %v5854, %v5856
      %v5858 = vrot.slane %v5536, 2
      %v5859 = vsel %vm986, %v5856, %v5858
      %v5860 = vrot.slane %v5538, 2
      %v5861 = vsel %vm986, %v5858, %v5860
      %v5862 = vrot.slane %v5540, 2
      %v5863 = vsel %vm986, %v5860, %v5862
      %v5864 = vrot.slane %v5542, 2
      %v5865 = vsel %vm986, %v5862, %v5864
      %v5866 = vrot.slane %v5544, 2
      %v5867 = vsel %vm986, %v5864, %v5866
      %5868 = vrot.lane.b32.xlu0 %v5791, 32
      %v5869 = vpop.permute.xlu0 %5868
      %5870 = vrot.lane.b32.xlu0 %v5793, 32
      %v5871 = vpop.permute.xlu0 %5870
      %5872 = vrot.lane.b32.xlu0 %v5795, 32
      %v5873 = vpop.permute.xlu0 %5872
      %5874 = vrot.lane.b32.xlu0 %v5797, 32
      %v5875 = vpop.permute.xlu0 %5874
      %5876 = vrot.lane.b32.xlu0 %v5799, 32
      %v5877 = vpop.permute.xlu0 %5876
      %5878 = vrot.lane.b32.xlu0 %v5801, 32
      %v5879 = vpop.permute.xlu0 %5878
      %5880 = vrot.lane.b32.xlu0 %v5803, 32
      %v5881 = vpop.permute.xlu0 %5880
      %5882 = vrot.lane.b32.xlu0 %v5805, 32
      %v5883 = vpop.permute.xlu0 %5882
      %5884 = vrot.lane.b32.xlu0 %v5807, 32
      %v5885 = vpop.permute.xlu0 %5884
      %5886 = vrot.lane.b32.xlu0 %v5809, 32
      %v5887 = vpop.permute.xlu0 %5886
      %5888 = vrot.lane.b32.xlu0 %v5811, 32
      %v5889 = vpop.permute.xlu0 %5888
      %5890 = vrot.lane.b32.xlu0 %v5813, 32
      %v5891 = vpop.permute.xlu0 %5890
      %5892 = vrot.lane.b32.xlu0 %v5815, 32
      %v5893 = vpop.permute.xlu0 %5892
      %5894 = vrot.lane.b32.xlu0 %v5817, 32
      %v5895 = vpop.permute.xlu0 %5894
      %5896 = vrot.lane.b32.xlu0 %v5819, 32
      %v5897 = vpop.permute.xlu0 %5896
      %5898 = vrot.lane.b32.xlu0 %v5821, 32
      %v5899 = vpop.permute.xlu0 %5898
      %5900 = vrot.lane.b32.xlu0 %v5823, 32
      %v5901 = vpop.permute.xlu0 %5900
      %5902 = vrot.lane.b32.xlu0 %v5825, 32
      %v5903 = vpop.permute.xlu0 %5902
      %5904 = vrot.lane.b32.xlu0 %v5827, 32
      %v5905 = vpop.permute.xlu0 %5904
      %5906 = vrot.lane.b32.xlu0 %v5829, 32
      %v5907 = vpop.permute.xlu0 %5906
      %5908 = vrot.lane.b32.xlu0 %v5831, 32
      %v5909 = vpop.permute.xlu0 %5908
      %5910 = vrot.lane.b32.xlu0 %v5833, 32
      %v5911 = vpop.permute.xlu0 %5910
      %5912 = vrot.lane.b32.xlu0 %v5835, 32
      %v5913 = vpop.permute.xlu0 %5912
      %5914 = vrot.lane.b32.xlu0 %v5837, 32
      %v5915 = vpop.permute.xlu0 %5914
      %5916 = vrot.lane.b32.xlu0 %v5839, 32
      %v5917 = vpop.permute.xlu0 %5916
      %5918 = vrot.lane.b32.xlu0 %v5841, 32
      %v5919 = vpop.permute.xlu0 %5918
      %5920 = vrot.lane.b32.xlu0 %v5843, 32
      %v5921 = vpop.permute.xlu0 %5920
      %5922 = vrot.lane.b32.xlu0 %v5845, 32
      %v5923 = vpop.permute.xlu0 %5922
      %5924 = vrot.lane.b32.xlu0 %v5847, 32
      %v5925 = vpop.permute.xlu0 %5924
      %5926 = vrot.lane.b32.xlu0 %v5849, 32
      %v5927 = vpop.permute.xlu0 %5926
      %5928 = vrot.lane.b32.xlu0 %v5851, 32
      %v5929 = vpop.permute.xlu0 %5928
      %5930 = vrot.lane.b32.xlu0 %v5853, 32
      %v5931 = vpop.permute.xlu0 %5930
      %5932 = vrot.lane.b32.xlu0 %v5855, 32
      %v5933 = vpop.permute.xlu0 %5932
      %5934 = vrot.lane.b32.xlu0 %v5857, 32
      %v5935 = vpop.permute.xlu0 %5934
      %5936 = vrot.lane.b32.xlu0 %v5859, 32
      %v5937 = vpop.permute.xlu0 %5936
      %5938 = vrot.lane.b32.xlu0 %v5861, 32
      %v5939 = vpop.permute.xlu0 %5938
      %5940 = vrot.lane.b32.xlu0 %v5863, 32
      %v5941 = vpop.permute.xlu0 %5940
      %5942 = vrot.lane.b32.xlu0 %v5865, 32
      %v5943 = vpop.permute.xlu0 %5942
      %5944 = vrot.lane.b32.xlu0 %v5867, 32
      %v5945 = vpop.permute.xlu0 %5944
      %5946 = vrot.lane.b32.xlu0 %v5866, 32
      %v5947 = vpop.permute.xlu0 %5946
      %v5989 = vrot.slane %v5546, 2
      %v5990 = vsel %vm986, %v5866, %v5989
      %v5991 = vrot.slane %v5590, 2
      %v5992 = vsel %vm986, %v5989, %v5991
      %5993 = vrot.lane.b32.xlu0 %v5793, 48
      %v5994 = vpop.permute.xlu0 %5993
      %5995 = vrot.lane.b32.xlu0 %v5795, 48
      %v5996 = vpop.permute.xlu0 %5995
      %5997 = vrot.lane.b32.xlu0 %v5797, 48
      %v5998 = vpop.permute.xlu0 %5997
      %5999 = vrot.lane.b32.xlu0 %v5799, 48
      %v6000 = vpop.permute.xlu0 %5999
      %6001 = vrot.lane.b32.xlu0 %v5801, 48
      %v6002 = vpop.permute.xlu0 %6001
      %6003 = vrot.lane.b32.xlu0 %v5803, 48
      %v6004 = vpop.permute.xlu0 %6003
      %6005 = vrot.lane.b32.xlu0 %v5805, 48
      %v6006 = vpop.permute.xlu0 %6005
      %6007 = vrot.lane.b32.xlu0 %v5807, 48
      %v6008 = vpop.permute.xlu0 %6007
      %6009 = vrot.lane.b32.xlu0 %v5809, 48
      %v6010 = vpop.permute.xlu0 %6009
      %6011 = vrot.lane.b32.xlu0 %v5811, 48
      %v6012 = vpop.permute.xlu0 %6011
      %6013 = vrot.lane.b32.xlu0 %v5813, 48
      %v6014 = vpop.permute.xlu0 %6013
      %6015 = vrot.lane.b32.xlu0 %v5815, 48
      %v6016 = vpop.permute.xlu0 %6015
      %6017 = vrot.lane.b32.xlu0 %v5817, 48
      %v6018 = vpop.permute.xlu0 %6017
      %6019 = vrot.lane.b32.xlu0 %v5819, 48
      %v6020 = vpop.permute.xlu0 %6019
      %6021 = vrot.lane.b32.xlu0 %v5821, 48
      %v6022 = vpop.permute.xlu0 %6021
      %6023 = vrot.lane.b32.xlu0 %v5823, 48
      %v6024 = vpop.permute.xlu0 %6023
      %6025 = vrot.lane.b32.xlu0 %v5825, 48
      %v6026 = vpop.permute.xlu0 %6025
      %6027 = vrot.lane.b32.xlu0 %v5827, 48
      %v6028 = vpop.permute.xlu0 %6027
      %6029 = vrot.lane.b32.xlu0 %v5829, 48
      %v6030 = vpop.permute.xlu0 %6029
      %6031 = vrot.lane.b32.xlu0 %v5831, 48
      %v6032 = vpop.permute.xlu0 %6031
      %6033 = vrot.lane.b32.xlu0 %v5833, 48
      %v6034 = vpop.permute.xlu0 %6033
      %6035 = vrot.lane.b32.xlu0 %v5835, 48
      %v6036 = vpop.permute.xlu0 %6035
      %6037 = vrot.lane.b32.xlu0 %v5837, 48
      %v6038 = vpop.permute.xlu0 %6037
      %6039 = vrot.lane.b32.xlu0 %v5839, 48
      %v6040 = vpop.permute.xlu0 %6039
      %6041 = vrot.lane.b32.xlu0 %v5841, 48
      %v6042 = vpop.permute.xlu0 %6041
      %6043 = vrot.lane.b32.xlu0 %v5843, 48
      %v6044 = vpop.permute.xlu0 %6043
      %6045 = vrot.lane.b32.xlu0 %v5845, 48
      %v6046 = vpop.permute.xlu0 %6045
      %6047 = vrot.lane.b32.xlu0 %v5847, 48
      %v6048 = vpop.permute.xlu0 %6047
      %6049 = vrot.lane.b32.xlu0 %v5849, 48
      %v6050 = vpop.permute.xlu0 %6049
      %6051 = vrot.lane.b32.xlu0 %v5851, 48
      %v6052 = vpop.permute.xlu0 %6051
      %6053 = vrot.lane.b32.xlu0 %v5853, 48
      %v6054 = vpop.permute.xlu0 %6053
      %6055 = vrot.lane.b32.xlu0 %v5855, 48
      %v6056 = vpop.permute.xlu0 %6055
      %6057 = vrot.lane.b32.xlu0 %v5857, 48
      %v6058 = vpop.permute.xlu0 %6057
      %6059 = vrot.lane.b32.xlu0 %v5859, 48
      %v6060 = vpop.permute.xlu0 %6059
      %6061 = vrot.lane.b32.xlu0 %v5861, 48
      %v6062 = vpop.permute.xlu0 %6061
      %6063 = vrot.lane.b32.xlu0 %v5863, 48
      %v6064 = vpop.permute.xlu0 %6063
      %6065 = vrot.lane.b32.xlu0 %v5865, 48
      %v6066 = vpop.permute.xlu0 %6065
      %6067 = vrot.lane.b32.xlu0 %v5867, 48
      %v6068 = vpop.permute.xlu0 %6067
      %6069 = vrot.lane.b32.xlu0 %v5990, 48
      %v6070 = vpop.permute.xlu0 %6069
      %6071 = vrot.lane.b32.xlu0 %v5992, 48
      %v6072 = vpop.permute.xlu0 %6071
      %6073 = vrot.lane.b32.xlu0 %v5991, 48
      %v6074 = vpop.permute.xlu0 %6073
      %v6116 = vrot.slane %v5589, 3
      %v6117 = vrot.slane %v5470, 3
      %v6118 = vsel %vm1318, %v6116, %v6117
      %v6119 = vrot.slane %v5472, 3
      %v6120 = vsel %vm1318, %v6117, %v6119
      %v6121 = vrot.slane %v5474, 3
      %v6122 = vsel %vm1318, %v6119, %v6121
      %v6123 = vrot.slane %v5476, 3
      %v6124 = vsel %vm1318, %v6121, %v6123
      %v6125 = vrot.slane %v5478, 3
      %v6126 = vsel %vm1318, %v6123, %v6125
      %v6127 = vrot.slane %v5480, 3
      %v6128 = vsel %vm1318, %v6125, %v6127
      %v6129 = vrot.slane %v5482, 3
      %v6130 = vsel %vm1318, %v6127, %v6129
      %v6131 = vrot.slane %v5484, 3
      %v6132 = vsel %vm1318, %v6129, %v6131
      %v6133 = vrot.slane %v5486, 3
      %v6134 = vsel %vm1318, %v6131, %v6133
      %v6135 = vrot.slane %v5488, 3
      %v6136 = vsel %vm1318, %v6133, %v6135
      %v6137 = vrot.slane %v5490, 3
      %v6138 = vsel %vm1318, %v6135, %v6137
      %v6139 = vrot.slane %v5492, 3
      %v6140 = vsel %vm1318, %v6137, %v6139
      %v6141 = vrot.slane %v5494, 3
      %v6142 = vsel %vm1318, %v6139, %v6141
      %v6143 = vrot.slane %v5496, 3
      %v6144 = vsel %vm1318, %v6141, %v6143
      %v6145 = vrot.slane %v5498, 3
      %v6146 = vsel %vm1318, %v6143, %v6145
      %v6147 = vrot.slane %v5500, 3
      %v6148 = vsel %vm1318, %v6145, %v6147
      %v6149 = vrot.slane %v5502, 3
      %v6150 = vsel %vm1318, %v6147, %v6149
      %v6151 = vrot.slane %v5504, 3
      %v6152 = vsel %vm1318, %v6149, %v6151
      %v6153 = vrot.slane %v5506, 3
      %v6154 = vsel %vm1318, %v6151, %v6153
      %v6155 = vrot.slane %v5508, 3
      %v6156 = vsel %vm1318, %v6153, %v6155
      %v6157 = vrot.slane %v5510, 3
      %v6158 = vsel %vm1318, %v6155, %v6157
      %v6159 = vrot.slane %v5512, 3
      %v6160 = vsel %vm1318, %v6157, %v6159
      %v6161 = vrot.slane %v5514, 3
      %v6162 = vsel %vm1318, %v6159, %v6161
      %v6163 = vrot.slane %v5516, 3
      %v6164 = vsel %vm1318, %v6161, %v6163
      %v6165 = vrot.slane %v5518, 3
      %v6166 = vsel %vm1318, %v6163, %v6165
      %v6167 = vrot.slane %v5520, 3
      %v6168 = vsel %vm1318, %v6165, %v6167
      %v6169 = vrot.slane %v5522, 3
      %v6170 = vsel %vm1318, %v6167, %v6169
      %v6171 = vrot.slane %v5524, 3
      %v6172 = vsel %vm1318, %v6169, %v6171
      %v6173 = vrot.slane %v5526, 3
      %v6174 = vsel %vm1318, %v6171, %v6173
      %v6175 = vrot.slane %v5528, 3
      %v6176 = vsel %vm1318, %v6173, %v6175
      %v6177 = vrot.slane %v5530, 3
      %v6178 = vsel %vm1318, %v6175, %v6177
      %v6179 = vrot.slane %v5532, 3
      %v6180 = vsel %vm1318, %v6177, %v6179
      %v6181 = vrot.slane %v5534, 3
      %v6182 = vsel %vm1318, %v6179, %v6181
      %v6183 = vrot.slane %v5536, 3
      %v6184 = vsel %vm1318, %v6181, %v6183
      %v6185 = vrot.slane %v5538, 3
      %v6186 = vsel %vm1318, %v6183, %v6185
      %v6187 = vrot.slane %v5540, 3
      %v6188 = vsel %vm1318, %v6185, %v6187
      %v6189 = vrot.slane %v5542, 3
      %v6190 = vsel %vm1318, %v6187, %v6189
      %v6191 = vrot.slane %v5544, 3
      %v6192 = vsel %vm1318, %v6189, %v6191
      %v6193 = vrot.slane %v5546, 3
      %v6194 = vsel %vm1318, %v6191, %v6193
      %v6195 = vrot.slane %v5590, 3
      %v6196 = vsel %vm1318, %v6193, %v6195
      %6197 = vrot.lane.b32.xlu0 %v6118, 64
      %v6198 = vpop.permute.xlu0 %6197
      %6199 = vrot.lane.b32.xlu0 %v6120, 64
      %v6200 = vpop.permute.xlu0 %6199
      %6201 = vrot.lane.b32.xlu0 %v6122, 64
      %v6202 = vpop.permute.xlu0 %6201
      %6203 = vrot.lane.b32.xlu0 %v6124, 64
      %v6204 = vpop.permute.xlu0 %6203
      %6205 = vrot.lane.b32.xlu0 %v6126, 64
      %v6206 = vpop.permute.xlu0 %6205
      %6207 = vrot.lane.b32.xlu0 %v6128, 64
      %v6208 = vpop.permute.xlu0 %6207
      %6209 = vrot.lane.b32.xlu0 %v6130, 64
      %v6210 = vpop.permute.xlu0 %6209
      %6211 = vrot.lane.b32.xlu0 %v6132, 64
      %v6212 = vpop.permute.xlu0 %6211
      %6213 = vrot.lane.b32.xlu0 %v6134, 64
      %v6214 = vpop.permute.xlu0 %6213
      %6215 = vrot.lane.b32.xlu0 %v6136, 64
      %v6216 = vpop.permute.xlu0 %6215
      %6217 = vrot.lane.b32.xlu0 %v6138, 64
      %v6218 = vpop.permute.xlu0 %6217
      %6219 = vrot.lane.b32.xlu0 %v6140, 64
      %v6220 = vpop.permute.xlu0 %6219
      %6221 = vrot.lane.b32.xlu0 %v6142, 64
      %v6222 = vpop.permute.xlu0 %6221
      %6223 = vrot.lane.b32.xlu0 %v6144, 64
      %v6224 = vpop.permute.xlu0 %6223
      %6225 = vrot.lane.b32.xlu0 %v6146, 64
      %v6226 = vpop.permute.xlu0 %6225
      %6227 = vrot.lane.b32.xlu0 %v6148, 64
      %v6228 = vpop.permute.xlu0 %6227
      %6229 = vrot.lane.b32.xlu0 %v6150, 64
      %v6230 = vpop.permute.xlu0 %6229
      %6231 = vrot.lane.b32.xlu0 %v6152, 64
      %v6232 = vpop.permute.xlu0 %6231
      %6233 = vrot.lane.b32.xlu0 %v6154, 64
      %v6234 = vpop.permute.xlu0 %6233
      %6235 = vrot.lane.b32.xlu0 %v6156, 64
      %v6236 = vpop.permute.xlu0 %6235
      %6237 = vrot.lane.b32.xlu0 %v6158, 64
      %v6238 = vpop.permute.xlu0 %6237
      %6239 = vrot.lane.b32.xlu0 %v6160, 64
      %v6240 = vpop.permute.xlu0 %6239
      %6241 = vrot.lane.b32.xlu0 %v6162, 64
      %v6242 = vpop.permute.xlu0 %6241
      %6243 = vrot.lane.b32.xlu0 %v6164, 64
      %v6244 = vpop.permute.xlu0 %6243
      %6245 = vrot.lane.b32.xlu0 %v6166, 64
      %v6246 = vpop.permute.xlu0 %6245
      %6247 = vrot.lane.b32.xlu0 %v6168, 64
      %v6248 = vpop.permute.xlu0 %6247
      %6249 = vrot.lane.b32.xlu0 %v6170, 64
      %v6250 = vpop.permute.xlu0 %6249
      %6251 = vrot.lane.b32.xlu0 %v6172, 64
      %v6252 = vpop.permute.xlu0 %6251
      %6253 = vrot.lane.b32.xlu0 %v6174, 64
      %v6254 = vpop.permute.xlu0 %6253
      %6255 = vrot.lane.b32.xlu0 %v6176, 64
      %v6256 = vpop.permute.xlu0 %6255
      %6257 = vrot.lane.b32.xlu0 %v6178, 64
      %v6258 = vpop.permute.xlu0 %6257
      %6259 = vrot.lane.b32.xlu0 %v6180, 64
      %v6260 = vpop.permute.xlu0 %6259
      %6261 = vrot.lane.b32.xlu0 %v6182, 64
      %v6262 = vpop.permute.xlu0 %6261
      %6263 = vrot.lane.b32.xlu0 %v6184, 64
      %v6264 = vpop.permute.xlu0 %6263
      %6265 = vrot.lane.b32.xlu0 %v6186, 64
      %v6266 = vpop.permute.xlu0 %6265
      %6267 = vrot.lane.b32.xlu0 %v6188, 64
      %v6268 = vpop.permute.xlu0 %6267
      %6269 = vrot.lane.b32.xlu0 %v6190, 64
      %v6270 = vpop.permute.xlu0 %6269
      %6271 = vrot.lane.b32.xlu0 %v6192, 64
      %v6272 = vpop.permute.xlu0 %6271
      %6273 = vrot.lane.b32.xlu0 %v6194, 64
      %v6274 = vpop.permute.xlu0 %6273
      %6275 = vrot.lane.b32.xlu0 %v6196, 64
      %v6276 = vpop.permute.xlu0 %6275
      %6277 = vrot.lane.b32.xlu0 %v6195, 64
      %v6278 = vpop.permute.xlu0 %6277
      %v6320 = vrot.slane %v5589, 4
      %v6321 = vrot.slane %v5470, 4
      %v6322 = vsel %vm1523, %v6320, %v6321
      %v6323 = vrot.slane %v5472, 4
      %v6324 = vsel %vm1523, %v6321, %v6323
      %v6325 = vrot.slane %v5474, 4
      %v6326 = vsel %vm1523, %v6323, %v6325
      %v6327 = vrot.slane %v5476, 4
      %v6328 = vsel %vm1523, %v6325, %v6327
      %v6329 = vrot.slane %v5478, 4
      %v6330 = vsel %vm1523, %v6327, %v6329
      %v6331 = vrot.slane %v5480, 4
      %v6332 = vsel %vm1523, %v6329, %v6331
      %v6333 = vrot.slane %v5482, 4
      %v6334 = vsel %vm1523, %v6331, %v6333
      %v6335 = vrot.slane %v5484, 4
      %v6336 = vsel %vm1523, %v6333, %v6335
      %v6337 = vrot.slane %v5486, 4
      %v6338 = vsel %vm1523, %v6335, %v6337
      %v6339 = vrot.slane %v5488, 4
      %v6340 = vsel %vm1523, %v6337, %v6339
      %v6341 = vrot.slane %v5490, 4
      %v6342 = vsel %vm1523, %v6339, %v6341
      %v6343 = vrot.slane %v5492, 4
      %v6344 = vsel %vm1523, %v6341, %v6343
      %v6345 = vrot.slane %v5494, 4
      %v6346 = vsel %vm1523, %v6343, %v6345
      %v6347 = vrot.slane %v5496, 4
      %v6348 = vsel %vm1523, %v6345, %v6347
      %v6349 = vrot.slane %v5498, 4
      %v6350 = vsel %vm1523, %v6347, %v6349
      %v6351 = vrot.slane %v5500, 4
      %v6352 = vsel %vm1523, %v6349, %v6351
      %v6353 = vrot.slane %v5502, 4
      %v6354 = vsel %vm1523, %v6351, %v6353
      %v6355 = vrot.slane %v5504, 4
      %v6356 = vsel %vm1523, %v6353, %v6355
      %v6357 = vrot.slane %v5506, 4
      %v6358 = vsel %vm1523, %v6355, %v6357
      %v6359 = vrot.slane %v5508, 4
      %v6360 = vsel %vm1523, %v6357, %v6359
      %v6361 = vrot.slane %v5510, 4
      %v6362 = vsel %vm1523, %v6359, %v6361
      %v6363 = vrot.slane %v5512, 4
      %v6364 = vsel %vm1523, %v6361, %v6363
      %v6365 = vrot.slane %v5514, 4
      %v6366 = vsel %vm1523, %v6363, %v6365
      %v6367 = vrot.slane %v5516, 4
      %v6368 = vsel %vm1523, %v6365, %v6367
      %v6369 = vrot.slane %v5518, 4
      %v6370 = vsel %vm1523, %v6367, %v6369
      %v6371 = vrot.slane %v5520, 4
      %v6372 = vsel %vm1523, %v6369, %v6371
      %v6373 = vrot.slane %v5522, 4
      %v6374 = vsel %vm1523, %v6371, %v6373
      %v6375 = vrot.slane %v5524, 4
      %v6376 = vsel %vm1523, %v6373, %v6375
      %v6377 = vrot.slane %v5526, 4
      %v6378 = vsel %vm1523, %v6375, %v6377
      %v6379 = vrot.slane %v5528, 4
      %v6380 = vsel %vm1523, %v6377, %v6379
      %v6381 = vrot.slane %v5530, 4
      %v6382 = vsel %vm1523, %v6379, %v6381
      %v6383 = vrot.slane %v5532, 4
      %v6384 = vsel %vm1523, %v6381, %v6383
      %v6385 = vrot.slane %v5534, 4
      %v6386 = vsel %vm1523, %v6383, %v6385
      %v6387 = vrot.slane %v5536, 4
      %v6388 = vsel %vm1523, %v6385, %v6387
      %v6389 = vrot.slane %v5538, 4
      %v6390 = vsel %vm1523, %v6387, %v6389
      %v6391 = vrot.slane %v5540, 4
      %v6392 = vsel %vm1523, %v6389, %v6391
      %v6393 = vrot.slane %v5542, 4
      %v6394 = vsel %vm1523, %v6391, %v6393
      %v6395 = vrot.slane %v5544, 4
      %v6396 = vsel %vm1523, %v6393, %v6395
      %v6397 = vrot.slane %v5546, 4
      %v6398 = vsel %vm1523, %v6395, %v6397
      %v6399 = vrot.slane %v5590, 4
      %v6400 = vsel %vm1523, %v6397, %v6399
      %6401 = vrot.lane.b32.xlu0 %v6322, 80
      %v6402 = vpop.permute.xlu0 %6401
      %6403 = vrot.lane.b32.xlu0 %v6324, 80
      %v6404 = vpop.permute.xlu0 %6403
      %6405 = vrot.lane.b32.xlu0 %v6326, 80
      %v6406 = vpop.permute.xlu0 %6405
      %6407 = vrot.lane.b32.xlu0 %v6328, 80
      %v6408 = vpop.permute.xlu0 %6407
      %6409 = vrot.lane.b32.xlu0 %v6330, 80
      %v6410 = vpop.permute.xlu0 %6409
      %6411 = vrot.lane.b32.xlu0 %v6332, 80
      %v6412 = vpop.permute.xlu0 %6411
      %6413 = vrot.lane.b32.xlu0 %v6334, 80
      %v6414 = vpop.permute.xlu0 %6413
      %6415 = vrot.lane.b32.xlu0 %v6336, 80
      %v6416 = vpop.permute.xlu0 %6415
      %6417 = vrot.lane.b32.xlu0 %v6338, 80
      %v6418 = vpop.permute.xlu0 %6417
      %6419 = vrot.lane.b32.xlu0 %v6340, 80
      %v6420 = vpop.permute.xlu0 %6419
      %6421 = vrot.lane.b32.xlu0 %v6342, 80
      %v6422 = vpop.permute.xlu0 %6421
      %6423 = vrot.lane.b32.xlu0 %v6344, 80
      %v6424 = vpop.permute.xlu0 %6423
      %6425 = vrot.lane.b32.xlu0 %v6346, 80
      %v6426 = vpop.permute.xlu0 %6425
      %6427 = vrot.lane.b32.xlu0 %v6348, 80
      %v6428 = vpop.permute.xlu0 %6427
      %6429 = vrot.lane.b32.xlu0 %v6350, 80
      %v6430 = vpop.permute.xlu0 %6429
      %6431 = vrot.lane.b32.xlu0 %v6352, 80
      %v6432 = vpop.permute.xlu0 %6431
      %6433 = vrot.lane.b32.xlu0 %v6354, 80
      %v6434 = vpop.permute.xlu0 %6433
      %6435 = vrot.lane.b32.xlu0 %v6356, 80
      %v6436 = vpop.permute.xlu0 %6435
      %6437 = vrot.lane.b32.xlu0 %v6358, 80
      %v6438 = vpop.permute.xlu0 %6437
      %6439 = vrot.lane.b32.xlu0 %v6360, 80
      %v6440 = vpop.permute.xlu0 %6439
      %6441 = vrot.lane.b32.xlu0 %v6362, 80
      %v6442 = vpop.permute.xlu0 %6441
      %6443 = vrot.lane.b32.xlu0 %v6364, 80
      %v6444 = vpop.permute.xlu0 %6443
      %6445 = vrot.lane.b32.xlu0 %v6366, 80
      %v6446 = vpop.permute.xlu0 %6445
      %6447 = vrot.lane.b32.xlu0 %v6368, 80
      %v6448 = vpop.permute.xlu0 %6447
      %6449 = vrot.lane.b32.xlu0 %v6370, 80
      %v6450 = vpop.permute.xlu0 %6449
      %6451 = vrot.lane.b32.xlu0 %v6372, 80
      %v6452 = vpop.permute.xlu0 %6451
      %6453 = vrot.lane.b32.xlu0 %v6374, 80
      %v6454 = vpop.permute.xlu0 %6453
      %6455 = vrot.lane.b32.xlu0 %v6376, 80
      %v6456 = vpop.permute.xlu0 %6455
      %6457 = vrot.lane.b32.xlu0 %v6378, 80
      %v6458 = vpop.permute.xlu0 %6457
      %6459 = vrot.lane.b32.xlu0 %v6380, 80
      %v6460 = vpop.permute.xlu0 %6459
      %6461 = vrot.lane.b32.xlu0 %v6382, 80
      %v6462 = vpop.permute.xlu0 %6461
      %6463 = vrot.lane.b32.xlu0 %v6384, 80
      %v6464 = vpop.permute.xlu0 %6463
      %6465 = vrot.lane.b32.xlu0 %v6386, 80
      %v6466 = vpop.permute.xlu0 %6465
      %6467 = vrot.lane.b32.xlu0 %v6388, 80
      %v6468 = vpop.permute.xlu0 %6467
      %6469 = vrot.lane.b32.xlu0 %v6390, 80
      %v6470 = vpop.permute.xlu0 %6469
      %6471 = vrot.lane.b32.xlu0 %v6392, 80
      %v6472 = vpop.permute.xlu0 %6471
      %6473 = vrot.lane.b32.xlu0 %v6394, 80
      %v6474 = vpop.permute.xlu0 %6473
      %6475 = vrot.lane.b32.xlu0 %v6396, 80
      %v6476 = vpop.permute.xlu0 %6475
      %6477 = vrot.lane.b32.xlu0 %v6398, 80
      %v6478 = vpop.permute.xlu0 %6477
      %6479 = vrot.lane.b32.xlu0 %v6400, 80
      %v6480 = vpop.permute.xlu0 %6479
      %6481 = vrot.lane.b32.xlu0 %v6399, 80
      %v6482 = vpop.permute.xlu0 %6481
      %v6524 = vsel %vm1523, %v6399, %v1728
      %6525 = vrot.lane.b32.xlu0 %v6326, 96
      %v6526 = vpop.permute.xlu0 %6525
      %6527 = vrot.lane.b32.xlu0 %v6328, 96
      %v6528 = vpop.permute.xlu0 %6527
      %6529 = vrot.lane.b32.xlu0 %v6330, 96
      %v6530 = vpop.permute.xlu0 %6529
      %6531 = vrot.lane.b32.xlu0 %v6332, 96
      %v6532 = vpop.permute.xlu0 %6531
      %6533 = vrot.lane.b32.xlu0 %v6334, 96
      %v6534 = vpop.permute.xlu0 %6533
      %6535 = vrot.lane.b32.xlu0 %v6336, 96
      %v6536 = vpop.permute.xlu0 %6535
      %6537 = vrot.lane.b32.xlu0 %v6338, 96
      %v6538 = vpop.permute.xlu0 %6537
      %6539 = vrot.lane.b32.xlu0 %v6340, 96
      %v6540 = vpop.permute.xlu0 %6539
      %6541 = vrot.lane.b32.xlu0 %v6342, 96
      %v6542 = vpop.permute.xlu0 %6541
      %6543 = vrot.lane.b32.xlu0 %v6344, 96
      %v6544 = vpop.permute.xlu0 %6543
      %6545 = vrot.lane.b32.xlu0 %v6346, 96
      %v6546 = vpop.permute.xlu0 %6545
      %6547 = vrot.lane.b32.xlu0 %v6348, 96
      %v6548 = vpop.permute.xlu0 %6547
      %6549 = vrot.lane.b32.xlu0 %v6350, 96
      %v6550 = vpop.permute.xlu0 %6549
      %6551 = vrot.lane.b32.xlu0 %v6352, 96
      %v6552 = vpop.permute.xlu0 %6551
      %6553 = vrot.lane.b32.xlu0 %v6354, 96
      %v6554 = vpop.permute.xlu0 %6553
      %6555 = vrot.lane.b32.xlu0 %v6356, 96
      %v6556 = vpop.permute.xlu0 %6555
      %6557 = vrot.lane.b32.xlu0 %v6358, 96
      %v6558 = vpop.permute.xlu0 %6557
      %6559 = vrot.lane.b32.xlu0 %v6360, 96
      %v6560 = vpop.permute.xlu0 %6559
      %6561 = vrot.lane.b32.xlu0 %v6362, 96
      %v6562 = vpop.permute.xlu0 %6561
      %6563 = vrot.lane.b32.xlu0 %v6364, 96
      %v6564 = vpop.permute.xlu0 %6563
      %6565 = vrot.lane.b32.xlu0 %v6366, 96
      %v6566 = vpop.permute.xlu0 %6565
      %6567 = vrot.lane.b32.xlu0 %v6368, 96
      %v6568 = vpop.permute.xlu0 %6567
      %6569 = vrot.lane.b32.xlu0 %v6370, 96
      %v6570 = vpop.permute.xlu0 %6569
      %6571 = vrot.lane.b32.xlu0 %v6372, 96
      %v6572 = vpop.permute.xlu0 %6571
      %6573 = vrot.lane.b32.xlu0 %v6374, 96
      %v6574 = vpop.permute.xlu0 %6573
      %6575 = vrot.lane.b32.xlu0 %v6376, 96
      %v6576 = vpop.permute.xlu0 %6575
      %6577 = vrot.lane.b32.xlu0 %v6378, 96
      %v6578 = vpop.permute.xlu0 %6577
      %6579 = vrot.lane.b32.xlu0 %v6380, 96
      %v6580 = vpop.permute.xlu0 %6579
      %6581 = vrot.lane.b32.xlu0 %v6382, 96
      %v6582 = vpop.permute.xlu0 %6581
      %6583 = vrot.lane.b32.xlu0 %v6384, 96
      %v6584 = vpop.permute.xlu0 %6583
      %6585 = vrot.lane.b32.xlu0 %v6386, 96
      %v6586 = vpop.permute.xlu0 %6585
      %6587 = vrot.lane.b32.xlu0 %v6388, 96
      %v6588 = vpop.permute.xlu0 %6587
      %6589 = vrot.lane.b32.xlu0 %v6390, 96
      %v6590 = vpop.permute.xlu0 %6589
      %6591 = vrot.lane.b32.xlu0 %v6392, 96
      %v6592 = vpop.permute.xlu0 %6591
      %6593 = vrot.lane.b32.xlu0 %v6394, 96
      %v6594 = vpop.permute.xlu0 %6593
      %6595 = vrot.lane.b32.xlu0 %v6396, 96
      %v6596 = vpop.permute.xlu0 %6595
      %6597 = vrot.lane.b32.xlu0 %v6398, 96
      %v6598 = vpop.permute.xlu0 %6597
      %6599 = vrot.lane.b32.xlu0 %v6400, 96
      %v6600 = vpop.permute.xlu0 %6599
      %6601 = vrot.lane.b32.xlu0 %v6524, 96
      %v6602 = vpop.permute.xlu0 %6601
      %v6642 = vrot.slane %v5472, 5
      %v6643 = vrot.slane %v5474, 5
      %v6644 = vsel %vm656, %v6642, %v6643
      %v6645 = vrot.slane %v5476, 5
      %v6646 = vsel %vm656, %v6643, %v6645
      %v6647 = vrot.slane %v5478, 5
      %v6648 = vsel %vm656, %v6645, %v6647
      %v6649 = vrot.slane %v5480, 5
      %v6650 = vsel %vm656, %v6647, %v6649
      %v6651 = vrot.slane %v5482, 5
      %v6652 = vsel %vm656, %v6649, %v6651
      %v6653 = vrot.slane %v5484, 5
      %v6654 = vsel %vm656, %v6651, %v6653
      %v6655 = vrot.slane %v5486, 5
      %v6656 = vsel %vm656, %v6653, %v6655
      %v6657 = vrot.slane %v5488, 5
      %v6658 = vsel %vm656, %v6655, %v6657
      %v6659 = vrot.slane %v5490, 5
      %v6660 = vsel %vm656, %v6657, %v6659
      %v6661 = vrot.slane %v5492, 5
      %v6662 = vsel %vm656, %v6659, %v6661
      %v6663 = vrot.slane %v5494, 5
      %v6664 = vsel %vm656, %v6661, %v6663
      %v6665 = vrot.slane %v5496, 5
      %v6666 = vsel %vm656, %v6663, %v6665
      %v6667 = vrot.slane %v5498, 5
      %v6668 = vsel %vm656, %v6665, %v6667
      %v6669 = vrot.slane %v5500, 5
      %v6670 = vsel %vm656, %v6667, %v6669
      %v6671 = vrot.slane %v5502, 5
      %v6672 = vsel %vm656, %v6669, %v6671
      %v6673 = vrot.slane %v5504, 5
      %v6674 = vsel %vm656, %v6671, %v6673
      %v6675 = vrot.slane %v5506, 5
      %v6676 = vsel %vm656, %v6673, %v6675
      %v6677 = vrot.slane %v5508, 5
      %v6678 = vsel %vm656, %v6675, %v6677
      %v6679 = vrot.slane %v5510, 5
      %v6680 = vsel %vm656, %v6677, %v6679
      %v6681 = vrot.slane %v5512, 5
      %v6682 = vsel %vm656, %v6679, %v6681
      %v6683 = vrot.slane %v5514, 5
      %v6684 = vsel %vm656, %v6681, %v6683
      %v6685 = vrot.slane %v5516, 5
      %v6686 = vsel %vm656, %v6683, %v6685
      %v6687 = vrot.slane %v5518, 5
      %v6688 = vsel %vm656, %v6685, %v6687
      %v6689 = vrot.slane %v5520, 5
      %v6690 = vsel %vm656, %v6687, %v6689
      %v6691 = vrot.slane %v5522, 5
      %v6692 = vsel %vm656, %v6689, %v6691
      %v6693 = vrot.slane %v5524, 5
      %v6694 = vsel %vm656, %v6691, %v6693
      %v6695 = vrot.slane %v5526, 5
      %v6696 = vsel %vm656, %v6693, %v6695
      %v6697 = vrot.slane %v5528, 5
      %v6698 = vsel %vm656, %v6695, %v6697
      %v6699 = vrot.slane %v5530, 5
      %v6700 = vsel %vm656, %v6697, %v6699
      %v6701 = vrot.slane %v5532, 5
      %v6702 = vsel %vm656, %v6699, %v6701
      %v6703 = vrot.slane %v5534, 5
      %v6704 = vsel %vm656, %v6701, %v6703
      %v6705 = vrot.slane %v5536, 5
      %v6706 = vsel %vm656, %v6703, %v6705
      %v6707 = vrot.slane %v5538, 5
      %v6708 = vsel %vm656, %v6705, %v6707
      %v6709 = vrot.slane %v5540, 5
      %v6710 = vsel %vm656, %v6707, %v6709
      %v6711 = vrot.slane %v5542, 5
      %v6712 = vsel %vm656, %v6709, %v6711
      %v6713 = vrot.slane %v5544, 5
      %v6714 = vsel %vm656, %v6711, %v6713
      %v6715 = vrot.slane %v5546, 5
      %v6716 = vsel %vm656, %v6713, %v6715
      %v6717 = vrot.slane %v5590, 5
      %v6718 = vsel %vm656, %v6715, %v6717
      %v6719 = vsel %vm656, %v6717, %v1931
      %6720 = vrot.lane.b32.xlu0 %v6644, 112
      %v6721 = vpop.permute.xlu0 %6720
      %6722 = vrot.lane.b32.xlu0 %v6646, 112
      %v6723 = vpop.permute.xlu0 %6722
      %6724 = vrot.lane.b32.xlu0 %v6648, 112
      %v6725 = vpop.permute.xlu0 %6724
      %6726 = vrot.lane.b32.xlu0 %v6650, 112
      %v6727 = vpop.permute.xlu0 %6726
      %6728 = vrot.lane.b32.xlu0 %v6652, 112
      %v6729 = vpop.permute.xlu0 %6728
      %6730 = vrot.lane.b32.xlu0 %v6654, 112
      %v6731 = vpop.permute.xlu0 %6730
      %6732 = vrot.lane.b32.xlu0 %v6656, 112
      %v6733 = vpop.permute.xlu0 %6732
      %6734 = vrot.lane.b32.xlu0 %v6658, 112
      %v6735 = vpop.permute.xlu0 %6734
      %6736 = vrot.lane.b32.xlu0 %v6660, 112
      %v6737 = vpop.permute.xlu0 %6736
      %6738 = vrot.lane.b32.xlu0 %v6662, 112
      %v6739 = vpop.permute.xlu0 %6738
      %6740 = vrot.lane.b32.xlu0 %v6664, 112
      %v6741 = vpop.permute.xlu0 %6740
      %6742 = vrot.lane.b32.xlu0 %v6666, 112
      %v6743 = vpop.permute.xlu0 %6742
      %6744 = vrot.lane.b32.xlu0 %v6668, 112
      %v6745 = vpop.permute.xlu0 %6744
      %6746 = vrot.lane.b32.xlu0 %v6670, 112
      %v6747 = vpop.permute.xlu0 %6746
      %6748 = vrot.lane.b32.xlu0 %v6672, 112
      %v6749 = vpop.permute.xlu0 %6748
      %6750 = vrot.lane.b32.xlu0 %v6674, 112
      %v6751 = vpop.permute.xlu0 %6750
      %6752 = vrot.lane.b32.xlu0 %v6676, 112
      %v6753 = vpop.permute.xlu0 %6752
      %6754 = vrot.lane.b32.xlu0 %v6678, 112
      %v6755 = vpop.permute.xlu0 %6754
      %6756 = vrot.lane.b32.xlu0 %v6680, 112
      %v6757 = vpop.permute.xlu0 %6756
      %6758 = vrot.lane.b32.xlu0 %v6682, 112
      %v6759 = vpop.permute.xlu0 %6758
      %6760 = vrot.lane.b32.xlu0 %v6684, 112
      %v6761 = vpop.permute.xlu0 %6760
      %6762 = vrot.lane.b32.xlu0 %v6686, 112
      %v6763 = vpop.permute.xlu0 %6762
      %6764 = vrot.lane.b32.xlu0 %v6688, 112
      %v6765 = vpop.permute.xlu0 %6764
      %6766 = vrot.lane.b32.xlu0 %v6690, 112
      %v6767 = vpop.permute.xlu0 %6766
      %6768 = vrot.lane.b32.xlu0 %v6692, 112
      %v6769 = vpop.permute.xlu0 %6768
      %6770 = vrot.lane.b32.xlu0 %v6694, 112
      %v6771 = vpop.permute.xlu0 %6770
      %6772 = vrot.lane.b32.xlu0 %v6696, 112
      %v6773 = vpop.permute.xlu0 %6772
      %6774 = vrot.lane.b32.xlu0 %v6698, 112
      %v6775 = vpop.permute.xlu0 %6774
      %6776 = vrot.lane.b32.xlu0 %v6700, 112
      %v6777 = vpop.permute.xlu0 %6776
      %6778 = vrot.lane.b32.xlu0 %v6702, 112
      %v6779 = vpop.permute.xlu0 %6778
      %6780 = vrot.lane.b32.xlu0 %v6704, 112
      %v6781 = vpop.permute.xlu0 %6780
      %6782 = vrot.lane.b32.xlu0 %v6706, 112
      %v6783 = vpop.permute.xlu0 %6782
      %6784 = vrot.lane.b32.xlu0 %v6708, 112
      %v6785 = vpop.permute.xlu0 %6784
      %6786 = vrot.lane.b32.xlu0 %v6710, 112
      %v6787 = vpop.permute.xlu0 %6786
      %6788 = vrot.lane.b32.xlu0 %v6712, 112
      %v6789 = vpop.permute.xlu0 %6788
      %6790 = vrot.lane.b32.xlu0 %v6714, 112
      %v6791 = vpop.permute.xlu0 %6790
      %6792 = vrot.lane.b32.xlu0 %v6716, 112
      %v6793 = vpop.permute.xlu0 %6792
      %6794 = vrot.lane.b32.xlu0 %v6718, 112
      %v6795 = vpop.permute.xlu0 %6794
      %6796 = vrot.lane.b32.xlu0 %v6719, 112
      %v6797 = vpop.permute.xlu0 %6796
      %v6837 = vrot.slane %v5472, 6
      %v6838 = vrot.slane %v5474, 6
      %v6839 = vsel %vm2054, %v6837, %v6838
      %v6840 = vrot.slane %v5476, 6
      %v6841 = vsel %vm2054, %v6838, %v6840
      %v6842 = vrot.slane %v5478, 6
      %v6843 = vsel %vm2054, %v6840, %v6842
      %v6844 = vrot.slane %v5480, 6
      %v6845 = vsel %vm2054, %v6842, %v6844
      %v6846 = vrot.slane %v5482, 6
      %v6847 = vsel %vm2054, %v6844, %v6846
      %v6848 = vrot.slane %v5484, 6
      %v6849 = vsel %vm2054, %v6846, %v6848
      %v6850 = vrot.slane %v5486, 6
      %v6851 = vsel %vm2054, %v6848, %v6850
      %v6852 = vrot.slane %v5488, 6
      %v6853 = vsel %vm2054, %v6850, %v6852
      %v6854 = vrot.slane %v5490, 6
      %v6855 = vsel %vm2054, %v6852, %v6854
      %v6856 = vrot.slane %v5492, 6
      %v6857 = vsel %vm2054, %v6854, %v6856
      %v6858 = vrot.slane %v5494, 6
      %v6859 = vsel %vm2054, %v6856, %v6858
      %v6860 = vrot.slane %v5496, 6
      %v6861 = vsel %vm2054, %v6858, %v6860
      %v6862 = vrot.slane %v5498, 6
      %v6863 = vsel %vm2054, %v6860, %v6862
      %v6864 = vrot.slane %v5500, 6
      %v6865 = vsel %vm2054, %v6862, %v6864
      %v6866 = vrot.slane %v5502, 6
      %v6867 = vsel %vm2054, %v6864, %v6866
      %v6868 = vrot.slane %v5504, 6
      %v6869 = vsel %vm2054, %v6866, %v6868
      %v6870 = vrot.slane %v5506, 6
      %v6871 = vsel %vm2054, %v6868, %v6870
      %v6872 = vrot.slane %v5508, 6
      %v6873 = vsel %vm2054, %v6870, %v6872
      %v6874 = vrot.slane %v5510, 6
      %v6875 = vsel %vm2054, %v6872, %v6874
      %v6876 = vrot.slane %v5512, 6
      %v6877 = vsel %vm2054, %v6874, %v6876
      %v6878 = vrot.slane %v5514, 6
      %v6879 = vsel %vm2054, %v6876, %v6878
      %v6880 = vrot.slane %v5516, 6
      %v6881 = vsel %vm2054, %v6878, %v6880
      %v6882 = vrot.slane %v5518, 6
      %v6883 = vsel %vm2054, %v6880, %v6882
      %v6884 = vrot.slane %v5520, 6
      %v6885 = vsel %vm2054, %v6882, %v6884
      %v6886 = vrot.slane %v5522, 6
      %v6887 = vsel %vm2054, %v6884, %v6886
      %v6888 = vrot.slane %v5524, 6
      %v6889 = vsel %vm2054, %v6886, %v6888
      %v6890 = vrot.slane %v5526, 6
      %v6891 = vsel %vm2054, %v6888, %v6890
      %v6892 = vrot.slane %v5528, 6
      %v6893 = vsel %vm2054, %v6890, %v6892
      %v6894 = vrot.slane %v5530, 6
      %v6895 = vsel %vm2054, %v6892, %v6894
      %v6896 = vrot.slane %v5532, 6
      %v6897 = vsel %vm2054, %v6894, %v6896
      %v6898 = vrot.slane %v5534, 6
      %v6899 = vsel %vm2054, %v6896, %v6898
      %v6900 = vrot.slane %v5536, 6
      %v6901 = vsel %vm2054, %v6898, %v6900
      %v6902 = vrot.slane %v5538, 6
      %v6903 = vsel %vm2054, %v6900, %v6902
      %v6904 = vrot.slane %v5540, 6
      %v6905 = vsel %vm2054, %v6902, %v6904
      %v6906 = vrot.slane %v5542, 6
      %v6907 = vsel %vm2054, %v6904, %v6906
      %v6908 = vrot.slane %v5544, 6
      %v6909 = vsel %vm2054, %v6906, %v6908
      %v6910 = vrot.slane %v5546, 6
      %v6911 = vsel %vm2054, %v6908, %v6910
      %v6912 = vrot.slane %v5590, 6
      %v6913 = vsel %vm2054, %v6910, %v6912
      %v6914 = vsel %vm2054, %v6912, %v2132
      %v6954 = vsel %vm2381, 0.0, %v5671
      %v6955 = vsel %vm2381, %v5589, %v5673
      %v6956 = vsel %vm2381, %v5470, %v5675
      %v6957 = vsel %vm2381, %v5472, %v5677
      %v6958 = vsel %vm2381, %v5474, %v5679
      %v6959 = vsel %vm2381, %v5476, %v5681
      %v6960 = vsel %vm2381, %v5478, %v5683
      %v6961 = vsel %vm2381, %v5480, %v5685
      %v6962 = vsel %vm2381, %v5482, %v5687
      %v6963 = vsel %vm2381, %v5484, %v5689
      %v6964 = vsel %vm2381, %v5486, %v5691
      %v6965 = vsel %vm2381, %v5488, %v5693
      %v6966 = vsel %vm2381, %v5490, %v5695
      %v6967 = vsel %vm2381, %v5492, %v5697
      %v6968 = vsel %vm2381, %v5494, %v5699
      %v6969 = vsel %vm2381, %v5496, %v5701
      %v6970 = vsel %vm2381, %v5498, %v5703
      %v6971 = vsel %vm2381, %v5500, %v5705
      %v6972 = vsel %vm2381, %v5502, %v5707
      %v6973 = vsel %vm2381, %v5504, %v5709
      %v6974 = vsel %vm2381, %v5506, %v5711
      %v6975 = vsel %vm2381, %v5508, %v5713
      %v6976 = vsel %vm2381, %v5510, %v5715
      %v6977 = vsel %vm2381, %v5512, %v5717
      %v6978 = vsel %vm2381, %v5514, %v5719
      %v6979 = vsel %vm2381, %v5516, %v5721
      %v6980 = vsel %vm2381, %v5518, %v5723
      %v6981 = vsel %vm2381, %v5520, %v5725
      %v6982 = vsel %vm2381, %v5522, %v5727
      %v6983 = vsel %vm2381, %v5524, %v5729
      %v6984 = vsel %vm2381, %v5526, %v5731
      %v6985 = vsel %vm2381, %v5528, %v5733
      %v6986 = vsel %vm2381, %v5530, %v5735
      %v6987 = vsel %vm2381, %v5532, %v5737
      %v6988 = vsel %vm2381, %v5534, %v5739
      %v6989 = vsel %vm2381, %v5536, %v5741
      %v6990 = vsel %vm2381, %v5538, %v5743
      %v6991 = vsel %vm2381, %v5540, %v5745
      %v6992 = vsel %vm2381, %v5542, %v5747
      %v6993 = vsel %vm2381, %v5544, %v5749
      %v6994 = vsel %vm2549, %v6954, %v5869
      %v6995 = vsel %vm2549, %v6955, %v5871
      %v6996 = vsel %vm2549, %v6956, %v5873
      %v6997 = vsel %vm2549, %v6957, %v5875
      %v6998 = vsel %vm2549, %v6958, %v5877
      %v6999 = vsel %vm2549, %v6959, %v5879
      %v7000 = vsel %vm2549, %v6960, %v5881
      %v7001 = vsel %vm2549, %v6961, %v5883
      %v7002 = vsel %vm2549, %v6962, %v5885
      %v7003 = vsel %vm2549, %v6963, %v5887
      %v7004 = vsel %vm2549, %v6964, %v5889
      %v7005 = vsel %vm2549, %v6965, %v5891
      %v7006 = vsel %vm2549, %v6966, %v5893
      %v7007 = vsel %vm2549, %v6967, %v5895
      %v7008 = vsel %vm2549, %v6968, %v5897
      %v7009 = vsel %vm2549, %v6969, %v5899
      %v7010 = vsel %vm2549, %v6970, %v5901
      %v7011 = vsel %vm2549, %v6971, %v5903
      %v7012 = vsel %vm2549, %v6972, %v5905
      %v7013 = vsel %vm2549, %v6973, %v5907
      %v7014 = vsel %vm2549, %v6974, %v5909
      %v7015 = vsel %vm2549, %v6975, %v5911
      %v7016 = vsel %vm2549, %v6976, %v5913
      %v7017 = vsel %vm2549, %v6977, %v5915
      %v7018 = vsel %vm2549, %v6978, %v5917
      %v7019 = vsel %vm2549, %v6979, %v5919
      %v7020 = vsel %vm2549, %v6980, %v5921
      %v7021 = vsel %vm2549, %v6981, %v5923
      %v7022 = vsel %vm2549, %v6982, %v5925
      %v7023 = vsel %vm2549, %v6983, %v5927
      %v7024 = vsel %vm2549, %v6984, %v5929
      %v7025 = vsel %vm2549, %v6985, %v5931
      %v7026 = vsel %vm2549, %v6986, %v5933
      %v7027 = vsel %vm2549, %v6987, %v5935
      %v7028 = vsel %vm2549, %v6988, %v5937
      %v7029 = vsel %vm2549, %v6989, %v5939
      %v7030 = vsel %vm2549, %v6990, %v5941
      %v7031 = vsel %vm2549, %v6991, %v5943
      %v7032 = vsel %vm2549, %v6992, %v5945
      %v7033 = vsel %vm2549, %v6993, %v5947
      %v7034 = vsel %vm4728, %v4687, %v5994
      %v7035 = vsel %vm4728, %v6994, %v5996
      %v7036 = vsel %vm4728, %v6995, %v5998
      %v7037 = vsel %vm4728, %v6996, %v6000
      %v7038 = vsel %vm4728, %v6997, %v6002
      %v7039 = vsel %vm4728, %v6998, %v6004
      %v7040 = vsel %vm4728, %v6999, %v6006
      %v7041 = vsel %vm4728, %v7000, %v6008
      %v7042 = vsel %vm4728, %v7001, %v6010
      %v7043 = vsel %vm4728, %v7002, %v6012
      %v7044 = vsel %vm4728, %v7003, %v6014
      %v7045 = vsel %vm4728, %v7004, %v6016
      %v7046 = vsel %vm4728, %v7005, %v6018
      %v7047 = vsel %vm4728, %v7006, %v6020
      %v7048 = vsel %vm4728, %v7007, %v6022
      %v7049 = vsel %vm4728, %v7008, %v6024
      %v7050 = vsel %vm4728, %v7009, %v6026
      %v7051 = vsel %vm4728, %v7010, %v6028
      %v7052 = vsel %vm4728, %v7011, %v6030
      %v7053 = vsel %vm4728, %v7012, %v6032
      %v7054 = vsel %vm4728, %v7013, %v6034
      %v7055 = vsel %vm4728, %v7014, %v6036
      %v7056 = vsel %vm4728, %v7015, %v6038
      %v7057 = vsel %vm4728, %v7016, %v6040
      %v7058 = vsel %vm4728, %v7017, %v6042
      %v7059 = vsel %vm4728, %v7018, %v6044
      %v7060 = vsel %vm4728, %v7019, %v6046
      %v7061 = vsel %vm4728, %v7020, %v6048
      %v7062 = vsel %vm4728, %v7021, %v6050
      %v7063 = vsel %vm4728, %v7022, %v6052
      %v7064 = vsel %vm4728, %v7023, %v6054
      %v7065 = vsel %vm4728, %v7024, %v6056
      %v7066 = vsel %vm4728, %v7025, %v6058
      %v7067 = vsel %vm4728, %v7026, %v6060
      %v7068 = vsel %vm4728, %v7027, %v6062
      %v7069 = vsel %vm4728, %v7028, %v6064
      %v7070 = vsel %vm4728, %v7029, %v6066
      %v7071 = vsel %vm4728, %v7030, %v6068
      %v7072 = vsel %vm4728, %v7031, %v6070
      %v7073 = vsel %vm4728, %v7032, %v6072
      %v7074 = vsel %vm4728, %v7033, %v6074
      %v7075 = vsel %vm4770, %v7034, %v6198
      %v7076 = vsel %vm4770, %v7035, %v6200
      %v7077 = vsel %vm4770, %v7036, %v6202
      %v7078 = vsel %vm4770, %v7037, %v6204
      %v7079 = vsel %vm4770, %v7038, %v6206
      %v7080 = vsel %vm4770, %v7039, %v6208
      %v7081 = vsel %vm4770, %v7040, %v6210
      %v7082 = vsel %vm4770, %v7041, %v6212
      %v7083 = vsel %vm4770, %v7042, %v6214
      %v7084 = vsel %vm4770, %v7043, %v6216
      %v7085 = vsel %vm4770, %v7044, %v6218
      %v7086 = vsel %vm4770, %v7045, %v6220
      %v7087 = vsel %vm4770, %v7046, %v6222
      %v7088 = vsel %vm4770, %v7047, %v6224
      %v7089 = vsel %vm4770, %v7048, %v6226
      %v7090 = vsel %vm4770, %v7049, %v6228
      %v7091 = vsel %vm4770, %v7050, %v6230
      %v7092 = vsel %vm4770, %v7051, %v6232
      %v7093 = vsel %vm4770, %v7052, %v6234
      %v7094 = vsel %vm4770, %v7053, %v6236
      %v7095 = vsel %vm4770, %v7054, %v6238
      %v7096 = vsel %vm4770, %v7055, %v6240
      %v7097 = vsel %vm4770, %v7056, %v6242
      %v7098 = vsel %vm4770, %v7057, %v6244
      %v7099 = vsel %vm4770, %v7058, %v6246
      %v7100 = vsel %vm4770, %v7059, %v6248
      %v7101 = vsel %vm4770, %v7060, %v6250
      %v7102 = vsel %vm4770, %v7061, %v6252
      %v7103 = vsel %vm4770, %v7062, %v6254
      %v7104 = vsel %vm4770, %v7063, %v6256
      %v7105 = vsel %vm4770, %v7064, %v6258
      %v7106 = vsel %vm4770, %v7065, %v6260
      %v7107 = vsel %vm4770, %v7066, %v6262
      %v7108 = vsel %vm4770, %v7067, %v6264
      %v7109 = vsel %vm4770, %v7068, %v6266
      %v7110 = vsel %vm4770, %v7069, %v6268
      %v7111 = vsel %vm4770, %v7070, %v6270
      %v7112 = vsel %vm4770, %v7071, %v6272
      %v7113 = vsel %vm4770, %v7072, %v6274
      %v7114 = vsel %vm4770, %v7073, %v6276
      %v7115 = vsel %vm4770, %v7074, %v6278
      %v7116 = vsel %vm4812, %v7075, %v6402
      %v7117 = vsel %vm4812, %v7076, %v6404
      %v7118 = vsel %vm4812, %v7077, %v6406
      %v7119 = vsel %vm4812, %v7078, %v6408
      %v7120 = vsel %vm4812, %v7079, %v6410
      %v7121 = vsel %vm4812, %v7080, %v6412
      %v7122 = vsel %vm4812, %v7081, %v6414
      %v7123 = vsel %vm4812, %v7082, %v6416
      %v7124 = vsel %vm4812, %v7083, %v6418
      %v7125 = vsel %vm4812, %v7084, %v6420
      %v7126 = vsel %vm4812, %v7085, %v6422
      %v7127 = vsel %vm4812, %v7086, %v6424
      %v7128 = vsel %vm4812, %v7087, %v6426
      %v7129 = vsel %vm4812, %v7088, %v6428
      %v7130 = vsel %vm4812, %v7089, %v6430
      %v7131 = vsel %vm4812, %v7090, %v6432
      %v7132 = vsel %vm4812, %v7091, %v6434
      %v7133 = vsel %vm4812, %v7092, %v6436
      %v7134 = vsel %vm4812, %v7093, %v6438
      %v7135 = vsel %vm4812, %v7094, %v6440
      %v7136 = vsel %vm4812, %v7095, %v6442
      %v7137 = vsel %vm4812, %v7096, %v6444
      %v7138 = vsel %vm4812, %v7097, %v6446
      %v7139 = vsel %vm4812, %v7098, %v6448
      %v7140 = vsel %vm4812, %v7099, %v6450
      %v7141 = vsel %vm4812, %v7100, %v6452
      %v7142 = vsel %vm4812, %v7101, %v6454
      %v7143 = vsel %vm4812, %v7102, %v6456
      %v7144 = vsel %vm4812, %v7103, %v6458
      %v7145 = vsel %vm4812, %v7104, %v6460
      %v7146 = vsel %vm4812, %v7105, %v6462
      %v7147 = vsel %vm4812, %v7106, %v6464
      %v7148 = vsel %vm4812, %v7107, %v6466
      %v7149 = vsel %vm4812, %v7108, %v6468
      %v7150 = vsel %vm4812, %v7109, %v6470
      %v7151 = vsel %vm4812, %v7110, %v6472
      %v7152 = vsel %vm4812, %v7111, %v6474
      %v7153 = vsel %vm4812, %v7112, %v6476
      %v7154 = vsel %vm4812, %v7113, %v6478
      %v7155 = vsel %vm4812, %v7114, %v6480
      %v7156 = vsel %vm4812, %v7115, %v6482
      %v7157 = vsel %vm4854, %v7116, %v6526
      %v7158 = vsel %vm4854, %v7117, %v6528
      %v7159 = vsel %vm4854, %v7118, %v6530
      %v7160 = vsel %vm4854, %v7119, %v6532
      %v7161 = vsel %vm4854, %v7120, %v6534
      %v7162 = vsel %vm4854, %v7121, %v6536
      %v7163 = vsel %vm4854, %v7122, %v6538
      %v7164 = vsel %vm4854, %v7123, %v6540
      %v7165 = vsel %vm4854, %v7124, %v6542
      %v7166 = vsel %vm4854, %v7125, %v6544
      %v7167 = vsel %vm4854, %v7126, %v6546
      %v7168 = vsel %vm4854, %v7127, %v6548
      %v7169 = vsel %vm4854, %v7128, %v6550
      %v7170 = vsel %vm4854, %v7129, %v6552
      %v7171 = vsel %vm4854, %v7130, %v6554
      %v7172 = vsel %vm4854, %v7131, %v6556
      %v7173 = vsel %vm4854, %v7132, %v6558
      %v7174 = vsel %vm4854, %v7133, %v6560
      %v7175 = vsel %vm4854, %v7134, %v6562
      %v7176 = vsel %vm4854, %v7135, %v6564
      %v7177 = vsel %vm4854, %v7136, %v6566
      %v7178 = vsel %vm4854, %v7137, %v6568
      %v7179 = vsel %vm4854, %v7138, %v6570
      %v7180 = vsel %vm4854, %v7139, %v6572
      %v7181 = vsel %vm4854, %v7140, %v6574
      %v7182 = vsel %vm4854, %v7141, %v6576
      %v7183 = vsel %vm4854, %v7142, %v6578
      %v7184 = vsel %vm4854, %v7143, %v6580
      %v7185 = vsel %vm4854, %v7144, %v6582
      %v7186 = vsel %vm4854, %v7145, %v6584
      %v7187 = vsel %vm4854, %v7146, %v6586
      %v7188 = vsel %vm4854, %v7147, %v6588
      %v7189 = vsel %vm4854, %v7148, %v6590
      %v7190 = vsel %vm4854, %v7149, %v6592
      %v7191 = vsel %vm4854, %v7150, %v6594
      %v7192 = vsel %vm4854, %v7151, %v6596
      %v7193 = vsel %vm4854, %v7152, %v6598
      %v7194 = vsel %vm4854, %v7153, %v6600
      %v7195 = vsel %vm4854, %v7154, %v6602
      %v7196 = vsel %vm4854, %v7155, %v4286
      %v7197 = vsel %vm4854, %v7156, %v4288
      %v7198 = vsel %vm4896, %v7157, %v6721
      %v7199 = vsel %vm4896, %v7158, %v6723
      %v7200 = vsel %vm4896, %v7159, %v6725
      %v7201 = vsel %vm4896, %v7160, %v6727
      %v7202 = vsel %vm4896, %v7161, %v6729
      %v7203 = vsel %vm4896, %v7162, %v6731
      %v7204 = vsel %vm4896, %v7163, %v6733
      %v7205 = vsel %vm4896, %v7164, %v6735
      %v7206 = vsel %vm4896, %v7165, %v6737
      %v7207 = vsel %vm4896, %v7166, %v6739
      %v7208 = vsel %vm4896, %v7167, %v6741
      %v7209 = vsel %vm4896, %v7168, %v6743
      %v7210 = vsel %vm4896, %v7169, %v6745
      %v7211 = vsel %vm4896, %v7170, %v6747
      %v7212 = vsel %vm4896, %v7171, %v6749
      %v7213 = vsel %vm4896, %v7172, %v6751
      %v7214 = vsel %vm4896, %v7173, %v6753
      %v7215 = vsel %vm4896, %v7174, %v6755
      %v7216 = vsel %vm4896, %v7175, %v6757
      %v7217 = vsel %vm4896, %v7176, %v6759
      %v7218 = vsel %vm4896, %v7177, %v6761
      %v7219 = vsel %vm4896, %v7178, %v6763
      %v7220 = vsel %vm4896, %v7179, %v6765
      %v7221 = vsel %vm4896, %v7180, %v6767
      %v7222 = vsel %vm4896, %v7181, %v6769
      %v7223 = vsel %vm4896, %v7182, %v6771
      %v7224 = vsel %vm4896, %v7183, %v6773
      %v7225 = vsel %vm4896, %v7184, %v6775
      %v7226 = vsel %vm4896, %v7185, %v6777
      %v7227 = vsel %vm4896, %v7186, %v6779
      %v7228 = vsel %vm4896, %v7187, %v6781
      %v7229 = vsel %vm4896, %v7188, %v6783
      %v7230 = vsel %vm4896, %v7189, %v6785
      %v7231 = vsel %vm4896, %v7190, %v6787
      %v7232 = vsel %vm4896, %v7191, %v6789
      %v7233 = vsel %vm4896, %v7192, %v6791
      %v7234 = vsel %vm4896, %v7193, %v6793
      %v7235 = vsel %vm4896, %v7194, %v6795
      %v7236 = vsel %vm4896, %v7195, %v6797
      %v7237 = vsel %vm4896, %v7196, %v4487
      %v7238 = vsel %vm4896, %v7197, %v4487
      %v7239 = vpack.c.bf16 %v7199, %v7198
      %v7240 = vpack.c.bf16 %v6841, %v6839
      %v7241 = vpack.c.bf16 %v7201, %v7200
      %v7242 = vpack.c.bf16 %v6845, %v6843
      %v7243 = vpack.c.bf16 %v7203, %v7202
      %v7244 = vpack.c.bf16 %v6849, %v6847
      %v7245 = vpack.c.bf16 %v7205, %v7204
      %v7246 = vpack.c.bf16 %v6853, %v6851
      %v7247 = vpack.c.bf16 %v7207, %v7206
      %v7248 = vpack.c.bf16 %v6857, %v6855
      %v7249 = vpack.c.bf16 %v7209, %v7208
      %v7250 = vpack.c.bf16 %v6861, %v6859
      %v7251 = vpack.c.bf16 %v7211, %v7210
      %v7252 = vpack.c.bf16 %v6865, %v6863
      %v7253 = vpack.c.bf16 %v7213, %v7212
      %v7254 = vpack.c.bf16 %v6869, %v6867
      %v7255 = vpack.c.bf16 %v7215, %v7214
      %v7256 = vpack.c.bf16 %v6873, %v6871
      %v7257 = vpack.c.bf16 %v7217, %v7216
      %v7258 = vpack.c.bf16 %v6877, %v6875
      %v7259 = vpack.c.bf16 %v7219, %v7218
      %v7260 = vpack.c.bf16 %v6881, %v6879
      %v7261 = vpack.c.bf16 %v7221, %v7220
      %v7262 = vpack.c.bf16 %v6885, %v6883
      %v7263 = vpack.c.bf16 %v7223, %v7222
      %v7264 = vpack.c.bf16 %v6889, %v6887
      %v7265 = vpack.c.bf16 %v7225, %v7224
      %v7266 = vpack.c.bf16 %v6893, %v6891
      %v7267 = vpack.c.bf16 %v7227, %v7226
      %v7268 = vpack.c.bf16 %v6897, %v6895
      %v7269 = vpack.c.bf16 %v7229, %v7228
      %v7270 = vpack.c.bf16 %v6901, %v6899
      %v7271 = vpack.c.bf16 %v7231, %v7230
      %v7272 = vpack.c.bf16 %v6905, %v6903
      %v7273 = vpack.c.bf16 %v7233, %v7232
      %v7274 = vpack.c.bf16 %v6909, %v6907
      %v7275 = vpack.c.bf16 %v7235, %v7234
      %v7276 = vpack.c.bf16 %v6913, %v6911
      %v7277 = vpack.c.bf16 %v7237, %v7236
      %v7278 = vpack.c.bf16 %v2134, %v6914
      %v7279 = vpack.c.bf16 %v7238, %v7238
      %v7280 = vld [vmem:[%s7] sm:$0xf]
      %v7281 = vld [vmem:[%s7 + $0x4] sm:$0xf]
      %v7282 = vld [vmem:[%s7 + $0x8] sm:$0xf]
      %v7283 = vld [vmem:[%s7 + $0xc] sm:$0xf]
      %v7284 = vld [vmem:[%s7 + $0x10] sm:$0xf]
      %v7285 = vld [vmem:[%s7 + $0x14] sm:$0xf]
      %v7286 = vld [vmem:[%s7 + $0x18] sm:$0xf]
      %v7287 = vld [vmem:[%s7 + $0x1c] sm:$0xf]
      %v7288 = vld [vmem:[%s7 + $0x20] sm:$0xf]
      %v7289 = vld [vmem:[%s7 + $0x24] sm:$0xf]
      %v7290 = vld [vmem:[%s7 + $0x28] sm:$0xf]
      %v7291 = vld [vmem:[%s7 + $0x2c] sm:$0xf]
      %v7292 = vld [vmem:[%s7 + $0x30] sm:$0xf]
      %v7293 = vld [vmem:[%s7 + $0x34] sm:$0xf]
      %v7294 = vld [vmem:[%s7 + $0x38] sm:$0xf]
      %v7295 = vld [vmem:[%s7 + $0x3c] sm:$0xf]
      %v7296 = vld [vmem:[%s7 + $0x40] sm:$0xf]
      %v7297 = vld [vmem:[%s7 + $0x44] sm:$0xf]
      %v7298 = vld [vmem:[%s8] sm:$0x1]
      %v7300 = vperm.slane %v7298, 0
      %v7320 = vunpack.c.l.b16 %v7280
      %v7321 = vunpack.c.l.b16 %v7281
      %v7322 = vunpack.c.l.b16 %v7282
      %v7323 = vunpack.c.l.b16 %v7283
      %v7324 = vunpack.c.l.b16 %v7284
      %v7325 = vunpack.c.l.b16 %v7285
      %v7326 = vunpack.c.l.b16 %v7286
      %v7327 = vunpack.c.l.b16 %v7287
      %v7328 = vunpack.c.l.b16 %v7288
      %v7329 = vunpack.c.l.b16 %v7289
      %v7330 = vunpack.c.l.b16 %v7290
      %v7331 = vunpack.c.l.b16 %v7291
      %v7332 = vunpack.c.l.b16 %v7292
      %v7333 = vunpack.c.l.b16 %v7293
      %v7334 = vunpack.c.l.b16 %v7294
      %v7335 = vunpack.c.l.b16 %v7295
      %v7336 = vunpack.c.l.b16 %v7296
      %v7337 = vunpack.c.l.b16 %v7297
      %v7338 = vpack.c.b16 %v7321, %v7320
      %v7339 = vpack.c.b16 %v7323, %v7322
      %v7340 = vpack.c.b16 %v7325, %v7324
      %v7341 = vpack.c.b16 %v7327, %v7326
      %v7342 = vpack.c.b16 %v7329, %v7328
      %v7343 = vpack.c.b16 %v7331, %v7330
      %v7344 = vpack.c.b16 %v7333, %v7332
      %v7345 = vpack.c.b16 %v7335, %v7334
      %v7346 = vpack.c.b16 %v7337, %v7336
      %v7357 = vsel %vm2381, %v7240, 0
      %v7360 = vsel %vm2381, %v7242, 0
      %v7363 = vsel %vm2381, %v7244, 0
      %v7366 = vsel %vm2381, %v7246, 0
      %v7369 = vsel %vm2381, %v7248, 0
      %v7372 = vsel %vm2381, %v7250, 0
      %v7375 = vsel %vm2381, %v7252, 0
      %v7378 = vsel %vm2381, %v7254, 0
      %v7381 = vsel %vm2381, %v7256, 0
      %v7384 = vsel %vm2381, %v7258, 0
      %v7387 = vsel %vm2381, %v7260, 0
      %v7390 = vsel %vm2381, %v7262, 0
      %v7393 = vsel %vm2381, %v7264, 0
      %v7396 = vsel %vm2381, %v7266, 0
      %v7399 = vsel %vm2381, %v7268, 0
      %v7402 = vsel %vm2381, %v7270, 0
      %v7405 = vsel %vm2381, %v7272, 0
      %v7408 = vsel %vm2381, %v7274, 0
      %v7411 = vsel %vm2381, %v7276, 0
      %v7414 = vsel %vm2381, %v7278, 0
      %7416 = vmatpush.bf16.msra.mxu0 %v7345
      %7417 = vmatpush.bf16.msra.mxu0 %v7344
      %7418 = vmatpush.bf16.msra.mxu0 %v7343
      %7419 = vmatpush.bf16.msra.mxu0 %v7342
      %7420 = vmatpush.bf16.msra.mxu0 %v7341
      %7421 = vmatpush.bf16.msra.mxu0 %v7340
      %7422 = vmatpush.bf16.msra.mxu0 %v7339
      %7423 = vmatpush.bf16.msra.mxu0 %v7338
      %7424 = vmatmul.bf16.gmra.mxu0 %v7239
      %v7425 = vpop.f32.mrf.mxu0
      %v7426 = vadd.f32 %v7300, %v7425
      %v7427 = vpop.f32.mrf.mxu0
      %v7428 = vadd.f32 %v7300, %v7427
      %7429 = vmatmul.bf16.gmra.mxu0 %v7241
      %v7430 = vpop.f32.mrf.mxu0
      %v7431 = vadd.f32 %v7300, %v7430
      %v7432 = vpop.f32.mrf.mxu0
      %v7433 = vadd.f32 %v7300, %v7432
      %7434 = vmatmul.bf16.gmra.mxu0 %v7243
      %v7435 = vpop.f32.mrf.mxu0
      %v7436 = vadd.f32 %v7300, %v7435
      %v7437 = vpop.f32.mrf.mxu0
      %v7438 = vadd.f32 %v7300, %v7437
      %7439 = vmatmul.bf16.gmra.mxu0 %v7245
      %v7440 = vpop.f32.mrf.mxu0
      %v7441 = vadd.f32 %v7300, %v7440
      %v7442 = vpop.f32.mrf.mxu0
      %v7443 = vadd.f32 %v7300, %v7442
      %7444 = vmatmul.bf16.gmra.mxu0 %v7247
      %v7445 = vpop.f32.mrf.mxu0
      %v7446 = vadd.f32 %v7300, %v7445
      %v7447 = vpop.f32.mrf.mxu0
      %v7448 = vadd.f32 %v7300, %v7447
      %7449 = vmatmul.bf16.gmra.mxu0 %v7249
      %v7450 = vpop.f32.mrf.mxu0
      %v7451 = vadd.f32 %v7300, %v7450
      %v7452 = vpop.f32.mrf.mxu0
      %v7453 = vadd.f32 %v7300, %v7452
      %7454 = vmatmul.bf16.gmra.mxu0 %v7251
      %v7455 = vpop.f32.mrf.mxu0
      %v7456 = vadd.f32 %v7300, %v7455
      %v7457 = vpop.f32.mrf.mxu0
      %v7458 = vadd.f32 %v7300, %v7457
      %7459 = vmatmul.bf16.gmra.mxu0 %v7253
      %v7460 = vpop.f32.mrf.mxu0
      %v7461 = vadd.f32 %v7300, %v7460
      %v7462 = vpop.f32.mrf.mxu0
      %v7463 = vadd.f32 %v7300, %v7462
      %7464 = vmatmul.bf16.gmra.mxu0 %v7255
      %v7465 = vpop.f32.mrf.mxu0
      %v7466 = vadd.f32 %v7300, %v7465
      %v7467 = vpop.f32.mrf.mxu0
      %v7468 = vadd.f32 %v7300, %v7467
      %7469 = vmatmul.bf16.gmra.mxu0 %v7257
      %v7470 = vpop.f32.mrf.mxu0
      %v7471 = vadd.f32 %v7300, %v7470
      %v7472 = vpop.f32.mrf.mxu0
      %v7473 = vadd.f32 %v7300, %v7472
      %7474 = vmatmul.bf16.gmra.mxu0 %v7259
      %v7475 = vpop.f32.mrf.mxu0
      %v7476 = vadd.f32 %v7300, %v7475
      %v7477 = vpop.f32.mrf.mxu0
      %v7478 = vadd.f32 %v7300, %v7477
      %7479 = vmatmul.bf16.gmra.mxu0 %v7261
      %v7480 = vpop.f32.mrf.mxu0
      %v7481 = vadd.f32 %v7300, %v7480
      %v7482 = vpop.f32.mrf.mxu0
      %v7483 = vadd.f32 %v7300, %v7482
      %7484 = vmatmul.bf16.gmra.mxu0 %v7263
      %v7485 = vpop.f32.mrf.mxu0
      %v7486 = vadd.f32 %v7300, %v7485
      %v7487 = vpop.f32.mrf.mxu0
      %v7488 = vadd.f32 %v7300, %v7487
      %7489 = vmatmul.bf16.gmra.mxu0 %v7265
      %v7490 = vpop.f32.mrf.mxu0
      %v7491 = vadd.f32 %v7300, %v7490
      %v7492 = vpop.f32.mrf.mxu0
      %v7493 = vadd.f32 %v7300, %v7492
      %7494 = vmatmul.bf16.gmra.mxu0 %v7267
      %v7495 = vpop.f32.mrf.mxu0
      %v7496 = vadd.f32 %v7300, %v7495
      %v7497 = vpop.f32.mrf.mxu0
      %v7498 = vadd.f32 %v7300, %v7497
      %7499 = vmatmul.bf16.gmra.mxu0 %v7269
      %v7500 = vpop.f32.mrf.mxu0
      %v7501 = vadd.f32 %v7300, %v7500
      %v7502 = vpop.f32.mrf.mxu0
      %v7503 = vadd.f32 %v7300, %v7502
      %7504 = vmatmul.bf16.gmra.mxu0 %v7271
      %v7505 = vpop.f32.mrf.mxu0
      %v7506 = vadd.f32 %v7300, %v7505
      %v7507 = vpop.f32.mrf.mxu0
      %v7508 = vadd.f32 %v7300, %v7507
      %7509 = vmatmul.bf16.gmra.mxu0 %v7273
      %v7510 = vpop.f32.mrf.mxu0
      %v7511 = vadd.f32 %v7300, %v7510
      %v7512 = vpop.f32.mrf.mxu0
      %v7513 = vadd.f32 %v7300, %v7512
      %7514 = vmatmul.bf16.gmra.mxu0 %v7275
      %v7515 = vpop.f32.mrf.mxu0
      %v7516 = vadd.f32 %v7300, %v7515
      %v7517 = vpop.f32.mrf.mxu0
      %v7518 = vadd.f32 %v7300, %v7517
      %7519 = vmatmul.bf16.gmra.mxu0 %v7277
      %v7520 = vpop.f32.mrf.mxu0
      %v7521 = vadd.f32 %v7300, %v7520
      %v7522 = vpop.f32.mrf.mxu0
      %v7523 = vadd.f32 %v7300, %v7522
      %7524 = vmatmul.bf16.gmra.mxu0 %v7279
      %v7525 = vpop.f32.mrf.mxu0
      %v7526 = vadd.f32 %v7300, %v7525
      %v7527 = vpop.f32.mrf.mxu0
      %7528 = vdwg.mxu0
      %7529 = vmatpush.bf16.msra.mxu0 0
      %7530 = vmatpush.bf16.msra.mxu0 0
      %7531 = vmatpush.bf16.msra.mxu0 0
      %7532 = vmatpush.bf16.msra.mxu0 0
      %7533 = vmatpush.bf16.msra.mxu0 0
      %7534 = vmatpush.bf16.msra.mxu0 0
      %7535 = vmatpush.bf16.msra.mxu0 0
      %7536 = vmatpush.bf16.msra.mxu0 %v7346
      %7537 = vmatmul.bf16.gmra.mxu0 %v7357
      %v7538 = vpop.f32.mrf.mxu0
      %v7539 = vadd.f32 %v7426, %v7538
      %v7540 = vpop.f32.mrf.mxu0
      %v7541 = vadd.f32 %v7428, %v7540
      %7542 = vmatmul.bf16.gmra.mxu0 %v7360
      %v7543 = vpop.f32.mrf.mxu0
      %v7544 = vadd.f32 %v7431, %v7543
      %v7545 = vpop.f32.mrf.mxu0
      %v7546 = vadd.f32 %v7433, %v7545
      %7547 = vmatmul.bf16.gmra.mxu0 %v7363
      %v7548 = vpop.f32.mrf.mxu0
      %v7549 = vadd.f32 %v7436, %v7548
      %v7550 = vpop.f32.mrf.mxu0
      %v7551 = vadd.f32 %v7438, %v7550
      %7552 = vmatmul.bf16.gmra.mxu0 %v7366
      %v7553 = vpop.f32.mrf.mxu0
      %v7554 = vadd.f32 %v7441, %v7553
      %v7555 = vpop.f32.mrf.mxu0
      %v7556 = vadd.f32 %v7443, %v7555
      %7557 = vmatmul.bf16.gmra.mxu0 %v7369
      %v7558 = vpop.f32.mrf.mxu0
      %v7559 = vadd.f32 %v7446, %v7558
      %v7560 = vpop.f32.mrf.mxu0
      %v7561 = vadd.f32 %v7448, %v7560
      %7562 = vmatmul.bf16.gmra.mxu0 %v7372
      %v7563 = vpop.f32.mrf.mxu0
      %v7564 = vadd.f32 %v7451, %v7563
      %v7565 = vpop.f32.mrf.mxu0
      %v7566 = vadd.f32 %v7453, %v7565
      %7567 = vmatmul.bf16.gmra.mxu0 %v7375
      %v7568 = vpop.f32.mrf.mxu0
      %v7569 = vadd.f32 %v7456, %v7568
      %v7570 = vpop.f32.mrf.mxu0
      %v7571 = vadd.f32 %v7458, %v7570
      %7572 = vmatmul.bf16.gmra.mxu0 %v7378
      %v7573 = vpop.f32.mrf.mxu0
      %v7574 = vadd.f32 %v7461, %v7573
      %v7575 = vpop.f32.mrf.mxu0
      %v7576 = vadd.f32 %v7463, %v7575
      %7577 = vmatmul.bf16.gmra.mxu0 %v7381
      %v7578 = vpop.f32.mrf.mxu0
      %v7579 = vadd.f32 %v7466, %v7578
      %v7580 = vpop.f32.mrf.mxu0
      %v7581 = vadd.f32 %v7468, %v7580
      %7582 = vmatmul.bf16.gmra.mxu0 %v7384
      %v7583 = vpop.f32.mrf.mxu0
      %v7584 = vadd.f32 %v7471, %v7583
      %v7585 = vpop.f32.mrf.mxu0
      %v7586 = vadd.f32 %v7473, %v7585
      %7587 = vmatmul.bf16.gmra.mxu0 %v7387
      %v7588 = vpop.f32.mrf.mxu0
      %v7589 = vadd.f32 %v7476, %v7588
      %v7590 = vpop.f32.mrf.mxu0
      %v7591 = vadd.f32 %v7478, %v7590
      %7592 = vmatmul.bf16.gmra.mxu0 %v7390
      %v7593 = vpop.f32.mrf.mxu0
      %v7594 = vadd.f32 %v7481, %v7593
      %v7595 = vpop.f32.mrf.mxu0
      %v7596 = vadd.f32 %v7483, %v7595
      %7597 = vmatmul.bf16.gmra.mxu0 %v7393
      %v7598 = vpop.f32.mrf.mxu0
      %v7599 = vadd.f32 %v7486, %v7598
      %v7600 = vpop.f32.mrf.mxu0
      %v7601 = vadd.f32 %v7488, %v7600
      %7602 = vmatmul.bf16.gmra.mxu0 %v7396
      %v7603 = vpop.f32.mrf.mxu0
      %v7604 = vadd.f32 %v7491, %v7603
      %v7605 = vpop.f32.mrf.mxu0
      %v7606 = vadd.f32 %v7493, %v7605
      %7607 = vmatmul.bf16.gmra.mxu0 %v7399
      %v7608 = vpop.f32.mrf.mxu0
      %v7609 = vadd.f32 %v7496, %v7608
      %v7610 = vpop.f32.mrf.mxu0
      %v7611 = vadd.f32 %v7498, %v7610
      %7612 = vmatmul.bf16.gmra.mxu0 %v7402
      %v7613 = vpop.f32.mrf.mxu0
      %v7614 = vadd.f32 %v7501, %v7613
      %v7615 = vpop.f32.mrf.mxu0
      %v7616 = vadd.f32 %v7503, %v7615
      %7617 = vmatmul.bf16.gmra.mxu0 %v7405
      %v7618 = vpop.f32.mrf.mxu0
      %v7619 = vadd.f32 %v7506, %v7618
      %v7620 = vpop.f32.mrf.mxu0
      %v7621 = vadd.f32 %v7508, %v7620
      %7622 = vmatmul.bf16.gmra.mxu0 %v7408
      %v7623 = vpop.f32.mrf.mxu0
      %v7624 = vadd.f32 %v7511, %v7623
      %v7625 = vpop.f32.mrf.mxu0
      %v7626 = vadd.f32 %v7513, %v7625
      %7627 = vmatmul.bf16.gmra.mxu0 %v7411
      %v7628 = vpop.f32.mrf.mxu0
      %v7629 = vadd.f32 %v7516, %v7628
      %v7630 = vpop.f32.mrf.mxu0
      %v7631 = vadd.f32 %v7518, %v7630
      %7632 = vmatmul.bf16.gmra.mxu0 %v7414
      %v7633 = vpop.f32.mrf.mxu0
      %v7634 = vadd.f32 %v7521, %v7633
      %v7635 = vpop.f32.mrf.mxu0
      %v7636 = vadd.f32 %v7523, %v7635
      %7637 = vmatmul.bf16.gmra.mxu0 %v5117
      %v7638 = vpop.f32.mrf.mxu0
      %v7639 = vadd.f32 %v7526, %v7638
      %v7640 = vpop.f32.mrf.mxu0
      %7641 = vdwg.mxu0
      %v7642 = vadd.f32 %v7539, %v3062
      %v7643 = vadd.f32 %v7541, %v3063
      %v7644 = vadd.f32 %v7544, %v3064
      %v7645 = vadd.f32 %v7546, %v3065
      %v7646 = vadd.f32 %v7549, %v3066
      %v7647 = vadd.f32 %v7551, %v3067
      %v7648 = vadd.f32 %v7554, %v3068
      %v7649 = vadd.f32 %v7556, %v3069
      %v7650 = vadd.f32 %v7559, %v3070
      %v7651 = vadd.f32 %v7561, %v3071
      %v7652 = vadd.f32 %v7564, %v3072
      %v7653 = vadd.f32 %v7566, %v3073
      %v7654 = vadd.f32 %v7569, %v3074
      %v7655 = vadd.f32 %v7571, %v3075
      %v7656 = vadd.f32 %v7574, %v3076
      %v7657 = vadd.f32 %v7576, %v3077
      %v7658 = vadd.f32 %v7579, %v3078
      %v7659 = vadd.f32 %v7581, %v3079
      %v7660 = vadd.f32 %v7584, %v3080
      %v7661 = vadd.f32 %v7586, %v3081
      %v7662 = vadd.f32 %v7589, %v3082
      %v7663 = vadd.f32 %v7591, %v3083
      %v7664 = vadd.f32 %v7594, %v3084
      %v7665 = vadd.f32 %v7596, %v3085
      %v7666 = vadd.f32 %v7599, %v3086
      %v7667 = vadd.f32 %v7601, %v3087
      %v7668 = vadd.f32 %v7604, %v3088
      %v7669 = vadd.f32 %v7606, %v3089
      %v7670 = vadd.f32 %v7609, %v3090
      %v7671 = vadd.f32 %v7611, %v3091
      %v7672 = vadd.f32 %v7614, %v3092
      %v7673 = vadd.f32 %v7616, %v3093
      %v7674 = vadd.f32 %v7619, %v3094
      %v7675 = vadd.f32 %v7621, %v3095
      %v7676 = vadd.f32 %v7624, %v3096
      %v7677 = vadd.f32 %v7626, %v3097
      %v7678 = vadd.f32 %v7629, %v3098
      %v7679 = vadd.f32 %v7631, %v3099
      %v7680 = vadd.f32 %v7634, %v3100
      %v7681 = vadd.f32 %v7636, %v3101
      %v7682 = vadd.f32 %v7639, %v3102
      %v7683 = vmax.f32 %v7642, 0.0
      %v7684 = vmax.f32 %v7643, 0.0
      %v7685 = vmax.f32 %v7644, 0.0
      %v7686 = vmax.f32 %v7645, 0.0
      %v7687 = vmax.f32 %v7646, 0.0
      %v7688 = vmax.f32 %v7647, 0.0
      %v7689 = vmax.f32 %v7648, 0.0
      %v7690 = vmax.f32 %v7649, 0.0
      %v7691 = vmax.f32 %v7650, 0.0
      %v7692 = vmax.f32 %v7651, 0.0
      %v7693 = vmax.f32 %v7652, 0.0
      %v7694 = vmax.f32 %v7653, 0.0
      %v7695 = vmax.f32 %v7654, 0.0
      %v7696 = vmax.f32 %v7655, 0.0
      %v7697 = vmax.f32 %v7656, 0.0
      %v7698 = vmax.f32 %v7657, 0.0
      %v7699 = vmax.f32 %v7658, 0.0
      %v7700 = vmax.f32 %v7659, 0.0
      %v7701 = vmax.f32 %v7660, 0.0
      %v7702 = vmax.f32 %v7661, 0.0
      %v7703 = vmax.f32 %v7662, 0.0
      %v7704 = vmax.f32 %v7663, 0.0
      %v7705 = vmax.f32 %v7664, 0.0
      %v7706 = vmax.f32 %v7665, 0.0
      %v7707 = vmax.f32 %v7666, 0.0
      %v7708 = vmax.f32 %v7667, 0.0
      %v7709 = vmax.f32 %v7668, 0.0
      %v7710 = vmax.f32 %v7669, 0.0
      %v7711 = vmax.f32 %v7670, 0.0
      %v7712 = vmax.f32 %v7671, 0.0
      %v7713 = vmax.f32 %v7672, 0.0
      %v7714 = vmax.f32 %v7673, 0.0
      %v7715 = vmax.f32 %v7674, 0.0
      %v7716 = vmax.f32 %v7675, 0.0
      %v7717 = vmax.f32 %v7676, 0.0
      %v7718 = vmax.f32 %v7677, 0.0
      %v7719 = vmax.f32 %v7678, 0.0
      %v7720 = vmax.f32 %v7679, 0.0
      %v7721 = vmax.f32 %v7680, 0.0
      %v7722 = vmax.f32 %v7681, 0.0
      %v7723 = vmax.f32 %v7682, 0.0
      %v7724 = vmul.f32 %v7683, %v2860
      %v7725 = vmul.f32 %v7684, %v2865
      %v7726 = vmul.f32 %v7685, %v2870
      %v7727 = vmul.f32 %v7686, %v2875
      %v7728 = vmul.f32 %v7687, %v2880
      %v7729 = vmul.f32 %v7688, %v2885
      %v7730 = vmul.f32 %v7689, %v2890
      %v7731 = vmul.f32 %v7690, %v2895
      %v7732 = vmul.f32 %v7691, %v2900
      %v7733 = vmul.f32 %v7692, %v2905
      %v7734 = vmul.f32 %v7693, %v2910
      %v7735 = vmul.f32 %v7694, %v2915
      %v7736 = vmul.f32 %v7695, %v2920
      %v7737 = vmul.f32 %v7696, %v2925
      %v7738 = vmul.f32 %v7697, %v2930
      %v7739 = vmul.f32 %v7698, %v2935
      %v7740 = vmul.f32 %v7699, %v2940
      %v7741 = vmul.f32 %v7700, %v2945
      %v7742 = vmul.f32 %v7701, %v2950
      %v7743 = vmul.f32 %v7702, %v2955
      %v7744 = vmul.f32 %v7703, %v2960
      %v7745 = vmul.f32 %v7704, %v2965
      %v7746 = vmul.f32 %v7705, %v2970
      %v7747 = vmul.f32 %v7706, %v2975
      %v7748 = vmul.f32 %v7707, %v2980
      %v7749 = vmul.f32 %v7708, %v2985
      %v7750 = vmul.f32 %v7709, %v2990
      %v7751 = vmul.f32 %v7710, %v2995
      %v7752 = vmul.f32 %v7711, %v3000
      %v7753 = vmul.f32 %v7712, %v3005
      %v7754 = vmul.f32 %v7713, %v3010
      %v7755 = vmul.f32 %v7714, %v3015
      %v7756 = vmul.f32 %v7715, %v3020
      %v7757 = vmul.f32 %v7716, %v3025
      %v7758 = vmul.f32 %v7717, %v3030
      %v7759 = vmul.f32 %v7718, %v3035
      %v7760 = vmul.f32 %v7719, %v3040
      %v7761 = vmul.f32 %v7720, %v3045
      %v7762 = vmul.f32 %v7721, %v3050
      %v7763 = vmul.f32 %v7722, %v3055
      %v7764 = vmul.f32 %v7723, %v3060
      %v7765 = vpack.c.bf16 %v7725, %v7724
      %v7766 = vpack.c.bf16 %v7727, %v7726
      %v7767 = vpack.c.bf16 %v7729, %v7728
      %v7768 = vpack.c.bf16 %v7731, %v7730
      %v7769 = vpack.c.bf16 %v7733, %v7732
      %v7770 = vpack.c.bf16 %v7735, %v7734
      %v7771 = vpack.c.bf16 %v7737, %v7736
      %v7772 = vpack.c.bf16 %v7739, %v7738
      %v7773 = vpack.c.bf16 %v7741, %v7740
      %v7774 = vpack.c.bf16 %v7743, %v7742
      %v7775 = vpack.c.bf16 %v7745, %v7744
      %v7776 = vpack.c.bf16 %v7747, %v7746
      %v7777 = vpack.c.bf16 %v7749, %v7748
      %v7778 = vpack.c.bf16 %v7751, %v7750
      %v7779 = vpack.c.bf16 %v7753, %v7752
      %v7780 = vpack.c.bf16 %v7755, %v7754
      %v7781 = vpack.c.bf16 %v7757, %v7756
      %v7782 = vpack.c.bf16 %v7759, %v7758
      %v7783 = vpack.c.bf16 %v7761, %v7760
      %v7784 = vpack.c.bf16 %v7763, %v7762
      %v7785 = vpack.c.bf16 %v7764, %v7764
      %v7786 = vld [vmem:[%s13] sm:$0xf]
      %v7787 = vld [vmem:[%s13 + $0x4] sm:$0xf]
      %v7788 = vld [vmem:[%s14] sm:$0x1]
      %v7790 = vperm.slane %v7788, 0
      %v7794 = vunpack.c.l.b16 %v7786
      %v7795 = vunpack.c.l.b16 %v7787
      %v7796 = vpack.c.b16 %v7795, %v7794
      %v7799 = vsel %vm2381, %v7765, 0
      %v7802 = vsel %vm2381, %v7766, 0
      %v7805 = vsel %vm2381, %v7767, 0
      %v7808 = vsel %vm2381, %v7768, 0
      %v7811 = vsel %vm2381, %v7769, 0
      %v7814 = vsel %vm2381, %v7770, 0
      %v7817 = vsel %vm2381, %v7771, 0
      %v7820 = vsel %vm2381, %v7772, 0
      %v7823 = vsel %vm2381, %v7773, 0
      %v7826 = vsel %vm2381, %v7774, 0
      %v7829 = vsel %vm2381, %v7775, 0
      %v7832 = vsel %vm2381, %v7776, 0
      %v7835 = vsel %vm2381, %v7777, 0
      %v7838 = vsel %vm2381, %v7778, 0
      %v7841 = vsel %vm2381, %v7779, 0
      %v7844 = vsel %vm2381, %v7780, 0
      %v7847 = vsel %vm2381, %v7781, 0
      %v7850 = vsel %vm2381, %v7782, 0
      %v7853 = vsel %vm2381, %v7783, 0
      %v7856 = vsel %vm2381, %v7784, 0
      %v7859 = vsel %vm2381, %v7785, 0
      %7861 = vmatpush.bf16.msra.mxu0 0
      %7862 = vmatpush.bf16.msra.mxu0 0
      %7863 = vmatpush.bf16.msra.mxu0 0
      %7864 = vmatpush.bf16.msra.mxu0 0
      %7865 = vmatpush.bf16.msra.mxu0 0
      %7866 = vmatpush.bf16.msra.mxu0 0
      %7867 = vmatpush.bf16.msra.mxu0 0
      %7868 = vmatpush.bf16.msra.mxu0 %v7796
      %7869 = vmatmul.bf16.gmra.mxu0 %v7799
      %v7870 = vpop.f32.mrf.mxu0
      %v7871 = vadd.f32 %v7790, %v7870
      %v7872 = vpop.f32.mrf.mxu0
      %v7873 = vadd.f32 %v7790, %v7872
      %7874 = vmatmul.bf16.gmra.mxu0 %v7802
      %v7875 = vpop.f32.mrf.mxu0
      %v7876 = vadd.f32 %v7790, %v7875
      %v7877 = vpop.f32.mrf.mxu0
      %v7878 = vadd.f32 %v7790, %v7877
      %7879 = vmatmul.bf16.gmra.mxu0 %v7805
      %v7880 = vpop.f32.mrf.mxu0
      %v7881 = vadd.f32 %v7790, %v7880
      %v7882 = vpop.f32.mrf.mxu0
      %v7883 = vadd.f32 %v7790, %v7882
      %7884 = vmatmul.bf16.gmra.mxu0 %v7808
      %v7885 = vpop.f32.mrf.mxu0
      %v7886 = vadd.f32 %v7790, %v7885
      %v7887 = vpop.f32.mrf.mxu0
      %v7888 = vadd.f32 %v7790, %v7887
      %7889 = vmatmul.bf16.gmra.mxu0 %v7811
      %v7890 = vpop.f32.mrf.mxu0
      %v7891 = vadd.f32 %v7790, %v7890
      %v7892 = vpop.f32.mrf.mxu0
      %v7893 = vadd.f32 %v7790, %v7892
      %7894 = vmatmul.bf16.gmra.mxu0 %v7814
      %v7895 = vpop.f32.mrf.mxu0
      %v7896 = vadd.f32 %v7790, %v7895
      %v7897 = vpop.f32.mrf.mxu0
      %v7898 = vadd.f32 %v7790, %v7897
      %7899 = vmatmul.bf16.gmra.mxu0 %v7817
      %v7900 = vpop.f32.mrf.mxu0
      %v7901 = vadd.f32 %v7790, %v7900
      %v7902 = vpop.f32.mrf.mxu0
      %v7903 = vadd.f32 %v7790, %v7902
      %7904 = vmatmul.bf16.gmra.mxu0 %v7820
      %v7905 = vpop.f32.mrf.mxu0
      %v7906 = vadd.f32 %v7790, %v7905
      %v7907 = vpop.f32.mrf.mxu0
      %v7908 = vadd.f32 %v7790, %v7907
      %7909 = vmatmul.bf16.gmra.mxu0 %v7823
      %v7910 = vpop.f32.mrf.mxu0
      %v7911 = vadd.f32 %v7790, %v7910
      %v7912 = vpop.f32.mrf.mxu0
      %v7913 = vadd.f32 %v7790, %v7912
      %7914 = vmatmul.bf16.gmra.mxu0 %v7826
      %v7915 = vpop.f32.mrf.mxu0
      %v7916 = vadd.f32 %v7790, %v7915
      %v7917 = vpop.f32.mrf.mxu0
      %v7918 = vadd.f32 %v7790, %v7917
      %7919 = vmatmul.bf16.gmra.mxu0 %v7829
      %v7920 = vpop.f32.mrf.mxu0
      %v7921 = vadd.f32 %v7790, %v7920
      %v7922 = vpop.f32.mrf.mxu0
      %v7923 = vadd.f32 %v7790, %v7922
      %7924 = vmatmul.bf16.gmra.mxu0 %v7832
      %v7925 = vpop.f32.mrf.mxu0
      %v7926 = vadd.f32 %v7790, %v7925
      %v7927 = vpop.f32.mrf.mxu0
      %v7928 = vadd.f32 %v7790, %v7927
      %7929 = vmatmul.bf16.gmra.mxu0 %v7835
      %v7930 = vpop.f32.mrf.mxu0
      %v7931 = vadd.f32 %v7790, %v7930
      %v7932 = vpop.f32.mrf.mxu0
      %v7933 = vadd.f32 %v7790, %v7932
      %7934 = vmatmul.bf16.gmra.mxu0 %v7838
      %v7935 = vpop.f32.mrf.mxu0
      %v7936 = vadd.f32 %v7790, %v7935
      %v7937 = vpop.f32.mrf.mxu0
      %v7938 = vadd.f32 %v7790, %v7937
      %7939 = vmatmul.bf16.gmra.mxu0 %v7841
      %v7940 = vpop.f32.mrf.mxu0
      %v7941 = vadd.f32 %v7790, %v7940
      %v7942 = vpop.f32.mrf.mxu0
      %v7943 = vadd.f32 %v7790, %v7942
      %7944 = vmatmul.bf16.gmra.mxu0 %v7844
      %v7945 = vpop.f32.mrf.mxu0
      %v7946 = vadd.f32 %v7790, %v7945
      %v7947 = vpop.f32.mrf.mxu0
      %v7948 = vadd.f32 %v7790, %v7947
      %7949 = vmatmul.bf16.gmra.mxu0 %v7847
      %v7950 = vpop.f32.mrf.mxu0
      %v7951 = vadd.f32 %v7790, %v7950
      %v7952 = vpop.f32.mrf.mxu0
      %v7953 = vadd.f32 %v7790, %v7952
      %7954 = vmatmul.bf16.gmra.mxu0 %v7850
      %v7955 = vpop.f32.mrf.mxu0
      %v7956 = vadd.f32 %v7790, %v7955
      %v7957 = vpop.f32.mrf.mxu0
      %v7958 = vadd.f32 %v7790, %v7957
      %7959 = vmatmul.bf16.gmra.mxu0 %v7853
      %v7960 = vpop.f32.mrf.mxu0
      %v7961 = vadd.f32 %v7790, %v7960
      %v7962 = vpop.f32.mrf.mxu0
      %v7963 = vadd.f32 %v7790, %v7962
      %7964 = vmatmul.bf16.gmra.mxu0 %v7856
      %v7965 = vpop.f32.mrf.mxu0
      %v7966 = vadd.f32 %v7790, %v7965
      %v7967 = vpop.f32.mrf.mxu0
      %v7968 = vadd.f32 %v7790, %v7967
      %7969 = vmatmul.bf16.gmra.mxu0 %v7859
      %v7970 = vpop.f32.mrf.mxu0
      %v7971 = vadd.f32 %v7790, %v7970
      %v7972 = vpop.f32.mrf.mxu0
      %7973 = vdwg.mxu0
      %7975 = vset.pattern.permute.xlu0 0
      %7976 = vperm.xlu0 %7975, %v533
      %v7977 = vpop.permute.xlu0 %7976
      %7980 = vset.pattern.permute.xlu0 0
      %7981 = vperm.xlu0 %7980, %v534
      %v7982 = vpop.permute.xlu0 %7981
      %7985 = vset.pattern.permute.xlu0 0
      %7986 = vperm.xlu0 %7985, %v535
      %v7987 = vpop.permute.xlu0 %7986
      %7990 = vset.pattern.permute.xlu0 0
      %7991 = vperm.xlu0 %7990, %v536
      %v7992 = vpop.permute.xlu0 %7991
      %7995 = vset.pattern.permute.xlu0 0
      %7996 = vperm.xlu0 %7995, %v537
      %v7997 = vpop.permute.xlu0 %7996
      %8000 = vset.pattern.permute.xlu0 0
      %8001 = vperm.xlu0 %8000, %v538
      %v8002 = vpop.permute.xlu0 %8001
      %8005 = vset.pattern.permute.xlu0 0
      %8006 = vperm.xlu0 %8005, %v539
      %v8007 = vpop.permute.xlu0 %8006
      %8010 = vset.pattern.permute.xlu0 0
      %8011 = vperm.xlu0 %8010, %v540
      %v8012 = vpop.permute.xlu0 %8011
      %8015 = vset.pattern.permute.xlu0 0
      %8016 = vperm.xlu0 %8015, %v541
      %v8017 = vpop.permute.xlu0 %8016
      %8020 = vset.pattern.permute.xlu0 0
      %8021 = vperm.xlu0 %8020, %v542
      %v8022 = vpop.permute.xlu0 %8021
      %8025 = vset.pattern.permute.xlu0 0
      %8026 = vperm.xlu0 %8025, %v543
      %v8027 = vpop.permute.xlu0 %8026
      %8030 = vset.pattern.permute.xlu0 0
      %8031 = vperm.xlu0 %8030, %v544
      %v8032 = vpop.permute.xlu0 %8031
      %8035 = vset.pattern.permute.xlu0 0
      %8036 = vperm.xlu0 %8035, %v545
      %v8037 = vpop.permute.xlu0 %8036
      %8040 = vset.pattern.permute.xlu0 0
      %8041 = vperm.xlu0 %8040, %v546
      %v8042 = vpop.permute.xlu0 %8041
      %8045 = vset.pattern.permute.xlu0 0
      %8046 = vperm.xlu0 %8045, %v547
      %v8047 = vpop.permute.xlu0 %8046
      %8050 = vset.pattern.permute.xlu0 0
      %8051 = vperm.xlu0 %8050, %v548
      %v8052 = vpop.permute.xlu0 %8051
      %8055 = vset.pattern.permute.xlu0 0
      %8056 = vperm.xlu0 %8055, %v549
      %v8057 = vpop.permute.xlu0 %8056
      %8060 = vset.pattern.permute.xlu0 0
      %8061 = vperm.xlu0 %8060, %v550
      %v8062 = vpop.permute.xlu0 %8061
      %8065 = vset.pattern.permute.xlu0 0
      %8066 = vperm.xlu0 %8065, %v551
      %v8067 = vpop.permute.xlu0 %8066
      %8070 = vset.pattern.permute.xlu0 0
      %8071 = vperm.xlu0 %8070, %v552
      %v8072 = vpop.permute.xlu0 %8071
      %8075 = vset.pattern.permute.xlu0 0
      %8076 = vperm.xlu0 %8075, %v553
      %v8077 = vpop.permute.xlu0 %8076
      %8080 = vset.pattern.permute.xlu0 0
      %8081 = vperm.xlu0 %8080, %v554
      %v8082 = vpop.permute.xlu0 %8081
      %8085 = vset.pattern.permute.xlu0 0
      %8086 = vperm.xlu0 %8085, %v555
      %v8087 = vpop.permute.xlu0 %8086
      %8090 = vset.pattern.permute.xlu0 0
      %8091 = vperm.xlu0 %8090, %v556
      %v8092 = vpop.permute.xlu0 %8091
      %8095 = vset.pattern.permute.xlu0 0
      %8096 = vperm.xlu0 %8095, %v557
      %v8097 = vpop.permute.xlu0 %8096
      %8100 = vset.pattern.permute.xlu0 0
      %8101 = vperm.xlu0 %8100, %v558
      %v8102 = vpop.permute.xlu0 %8101
      %8105 = vset.pattern.permute.xlu0 0
      %8106 = vperm.xlu0 %8105, %v559
      %v8107 = vpop.permute.xlu0 %8106
      %8110 = vset.pattern.permute.xlu0 0
      %8111 = vperm.xlu0 %8110, %v560
      %v8112 = vpop.permute.xlu0 %8111
      %8115 = vset.pattern.permute.xlu0 0
      %8116 = vperm.xlu0 %8115, %v561
      %v8117 = vpop.permute.xlu0 %8116
      %8120 = vset.pattern.permute.xlu0 0
      %8121 = vperm.xlu0 %8120, %v562
      %v8122 = vpop.permute.xlu0 %8121
      %8125 = vset.pattern.permute.xlu0 0
      %8126 = vperm.xlu0 %8125, %v563
      %v8127 = vpop.permute.xlu0 %8126
      %8130 = vset.pattern.permute.xlu0 0
      %8131 = vperm.xlu0 %8130, %v564
      %v8132 = vpop.permute.xlu0 %8131
      %8135 = vset.pattern.permute.xlu0 0
      %8136 = vperm.xlu0 %8135, %v565
      %v8137 = vpop.permute.xlu0 %8136
      %8140 = vset.pattern.permute.xlu0 0
      %8141 = vperm.xlu0 %8140, %v566
      %v8142 = vpop.permute.xlu0 %8141
      %8145 = vset.pattern.permute.xlu0 0
      %8146 = vperm.xlu0 %8145, %v567
      %v8147 = vpop.permute.xlu0 %8146
      %8150 = vset.pattern.permute.xlu0 0
      %8151 = vperm.xlu0 %8150, %v568
      %v8152 = vpop.permute.xlu0 %8151
      %8155 = vset.pattern.permute.xlu0 0
      %8156 = vperm.xlu0 %8155, %v569
      %v8157 = vpop.permute.xlu0 %8156
      %8160 = vset.pattern.permute.xlu0 0
      %8161 = vperm.xlu0 %8160, %v570
      %v8162 = vpop.permute.xlu0 %8161
      %8165 = vset.pattern.permute.xlu0 0
      %8166 = vperm.xlu0 %8165, %v571
      %v8167 = vpop.permute.xlu0 %8166
      %8170 = vset.pattern.permute.xlu0 0
      %8171 = vperm.xlu0 %8170, %v572
      %v8172 = vpop.permute.xlu0 %8171
      %8175 = vset.pattern.permute.xlu0 0
      %8176 = vperm.xlu0 %8175, %v573
      %v8177 = vpop.permute.xlu0 %8176
      %v8179 = vmul.f32 %v7871, %v7977
      %v8180 = vmul.f32 %v7873, %v7982
      %v8181 = vmul.f32 %v7876, %v7987
      %v8182 = vmul.f32 %v7878, %v7992
      %v8183 = vmul.f32 %v7881, %v7997
      %v8184 = vmul.f32 %v7883, %v8002
      %v8185 = vmul.f32 %v7886, %v8007
      %v8186 = vmul.f32 %v7888, %v8012
      %v8187 = vmul.f32 %v7891, %v8017
      %v8188 = vmul.f32 %v7893, %v8022
      %v8189 = vmul.f32 %v7896, %v8027
      %v8190 = vmul.f32 %v7898, %v8032
      %v8191 = vmul.f32 %v7901, %v8037
      %v8192 = vmul.f32 %v7903, %v8042
      %v8193 = vmul.f32 %v7906, %v8047
      %v8194 = vmul.f32 %v7908, %v8052
      %v8195 = vmul.f32 %v7911, %v8057
      %v8196 = vmul.f32 %v7913, %v8062
      %v8197 = vmul.f32 %v7916, %v8067
      %v8198 = vmul.f32 %v7918, %v8072
      %v8199 = vmul.f32 %v7921, %v8077
      %v8200 = vmul.f32 %v7923, %v8082
      %v8201 = vmul.f32 %v7926, %v8087
      %v8202 = vmul.f32 %v7928, %v8092
      %v8203 = vmul.f32 %v7931, %v8097
      %v8204 = vmul.f32 %v7933, %v8102
      %v8205 = vmul.f32 %v7936, %v8107
      %v8206 = vmul.f32 %v7938, %v8112
      %v8207 = vmul.f32 %v7941, %v8117
      %v8208 = vmul.f32 %v7943, %v8122
      %v8209 = vmul.f32 %v7946, %v8127
      %v8210 = vmul.f32 %v7948, %v8132
      %v8211 = vmul.f32 %v7951, %v8137
      %v8212 = vmul.f32 %v7953, %v8142
      %v8213 = vmul.f32 %v7956, %v8147
      %v8214 = vmul.f32 %v7958, %v8152
      %v8215 = vmul.f32 %v7961, %v8157
      %v8216 = vmul.f32 %v7963, %v8162
      %v8217 = vmul.f32 %v7966, %v8167
      %v8218 = vmul.f32 %v7968, %v8172
      %v8219 = vmul.f32 %v7971, %v8177
      %v8261 = vrot.slane %v7724, 5
      %v8262 = vrot.slane %v7725, 5
      %v8263 = vsel %vm656, %v8261, %v8262
      %v8264 = vrot.slane %v7726, 5
      %v8265 = vsel %vm656, %v8262, %v8264
      %v8266 = vrot.slane %v7727, 5
      %v8267 = vsel %vm656, %v8264, %v8266
      %v8268 = vrot.slane %v7728, 5
      %v8269 = vsel %vm656, %v8266, %v8268
      %v8270 = vrot.slane %v7729, 5
      %v8271 = vsel %vm656, %v8268, %v8270
      %v8272 = vrot.slane %v7730, 5
      %v8273 = vsel %vm656, %v8270, %v8272
      %v8274 = vrot.slane %v7731, 5
      %v8275 = vsel %vm656, %v8272, %v8274
      %v8276 = vrot.slane %v7732, 5
      %v8277 = vsel %vm656, %v8274, %v8276
      %v8278 = vrot.slane %v7733, 5
      %v8279 = vsel %vm656, %v8276, %v8278
      %v8280 = vrot.slane %v7734, 5
      %v8281 = vsel %vm656, %v8278, %v8280
      %v8282 = vrot.slane %v7735, 5
      %v8283 = vsel %vm656, %v8280, %v8282
      %v8284 = vrot.slane %v7736, 5
      %v8285 = vsel %vm656, %v8282, %v8284
      %v8286 = vrot.slane %v7737, 5
      %v8287 = vsel %vm656, %v8284, %v8286
      %v8288 = vrot.slane %v7738, 5
      %v8289 = vsel %vm656, %v8286, %v8288
      %v8290 = vrot.slane %v7739, 5
      %v8291 = vsel %vm656, %v8288, %v8290
      %v8292 = vrot.slane %v7740, 5
      %v8293 = vsel %vm656, %v8290, %v8292
      %v8294 = vrot.slane %v7741, 5
      %v8295 = vsel %vm656, %v8292, %v8294
      %v8296 = vrot.slane %v7742, 5
      %v8297 = vsel %vm656, %v8294, %v8296
      %v8298 = vrot.slane %v7743, 5
      %v8299 = vsel %vm656, %v8296, %v8298
      %v8300 = vrot.slane %v7744, 5
      %v8301 = vsel %vm656, %v8298, %v8300
      %v8302 = vrot.slane %v7745, 5
      %v8303 = vsel %vm656, %v8300, %v8302
      %v8304 = vrot.slane %v7746, 5
      %v8305 = vsel %vm656, %v8302, %v8304
      %v8306 = vrot.slane %v7747, 5
      %v8307 = vsel %vm656, %v8304, %v8306
      %v8308 = vrot.slane %v7748, 5
      %v8309 = vsel %vm656, %v8306, %v8308
      %v8310 = vrot.slane %v7749, 5
      %v8311 = vsel %vm656, %v8308, %v8310
      %v8312 = vrot.slane %v7750, 5
      %v8313 = vsel %vm656, %v8310, %v8312
      %v8314 = vrot.slane %v7751, 5
      %v8315 = vsel %vm656, %v8312, %v8314
      %v8316 = vrot.slane %v7752, 5
      %v8317 = vsel %vm656, %v8314, %v8316
      %v8318 = vrot.slane %v7753, 5
      %v8319 = vsel %vm656, %v8316, %v8318
      %v8320 = vrot.slane %v7754, 5
      %v8321 = vsel %vm656, %v8318, %v8320
      %v8322 = vrot.slane %v7755, 5
      %v8323 = vsel %vm656, %v8320, %v8322
      %v8324 = vrot.slane %v7756, 5
      %v8325 = vsel %vm656, %v8322, %v8324
      %v8326 = vrot.slane %v7757, 5
      %v8327 = vsel %vm656, %v8324, %v8326
      %v8328 = vrot.slane %v7758, 5
      %v8329 = vsel %vm656, %v8326, %v8328
      %v8330 = vrot.slane %v7759, 5
      %v8331 = vsel %vm656, %v8328, %v8330
      %v8332 = vrot.slane %v7760, 5
      %v8333 = vsel %vm656, %v8330, %v8332
      %v8334 = vrot.slane %v7761, 5
      %v8335 = vsel %vm656, %v8332, %v8334
      %v8336 = vrot.slane %v7762, 5
      %v8337 = vsel %vm656, %v8334, %v8336
      %v8338 = vrot.slane %v7763, 5
      %v8339 = vsel %vm656, %v8336, %v8338
      %v8340 = vrot.slane %v7764, 5
      %v8341 = vsel %vm656, %v8338, %v8340
      %v8382 = vsel %vm656, 0.0, %v8261
      %v8383 = vsel %vm779, %v8341, 0.0
      %v8385 = vrot.slane %v8382, 1
      %v8386 = vsel %vm779, %v783, %v8385
      %v8387 = vrot.slane %v8263, 1
      %v8388 = vsel %vm779, %v8385, %v8387
      %v8389 = vrot.slane %v8265, 1
      %v8390 = vsel %vm779, %v8387, %v8389
      %v8391 = vrot.slane %v8267, 1
      %v8392 = vsel %vm779, %v8389, %v8391
      %v8393 = vrot.slane %v8269, 1
      %v8394 = vsel %vm779, %v8391, %v8393
      %v8395 = vrot.slane %v8271, 1
      %v8396 = vsel %vm779, %v8393, %v8395
      %v8397 = vrot.slane %v8273, 1
      %v8398 = vsel %vm779, %v8395, %v8397
      %v8399 = vrot.slane %v8275, 1
      %v8400 = vsel %vm779, %v8397, %v8399
      %v8401 = vrot.slane %v8277, 1
      %v8402 = vsel %vm779, %v8399, %v8401
      %v8403 = vrot.slane %v8279, 1
      %v8404 = vsel %vm779, %v8401, %v8403
      %v8405 = vrot.slane %v8281, 1
      %v8406 = vsel %vm779, %v8403, %v8405
      %v8407 = vrot.slane %v8283, 1
      %v8408 = vsel %vm779, %v8405, %v8407
      %v8409 = vrot.slane %v8285, 1
      %v8410 = vsel %vm779, %v8407, %v8409
      %v8411 = vrot.slane %v8287, 1
      %v8412 = vsel %vm779, %v8409, %v8411
      %v8413 = vrot.slane %v8289, 1
      %v8414 = vsel %vm779, %v8411, %v8413
      %v8415 = vrot.slane %v8291, 1
      %v8416 = vsel %vm779, %v8413, %v8415
      %v8417 = vrot.slane %v8293, 1
      %v8418 = vsel %vm779, %v8415, %v8417
      %v8419 = vrot.slane %v8295, 1
      %v8420 = vsel %vm779, %v8417, %v8419
      %v8421 = vrot.slane %v8297, 1
      %v8422 = vsel %vm779, %v8419, %v8421
      %v8423 = vrot.slane %v8299, 1
      %v8424 = vsel %vm779, %v8421, %v8423
      %v8425 = vrot.slane %v8301, 1
      %v8426 = vsel %vm779, %v8423, %v8425
      %v8427 = vrot.slane %v8303, 1
      %v8428 = vsel %vm779, %v8425, %v8427
      %v8429 = vrot.slane %v8305, 1
      %v8430 = vsel %vm779, %v8427, %v8429
      %v8431 = vrot.slane %v8307, 1
      %v8432 = vsel %vm779, %v8429, %v8431
      %v8433 = vrot.slane %v8309, 1
      %v8434 = vsel %vm779, %v8431, %v8433
      %v8435 = vrot.slane %v8311, 1
      %v8436 = vsel %vm779, %v8433, %v8435
      %v8437 = vrot.slane %v8313, 1
      %v8438 = vsel %vm779, %v8435, %v8437
      %v8439 = vrot.slane %v8315, 1
      %v8440 = vsel %vm779, %v8437, %v8439
      %v8441 = vrot.slane %v8317, 1
      %v8442 = vsel %vm779, %v8439, %v8441
      %v8443 = vrot.slane %v8319, 1
      %v8444 = vsel %vm779, %v8441, %v8443
      %v8445 = vrot.slane %v8321, 1
      %v8446 = vsel %vm779, %v8443, %v8445
      %v8447 = vrot.slane %v8323, 1
      %v8448 = vsel %vm779, %v8445, %v8447
      %v8449 = vrot.slane %v8325, 1
      %v8450 = vsel %vm779, %v8447, %v8449
      %v8451 = vrot.slane %v8327, 1
      %v8452 = vsel %vm779, %v8449, %v8451
      %v8453 = vrot.slane %v8329, 1
      %v8454 = vsel %vm779, %v8451, %v8453
      %v8455 = vrot.slane %v8331, 1
      %v8456 = vsel %vm779, %v8453, %v8455
      %v8457 = vrot.slane %v8333, 1
      %v8458 = vsel %vm779, %v8455, %v8457
      %v8459 = vrot.slane %v8335, 1
      %v8460 = vsel %vm779, %v8457, %v8459
      %v8461 = vrot.slane %v8337, 1
      %v8462 = vsel %vm779, %v8459, %v8461
      %8463 = vrot.lane.b32.xlu0 %v8386, 16
      %v8464 = vpop.permute.xlu0 %8463
      %8465 = vrot.lane.b32.xlu0 %v8388, 16
      %v8466 = vpop.permute.xlu0 %8465
      %8467 = vrot.lane.b32.xlu0 %v8390, 16
      %v8468 = vpop.permute.xlu0 %8467
      %8469 = vrot.lane.b32.xlu0 %v8392, 16
      %v8470 = vpop.permute.xlu0 %8469
      %8471 = vrot.lane.b32.xlu0 %v8394, 16
      %v8472 = vpop.permute.xlu0 %8471
      %8473 = vrot.lane.b32.xlu0 %v8396, 16
      %v8474 = vpop.permute.xlu0 %8473
      %8475 = vrot.lane.b32.xlu0 %v8398, 16
      %v8476 = vpop.permute.xlu0 %8475
      %8477 = vrot.lane.b32.xlu0 %v8400, 16
      %v8478 = vpop.permute.xlu0 %8477
      %8479 = vrot.lane.b32.xlu0 %v8402, 16
      %v8480 = vpop.permute.xlu0 %8479
      %8481 = vrot.lane.b32.xlu0 %v8404, 16
      %v8482 = vpop.permute.xlu0 %8481
      %8483 = vrot.lane.b32.xlu0 %v8406, 16
      %v8484 = vpop.permute.xlu0 %8483
      %8485 = vrot.lane.b32.xlu0 %v8408, 16
      %v8486 = vpop.permute.xlu0 %8485
      %8487 = vrot.lane.b32.xlu0 %v8410, 16
      %v8488 = vpop.permute.xlu0 %8487
      %8489 = vrot.lane.b32.xlu0 %v8412, 16
      %v8490 = vpop.permute.xlu0 %8489
      %8491 = vrot.lane.b32.xlu0 %v8414, 16
      %v8492 = vpop.permute.xlu0 %8491
      %8493 = vrot.lane.b32.xlu0 %v8416, 16
      %v8494 = vpop.permute.xlu0 %8493
      %8495 = vrot.lane.b32.xlu0 %v8418, 16
      %v8496 = vpop.permute.xlu0 %8495
      %8497 = vrot.lane.b32.xlu0 %v8420, 16
      %v8498 = vpop.permute.xlu0 %8497
      %8499 = vrot.lane.b32.xlu0 %v8422, 16
      %v8500 = vpop.permute.xlu0 %8499
      %8501 = vrot.lane.b32.xlu0 %v8424, 16
      %v8502 = vpop.permute.xlu0 %8501
      %8503 = vrot.lane.b32.xlu0 %v8426, 16
      %v8504 = vpop.permute.xlu0 %8503
      %8505 = vrot.lane.b32.xlu0 %v8428, 16
      %v8506 = vpop.permute.xlu0 %8505
      %8507 = vrot.lane.b32.xlu0 %v8430, 16
      %v8508 = vpop.permute.xlu0 %8507
      %8509 = vrot.lane.b32.xlu0 %v8432, 16
      %v8510 = vpop.permute.xlu0 %8509
      %8511 = vrot.lane.b32.xlu0 %v8434, 16
      %v8512 = vpop.permute.xlu0 %8511
      %8513 = vrot.lane.b32.xlu0 %v8436, 16
      %v8514 = vpop.permute.xlu0 %8513
      %8515 = vrot.lane.b32.xlu0 %v8438, 16
      %v8516 = vpop.permute.xlu0 %8515
      %8517 = vrot.lane.b32.xlu0 %v8440, 16
      %v8518 = vpop.permute.xlu0 %8517
      %8519 = vrot.lane.b32.xlu0 %v8442, 16
      %v8520 = vpop.permute.xlu0 %8519
      %8521 = vrot.lane.b32.xlu0 %v8444, 16
      %v8522 = vpop.permute.xlu0 %8521
      %8523 = vrot.lane.b32.xlu0 %v8446, 16
      %v8524 = vpop.permute.xlu0 %8523
      %8525 = vrot.lane.b32.xlu0 %v8448, 16
      %v8526 = vpop.permute.xlu0 %8525
      %8527 = vrot.lane.b32.xlu0 %v8450, 16
      %v8528 = vpop.permute.xlu0 %8527
      %8529 = vrot.lane.b32.xlu0 %v8452, 16
      %v8530 = vpop.permute.xlu0 %8529
      %8531 = vrot.lane.b32.xlu0 %v8454, 16
      %v8532 = vpop.permute.xlu0 %8531
      %8533 = vrot.lane.b32.xlu0 %v8456, 16
      %v8534 = vpop.permute.xlu0 %8533
      %8535 = vrot.lane.b32.xlu0 %v8458, 16
      %v8536 = vpop.permute.xlu0 %8535
      %8537 = vrot.lane.b32.xlu0 %v8460, 16
      %v8538 = vpop.permute.xlu0 %8537
      %8539 = vrot.lane.b32.xlu0 %v8462, 16
      %v8540 = vpop.permute.xlu0 %8539
      %8541 = vrot.lane.b32.xlu0 %v8461, 16
      %v8542 = vpop.permute.xlu0 %8541
      %v8583 = vrot.slane %v8382, 2
      %v8584 = vsel %vm986, %v987, %v8583
      %v8585 = vrot.slane %v8263, 2
      %v8586 = vsel %vm986, %v8583, %v8585
      %v8587 = vrot.slane %v8265, 2
      %v8588 = vsel %vm986, %v8585, %v8587
      %v8589 = vrot.slane %v8267, 2
      %v8590 = vsel %vm986, %v8587, %v8589
      %v8591 = vrot.slane %v8269, 2
      %v8592 = vsel %vm986, %v8589, %v8591
      %v8593 = vrot.slane %v8271, 2
      %v8594 = vsel %vm986, %v8591, %v8593
      %v8595 = vrot.slane %v8273, 2
      %v8596 = vsel %vm986, %v8593, %v8595
      %v8597 = vrot.slane %v8275, 2
      %v8598 = vsel %vm986, %v8595, %v8597
      %v8599 = vrot.slane %v8277, 2
      %v8600 = vsel %vm986, %v8597, %v8599
      %v8601 = vrot.slane %v8279, 2
      %v8602 = vsel %vm986, %v8599, %v8601
      %v8603 = vrot.slane %v8281, 2
      %v8604 = vsel %vm986, %v8601, %v8603
      %v8605 = vrot.slane %v8283, 2
      %v8606 = vsel %vm986, %v8603, %v8605
      %v8607 = vrot.slane %v8285, 2
      %v8608 = vsel %vm986, %v8605, %v8607
      %v8609 = vrot.slane %v8287, 2
      %v8610 = vsel %vm986, %v8607, %v8609
      %v8611 = vrot.slane %v8289, 2
      %v8612 = vsel %vm986, %v8609, %v8611
      %v8613 = vrot.slane %v8291, 2
      %v8614 = vsel %vm986, %v8611, %v8613
      %v8615 = vrot.slane %v8293, 2
      %v8616 = vsel %vm986, %v8613, %v8615
      %v8617 = vrot.slane %v8295, 2
      %v8618 = vsel %vm986, %v8615, %v8617
      %v8619 = vrot.slane %v8297, 2
      %v8620 = vsel %vm986, %v8617, %v8619
      %v8621 = vrot.slane %v8299, 2
      %v8622 = vsel %vm986, %v8619, %v8621
      %v8623 = vrot.slane %v8301, 2
      %v8624 = vsel %vm986, %v8621, %v8623
      %v8625 = vrot.slane %v8303, 2
      %v8626 = vsel %vm986, %v8623, %v8625
      %v8627 = vrot.slane %v8305, 2
      %v8628 = vsel %vm986, %v8625, %v8627
      %v8629 = vrot.slane %v8307, 2
      %v8630 = vsel %vm986, %v8627, %v8629
      %v8631 = vrot.slane %v8309, 2
      %v8632 = vsel %vm986, %v8629, %v8631
      %v8633 = vrot.slane %v8311, 2
      %v8634 = vsel %vm986, %v8631, %v8633
      %v8635 = vrot.slane %v8313, 2
      %v8636 = vsel %vm986, %v8633, %v8635
      %v8637 = vrot.slane %v8315, 2
      %v8638 = vsel %vm986, %v8635, %v8637
      %v8639 = vrot.slane %v8317, 2
      %v8640 = vsel %vm986, %v8637, %v8639
      %v8641 = vrot.slane %v8319, 2
      %v8642 = vsel %vm986, %v8639, %v8641
      %v8643 = vrot.slane %v8321, 2
      %v8644 = vsel %vm986, %v8641, %v8643
      %v8645 = vrot.slane %v8323, 2
      %v8646 = vsel %vm986, %v8643, %v8645
      %v8647 = vrot.slane %v8325, 2
      %v8648 = vsel %vm986, %v8645, %v8647
      %v8649 = vrot.slane %v8327, 2
      %v8650 = vsel %vm986, %v8647, %v8649
      %v8651 = vrot.slane %v8329, 2
      %v8652 = vsel %vm986, %v8649, %v8651
      %v8653 = vrot.slane %v8331, 2
      %v8654 = vsel %vm986, %v8651, %v8653
      %v8655 = vrot.slane %v8333, 2
      %v8656 = vsel %vm986, %v8653, %v8655
      %v8657 = vrot.slane %v8335, 2
      %v8658 = vsel %vm986, %v8655, %v8657
      %v8659 = vrot.slane %v8337, 2
      %v8660 = vsel %vm986, %v8657, %v8659
      %8661 = vrot.lane.b32.xlu0 %v8584, 32
      %v8662 = vpop.permute.xlu0 %8661
      %8663 = vrot.lane.b32.xlu0 %v8586, 32
      %v8664 = vpop.permute.xlu0 %8663
      %8665 = vrot.lane.b32.xlu0 %v8588, 32
      %v8666 = vpop.permute.xlu0 %8665
      %8667 = vrot.lane.b32.xlu0 %v8590, 32
      %v8668 = vpop.permute.xlu0 %8667
      %8669 = vrot.lane.b32.xlu0 %v8592, 32
      %v8670 = vpop.permute.xlu0 %8669
      %8671 = vrot.lane.b32.xlu0 %v8594, 32
      %v8672 = vpop.permute.xlu0 %8671
      %8673 = vrot.lane.b32.xlu0 %v8596, 32
      %v8674 = vpop.permute.xlu0 %8673
      %8675 = vrot.lane.b32.xlu0 %v8598, 32
      %v8676 = vpop.permute.xlu0 %8675
      %8677 = vrot.lane.b32.xlu0 %v8600, 32
      %v8678 = vpop.permute.xlu0 %8677
      %8679 = vrot.lane.b32.xlu0 %v8602, 32
      %v8680 = vpop.permute.xlu0 %8679
      %8681 = vrot.lane.b32.xlu0 %v8604, 32
      %v8682 = vpop.permute.xlu0 %8681
      %8683 = vrot.lane.b32.xlu0 %v8606, 32
      %v8684 = vpop.permute.xlu0 %8683
      %8685 = vrot.lane.b32.xlu0 %v8608, 32
      %v8686 = vpop.permute.xlu0 %8685
      %8687 = vrot.lane.b32.xlu0 %v8610, 32
      %v8688 = vpop.permute.xlu0 %8687
      %8689 = vrot.lane.b32.xlu0 %v8612, 32
      %v8690 = vpop.permute.xlu0 %8689
      %8691 = vrot.lane.b32.xlu0 %v8614, 32
      %v8692 = vpop.permute.xlu0 %8691
      %8693 = vrot.lane.b32.xlu0 %v8616, 32
      %v8694 = vpop.permute.xlu0 %8693
      %8695 = vrot.lane.b32.xlu0 %v8618, 32
      %v8696 = vpop.permute.xlu0 %8695
      %8697 = vrot.lane.b32.xlu0 %v8620, 32
      %v8698 = vpop.permute.xlu0 %8697
      %8699 = vrot.lane.b32.xlu0 %v8622, 32
      %v8700 = vpop.permute.xlu0 %8699
      %8701 = vrot.lane.b32.xlu0 %v8624, 32
      %v8702 = vpop.permute.xlu0 %8701
      %8703 = vrot.lane.b32.xlu0 %v8626, 32
      %v8704 = vpop.permute.xlu0 %8703
      %8705 = vrot.lane.b32.xlu0 %v8628, 32
      %v8706 = vpop.permute.xlu0 %8705
      %8707 = vrot.lane.b32.xlu0 %v8630, 32
      %v8708 = vpop.permute.xlu0 %8707
      %8709 = vrot.lane.b32.xlu0 %v8632, 32
      %v8710 = vpop.permute.xlu0 %8709
      %8711 = vrot.lane.b32.xlu0 %v8634, 32
      %v8712 = vpop.permute.xlu0 %8711
      %8713 = vrot.lane.b32.xlu0 %v8636, 32
      %v8714 = vpop.permute.xlu0 %8713
      %8715 = vrot.lane.b32.xlu0 %v8638, 32
      %v8716 = vpop.permute.xlu0 %8715
      %8717 = vrot.lane.b32.xlu0 %v8640, 32
      %v8718 = vpop.permute.xlu0 %8717
      %8719 = vrot.lane.b32.xlu0 %v8642, 32
      %v8720 = vpop.permute.xlu0 %8719
      %8721 = vrot.lane.b32.xlu0 %v8644, 32
      %v8722 = vpop.permute.xlu0 %8721
      %8723 = vrot.lane.b32.xlu0 %v8646, 32
      %v8724 = vpop.permute.xlu0 %8723
      %8725 = vrot.lane.b32.xlu0 %v8648, 32
      %v8726 = vpop.permute.xlu0 %8725
      %8727 = vrot.lane.b32.xlu0 %v8650, 32
      %v8728 = vpop.permute.xlu0 %8727
      %8729 = vrot.lane.b32.xlu0 %v8652, 32
      %v8730 = vpop.permute.xlu0 %8729
      %8731 = vrot.lane.b32.xlu0 %v8654, 32
      %v8732 = vpop.permute.xlu0 %8731
      %8733 = vrot.lane.b32.xlu0 %v8656, 32
      %v8734 = vpop.permute.xlu0 %8733
      %8735 = vrot.lane.b32.xlu0 %v8658, 32
      %v8736 = vpop.permute.xlu0 %8735
      %8737 = vrot.lane.b32.xlu0 %v8660, 32
      %v8738 = vpop.permute.xlu0 %8737
      %8739 = vrot.lane.b32.xlu0 %v8659, 32
      %v8740 = vpop.permute.xlu0 %8739
      %v8782 = vrot.slane %v8339, 2
      %v8783 = vsel %vm986, %v8659, %v8782
      %v8784 = vrot.slane %v8383, 2
      %v8785 = vsel %vm986, %v8782, %v8784
      %8786 = vrot.lane.b32.xlu0 %v8586, 48
      %v8787 = vpop.permute.xlu0 %8786
      %8788 = vrot.lane.b32.xlu0 %v8588, 48
      %v8789 = vpop.permute.xlu0 %8788
      %8790 = vrot.lane.b32.xlu0 %v8590, 48
      %v8791 = vpop.permute.xlu0 %8790
      %8792 = vrot.lane.b32.xlu0 %v8592, 48
      %v8793 = vpop.permute.xlu0 %8792
      %8794 = vrot.lane.b32.xlu0 %v8594, 48
      %v8795 = vpop.permute.xlu0 %8794
      %8796 = vrot.lane.b32.xlu0 %v8596, 48
      %v8797 = vpop.permute.xlu0 %8796
      %8798 = vrot.lane.b32.xlu0 %v8598, 48
      %v8799 = vpop.permute.xlu0 %8798
      %8800 = vrot.lane.b32.xlu0 %v8600, 48
      %v8801 = vpop.permute.xlu0 %8800
      %8802 = vrot.lane.b32.xlu0 %v8602, 48
      %v8803 = vpop.permute.xlu0 %8802
      %8804 = vrot.lane.b32.xlu0 %v8604, 48
      %v8805 = vpop.permute.xlu0 %8804
      %8806 = vrot.lane.b32.xlu0 %v8606, 48
      %v8807 = vpop.permute.xlu0 %8806
      %8808 = vrot.lane.b32.xlu0 %v8608, 48
      %v8809 = vpop.permute.xlu0 %8808
      %8810 = vrot.lane.b32.xlu0 %v8610, 48
      %v8811 = vpop.permute.xlu0 %8810
      %8812 = vrot.lane.b32.xlu0 %v8612, 48
      %v8813 = vpop.permute.xlu0 %8812
      %8814 = vrot.lane.b32.xlu0 %v8614, 48
      %v8815 = vpop.permute.xlu0 %8814
      %8816 = vrot.lane.b32.xlu0 %v8616, 48
      %v8817 = vpop.permute.xlu0 %8816
      %8818 = vrot.lane.b32.xlu0 %v8618, 48
      %v8819 = vpop.permute.xlu0 %8818
      %8820 = vrot.lane.b32.xlu0 %v8620, 48
      %v8821 = vpop.permute.xlu0 %8820
      %8822 = vrot.lane.b32.xlu0 %v8622, 48
      %v8823 = vpop.permute.xlu0 %8822
      %8824 = vrot.lane.b32.xlu0 %v8624, 48
      %v8825 = vpop.permute.xlu0 %8824
      %8826 = vrot.lane.b32.xlu0 %v8626, 48
      %v8827 = vpop.permute.xlu0 %8826
      %8828 = vrot.lane.b32.xlu0 %v8628, 48
      %v8829 = vpop.permute.xlu0 %8828
      %8830 = vrot.lane.b32.xlu0 %v8630, 48
      %v8831 = vpop.permute.xlu0 %8830
      %8832 = vrot.lane.b32.xlu0 %v8632, 48
      %v8833 = vpop.permute.xlu0 %8832
      %8834 = vrot.lane.b32.xlu0 %v8634, 48
      %v8835 = vpop.permute.xlu0 %8834
      %8836 = vrot.lane.b32.xlu0 %v8636, 48
      %v8837 = vpop.permute.xlu0 %8836
      %8838 = vrot.lane.b32.xlu0 %v8638, 48
      %v8839 = vpop.permute.xlu0 %8838
      %8840 = vrot.lane.b32.xlu0 %v8640, 48
      %v8841 = vpop.permute.xlu0 %8840
      %8842 = vrot.lane.b32.xlu0 %v8642, 48
      %v8843 = vpop.permute.xlu0 %8842
      %8844 = vrot.lane.b32.xlu0 %v8644, 48
      %v8845 = vpop.permute.xlu0 %8844
      %8846 = vrot.lane.b32.xlu0 %v8646, 48
      %v8847 = vpop.permute.xlu0 %8846
      %8848 = vrot.lane.b32.xlu0 %v8648, 48
      %v8849 = vpop.permute.xlu0 %8848
      %8850 = vrot.lane.b32.xlu0 %v8650, 48
      %v8851 = vpop.permute.xlu0 %8850
      %8852 = vrot.lane.b32.xlu0 %v8652, 48
      %v8853 = vpop.permute.xlu0 %8852
      %8854 = vrot.lane.b32.xlu0 %v8654, 48
      %v8855 = vpop.permute.xlu0 %8854
      %8856 = vrot.lane.b32.xlu0 %v8656, 48
      %v8857 = vpop.permute.xlu0 %8856
      %8858 = vrot.lane.b32.xlu0 %v8658, 48
      %v8859 = vpop.permute.xlu0 %8858
      %8860 = vrot.lane.b32.xlu0 %v8660, 48
      %v8861 = vpop.permute.xlu0 %8860
      %8862 = vrot.lane.b32.xlu0 %v8783, 48
      %v8863 = vpop.permute.xlu0 %8862
      %8864 = vrot.lane.b32.xlu0 %v8785, 48
      %v8865 = vpop.permute.xlu0 %8864
      %8866 = vrot.lane.b32.xlu0 %v8784, 48
      %v8867 = vpop.permute.xlu0 %8866
      %v8909 = vrot.slane %v8382, 3
      %v8910 = vrot.slane %v8263, 3
      %v8911 = vsel %vm1318, %v8909, %v8910
      %v8912 = vrot.slane %v8265, 3
      %v8913 = vsel %vm1318, %v8910, %v8912
      %v8914 = vrot.slane %v8267, 3
      %v8915 = vsel %vm1318, %v8912, %v8914
      %v8916 = vrot.slane %v8269, 3
      %v8917 = vsel %vm1318, %v8914, %v8916
      %v8918 = vrot.slane %v8271, 3
      %v8919 = vsel %vm1318, %v8916, %v8918
      %v8920 = vrot.slane %v8273, 3
      %v8921 = vsel %vm1318, %v8918, %v8920
      %v8922 = vrot.slane %v8275, 3
      %v8923 = vsel %vm1318, %v8920, %v8922
      %v8924 = vrot.slane %v8277, 3
      %v8925 = vsel %vm1318, %v8922, %v8924
      %v8926 = vrot.slane %v8279, 3
      %v8927 = vsel %vm1318, %v8924, %v8926
      %v8928 = vrot.slane %v8281, 3
      %v8929 = vsel %vm1318, %v8926, %v8928
      %v8930 = vrot.slane %v8283, 3
      %v8931 = vsel %vm1318, %v8928, %v8930
      %v8932 = vrot.slane %v8285, 3
      %v8933 = vsel %vm1318, %v8930, %v8932
      %v8934 = vrot.slane %v8287, 3
      %v8935 = vsel %vm1318, %v8932, %v8934
      %v8936 = vrot.slane %v8289, 3
      %v8937 = vsel %vm1318, %v8934, %v8936
      %v8938 = vrot.slane %v8291, 3
      %v8939 = vsel %vm1318, %v8936, %v8938
      %v8940 = vrot.slane %v8293, 3
      %v8941 = vsel %vm1318, %v8938, %v8940
      %v8942 = vrot.slane %v8295, 3
      %v8943 = vsel %vm1318, %v8940, %v8942
      %v8944 = vrot.slane %v8297, 3
      %v8945 = vsel %vm1318, %v8942, %v8944
      %v8946 = vrot.slane %v8299, 3
      %v8947 = vsel %vm1318, %v8944, %v8946
      %v8948 = vrot.slane %v8301, 3
      %v8949 = vsel %vm1318, %v8946, %v8948
      %v8950 = vrot.slane %v8303, 3
      %v8951 = vsel %vm1318, %v8948, %v8950
      %v8952 = vrot.slane %v8305, 3
      %v8953 = vsel %vm1318, %v8950, %v8952
      %v8954 = vrot.slane %v8307, 3
      %v8955 = vsel %vm1318, %v8952, %v8954
      %v8956 = vrot.slane %v8309, 3
      %v8957 = vsel %vm1318, %v8954, %v8956
      %v8958 = vrot.slane %v8311, 3
      %v8959 = vsel %vm1318, %v8956, %v8958
      %v8960 = vrot.slane %v8313, 3
      %v8961 = vsel %vm1318, %v8958, %v8960
      %v8962 = vrot.slane %v8315, 3
      %v8963 = vsel %vm1318, %v8960, %v8962
      %v8964 = vrot.slane %v8317, 3
      %v8965 = vsel %vm1318, %v8962, %v8964
      %v8966 = vrot.slane %v8319, 3
      %v8967 = vsel %vm1318, %v8964, %v8966
      %v8968 = vrot.slane %v8321, 3
      %v8969 = vsel %vm1318, %v8966, %v8968
      %v8970 = vrot.slane %v8323, 3
      %v8971 = vsel %vm1318, %v8968, %v8970
      %v8972 = vrot.slane %v8325, 3
      %v8973 = vsel %vm1318, %v8970, %v8972
      %v8974 = vrot.slane %v8327, 3
      %v8975 = vsel %vm1318, %v8972, %v8974
      %v8976 = vrot.slane %v8329, 3
      %v8977 = vsel %vm1318, %v8974, %v8976
      %v8978 = vrot.slane %v8331, 3
      %v8979 = vsel %vm1318, %v8976, %v8978
      %v8980 = vrot.slane %v8333, 3
      %v8981 = vsel %vm1318, %v8978, %v8980
      %v8982 = vrot.slane %v8335, 3
      %v8983 = vsel %vm1318, %v8980, %v8982
      %v8984 = vrot.slane %v8337, 3
      %v8985 = vsel %vm1318, %v8982, %v8984
      %v8986 = vrot.slane %v8339, 3
      %v8987 = vsel %vm1318, %v8984, %v8986
      %v8988 = vrot.slane %v8383, 3
      %v8989 = vsel %vm1318, %v8986, %v8988
      %8990 = vrot.lane.b32.xlu0 %v8911, 64
      %v8991 = vpop.permute.xlu0 %8990
      %8992 = vrot.lane.b32.xlu0 %v8913, 64
      %v8993 = vpop.permute.xlu0 %8992
      %8994 = vrot.lane.b32.xlu0 %v8915, 64
      %v8995 = vpop.permute.xlu0 %8994
      %8996 = vrot.lane.b32.xlu0 %v8917, 64
      %v8997 = vpop.permute.xlu0 %8996
      %8998 = vrot.lane.b32.xlu0 %v8919, 64
      %v8999 = vpop.permute.xlu0 %8998
      %9000 = vrot.lane.b32.xlu0 %v8921, 64
      %v9001 = vpop.permute.xlu0 %9000
      %9002 = vrot.lane.b32.xlu0 %v8923, 64
      %v9003 = vpop.permute.xlu0 %9002
      %9004 = vrot.lane.b32.xlu0 %v8925, 64
      %v9005 = vpop.permute.xlu0 %9004
      %9006 = vrot.lane.b32.xlu0 %v8927, 64
      %v9007 = vpop.permute.xlu0 %9006
      %9008 = vrot.lane.b32.xlu0 %v8929, 64
      %v9009 = vpop.permute.xlu0 %9008
      %9010 = vrot.lane.b32.xlu0 %v8931, 64
      %v9011 = vpop.permute.xlu0 %9010
      %9012 = vrot.lane.b32.xlu0 %v8933, 64
      %v9013 = vpop.permute.xlu0 %9012
      %9014 = vrot.lane.b32.xlu0 %v8935, 64
      %v9015 = vpop.permute.xlu0 %9014
      %9016 = vrot.lane.b32.xlu0 %v8937, 64
      %v9017 = vpop.permute.xlu0 %9016
      %9018 = vrot.lane.b32.xlu0 %v8939, 64
      %v9019 = vpop.permute.xlu0 %9018
      %9020 = vrot.lane.b32.xlu0 %v8941, 64
      %v9021 = vpop.permute.xlu0 %9020
      %9022 = vrot.lane.b32.xlu0 %v8943, 64
      %v9023 = vpop.permute.xlu0 %9022
      %9024 = vrot.lane.b32.xlu0 %v8945, 64
      %v9025 = vpop.permute.xlu0 %9024
      %9026 = vrot.lane.b32.xlu0 %v8947, 64
      %v9027 = vpop.permute.xlu0 %9026
      %9028 = vrot.lane.b32.xlu0 %v8949, 64
      %v9029 = vpop.permute.xlu0 %9028
      %9030 = vrot.lane.b32.xlu0 %v8951, 64
      %v9031 = vpop.permute.xlu0 %9030
      %9032 = vrot.lane.b32.xlu0 %v8953, 64
      %v9033 = vpop.permute.xlu0 %9032
      %9034 = vrot.lane.b32.xlu0 %v8955, 64
      %v9035 = vpop.permute.xlu0 %9034
      %9036 = vrot.lane.b32.xlu0 %v8957, 64
      %v9037 = vpop.permute.xlu0 %9036
      %9038 = vrot.lane.b32.xlu0 %v8959, 64
      %v9039 = vpop.permute.xlu0 %9038
      %9040 = vrot.lane.b32.xlu0 %v8961, 64
      %v9041 = vpop.permute.xlu0 %9040
      %9042 = vrot.lane.b32.xlu0 %v8963, 64
      %v9043 = vpop.permute.xlu0 %9042
      %9044 = vrot.lane.b32.xlu0 %v8965, 64
      %v9045 = vpop.permute.xlu0 %9044
      %9046 = vrot.lane.b32.xlu0 %v8967, 64
      %v9047 = vpop.permute.xlu0 %9046
      %9048 = vrot.lane.b32.xlu0 %v8969, 64
      %v9049 = vpop.permute.xlu0 %9048
      %9050 = vrot.lane.b32.xlu0 %v8971, 64
      %v9051 = vpop.permute.xlu0 %9050
      %9052 = vrot.lane.b32.xlu0 %v8973, 64
      %v9053 = vpop.permute.xlu0 %9052
      %9054 = vrot.lane.b32.xlu0 %v8975, 64
      %v9055 = vpop.permute.xlu0 %9054
      %9056 = vrot.lane.b32.xlu0 %v8977, 64
      %v9057 = vpop.permute.xlu0 %9056
      %9058 = vrot.lane.b32.xlu0 %v8979, 64
      %v9059 = vpop.permute.xlu0 %9058
      %9060 = vrot.lane.b32.xlu0 %v8981, 64
      %v9061 = vpop.permute.xlu0 %9060
      %9062 = vrot.lane.b32.xlu0 %v8983, 64
      %v9063 = vpop.permute.xlu0 %9062
      %9064 = vrot.lane.b32.xlu0 %v8985, 64
      %v9065 = vpop.permute.xlu0 %9064
      %9066 = vrot.lane.b32.xlu0 %v8987, 64
      %v9067 = vpop.permute.xlu0 %9066
      %9068 = vrot.lane.b32.xlu0 %v8989, 64
      %v9069 = vpop.permute.xlu0 %9068
      %9070 = vrot.lane.b32.xlu0 %v8988, 64
      %v9071 = vpop.permute.xlu0 %9070
      %v9113 = vrot.slane %v8382, 4
      %v9114 = vrot.slane %v8263, 4
      %v9115 = vsel %vm1523, %v9113, %v9114
      %v9116 = vrot.slane %v8265, 4
      %v9117 = vsel %vm1523, %v9114, %v9116
      %v9118 = vrot.slane %v8267, 4
      %v9119 = vsel %vm1523, %v9116, %v9118
      %v9120 = vrot.slane %v8269, 4
      %v9121 = vsel %vm1523, %v9118, %v9120
      %v9122 = vrot.slane %v8271, 4
      %v9123 = vsel %vm1523, %v9120, %v9122
      %v9124 = vrot.slane %v8273, 4
      %v9125 = vsel %vm1523, %v9122, %v9124
      %v9126 = vrot.slane %v8275, 4
      %v9127 = vsel %vm1523, %v9124, %v9126
      %v9128 = vrot.slane %v8277, 4
      %v9129 = vsel %vm1523, %v9126, %v9128
      %v9130 = vrot.slane %v8279, 4
      %v9131 = vsel %vm1523, %v9128, %v9130
      %v9132 = vrot.slane %v8281, 4
      %v9133 = vsel %vm1523, %v9130, %v9132
      %v9134 = vrot.slane %v8283, 4
      %v9135 = vsel %vm1523, %v9132, %v9134
      %v9136 = vrot.slane %v8285, 4
      %v9137 = vsel %vm1523, %v9134, %v9136
      %v9138 = vrot.slane %v8287, 4
      %v9139 = vsel %vm1523, %v9136, %v9138
      %v9140 = vrot.slane %v8289, 4
      %v9141 = vsel %vm1523, %v9138, %v9140
      %v9142 = vrot.slane %v8291, 4
      %v9143 = vsel %vm1523, %v9140, %v9142
      %v9144 = vrot.slane %v8293, 4
      %v9145 = vsel %vm1523, %v9142, %v9144
      %v9146 = vrot.slane %v8295, 4
      %v9147 = vsel %vm1523, %v9144, %v9146
      %v9148 = vrot.slane %v8297, 4
      %v9149 = vsel %vm1523, %v9146, %v9148
      %v9150 = vrot.slane %v8299, 4
      %v9151 = vsel %vm1523, %v9148, %v9150
      %v9152 = vrot.slane %v8301, 4
      %v9153 = vsel %vm1523, %v9150, %v9152
      %v9154 = vrot.slane %v8303, 4
      %v9155 = vsel %vm1523, %v9152, %v9154
      %v9156 = vrot.slane %v8305, 4
      %v9157 = vsel %vm1523, %v9154, %v9156
      %v9158 = vrot.slane %v8307, 4
      %v9159 = vsel %vm1523, %v9156, %v9158
      %v9160 = vrot.slane %v8309, 4
      %v9161 = vsel %vm1523, %v9158, %v9160
      %v9162 = vrot.slane %v8311, 4
      %v9163 = vsel %vm1523, %v9160, %v9162
      %v9164 = vrot.slane %v8313, 4
      %v9165 = vsel %vm1523, %v9162, %v9164
      %v9166 = vrot.slane %v8315, 4
      %v9167 = vsel %vm1523, %v9164, %v9166
      %v9168 = vrot.slane %v8317, 4
      %v9169 = vsel %vm1523, %v9166, %v9168
      %v9170 = vrot.slane %v8319, 4
      %v9171 = vsel %vm1523, %v9168, %v9170
      %v9172 = vrot.slane %v8321, 4
      %v9173 = vsel %vm1523, %v9170, %v9172
      %v9174 = vrot.slane %v8323, 4
      %v9175 = vsel %vm1523, %v9172, %v9174
      %v9176 = vrot.slane %v8325, 4
      %v9177 = vsel %vm1523, %v9174, %v9176
      %v9178 = vrot.slane %v8327, 4
      %v9179 = vsel %vm1523, %v9176, %v9178
      %v9180 = vrot.slane %v8329, 4
      %v9181 = vsel %vm1523, %v9178, %v9180
      %v9182 = vrot.slane %v8331, 4
      %v9183 = vsel %vm1523, %v9180, %v9182
      %v9184 = vrot.slane %v8333, 4
      %v9185 = vsel %vm1523, %v9182, %v9184
      %v9186 = vrot.slane %v8335, 4
      %v9187 = vsel %vm1523, %v9184, %v9186
      %v9188 = vrot.slane %v8337, 4
      %v9189 = vsel %vm1523, %v9186, %v9188
      %v9190 = vrot.slane %v8339, 4
      %v9191 = vsel %vm1523, %v9188, %v9190
      %v9192 = vrot.slane %v8383, 4
      %v9193 = vsel %vm1523, %v9190, %v9192
      %9194 = vrot.lane.b32.xlu0 %v9115, 80
      %v9195 = vpop.permute.xlu0 %9194
      %9196 = vrot.lane.b32.xlu0 %v9117, 80
      %v9197 = vpop.permute.xlu0 %9196
      %9198 = vrot.lane.b32.xlu0 %v9119, 80
      %v9199 = vpop.permute.xlu0 %9198
      %9200 = vrot.lane.b32.xlu0 %v9121, 80
      %v9201 = vpop.permute.xlu0 %9200
      %9202 = vrot.lane.b32.xlu0 %v9123, 80
      %v9203 = vpop.permute.xlu0 %9202
      %9204 = vrot.lane.b32.xlu0 %v9125, 80
      %v9205 = vpop.permute.xlu0 %9204
      %9206 = vrot.lane.b32.xlu0 %v9127, 80
      %v9207 = vpop.permute.xlu0 %9206
      %9208 = vrot.lane.b32.xlu0 %v9129, 80
      %v9209 = vpop.permute.xlu0 %9208
      %9210 = vrot.lane.b32.xlu0 %v9131, 80
      %v9211 = vpop.permute.xlu0 %9210
      %9212 = vrot.lane.b32.xlu0 %v9133, 80
      %v9213 = vpop.permute.xlu0 %9212
      %9214 = vrot.lane.b32.xlu0 %v9135, 80
      %v9215 = vpop.permute.xlu0 %9214
      %9216 = vrot.lane.b32.xlu0 %v9137, 80
      %v9217 = vpop.permute.xlu0 %9216
      %9218 = vrot.lane.b32.xlu0 %v9139, 80
      %v9219 = vpop.permute.xlu0 %9218
      %9220 = vrot.lane.b32.xlu0 %v9141, 80
      %v9221 = vpop.permute.xlu0 %9220
      %9222 = vrot.lane.b32.xlu0 %v9143, 80
      %v9223 = vpop.permute.xlu0 %9222
      %9224 = vrot.lane.b32.xlu0 %v9145, 80
      %v9225 = vpop.permute.xlu0 %9224
      %9226 = vrot.lane.b32.xlu0 %v9147, 80
      %v9227 = vpop.permute.xlu0 %9226
      %9228 = vrot.lane.b32.xlu0 %v9149, 80
      %v9229 = vpop.permute.xlu0 %9228
      %9230 = vrot.lane.b32.xlu0 %v9151, 80
      %v9231 = vpop.permute.xlu0 %9230
      %9232 = vrot.lane.b32.xlu0 %v9153, 80
      %v9233 = vpop.permute.xlu0 %9232
      %9234 = vrot.lane.b32.xlu0 %v9155, 80
      %v9235 = vpop.permute.xlu0 %9234
      %9236 = vrot.lane.b32.xlu0 %v9157, 80
      %v9237 = vpop.permute.xlu0 %9236
      %9238 = vrot.lane.b32.xlu0 %v9159, 80
      %v9239 = vpop.permute.xlu0 %9238
      %9240 = vrot.lane.b32.xlu0 %v9161, 80
      %v9241 = vpop.permute.xlu0 %9240
      %9242 = vrot.lane.b32.xlu0 %v9163, 80
      %v9243 = vpop.permute.xlu0 %9242
      %9244 = vrot.lane.b32.xlu0 %v9165, 80
      %v9245 = vpop.permute.xlu0 %9244
      %9246 = vrot.lane.b32.xlu0 %v9167, 80
      %v9247 = vpop.permute.xlu0 %9246
      %9248 = vrot.lane.b32.xlu0 %v9169, 80
      %v9249 = vpop.permute.xlu0 %9248
      %9250 = vrot.lane.b32.xlu0 %v9171, 80
      %v9251 = vpop.permute.xlu0 %9250
      %9252 = vrot.lane.b32.xlu0 %v9173, 80
      %v9253 = vpop.permute.xlu0 %9252
      %9254 = vrot.lane.b32.xlu0 %v9175, 80
      %v9255 = vpop.permute.xlu0 %9254
      %9256 = vrot.lane.b32.xlu0 %v9177, 80
      %v9257 = vpop.permute.xlu0 %9256
      %9258 = vrot.lane.b32.xlu0 %v9179, 80
      %v9259 = vpop.permute.xlu0 %9258
      %9260 = vrot.lane.b32.xlu0 %v9181, 80
      %v9261 = vpop.permute.xlu0 %9260
      %9262 = vrot.lane.b32.xlu0 %v9183, 80
      %v9263 = vpop.permute.xlu0 %9262
      %9264 = vrot.lane.b32.xlu0 %v9185, 80
      %v9265 = vpop.permute.xlu0 %9264
      %9266 = vrot.lane.b32.xlu0 %v9187, 80
      %v9267 = vpop.permute.xlu0 %9266
      %9268 = vrot.lane.b32.xlu0 %v9189, 80
      %v9269 = vpop.permute.xlu0 %9268
      %9270 = vrot.lane.b32.xlu0 %v9191, 80
      %v9271 = vpop.permute.xlu0 %9270
      %9272 = vrot.lane.b32.xlu0 %v9193, 80
      %v9273 = vpop.permute.xlu0 %9272
      %9274 = vrot.lane.b32.xlu0 %v9192, 80
      %v9275 = vpop.permute.xlu0 %9274
      %v9317 = vsel %vm1523, %v9192, %v1728
      %9318 = vrot.lane.b32.xlu0 %v9119, 96
      %v9319 = vpop.permute.xlu0 %9318
      %9320 = vrot.lane.b32.xlu0 %v9121, 96
      %v9321 = vpop.permute.xlu0 %9320
      %9322 = vrot.lane.b32.xlu0 %v9123, 96
      %v9323 = vpop.permute.xlu0 %9322
      %9324 = vrot.lane.b32.xlu0 %v9125, 96
      %v9325 = vpop.permute.xlu0 %9324
      %9326 = vrot.lane.b32.xlu0 %v9127, 96
      %v9327 = vpop.permute.xlu0 %9326
      %9328 = vrot.lane.b32.xlu0 %v9129, 96
      %v9329 = vpop.permute.xlu0 %9328
      %9330 = vrot.lane.b32.xlu0 %v9131, 96
      %v9331 = vpop.permute.xlu0 %9330
      %9332 = vrot.lane.b32.xlu0 %v9133, 96
      %v9333 = vpop.permute.xlu0 %9332
      %9334 = vrot.lane.b32.xlu0 %v9135, 96
      %v9335 = vpop.permute.xlu0 %9334
      %9336 = vrot.lane.b32.xlu0 %v9137, 96
      %v9337 = vpop.permute.xlu0 %9336
      %9338 = vrot.lane.b32.xlu0 %v9139, 96
      %v9339 = vpop.permute.xlu0 %9338
      %9340 = vrot.lane.b32.xlu0 %v9141, 96
      %v9341 = vpop.permute.xlu0 %9340
      %9342 = vrot.lane.b32.xlu0 %v9143, 96
      %v9343 = vpop.permute.xlu0 %9342
      %9344 = vrot.lane.b32.xlu0 %v9145, 96
      %v9345 = vpop.permute.xlu0 %9344
      %9346 = vrot.lane.b32.xlu0 %v9147, 96
      %v9347 = vpop.permute.xlu0 %9346
      %9348 = vrot.lane.b32.xlu0 %v9149, 96
      %v9349 = vpop.permute.xlu0 %9348
      %9350 = vrot.lane.b32.xlu0 %v9151, 96
      %v9351 = vpop.permute.xlu0 %9350
      %9352 = vrot.lane.b32.xlu0 %v9153, 96
      %v9353 = vpop.permute.xlu0 %9352
      %9354 = vrot.lane.b32.xlu0 %v9155, 96
      %v9355 = vpop.permute.xlu0 %9354
      %9356 = vrot.lane.b32.xlu0 %v9157, 96
      %v9357 = vpop.permute.xlu0 %9356
      %9358 = vrot.lane.b32.xlu0 %v9159, 96
      %v9359 = vpop.permute.xlu0 %9358
      %9360 = vrot.lane.b32.xlu0 %v9161, 96
      %v9361 = vpop.permute.xlu0 %9360
      %9362 = vrot.lane.b32.xlu0 %v9163, 96
      %v9363 = vpop.permute.xlu0 %9362
      %9364 = vrot.lane.b32.xlu0 %v9165, 96
      %v9365 = vpop.permute.xlu0 %9364
      %9366 = vrot.lane.b32.xlu0 %v9167, 96
      %v9367 = vpop.permute.xlu0 %9366
      %9368 = vrot.lane.b32.xlu0 %v9169, 96
      %v9369 = vpop.permute.xlu0 %9368
      %9370 = vrot.lane.b32.xlu0 %v9171, 96
      %v9371 = vpop.permute.xlu0 %9370
      %9372 = vrot.lane.b32.xlu0 %v9173, 96
      %v9373 = vpop.permute.xlu0 %9372
      %9374 = vrot.lane.b32.xlu0 %v9175, 96
      %v9375 = vpop.permute.xlu0 %9374
      %9376 = vrot.lane.b32.xlu0 %v9177, 96
      %v9377 = vpop.permute.xlu0 %9376
      %9378 = vrot.lane.b32.xlu0 %v9179, 96
      %v9379 = vpop.permute.xlu0 %9378
      %9380 = vrot.lane.b32.xlu0 %v9181, 96
      %v9381 = vpop.permute.xlu0 %9380
      %9382 = vrot.lane.b32.xlu0 %v9183, 96
      %v9383 = vpop.permute.xlu0 %9382
      %9384 = vrot.lane.b32.xlu0 %v9185, 96
      %v9385 = vpop.permute.xlu0 %9384
      %9386 = vrot.lane.b32.xlu0 %v9187, 96
      %v9387 = vpop.permute.xlu0 %9386
      %9388 = vrot.lane.b32.xlu0 %v9189, 96
      %v9389 = vpop.permute.xlu0 %9388
      %9390 = vrot.lane.b32.xlu0 %v9191, 96
      %v9391 = vpop.permute.xlu0 %9390
      %9392 = vrot.lane.b32.xlu0 %v9193, 96
      %v9393 = vpop.permute.xlu0 %9392
      %9394 = vrot.lane.b32.xlu0 %v9317, 96
      %v9395 = vpop.permute.xlu0 %9394
      %v9435 = vrot.slane %v8265, 5
      %v9436 = vrot.slane %v8267, 5
      %v9437 = vsel %vm656, %v9435, %v9436
      %v9438 = vrot.slane %v8269, 5
      %v9439 = vsel %vm656, %v9436, %v9438
      %v9440 = vrot.slane %v8271, 5
      %v9441 = vsel %vm656, %v9438, %v9440
      %v9442 = vrot.slane %v8273, 5
      %v9443 = vsel %vm656, %v9440, %v9442
      %v9444 = vrot.slane %v8275, 5
      %v9445 = vsel %vm656, %v9442, %v9444
      %v9446 = vrot.slane %v8277, 5
      %v9447 = vsel %vm656, %v9444, %v9446
      %v9448 = vrot.slane %v8279, 5
      %v9449 = vsel %vm656, %v9446, %v9448
      %v9450 = vrot.slane %v8281, 5
      %v9451 = vsel %vm656, %v9448, %v9450
      %v9452 = vrot.slane %v8283, 5
      %v9453 = vsel %vm656, %v9450, %v9452
      %v9454 = vrot.slane %v8285, 5
      %v9455 = vsel %vm656, %v9452, %v9454
      %v9456 = vrot.slane %v8287, 5
      %v9457 = vsel %vm656, %v9454, %v9456
      %v9458 = vrot.slane %v8289, 5
      %v9459 = vsel %vm656, %v9456, %v9458
      %v9460 = vrot.slane %v8291, 5
      %v9461 = vsel %vm656, %v9458, %v9460
      %v9462 = vrot.slane %v8293, 5
      %v9463 = vsel %vm656, %v9460, %v9462
      %v9464 = vrot.slane %v8295, 5
      %v9465 = vsel %vm656, %v9462, %v9464
      %v9466 = vrot.slane %v8297, 5
      %v9467 = vsel %vm656, %v9464, %v9466
      %v9468 = vrot.slane %v8299, 5
      %v9469 = vsel %vm656, %v9466, %v9468
      %v9470 = vrot.slane %v8301, 5
      %v9471 = vsel %vm656, %v9468, %v9470
      %v9472 = vrot.slane %v8303, 5
      %v9473 = vsel %vm656, %v9470, %v9472
      %v9474 = vrot.slane %v8305, 5
      %v9475 = vsel %vm656, %v9472, %v9474
      %v9476 = vrot.slane %v8307, 5
      %v9477 = vsel %vm656, %v9474, %v9476
      %v9478 = vrot.slane %v8309, 5
      %v9479 = vsel %vm656, %v9476, %v9478
      %v9480 = vrot.slane %v8311, 5
      %v9481 = vsel %vm656, %v9478, %v9480
      %v9482 = vrot.slane %v8313, 5
      %v9483 = vsel %vm656, %v9480, %v9482
      %v9484 = vrot.slane %v8315, 5
      %v9485 = vsel %vm656, %v9482, %v9484
      %v9486 = vrot.slane %v8317, 5
      %v9487 = vsel %vm656, %v9484, %v9486
      %v9488 = vrot.slane %v8319, 5
      %v9489 = vsel %vm656, %v9486, %v9488
      %v9490 = vrot.slane %v8321, 5
      %v9491 = vsel %vm656, %v9488, %v9490
      %v9492 = vrot.slane %v8323, 5
      %v9493 = vsel %vm656, %v9490, %v9492
      %v9494 = vrot.slane %v8325, 5
      %v9495 = vsel %vm656, %v9492, %v9494
      %v9496 = vrot.slane %v8327, 5
      %v9497 = vsel %vm656, %v9494, %v9496
      %v9498 = vrot.slane %v8329, 5
      %v9499 = vsel %vm656, %v9496, %v9498
      %v9500 = vrot.slane %v8331, 5
      %v9501 = vsel %vm656, %v9498, %v9500
      %v9502 = vrot.slane %v8333, 5
      %v9503 = vsel %vm656, %v9500, %v9502
      %v9504 = vrot.slane %v8335, 5
      %v9505 = vsel %vm656, %v9502, %v9504
      %v9506 = vrot.slane %v8337, 5
      %v9507 = vsel %vm656, %v9504, %v9506
      %v9508 = vrot.slane %v8339, 5
      %v9509 = vsel %vm656, %v9506, %v9508
      %v9510 = vrot.slane %v8383, 5
      %v9511 = vsel %vm656, %v9508, %v9510
      %v9512 = vsel %vm656, %v9510, %v1931
      %9513 = vrot.lane.b32.xlu0 %v9437, 112
      %v9514 = vpop.permute.xlu0 %9513
      %9515 = vrot.lane.b32.xlu0 %v9439, 112
      %v9516 = vpop.permute.xlu0 %9515
      %9517 = vrot.lane.b32.xlu0 %v9441, 112
      %v9518 = vpop.permute.xlu0 %9517
      %9519 = vrot.lane.b32.xlu0 %v9443, 112
      %v9520 = vpop.permute.xlu0 %9519
      %9521 = vrot.lane.b32.xlu0 %v9445, 112
      %v9522 = vpop.permute.xlu0 %9521
      %9523 = vrot.lane.b32.xlu0 %v9447, 112
      %v9524 = vpop.permute.xlu0 %9523
      %9525 = vrot.lane.b32.xlu0 %v9449, 112
      %v9526 = vpop.permute.xlu0 %9525
      %9527 = vrot.lane.b32.xlu0 %v9451, 112
      %v9528 = vpop.permute.xlu0 %9527
      %9529 = vrot.lane.b32.xlu0 %v9453, 112
      %v9530 = vpop.permute.xlu0 %9529
      %9531 = vrot.lane.b32.xlu0 %v9455, 112
      %v9532 = vpop.permute.xlu0 %9531
      %9533 = vrot.lane.b32.xlu0 %v9457, 112
      %v9534 = vpop.permute.xlu0 %9533
      %9535 = vrot.lane.b32.xlu0 %v9459, 112
      %v9536 = vpop.permute.xlu0 %9535
      %9537 = vrot.lane.b32.xlu0 %v9461, 112
      %v9538 = vpop.permute.xlu0 %9537
      %9539 = vrot.lane.b32.xlu0 %v9463, 112
      %v9540 = vpop.permute.xlu0 %9539
      %9541 = vrot.lane.b32.xlu0 %v9465, 112
      %v9542 = vpop.permute.xlu0 %9541
      %9543 = vrot.lane.b32.xlu0 %v9467, 112
      %v9544 = vpop.permute.xlu0 %9543
      %9545 = vrot.lane.b32.xlu0 %v9469, 112
      %v9546 = vpop.permute.xlu0 %9545
      %9547 = vrot.lane.b32.xlu0 %v9471, 112
      %v9548 = vpop.permute.xlu0 %9547
      %9549 = vrot.lane.b32.xlu0 %v9473, 112
      %v9550 = vpop.permute.xlu0 %9549
      %9551 = vrot.lane.b32.xlu0 %v9475, 112
      %v9552 = vpop.permute.xlu0 %9551
      %9553 = vrot.lane.b32.xlu0 %v9477, 112
      %v9554 = vpop.permute.xlu0 %9553
      %9555 = vrot.lane.b32.xlu0 %v9479, 112
      %v9556 = vpop.permute.xlu0 %9555
      %9557 = vrot.lane.b32.xlu0 %v9481, 112
      %v9558 = vpop.permute.xlu0 %9557
      %9559 = vrot.lane.b32.xlu0 %v9483, 112
      %v9560 = vpop.permute.xlu0 %9559
      %9561 = vrot.lane.b32.xlu0 %v9485, 112
      %v9562 = vpop.permute.xlu0 %9561
      %9563 = vrot.lane.b32.xlu0 %v9487, 112
      %v9564 = vpop.permute.xlu0 %9563
      %9565 = vrot.lane.b32.xlu0 %v9489, 112
      %v9566 = vpop.permute.xlu0 %9565
      %9567 = vrot.lane.b32.xlu0 %v9491, 112
      %v9568 = vpop.permute.xlu0 %9567
      %9569 = vrot.lane.b32.xlu0 %v9493, 112
      %v9570 = vpop.permute.xlu0 %9569
      %9571 = vrot.lane.b32.xlu0 %v9495, 112
      %v9572 = vpop.permute.xlu0 %9571
      %9573 = vrot.lane.b32.xlu0 %v9497, 112
      %v9574 = vpop.permute.xlu0 %9573
      %9575 = vrot.lane.b32.xlu0 %v9499, 112
      %v9576 = vpop.permute.xlu0 %9575
      %9577 = vrot.lane.b32.xlu0 %v9501, 112
      %v9578 = vpop.permute.xlu0 %9577
      %9579 = vrot.lane.b32.xlu0 %v9503, 112
      %v9580 = vpop.permute.xlu0 %9579
      %9581 = vrot.lane.b32.xlu0 %v9505, 112
      %v9582 = vpop.permute.xlu0 %9581
      %9583 = vrot.lane.b32.xlu0 %v9507, 112
      %v9584 = vpop.permute.xlu0 %9583
      %9585 = vrot.lane.b32.xlu0 %v9509, 112
      %v9586 = vpop.permute.xlu0 %9585
      %9587 = vrot.lane.b32.xlu0 %v9511, 112
      %v9588 = vpop.permute.xlu0 %9587
      %9589 = vrot.lane.b32.xlu0 %v9512, 112
      %v9590 = vpop.permute.xlu0 %9589
      %v9630 = vrot.slane %v8265, 6
      %v9631 = vrot.slane %v8267, 6
      %v9632 = vsel %vm2054, %v9630, %v9631
      %v9633 = vrot.slane %v8269, 6
      %v9634 = vsel %vm2054, %v9631, %v9633
      %v9635 = vrot.slane %v8271, 6
      %v9636 = vsel %vm2054, %v9633, %v9635
      %v9637 = vrot.slane %v8273, 6
      %v9638 = vsel %vm2054, %v9635, %v9637
      %v9639 = vrot.slane %v8275, 6
      %v9640 = vsel %vm2054, %v9637, %v9639
      %v9641 = vrot.slane %v8277, 6
      %v9642 = vsel %vm2054, %v9639, %v9641
      %v9643 = vrot.slane %v8279, 6
      %v9644 = vsel %vm2054, %v9641, %v9643
      %v9645 = vrot.slane %v8281, 6
      %v9646 = vsel %vm2054, %v9643, %v9645
      %v9647 = vrot.slane %v8283, 6
      %v9648 = vsel %vm2054, %v9645, %v9647
      %v9649 = vrot.slane %v8285, 6
      %v9650 = vsel %vm2054, %v9647, %v9649
      %v9651 = vrot.slane %v8287, 6
      %v9652 = vsel %vm2054, %v9649, %v9651
      %v9653 = vrot.slane %v8289, 6
      %v9654 = vsel %vm2054, %v9651, %v9653
      %v9655 = vrot.slane %v8291, 6
      %v9656 = vsel %vm2054, %v9653, %v9655
      %v9657 = vrot.slane %v8293, 6
      %v9658 = vsel %vm2054, %v9655, %v9657
      %v9659 = vrot.slane %v8295, 6
      %v9660 = vsel %vm2054, %v9657, %v9659
      %v9661 = vrot.slane %v8297, 6
      %v9662 = vsel %vm2054, %v9659, %v9661
      %v9663 = vrot.slane %v8299, 6
      %v9664 = vsel %vm2054, %v9661, %v9663
      %v9665 = vrot.slane %v8301, 6
      %v9666 = vsel %vm2054, %v9663, %v9665
      %v9667 = vrot.slane %v8303, 6
      %v9668 = vsel %vm2054, %v9665, %v9667
      %v9669 = vrot.slane %v8305, 6
      %v9670 = vsel %vm2054, %v9667, %v9669
      %v9671 = vrot.slane %v8307, 6
      %v9672 = vsel %vm2054, %v9669, %v9671
      %v9673 = vrot.slane %v8309, 6
      %v9674 = vsel %vm2054, %v9671, %v9673
      %v9675 = vrot.slane %v8311, 6
      %v9676 = vsel %vm2054, %v9673, %v9675
      %v9677 = vrot.slane %v8313, 6
      %v9678 = vsel %vm2054, %v9675, %v9677
      %v9679 = vrot.slane %v8315, 6
      %v9680 = vsel %vm2054, %v9677, %v9679
      %v9681 = vrot.slane %v8317, 6
      %v9682 = vsel %vm2054, %v9679, %v9681
      %v9683 = vrot.slane %v8319, 6
      %v9684 = vsel %vm2054, %v9681, %v9683
      %v9685 = vrot.slane %v8321, 6
      %v9686 = vsel %vm2054, %v9683, %v9685
      %v9687 = vrot.slane %v8323, 6
      %v9688 = vsel %vm2054, %v9685, %v9687
      %v9689 = vrot.slane %v8325, 6
      %v9690 = vsel %vm2054, %v9687, %v9689
      %v9691 = vrot.slane %v8327, 6
      %v9692 = vsel %vm2054, %v9689, %v9691
      %v9693 = vrot.slane %v8329, 6
      %v9694 = vsel %vm2054, %v9691, %v9693
      %v9695 = vrot.slane %v8331, 6
      %v9696 = vsel %vm2054, %v9693, %v9695
      %v9697 = vrot.slane %v8333, 6
      %v9698 = vsel %vm2054, %v9695, %v9697
      %v9699 = vrot.slane %v8335, 6
      %v9700 = vsel %vm2054, %v9697, %v9699
      %v9701 = vrot.slane %v8337, 6
      %v9702 = vsel %vm2054, %v9699, %v9701
      %v9703 = vrot.slane %v8339, 6
      %v9704 = vsel %vm2054, %v9701, %v9703
      %v9705 = vrot.slane %v8383, 6
      %v9706 = vsel %vm2054, %v9703, %v9705
      %v9707 = vsel %vm2054, %v9705, %v2132
      %v9747 = vsel %vm2381, 0.0, %v8464
      %v9748 = vsel %vm2381, %v8382, %v8466
      %v9749 = vsel %vm2381, %v8263, %v8468
      %v9750 = vsel %vm2381, %v8265, %v8470
      %v9751 = vsel %vm2381, %v8267, %v8472
      %v9752 = vsel %vm2381, %v8269, %v8474
      %v9753 = vsel %vm2381, %v8271, %v8476
      %v9754 = vsel %vm2381, %v8273, %v8478
      %v9755 = vsel %vm2381, %v8275, %v8480
      %v9756 = vsel %vm2381, %v8277, %v8482
      %v9757 = vsel %vm2381, %v8279, %v8484
      %v9758 = vsel %vm2381, %v8281, %v8486
      %v9759 = vsel %vm2381, %v8283, %v8488
      %v9760 = vsel %vm2381, %v8285, %v8490
      %v9761 = vsel %vm2381, %v8287, %v8492
      %v9762 = vsel %vm2381, %v8289, %v8494
      %v9763 = vsel %vm2381, %v8291, %v8496
      %v9764 = vsel %vm2381, %v8293, %v8498
      %v9765 = vsel %vm2381, %v8295, %v8500
      %v9766 = vsel %vm2381, %v8297, %v8502
      %v9767 = vsel %vm2381, %v8299, %v8504
      %v9768 = vsel %vm2381, %v8301, %v8506
      %v9769 = vsel %vm2381, %v8303, %v8508
      %v9770 = vsel %vm2381, %v8305, %v8510
      %v9771 = vsel %vm2381, %v8307, %v8512
      %v9772 = vsel %vm2381, %v8309, %v8514
      %v9773 = vsel %vm2381, %v8311, %v8516
      %v9774 = vsel %vm2381, %v8313, %v8518
      %v9775 = vsel %vm2381, %v8315, %v8520
      %v9776 = vsel %vm2381, %v8317, %v8522
      %v9777 = vsel %vm2381, %v8319, %v8524
      %v9778 = vsel %vm2381, %v8321, %v8526
      %v9779 = vsel %vm2381, %v8323, %v8528
      %v9780 = vsel %vm2381, %v8325, %v8530
      %v9781 = vsel %vm2381, %v8327, %v8532
      %v9782 = vsel %vm2381, %v8329, %v8534
      %v9783 = vsel %vm2381, %v8331, %v8536
      %v9784 = vsel %vm2381, %v8333, %v8538
      %v9785 = vsel %vm2381, %v8335, %v8540
      %v9786 = vsel %vm2381, %v8337, %v8542
      %v9787 = vsel %vm2549, %v9747, %v8662
      %v9788 = vsel %vm2549, %v9748, %v8664
      %v9789 = vsel %vm2549, %v9749, %v8666
      %v9790 = vsel %vm2549, %v9750, %v8668
      %v9791 = vsel %vm2549, %v9751, %v8670
      %v9792 = vsel %vm2549, %v9752, %v8672
      %v9793 = vsel %vm2549, %v9753, %v8674
      %v9794 = vsel %vm2549, %v9754, %v8676
      %v9795 = vsel %vm2549, %v9755, %v8678
      %v9796 = vsel %vm2549, %v9756, %v8680
      %v9797 = vsel %vm2549, %v9757, %v8682
      %v9798 = vsel %vm2549, %v9758, %v8684
      %v9799 = vsel %vm2549, %v9759, %v8686
      %v9800 = vsel %vm2549, %v9760, %v8688
      %v9801 = vsel %vm2549, %v9761, %v8690
      %v9802 = vsel %vm2549, %v9762, %v8692
      %v9803 = vsel %vm2549, %v9763, %v8694
      %v9804 = vsel %vm2549, %v9764, %v8696
      %v9805 = vsel %vm2549, %v9765, %v8698
      %v9806 = vsel %vm2549, %v9766, %v8700
      %v9807 = vsel %vm2549, %v9767, %v8702
      %v9808 = vsel %vm2549, %v9768, %v8704
      %v9809 = vsel %vm2549, %v9769, %v8706
      %v9810 = vsel %vm2549, %v9770, %v8708
      %v9811 = vsel %vm2549, %v9771, %v8710
      %v9812 = vsel %vm2549, %v9772, %v8712
      %v9813 = vsel %vm2549, %v9773, %v8714
      %v9814 = vsel %vm2549, %v9774, %v8716
      %v9815 = vsel %vm2549, %v9775, %v8718
      %v9816 = vsel %vm2549, %v9776, %v8720
      %v9817 = vsel %vm2549, %v9777, %v8722
      %v9818 = vsel %vm2549, %v9778, %v8724
      %v9819 = vsel %vm2549, %v9779, %v8726
      %v9820 = vsel %vm2549, %v9780, %v8728
      %v9821 = vsel %vm2549, %v9781, %v8730
      %v9822 = vsel %vm2549, %v9782, %v8732
      %v9823 = vsel %vm2549, %v9783, %v8734
      %v9824 = vsel %vm2549, %v9784, %v8736
      %v9825 = vsel %vm2549, %v9785, %v8738
      %v9826 = vsel %vm2549, %v9786, %v8740
      %v9827 = vsel %vm4728, %v4687, %v8787
      %v9828 = vsel %vm4728, %v9787, %v8789
      %v9829 = vsel %vm4728, %v9788, %v8791
      %v9830 = vsel %vm4728, %v9789, %v8793
      %v9831 = vsel %vm4728, %v9790, %v8795
      %v9832 = vsel %vm4728, %v9791, %v8797
      %v9833 = vsel %vm4728, %v9792, %v8799
      %v9834 = vsel %vm4728, %v9793, %v8801
      %v9835 = vsel %vm4728, %v9794, %v8803
      %v9836 = vsel %vm4728, %v9795, %v8805
      %v9837 = vsel %vm4728, %v9796, %v8807
      %v9838 = vsel %vm4728, %v9797, %v8809
      %v9839 = vsel %vm4728, %v9798, %v8811
      %v9840 = vsel %vm4728, %v9799, %v8813
      %v9841 = vsel %vm4728, %v9800, %v8815
      %v9842 = vsel %vm4728, %v9801, %v8817
      %v9843 = vsel %vm4728, %v9802, %v8819
      %v9844 = vsel %vm4728, %v9803, %v8821
      %v9845 = vsel %vm4728, %v9804, %v8823
      %v9846 = vsel %vm4728, %v9805, %v8825
      %v9847 = vsel %vm4728, %v9806, %v8827
      %v9848 = vsel %vm4728, %v9807, %v8829
      %v9849 = vsel %vm4728, %v9808, %v8831
      %v9850 = vsel %vm4728, %v9809, %v8833
      %v9851 = vsel %vm4728, %v9810, %v8835
      %v9852 = vsel %vm4728, %v9811, %v8837
      %v9853 = vsel %vm4728, %v9812, %v8839
      %v9854 = vsel %vm4728, %v9813, %v8841
      %v9855 = vsel %vm4728, %v9814, %v8843
      %v9856 = vsel %vm4728, %v9815, %v8845
      %v9857 = vsel %vm4728, %v9816, %v8847
      %v9858 = vsel %vm4728, %v9817, %v8849
      %v9859 = vsel %vm4728, %v9818, %v8851
      %v9860 = vsel %vm4728, %v9819, %v8853
      %v9861 = vsel %vm4728, %v9820, %v8855
      %v9862 = vsel %vm4728, %v9821, %v8857
      %v9863 = vsel %vm4728, %v9822, %v8859
      %v9864 = vsel %vm4728, %v9823, %v8861
      %v9865 = vsel %vm4728, %v9824, %v8863
      %v9866 = vsel %vm4728, %v9825, %v8865
      %v9867 = vsel %vm4728, %v9826, %v8867
      %v9868 = vsel %vm4770, %v9827, %v8991
      %v9869 = vsel %vm4770, %v9828, %v8993
      %v9870 = vsel %vm4770, %v9829, %v8995
      %v9871 = vsel %vm4770, %v9830, %v8997
      %v9872 = vsel %vm4770, %v9831, %v8999
      %v9873 = vsel %vm4770, %v9832, %v9001
      %v9874 = vsel %vm4770, %v9833, %v9003
      %v9875 = vsel %vm4770, %v9834, %v9005
      %v9876 = vsel %vm4770, %v9835, %v9007
      %v9877 = vsel %vm4770, %v9836, %v9009
      %v9878 = vsel %vm4770, %v9837, %v9011
      %v9879 = vsel %vm4770, %v9838, %v9013
      %v9880 = vsel %vm4770, %v9839, %v9015
      %v9881 = vsel %vm4770, %v9840, %v9017
      %v9882 = vsel %vm4770, %v9841, %v9019
      %v9883 = vsel %vm4770, %v9842, %v9021
      %v9884 = vsel %vm4770, %v9843, %v9023
      %v9885 = vsel %vm4770, %v9844, %v9025
      %v9886 = vsel %vm4770, %v9845, %v9027
      %v9887 = vsel %vm4770, %v9846, %v9029
      %v9888 = vsel %vm4770, %v9847, %v9031
      %v9889 = vsel %vm4770, %v9848, %v9033
      %v9890 = vsel %vm4770, %v9849, %v9035
      %v9891 = vsel %vm4770, %v9850, %v9037
      %v9892 = vsel %vm4770, %v9851, %v9039
      %v9893 = vsel %vm4770, %v9852, %v9041
      %v9894 = vsel %vm4770, %v9853, %v9043
      %v9895 = vsel %vm4770, %v9854, %v9045
      %v9896 = vsel %vm4770, %v9855, %v9047
      %v9897 = vsel %vm4770, %v9856, %v9049
      %v9898 = vsel %vm4770, %v9857, %v9051
      %v9899 = vsel %vm4770, %v9858, %v9053
      %v9900 = vsel %vm4770, %v9859, %v9055
      %v9901 = vsel %vm4770, %v9860, %v9057
      %v9902 = vsel %vm4770, %v9861, %v9059
      %v9903 = vsel %vm4770, %v9862, %v9061
      %v9904 = vsel %vm4770, %v9863, %v9063
      %v9905 = vsel %vm4770, %v9864, %v9065
      %v9906 = vsel %vm4770, %v9865, %v9067
      %v9907 = vsel %vm4770, %v9866, %v9069
      %v9908 = vsel %vm4770, %v9867, %v9071
      %v9909 = vsel %vm4812, %v9868, %v9195
      %v9910 = vsel %vm4812, %v9869, %v9197
      %v9911 = vsel %vm4812, %v9870, %v9199
      %v9912 = vsel %vm4812, %v9871, %v9201
      %v9913 = vsel %vm4812, %v9872, %v9203
      %v9914 = vsel %vm4812, %v9873, %v9205
      %v9915 = vsel %vm4812, %v9874, %v9207
      %v9916 = vsel %vm4812, %v9875, %v9209
      %v9917 = vsel %vm4812, %v9876, %v9211
      %v9918 = vsel %vm4812, %v9877, %v9213
      %v9919 = vsel %vm4812, %v9878, %v9215
      %v9920 = vsel %vm4812, %v9879, %v9217
      %v9921 = vsel %vm4812, %v9880, %v9219
      %v9922 = vsel %vm4812, %v9881, %v9221
      %v9923 = vsel %vm4812, %v9882, %v9223
      %v9924 = vsel %vm4812, %v9883, %v9225
      %v9925 = vsel %vm4812, %v9884, %v9227
      %v9926 = vsel %vm4812, %v9885, %v9229
      %v9927 = vsel %vm4812, %v9886, %v9231
      %v9928 = vsel %vm4812, %v9887, %v9233
      %v9929 = vsel %vm4812, %v9888, %v9235
      %v9930 = vsel %vm4812, %v9889, %v9237
      %v9931 = vsel %vm4812, %v9890, %v9239
      %v9932 = vsel %vm4812, %v9891, %v9241
      %v9933 = vsel %vm4812, %v9892, %v9243
      %v9934 = vsel %vm4812, %v9893, %v9245
      %v9935 = vsel %vm4812, %v9894, %v9247
      %v9936 = vsel %vm4812, %v9895, %v9249
      %v9937 = vsel %vm4812, %v9896, %v9251
      %v9938 = vsel %vm4812, %v9897, %v9253
      %v9939 = vsel %vm4812, %v9898, %v9255
      %v9940 = vsel %vm4812, %v9899, %v9257
      %v9941 = vsel %vm4812, %v9900, %v9259
      %v9942 = vsel %vm4812, %v9901, %v9261
      %v9943 = vsel %vm4812, %v9902, %v9263
      %v9944 = vsel %vm4812, %v9903, %v9265
      %v9945 = vsel %vm4812, %v9904, %v9267
      %v9946 = vsel %vm4812, %v9905, %v9269
      %v9947 = vsel %vm4812, %v9906, %v9271
      %v9948 = vsel %vm4812, %v9907, %v9273
      %v9949 = vsel %vm4812, %v9908, %v9275
      %v9950 = vsel %vm4854, %v9909, %v9319
      %v9951 = vsel %vm4854, %v9910, %v9321
      %v9952 = vsel %vm4854, %v9911, %v9323
      %v9953 = vsel %vm4854, %v9912, %v9325
      %v9954 = vsel %vm4854, %v9913, %v9327
      %v9955 = vsel %vm4854, %v9914, %v9329
      %v9956 = vsel %vm4854, %v9915, %v9331
      %v9957 = vsel %vm4854, %v9916, %v9333
      %v9958 = vsel %vm4854, %v9917, %v9335
      %v9959 = vsel %vm4854, %v9918, %v9337
      %v9960 = vsel %vm4854, %v9919, %v9339
      %v9961 = vsel %vm4854, %v9920, %v9341
      %v9962 = vsel %vm4854, %v9921, %v9343
      %v9963 = vsel %vm4854, %v9922, %v9345
      %v9964 = vsel %vm4854, %v9923, %v9347
      %v9965 = vsel %vm4854, %v9924, %v9349
      %v9966 = vsel %vm4854, %v9925, %v9351
      %v9967 = vsel %vm4854, %v9926, %v9353
      %v9968 = vsel %vm4854, %v9927, %v9355
      %v9969 = vsel %vm4854, %v9928, %v9357
      %v9970 = vsel %vm4854, %v9929, %v9359
      %v9971 = vsel %vm4854, %v9930, %v9361
      %v9972 = vsel %vm4854, %v9931, %v9363
      %v9973 = vsel %vm4854, %v9932, %v9365
      %v9974 = vsel %vm4854, %v9933, %v9367
      %v9975 = vsel %vm4854, %v9934, %v9369
      %v9976 = vsel %vm4854, %v9935, %v9371
      %v9977 = vsel %vm4854, %v9936, %v9373
      %v9978 = vsel %vm4854, %v9937, %v9375
      %v9979 = vsel %vm4854, %v9938, %v9377
      %v9980 = vsel %vm4854, %v9939, %v9379
      %v9981 = vsel %vm4854, %v9940, %v9381
      %v9982 = vsel %vm4854, %v9941, %v9383
      %v9983 = vsel %vm4854, %v9942, %v9385
      %v9984 = vsel %vm4854, %v9943, %v9387
      %v9985 = vsel %vm4854, %v9944, %v9389
      %v9986 = vsel %vm4854, %v9945, %v9391
      %v9987 = vsel %vm4854, %v9946, %v9393
      %v9988 = vsel %vm4854, %v9947, %v9395
      %v9989 = vsel %vm4854, %v9948, %v4286
      %v9990 = vsel %vm4854, %v9949, %v4288
      %v9991 = vsel %vm4896, %v9950, %v9514
      %v9992 = vsel %vm4896, %v9951, %v9516
      %v9993 = vsel %vm4896, %v9952, %v9518
      %v9994 = vsel %vm4896, %v9953, %v9520
      %v9995 = vsel %vm4896, %v9954, %v9522
      %v9996 = vsel %vm4896, %v9955, %v9524
      %v9997 = vsel %vm4896, %v9956, %v9526
      %v9998 = vsel %vm4896, %v9957, %v9528
      %v9999 = vsel %vm4896, %v9958, %v9530
      %v10000 = vsel %vm4896, %v9959, %v9532
      %v10001 = vsel %vm4896, %v9960, %v9534
      %v10002 = vsel %vm4896, %v9961, %v9536
      %v10003 = vsel %vm4896, %v9962, %v9538
      %v10004 = vsel %vm4896, %v9963, %v9540
      %v10005 = vsel %vm4896, %v9964, %v9542
      %v10006 = vsel %vm4896, %v9965, %v9544
      %v10007 = vsel %vm4896, %v9966, %v9546
      %v10008 = vsel %vm4896, %v9967, %v9548
      %v10009 = vsel %vm4896, %v9968, %v9550
      %v10010 = vsel %vm4896, %v9969, %v9552
      %v10011 = vsel %vm4896, %v9970, %v9554
      %v10012 = vsel %vm4896, %v9971, %v9556
      %v10013 = vsel %vm4896, %v9972, %v9558
      %v10014 = vsel %vm4896, %v9973, %v9560
      %v10015 = vsel %vm4896, %v9974, %v9562
      %v10016 = vsel %vm4896, %v9975, %v9564
      %v10017 = vsel %vm4896, %v9976, %v9566
      %v10018 = vsel %vm4896, %v9977, %v9568
      %v10019 = vsel %vm4896, %v9978, %v9570
      %v10020 = vsel %vm4896, %v9979, %v9572
      %v10021 = vsel %vm4896, %v9980, %v9574
      %v10022 = vsel %vm4896, %v9981, %v9576
      %v10023 = vsel %vm4896, %v9982, %v9578
      %v10024 = vsel %vm4896, %v9983, %v9580
      %v10025 = vsel %vm4896, %v9984, %v9582
      %v10026 = vsel %vm4896, %v9985, %v9584
      %v10027 = vsel %vm4896, %v9986, %v9586
      %v10028 = vsel %vm4896, %v9987, %v9588
      %v10029 = vsel %vm4896, %v9988, %v9590
      %v10030 = vsel %vm4896, %v9989, %v4487
      %v10031 = vsel %vm4896, %v9990, %v4487
      %v10032 = vpack.c.bf16 %v9992, %v9991
      %v10033 = vpack.c.bf16 %v9634, %v9632
      %v10034 = vpack.c.bf16 %v9994, %v9993
      %v10035 = vpack.c.bf16 %v9638, %v9636
      %v10036 = vpack.c.bf16 %v9996, %v9995
      %v10037 = vpack.c.bf16 %v9642, %v9640
      %v10038 = vpack.c.bf16 %v9998, %v9997
      %v10039 = vpack.c.bf16 %v9646, %v9644
      %v10040 = vpack.c.bf16 %v10000, %v9999
      %v10041 = vpack.c.bf16 %v9650, %v9648
      %v10042 = vpack.c.bf16 %v10002, %v10001
      %v10043 = vpack.c.bf16 %v9654, %v9652
      %v10044 = vpack.c.bf16 %v10004, %v10003
      %v10045 = vpack.c.bf16 %v9658, %v9656
      %v10046 = vpack.c.bf16 %v10006, %v10005
      %v10047 = vpack.c.bf16 %v9662, %v9660
      %v10048 = vpack.c.bf16 %v10008, %v10007
      %v10049 = vpack.c.bf16 %v9666, %v9664
      %v10050 = vpack.c.bf16 %v10010, %v10009
      %v10051 = vpack.c.bf16 %v9670, %v9668
      %v10052 = vpack.c.bf16 %v10012, %v10011
      %v10053 = vpack.c.bf16 %v9674, %v9672
      %v10054 = vpack.c.bf16 %v10014, %v10013
      %v10055 = vpack.c.bf16 %v9678, %v9676
      %v10056 = vpack.c.bf16 %v10016, %v10015
      %v10057 = vpack.c.bf16 %v9682, %v9680
      %v10058 = vpack.c.bf16 %v10018, %v10017
      %v10059 = vpack.c.bf16 %v9686, %v9684
      %v10060 = vpack.c.bf16 %v10020, %v10019
      %v10061 = vpack.c.bf16 %v9690, %v9688
      %v10062 = vpack.c.bf16 %v10022, %v10021
      %v10063 = vpack.c.bf16 %v9694, %v9692
      %v10064 = vpack.c.bf16 %v10024, %v10023
      %v10065 = vpack.c.bf16 %v9698, %v9696
      %v10066 = vpack.c.bf16 %v10026, %v10025
      %v10067 = vpack.c.bf16 %v9702, %v9700
      %v10068 = vpack.c.bf16 %v10028, %v10027
      %v10069 = vpack.c.bf16 %v9706, %v9704
      %v10070 = vpack.c.bf16 %v10030, %v10029
      %v10071 = vpack.c.bf16 %v2134, %v9707
      %v10072 = vpack.c.bf16 %v10031, %v10031
      %v10073 = vld [vmem:[%s9] sm:$0xf]
      %v10074 = vld [vmem:[%s9 + $0x4] sm:$0xf]
      %v10075 = vld [vmem:[%s9 + $0x8] sm:$0xf]
      %v10076 = vld [vmem:[%s9 + $0xc] sm:$0xf]
      %v10077 = vld [vmem:[%s9 + $0x10] sm:$0xf]
      %v10078 = vld [vmem:[%s9 + $0x14] sm:$0xf]
      %v10079 = vld [vmem:[%s9 + $0x18] sm:$0xf]
      %v10080 = vld [vmem:[%s9 + $0x1c] sm:$0xf]
      %v10081 = vld [vmem:[%s9 + $0x20] sm:$0xf]
      %v10082 = vld [vmem:[%s9 + $0x24] sm:$0xf]
      %v10083 = vld [vmem:[%s9 + $0x28] sm:$0xf]
      %v10084 = vld [vmem:[%s9 + $0x2c] sm:$0xf]
      %v10085 = vld [vmem:[%s9 + $0x30] sm:$0xf]
      %v10086 = vld [vmem:[%s9 + $0x34] sm:$0xf]
      %v10087 = vld [vmem:[%s9 + $0x38] sm:$0xf]
      %v10088 = vld [vmem:[%s9 + $0x3c] sm:$0xf]
      %v10089 = vld [vmem:[%s9 + $0x40] sm:$0xf]
      %v10090 = vld [vmem:[%s9 + $0x44] sm:$0xf]
      %v10091 = vld [vmem:[%s10] sm:$0x1]
      %v10093 = vperm.slane %v10091, 0
      %v10113 = vunpack.c.l.b16 %v10073
      %v10114 = vunpack.c.l.b16 %v10074
      %v10115 = vunpack.c.l.b16 %v10075
      %v10116 = vunpack.c.l.b16 %v10076
      %v10117 = vunpack.c.l.b16 %v10077
      %v10118 = vunpack.c.l.b16 %v10078
      %v10119 = vunpack.c.l.b16 %v10079
      %v10120 = vunpack.c.l.b16 %v10080
      %v10121 = vunpack.c.l.b16 %v10081
      %v10122 = vunpack.c.l.b16 %v10082
      %v10123 = vunpack.c.l.b16 %v10083
      %v10124 = vunpack.c.l.b16 %v10084
      %v10125 = vunpack.c.l.b16 %v10085
      %v10126 = vunpack.c.l.b16 %v10086
      %v10127 = vunpack.c.l.b16 %v10087
      %v10128 = vunpack.c.l.b16 %v10088
      %v10129 = vunpack.c.l.b16 %v10089
      %v10130 = vunpack.c.l.b16 %v10090
      %v10131 = vpack.c.b16 %v10114, %v10113
      %v10132 = vpack.c.b16 %v10116, %v10115
      %v10133 = vpack.c.b16 %v10118, %v10117
      %v10134 = vpack.c.b16 %v10120, %v10119
      %v10135 = vpack.c.b16 %v10122, %v10121
      %v10136 = vpack.c.b16 %v10124, %v10123
      %v10137 = vpack.c.b16 %v10126, %v10125
      %v10138 = vpack.c.b16 %v10128, %v10127
      %v10139 = vpack.c.b16 %v10130, %v10129
      %v10150 = vsel %vm2381, %v10033, 0
      %v10153 = vsel %vm2381, %v10035, 0
      %v10156 = vsel %vm2381, %v10037, 0
      %v10159 = vsel %vm2381, %v10039, 0
      %v10162 = vsel %vm2381, %v10041, 0
      %v10165 = vsel %vm2381, %v10043, 0
      %v10168 = vsel %vm2381, %v10045, 0
      %v10171 = vsel %vm2381, %v10047, 0
      %v10174 = vsel %vm2381, %v10049, 0
      %v10177 = vsel %vm2381, %v10051, 0
      %v10180 = vsel %vm2381, %v10053, 0
      %v10183 = vsel %vm2381, %v10055, 0
      %v10186 = vsel %vm2381, %v10057, 0
      %v10189 = vsel %vm2381, %v10059, 0
      %v10192 = vsel %vm2381, %v10061, 0
      %v10195 = vsel %vm2381, %v10063, 0
      %v10198 = vsel %vm2381, %v10065, 0
      %v10201 = vsel %vm2381, %v10067, 0
      %v10204 = vsel %vm2381, %v10069, 0
      %v10207 = vsel %vm2381, %v10071, 0
      %10209 = vmatpush.bf16.msra.mxu0 %v10138
      %10210 = vmatpush.bf16.msra.mxu0 %v10137
      %10211 = vmatpush.bf16.msra.mxu0 %v10136
      %10212 = vmatpush.bf16.msra.mxu0 %v10135
      %10213 = vmatpush.bf16.msra.mxu0 %v10134
      %10214 = vmatpush.bf16.msra.mxu0 %v10133
      %10215 = vmatpush.bf16.msra.mxu0 %v10132
      %10216 = vmatpush.bf16.msra.mxu0 %v10131
      %10217 = vmatmul.bf16.gmra.mxu0 %v10032
      %v10218 = vpop.f32.mrf.mxu0
      %v10219 = vadd.f32 %v10093, %v10218
      %v10220 = vpop.f32.mrf.mxu0
      %v10221 = vadd.f32 %v10093, %v10220
      %10222 = vmatmul.bf16.gmra.mxu0 %v10034
      %v10223 = vpop.f32.mrf.mxu0
      %v10224 = vadd.f32 %v10093, %v10223
      %v10225 = vpop.f32.mrf.mxu0
      %v10226 = vadd.f32 %v10093, %v10225
      %10227 = vmatmul.bf16.gmra.mxu0 %v10036
      %v10228 = vpop.f32.mrf.mxu0
      %v10229 = vadd.f32 %v10093, %v10228
      %v10230 = vpop.f32.mrf.mxu0
      %v10231 = vadd.f32 %v10093, %v10230
      %10232 = vmatmul.bf16.gmra.mxu0 %v10038
      %v10233 = vpop.f32.mrf.mxu0
      %v10234 = vadd.f32 %v10093, %v10233
      %v10235 = vpop.f32.mrf.mxu0
      %v10236 = vadd.f32 %v10093, %v10235
      %10237 = vmatmul.bf16.gmra.mxu0 %v10040
      %v10238 = vpop.f32.mrf.mxu0
      %v10239 = vadd.f32 %v10093, %v10238
      %v10240 = vpop.f32.mrf.mxu0
      %v10241 = vadd.f32 %v10093, %v10240
      %10242 = vmatmul.bf16.gmra.mxu0 %v10042
      %v10243 = vpop.f32.mrf.mxu0
      %v10244 = vadd.f32 %v10093, %v10243
      %v10245 = vpop.f32.mrf.mxu0
      %v10246 = vadd.f32 %v10093, %v10245
      %10247 = vmatmul.bf16.gmra.mxu0 %v10044
      %v10248 = vpop.f32.mrf.mxu0
      %v10249 = vadd.f32 %v10093, %v10248
      %v10250 = vpop.f32.mrf.mxu0
      %v10251 = vadd.f32 %v10093, %v10250
      %10252 = vmatmul.bf16.gmra.mxu0 %v10046
      %v10253 = vpop.f32.mrf.mxu0
      %v10254 = vadd.f32 %v10093, %v10253
      %v10255 = vpop.f32.mrf.mxu0
      %v10256 = vadd.f32 %v10093, %v10255
      %10257 = vmatmul.bf16.gmra.mxu0 %v10048
      %v10258 = vpop.f32.mrf.mxu0
      %v10259 = vadd.f32 %v10093, %v10258
      %v10260 = vpop.f32.mrf.mxu0
      %v10261 = vadd.f32 %v10093, %v10260
      %10262 = vmatmul.bf16.gmra.mxu0 %v10050
      %v10263 = vpop.f32.mrf.mxu0
      %v10264 = vadd.f32 %v10093, %v10263
      %v10265 = vpop.f32.mrf.mxu0
      %v10266 = vadd.f32 %v10093, %v10265
      %10267 = vmatmul.bf16.gmra.mxu0 %v10052
      %v10268 = vpop.f32.mrf.mxu0
      %v10269 = vadd.f32 %v10093, %v10268
      %v10270 = vpop.f32.mrf.mxu0
      %v10271 = vadd.f32 %v10093, %v10270
      %10272 = vmatmul.bf16.gmra.mxu0 %v10054
      %v10273 = vpop.f32.mrf.mxu0
      %v10274 = vadd.f32 %v10093, %v10273
      %v10275 = vpop.f32.mrf.mxu0
      %v10276 = vadd.f32 %v10093, %v10275
      %10277 = vmatmul.bf16.gmra.mxu0 %v10056
      %v10278 = vpop.f32.mrf.mxu0
      %v10279 = vadd.f32 %v10093, %v10278
      %v10280 = vpop.f32.mrf.mxu0
      %v10281 = vadd.f32 %v10093, %v10280
      %10282 = vmatmul.bf16.gmra.mxu0 %v10058
      %v10283 = vpop.f32.mrf.mxu0
      %v10284 = vadd.f32 %v10093, %v10283
      %v10285 = vpop.f32.mrf.mxu0
      %v10286 = vadd.f32 %v10093, %v10285
      %10287 = vmatmul.bf16.gmra.mxu0 %v10060
      %v10288 = vpop.f32.mrf.mxu0
      %v10289 = vadd.f32 %v10093, %v10288
      %v10290 = vpop.f32.mrf.mxu0
      %v10291 = vadd.f32 %v10093, %v10290
      %10292 = vmatmul.bf16.gmra.mxu0 %v10062
      %v10293 = vpop.f32.mrf.mxu0
      %v10294 = vadd.f32 %v10093, %v10293
      %v10295 = vpop.f32.mrf.mxu0
      %v10296 = vadd.f32 %v10093, %v10295
      %10297 = vmatmul.bf16.gmra.mxu0 %v10064
      %v10298 = vpop.f32.mrf.mxu0
      %v10299 = vadd.f32 %v10093, %v10298
      %v10300 = vpop.f32.mrf.mxu0
      %v10301 = vadd.f32 %v10093, %v10300
      %10302 = vmatmul.bf16.gmra.mxu0 %v10066
      %v10303 = vpop.f32.mrf.mxu0
      %v10304 = vadd.f32 %v10093, %v10303
      %v10305 = vpop.f32.mrf.mxu0
      %v10306 = vadd.f32 %v10093, %v10305
      %10307 = vmatmul.bf16.gmra.mxu0 %v10068
      %v10308 = vpop.f32.mrf.mxu0
      %v10309 = vadd.f32 %v10093, %v10308
      %v10310 = vpop.f32.mrf.mxu0
      %v10311 = vadd.f32 %v10093, %v10310
      %10312 = vmatmul.bf16.gmra.mxu0 %v10070
      %v10313 = vpop.f32.mrf.mxu0
      %v10314 = vadd.f32 %v10093, %v10313
      %v10315 = vpop.f32.mrf.mxu0
      %v10316 = vadd.f32 %v10093, %v10315
      %10317 = vmatmul.bf16.gmra.mxu0 %v10072
      %v10318 = vpop.f32.mrf.mxu0
      %v10319 = vadd.f32 %v10093, %v10318
      %v10320 = vpop.f32.mrf.mxu0
      %10321 = vdwg.mxu0
      %10322 = vmatpush.bf16.msra.mxu0 0
      %10323 = vmatpush.bf16.msra.mxu0 0
      %10324 = vmatpush.bf16.msra.mxu0 0
      %10325 = vmatpush.bf16.msra.mxu0 0
      %10326 = vmatpush.bf16.msra.mxu0 0
      %10327 = vmatpush.bf16.msra.mxu0 0
      %10328 = vmatpush.bf16.msra.mxu0 0
      %10329 = vmatpush.bf16.msra.mxu0 %v10139
      %10330 = vmatmul.bf16.gmra.mxu0 %v10150
      %v10331 = vpop.f32.mrf.mxu0
      %v10332 = vadd.f32 %v10219, %v10331
      %v10333 = vpop.f32.mrf.mxu0
      %v10334 = vadd.f32 %v10221, %v10333
      %10335 = vmatmul.bf16.gmra.mxu0 %v10153
      %v10336 = vpop.f32.mrf.mxu0
      %v10337 = vadd.f32 %v10224, %v10336
      %v10338 = vpop.f32.mrf.mxu0
      %v10339 = vadd.f32 %v10226, %v10338
      %10340 = vmatmul.bf16.gmra.mxu0 %v10156
      %v10341 = vpop.f32.mrf.mxu0
      %v10342 = vadd.f32 %v10229, %v10341
      %v10343 = vpop.f32.mrf.mxu0
      %v10344 = vadd.f32 %v10231, %v10343
      %10345 = vmatmul.bf16.gmra.mxu0 %v10159
      %v10346 = vpop.f32.mrf.mxu0
      %v10347 = vadd.f32 %v10234, %v10346
      %v10348 = vpop.f32.mrf.mxu0
      %v10349 = vadd.f32 %v10236, %v10348
      %10350 = vmatmul.bf16.gmra.mxu0 %v10162
      %v10351 = vpop.f32.mrf.mxu0
      %v10352 = vadd.f32 %v10239, %v10351
      %v10353 = vpop.f32.mrf.mxu0
      %v10354 = vadd.f32 %v10241, %v10353
      %10355 = vmatmul.bf16.gmra.mxu0 %v10165
      %v10356 = vpop.f32.mrf.mxu0
      %v10357 = vadd.f32 %v10244, %v10356
      %v10358 = vpop.f32.mrf.mxu0
      %v10359 = vadd.f32 %v10246, %v10358
      %10360 = vmatmul.bf16.gmra.mxu0 %v10168
      %v10361 = vpop.f32.mrf.mxu0
      %v10362 = vadd.f32 %v10249, %v10361
      %v10363 = vpop.f32.mrf.mxu0
      %v10364 = vadd.f32 %v10251, %v10363
      %10365 = vmatmul.bf16.gmra.mxu0 %v10171
      %v10366 = vpop.f32.mrf.mxu0
      %v10367 = vadd.f32 %v10254, %v10366
      %v10368 = vpop.f32.mrf.mxu0
      %v10369 = vadd.f32 %v10256, %v10368
      %10370 = vmatmul.bf16.gmra.mxu0 %v10174
      %v10371 = vpop.f32.mrf.mxu0
      %v10372 = vadd.f32 %v10259, %v10371
      %v10373 = vpop.f32.mrf.mxu0
      %v10374 = vadd.f32 %v10261, %v10373
      %10375 = vmatmul.bf16.gmra.mxu0 %v10177
      %v10376 = vpop.f32.mrf.mxu0
      %v10377 = vadd.f32 %v10264, %v10376
      %v10378 = vpop.f32.mrf.mxu0
      %v10379 = vadd.f32 %v10266, %v10378
      %10380 = vmatmul.bf16.gmra.mxu0 %v10180
      %v10381 = vpop.f32.mrf.mxu0
      %v10382 = vadd.f32 %v10269, %v10381
      %v10383 = vpop.f32.mrf.mxu0
      %v10384 = vadd.f32 %v10271, %v10383
      %10385 = vmatmul.bf16.gmra.mxu0 %v10183
      %v10386 = vpop.f32.mrf.mxu0
      %v10387 = vadd.f32 %v10274, %v10386
      %v10388 = vpop.f32.mrf.mxu0
      %v10389 = vadd.f32 %v10276, %v10388
      %10390 = vmatmul.bf16.gmra.mxu0 %v10186
      %v10391 = vpop.f32.mrf.mxu0
      %v10392 = vadd.f32 %v10279, %v10391
      %v10393 = vpop.f32.mrf.mxu0
      %v10394 = vadd.f32 %v10281, %v10393
      %10395 = vmatmul.bf16.gmra.mxu0 %v10189
      %v10396 = vpop.f32.mrf.mxu0
      %v10397 = vadd.f32 %v10284, %v10396
      %v10398 = vpop.f32.mrf.mxu0
      %v10399 = vadd.f32 %v10286, %v10398
      %10400 = vmatmul.bf16.gmra.mxu0 %v10192
      %v10401 = vpop.f32.mrf.mxu0
      %v10402 = vadd.f32 %v10289, %v10401
      %v10403 = vpop.f32.mrf.mxu0
      %v10404 = vadd.f32 %v10291, %v10403
      %10405 = vmatmul.bf16.gmra.mxu0 %v10195
      %v10406 = vpop.f32.mrf.mxu0
      %v10407 = vadd.f32 %v10294, %v10406
      %v10408 = vpop.f32.mrf.mxu0
      %v10409 = vadd.f32 %v10296, %v10408
      %10410 = vmatmul.bf16.gmra.mxu0 %v10198
      %v10411 = vpop.f32.mrf.mxu0
      %v10412 = vadd.f32 %v10299, %v10411
      %v10413 = vpop.f32.mrf.mxu0
      %v10414 = vadd.f32 %v10301, %v10413
      %10415 = vmatmul.bf16.gmra.mxu0 %v10201
      %v10416 = vpop.f32.mrf.mxu0
      %v10417 = vadd.f32 %v10304, %v10416
      %v10418 = vpop.f32.mrf.mxu0
      %v10419 = vadd.f32 %v10306, %v10418
      %10420 = vmatmul.bf16.gmra.mxu0 %v10204
      %v10421 = vpop.f32.mrf.mxu0
      %v10422 = vadd.f32 %v10309, %v10421
      %v10423 = vpop.f32.mrf.mxu0
      %v10424 = vadd.f32 %v10311, %v10423
      %10425 = vmatmul.bf16.gmra.mxu0 %v10207
      %v10426 = vpop.f32.mrf.mxu0
      %v10427 = vadd.f32 %v10314, %v10426
      %v10428 = vpop.f32.mrf.mxu0
      %v10429 = vadd.f32 %v10316, %v10428
      %10430 = vmatmul.bf16.gmra.mxu0 %v5117
      %v10431 = vpop.f32.mrf.mxu0
      %v10432 = vadd.f32 %v10319, %v10431
      %v10433 = vpop.f32.mrf.mxu0
      %10434 = vdwg.mxu0
      %v10435 = vmax.f32 %v10332, 0.0
      %v10436 = vmax.f32 %v10334, 0.0
      %v10437 = vmax.f32 %v10337, 0.0
      %v10438 = vmax.f32 %v10339, 0.0
      %v10439 = vmax.f32 %v10342, 0.0
      %v10440 = vmax.f32 %v10344, 0.0
      %v10441 = vmax.f32 %v10347, 0.0
      %v10442 = vmax.f32 %v10349, 0.0
      %v10443 = vmax.f32 %v10352, 0.0
      %v10444 = vmax.f32 %v10354, 0.0
      %v10445 = vmax.f32 %v10357, 0.0
      %v10446 = vmax.f32 %v10359, 0.0
      %v10447 = vmax.f32 %v10362, 0.0
      %v10448 = vmax.f32 %v10364, 0.0
      %v10449 = vmax.f32 %v10367, 0.0
      %v10450 = vmax.f32 %v10369, 0.0
      %v10451 = vmax.f32 %v10372, 0.0
      %v10452 = vmax.f32 %v10374, 0.0
      %v10453 = vmax.f32 %v10377, 0.0
      %v10454 = vmax.f32 %v10379, 0.0
      %v10455 = vmax.f32 %v10382, 0.0
      %v10456 = vmax.f32 %v10384, 0.0
      %v10457 = vmax.f32 %v10387, 0.0
      %v10458 = vmax.f32 %v10389, 0.0
      %v10459 = vmax.f32 %v10392, 0.0
      %v10460 = vmax.f32 %v10394, 0.0
      %v10461 = vmax.f32 %v10397, 0.0
      %v10462 = vmax.f32 %v10399, 0.0
      %v10463 = vmax.f32 %v10402, 0.0
      %v10464 = vmax.f32 %v10404, 0.0
      %v10465 = vmax.f32 %v10407, 0.0
      %v10466 = vmax.f32 %v10409, 0.0
      %v10467 = vmax.f32 %v10412, 0.0
      %v10468 = vmax.f32 %v10414, 0.0
      %v10469 = vmax.f32 %v10417, 0.0
      %v10470 = vmax.f32 %v10419, 0.0
      %v10471 = vmax.f32 %v10422, 0.0
      %v10472 = vmax.f32 %v10424, 0.0
      %v10473 = vmax.f32 %v10427, 0.0
      %v10474 = vmax.f32 %v10429, 0.0
      %v10475 = vmax.f32 %v10432, 0.0
      %v10476 = vmul.f32 %v10435, %v7977
      %v10477 = vmul.f32 %v10436, %v7982
      %v10478 = vmul.f32 %v10437, %v7987
      %v10479 = vmul.f32 %v10438, %v7992
      %v10480 = vmul.f32 %v10439, %v7997
      %v10481 = vmul.f32 %v10440, %v8002
      %v10482 = vmul.f32 %v10441, %v8007
      %v10483 = vmul.f32 %v10442, %v8012
      %v10484 = vmul.f32 %v10443, %v8017
      %v10485 = vmul.f32 %v10444, %v8022
      %v10486 = vmul.f32 %v10445, %v8027
      %v10487 = vmul.f32 %v10446, %v8032
      %v10488 = vmul.f32 %v10447, %v8037
      %v10489 = vmul.f32 %v10448, %v8042
      %v10490 = vmul.f32 %v10449, %v8047
      %v10491 = vmul.f32 %v10450, %v8052
      %v10492 = vmul.f32 %v10451, %v8057
      %v10493 = vmul.f32 %v10452, %v8062
      %v10494 = vmul.f32 %v10453, %v8067
      %v10495 = vmul.f32 %v10454, %v8072
      %v10496 = vmul.f32 %v10455, %v8077
      %v10497 = vmul.f32 %v10456, %v8082
      %v10498 = vmul.f32 %v10457, %v8087
      %v10499 = vmul.f32 %v10458, %v8092
      %v10500 = vmul.f32 %v10459, %v8097
      %v10501 = vmul.f32 %v10460, %v8102
      %v10502 = vmul.f32 %v10461, %v8107
      %v10503 = vmul.f32 %v10462, %v8112
      %v10504 = vmul.f32 %v10463, %v8117
      %v10505 = vmul.f32 %v10464, %v8122
      %v10506 = vmul.f32 %v10465, %v8127
      %v10507 = vmul.f32 %v10466, %v8132
      %v10508 = vmul.f32 %v10467, %v8137
      %v10509 = vmul.f32 %v10468, %v8142
      %v10510 = vmul.f32 %v10469, %v8147
      %v10511 = vmul.f32 %v10470, %v8152
      %v10512 = vmul.f32 %v10471, %v8157
      %v10513 = vmul.f32 %v10472, %v8162
      %v10514 = vmul.f32 %v10473, %v8167
      %v10515 = vmul.f32 %v10474, %v8172
      %v10516 = vmul.f32 %v10475, %v8177
      %v10558 = vrot.slane %v10476, 2
      %v10559 = vrot.slane %v10477, 2
      %v10560 = vsel %vm986, %v10558, %v10559
      %v10561 = vrot.slane %v10478, 2
      %v10562 = vsel %vm986, %v10559, %v10561
      %v10563 = vrot.slane %v10479, 2
      %v10564 = vsel %vm986, %v10561, %v10563
      %v10565 = vrot.slane %v10480, 2
      %v10566 = vsel %vm986, %v10563, %v10565
      %v10567 = vrot.slane %v10481, 2
      %v10568 = vsel %vm986, %v10565, %v10567
      %v10569 = vrot.slane %v10482, 2
      %v10570 = vsel %vm986, %v10567, %v10569
      %v10571 = vrot.slane %v10483, 2
      %v10572 = vsel %vm986, %v10569, %v10571
      %v10573 = vrot.slane %v10484, 2
      %v10574 = vsel %vm986, %v10571, %v10573
      %v10575 = vrot.slane %v10485, 2
      %v10576 = vsel %vm986, %v10573, %v10575
      %v10577 = vrot.slane %v10486, 2
      %v10578 = vsel %vm986, %v10575, %v10577
      %v10579 = vrot.slane %v10487, 2
      %v10580 = vsel %vm986, %v10577, %v10579
      %v10581 = vrot.slane %v10488, 2
      %v10582 = vsel %vm986, %v10579, %v10581
      %v10583 = vrot.slane %v10489, 2
      %v10584 = vsel %vm986, %v10581, %v10583
      %v10585 = vrot.slane %v10490, 2
      %v10586 = vsel %vm986, %v10583, %v10585
      %v10587 = vrot.slane %v10491, 2
      %v10588 = vsel %vm986, %v10585, %v10587
      %v10589 = vrot.slane %v10492, 2
      %v10590 = vsel %vm986, %v10587, %v10589
      %v10591 = vrot.slane %v10493, 2
      %v10592 = vsel %vm986, %v10589, %v10591
      %v10593 = vrot.slane %v10494, 2
      %v10594 = vsel %vm986, %v10591, %v10593
      %v10595 = vrot.slane %v10495, 2
      %v10596 = vsel %vm986, %v10593, %v10595
      %v10597 = vrot.slane %v10496, 2
      %v10598 = vsel %vm986, %v10595, %v10597
      %v10599 = vrot.slane %v10497, 2
      %v10600 = vsel %vm986, %v10597, %v10599
      %v10601 = vrot.slane %v10498, 2
      %v10602 = vsel %vm986, %v10599, %v10601
      %v10603 = vrot.slane %v10499, 2
      %v10604 = vsel %vm986, %v10601, %v10603
      %v10605 = vrot.slane %v10500, 2
      %v10606 = vsel %vm986, %v10603, %v10605
      %v10607 = vrot.slane %v10501, 2
      %v10608 = vsel %vm986, %v10605, %v10607
      %v10609 = vrot.slane %v10502, 2
      %v10610 = vsel %vm986, %v10607, %v10609
      %v10611 = vrot.slane %v10503, 2
      %v10612 = vsel %vm986, %v10609, %v10611
      %v10613 = vrot.slane %v10504, 2
      %v10614 = vsel %vm986, %v10611, %v10613
      %v10615 = vrot.slane %v10505, 2
      %v10616 = vsel %vm986, %v10613, %v10615
      %v10617 = vrot.slane %v10506, 2
      %v10618 = vsel %vm986, %v10615, %v10617
      %v10619 = vrot.slane %v10507, 2
      %v10620 = vsel %vm986, %v10617, %v10619
      %v10621 = vrot.slane %v10508, 2
      %v10622 = vsel %vm986, %v10619, %v10621
      %v10623 = vrot.slane %v10509, 2
      %v10624 = vsel %vm986, %v10621, %v10623
      %v10625 = vrot.slane %v10510, 2
      %v10626 = vsel %vm986, %v10623, %v10625
      %v10627 = vrot.slane %v10511, 2
      %v10628 = vsel %vm986, %v10625, %v10627
      %v10629 = vrot.slane %v10512, 2
      %v10630 = vsel %vm986, %v10627, %v10629
      %v10631 = vrot.slane %v10513, 2
      %v10632 = vsel %vm986, %v10629, %v10631
      %v10633 = vrot.slane %v10514, 2
      %v10634 = vsel %vm986, %v10631, %v10633
      %v10635 = vrot.slane %v10515, 2
      %v10636 = vsel %vm986, %v10633, %v10635
      %v10637 = vrot.slane %v10516, 2
      %v10638 = vsel %vm986, %v10635, %v10637
      %v10677 = vsel %vm986, 0.0, %v10558
      %v10678 = vsel %vm2054, %v10637, 0.0
      %v10680 = vrot.slane %v10677, 2
      %v10681 = vsel %vm986, %v987, %v10680
      %v10682 = vrot.slane %v10560, 2
      %v10683 = vsel %vm986, %v10680, %v10682
      %v10684 = vrot.slane %v10562, 2
      %v10685 = vsel %vm986, %v10682, %v10684
      %v10686 = vrot.slane %v10564, 2
      %v10687 = vsel %vm986, %v10684, %v10686
      %v10688 = vrot.slane %v10566, 2
      %v10689 = vsel %vm986, %v10686, %v10688
      %v10690 = vrot.slane %v10568, 2
      %v10691 = vsel %vm986, %v10688, %v10690
      %v10692 = vrot.slane %v10570, 2
      %v10693 = vsel %vm986, %v10690, %v10692
      %v10694 = vrot.slane %v10572, 2
      %v10695 = vsel %vm986, %v10692, %v10694
      %v10696 = vrot.slane %v10574, 2
      %v10697 = vsel %vm986, %v10694, %v10696
      %v10698 = vrot.slane %v10576, 2
      %v10699 = vsel %vm986, %v10696, %v10698
      %v10700 = vrot.slane %v10578, 2
      %v10701 = vsel %vm986, %v10698, %v10700
      %v10702 = vrot.slane %v10580, 2
      %v10703 = vsel %vm986, %v10700, %v10702
      %v10704 = vrot.slane %v10582, 2
      %v10705 = vsel %vm986, %v10702, %v10704
      %v10706 = vrot.slane %v10584, 2
      %v10707 = vsel %vm986, %v10704, %v10706
      %v10708 = vrot.slane %v10586, 2
      %v10709 = vsel %vm986, %v10706, %v10708
      %v10710 = vrot.slane %v10588, 2
      %v10711 = vsel %vm986, %v10708, %v10710
      %v10712 = vrot.slane %v10590, 2
      %v10713 = vsel %vm986, %v10710, %v10712
      %v10714 = vrot.slane %v10592, 2
      %v10715 = vsel %vm986, %v10712, %v10714
      %v10716 = vrot.slane %v10594, 2
      %v10717 = vsel %vm986, %v10714, %v10716
      %v10718 = vrot.slane %v10596, 2
      %v10719 = vsel %vm986, %v10716, %v10718
      %v10720 = vrot.slane %v10598, 2
      %v10721 = vsel %vm986, %v10718, %v10720
      %v10722 = vrot.slane %v10600, 2
      %v10723 = vsel %vm986, %v10720, %v10722
      %v10724 = vrot.slane %v10602, 2
      %v10725 = vsel %vm986, %v10722, %v10724
      %v10726 = vrot.slane %v10604, 2
      %v10727 = vsel %vm986, %v10724, %v10726
      %v10728 = vrot.slane %v10606, 2
      %v10729 = vsel %vm986, %v10726, %v10728
      %v10730 = vrot.slane %v10608, 2
      %v10731 = vsel %vm986, %v10728, %v10730
      %v10732 = vrot.slane %v10610, 2
      %v10733 = vsel %vm986, %v10730, %v10732
      %v10734 = vrot.slane %v10612, 2
      %v10735 = vsel %vm986, %v10732, %v10734
      %v10736 = vrot.slane %v10614, 2
      %v10737 = vsel %vm986, %v10734, %v10736
      %v10738 = vrot.slane %v10616, 2
      %v10739 = vsel %vm986, %v10736, %v10738
      %v10740 = vrot.slane %v10618, 2
      %v10741 = vsel %vm986, %v10738, %v10740
      %v10742 = vrot.slane %v10620, 2
      %v10743 = vsel %vm986, %v10740, %v10742
      %v10744 = vrot.slane %v10622, 2
      %v10745 = vsel %vm986, %v10742, %v10744
      %v10746 = vrot.slane %v10624, 2
      %v10747 = vsel %vm986, %v10744, %v10746
      %v10748 = vrot.slane %v10626, 2
      %v10749 = vsel %vm986, %v10746, %v10748
      %v10750 = vrot.slane %v10628, 2
      %v10751 = vsel %vm986, %v10748, %v10750
      %v10752 = vrot.slane %v10630, 2
      %v10753 = vsel %vm986, %v10750, %v10752
      %10754 = vrot.lane.b32.xlu0 %v10681, 32
      %v10755 = vpop.permute.xlu0 %10754
      %10756 = vrot.lane.b32.xlu0 %v10683, 32
      %v10757 = vpop.permute.xlu0 %10756
      %10758 = vrot.lane.b32.xlu0 %v10685, 32
      %v10759 = vpop.permute.xlu0 %10758
      %10760 = vrot.lane.b32.xlu0 %v10687, 32
      %v10761 = vpop.permute.xlu0 %10760
      %10762 = vrot.lane.b32.xlu0 %v10689, 32
      %v10763 = vpop.permute.xlu0 %10762
      %10764 = vrot.lane.b32.xlu0 %v10691, 32
      %v10765 = vpop.permute.xlu0 %10764
      %10766 = vrot.lane.b32.xlu0 %v10693, 32
      %v10767 = vpop.permute.xlu0 %10766
      %10768 = vrot.lane.b32.xlu0 %v10695, 32
      %v10769 = vpop.permute.xlu0 %10768
      %10770 = vrot.lane.b32.xlu0 %v10697, 32
      %v10771 = vpop.permute.xlu0 %10770
      %10772 = vrot.lane.b32.xlu0 %v10699, 32
      %v10773 = vpop.permute.xlu0 %10772
      %10774 = vrot.lane.b32.xlu0 %v10701, 32
      %v10775 = vpop.permute.xlu0 %10774
      %10776 = vrot.lane.b32.xlu0 %v10703, 32
      %v10777 = vpop.permute.xlu0 %10776
      %10778 = vrot.lane.b32.xlu0 %v10705, 32
      %v10779 = vpop.permute.xlu0 %10778
      %10780 = vrot.lane.b32.xlu0 %v10707, 32
      %v10781 = vpop.permute.xlu0 %10780
      %10782 = vrot.lane.b32.xlu0 %v10709, 32
      %v10783 = vpop.permute.xlu0 %10782
      %10784 = vrot.lane.b32.xlu0 %v10711, 32
      %v10785 = vpop.permute.xlu0 %10784
      %10786 = vrot.lane.b32.xlu0 %v10713, 32
      %v10787 = vpop.permute.xlu0 %10786
      %10788 = vrot.lane.b32.xlu0 %v10715, 32
      %v10789 = vpop.permute.xlu0 %10788
      %10790 = vrot.lane.b32.xlu0 %v10717, 32
      %v10791 = vpop.permute.xlu0 %10790
      %10792 = vrot.lane.b32.xlu0 %v10719, 32
      %v10793 = vpop.permute.xlu0 %10792
      %10794 = vrot.lane.b32.xlu0 %v10721, 32
      %v10795 = vpop.permute.xlu0 %10794
      %10796 = vrot.lane.b32.xlu0 %v10723, 32
      %v10797 = vpop.permute.xlu0 %10796
      %10798 = vrot.lane.b32.xlu0 %v10725, 32
      %v10799 = vpop.permute.xlu0 %10798
      %10800 = vrot.lane.b32.xlu0 %v10727, 32
      %v10801 = vpop.permute.xlu0 %10800
      %10802 = vrot.lane.b32.xlu0 %v10729, 32
      %v10803 = vpop.permute.xlu0 %10802
      %10804 = vrot.lane.b32.xlu0 %v10731, 32
      %v10805 = vpop.permute.xlu0 %10804
      %10806 = vrot.lane.b32.xlu0 %v10733, 32
      %v10807 = vpop.permute.xlu0 %10806
      %10808 = vrot.lane.b32.xlu0 %v10735, 32
      %v10809 = vpop.permute.xlu0 %10808
      %10810 = vrot.lane.b32.xlu0 %v10737, 32
      %v10811 = vpop.permute.xlu0 %10810
      %10812 = vrot.lane.b32.xlu0 %v10739, 32
      %v10813 = vpop.permute.xlu0 %10812
      %10814 = vrot.lane.b32.xlu0 %v10741, 32
      %v10815 = vpop.permute.xlu0 %10814
      %10816 = vrot.lane.b32.xlu0 %v10743, 32
      %v10817 = vpop.permute.xlu0 %10816
      %10818 = vrot.lane.b32.xlu0 %v10745, 32
      %v10819 = vpop.permute.xlu0 %10818
      %10820 = vrot.lane.b32.xlu0 %v10747, 32
      %v10821 = vpop.permute.xlu0 %10820
      %10822 = vrot.lane.b32.xlu0 %v10749, 32
      %v10823 = vpop.permute.xlu0 %10822
      %10824 = vrot.lane.b32.xlu0 %v10751, 32
      %v10825 = vpop.permute.xlu0 %10824
      %10826 = vrot.lane.b32.xlu0 %v10753, 32
      %v10827 = vpop.permute.xlu0 %10826
      %10828 = vrot.lane.b32.xlu0 %v10752, 32
      %v10829 = vpop.permute.xlu0 %10828
      %v10868 = vrot.slane %v10677, 4
      %v10869 = vsel %vm1523, %v1728, %v10868
      %v10870 = vrot.slane %v10560, 4
      %v10871 = vsel %vm1523, %v10868, %v10870
      %v10872 = vrot.slane %v10562, 4
      %v10873 = vsel %vm1523, %v10870, %v10872
      %v10874 = vrot.slane %v10564, 4
      %v10875 = vsel %vm1523, %v10872, %v10874
      %v10876 = vrot.slane %v10566, 4
      %v10877 = vsel %vm1523, %v10874, %v10876
      %v10878 = vrot.slane %v10568, 4
      %v10879 = vsel %vm1523, %v10876, %v10878
      %v10880 = vrot.slane %v10570, 4
      %v10881 = vsel %vm1523, %v10878, %v10880
      %v10882 = vrot.slane %v10572, 4
      %v10883 = vsel %vm1523, %v10880, %v10882
      %v10884 = vrot.slane %v10574, 4
      %v10885 = vsel %vm1523, %v10882, %v10884
      %v10886 = vrot.slane %v10576, 4
      %v10887 = vsel %vm1523, %v10884, %v10886
      %v10888 = vrot.slane %v10578, 4
      %v10889 = vsel %vm1523, %v10886, %v10888
      %v10890 = vrot.slane %v10580, 4
      %v10891 = vsel %vm1523, %v10888, %v10890
      %v10892 = vrot.slane %v10582, 4
      %v10893 = vsel %vm1523, %v10890, %v10892
      %v10894 = vrot.slane %v10584, 4
      %v10895 = vsel %vm1523, %v10892, %v10894
      %v10896 = vrot.slane %v10586, 4
      %v10897 = vsel %vm1523, %v10894, %v10896
      %v10898 = vrot.slane %v10588, 4
      %v10899 = vsel %vm1523, %v10896, %v10898
      %v10900 = vrot.slane %v10590, 4
      %v10901 = vsel %vm1523, %v10898, %v10900
      %v10902 = vrot.slane %v10592, 4
      %v10903 = vsel %vm1523, %v10900, %v10902
      %v10904 = vrot.slane %v10594, 4
      %v10905 = vsel %vm1523, %v10902, %v10904
      %v10906 = vrot.slane %v10596, 4
      %v10907 = vsel %vm1523, %v10904, %v10906
      %v10908 = vrot.slane %v10598, 4
      %v10909 = vsel %vm1523, %v10906, %v10908
      %v10910 = vrot.slane %v10600, 4
      %v10911 = vsel %vm1523, %v10908, %v10910
      %v10912 = vrot.slane %v10602, 4
      %v10913 = vsel %vm1523, %v10910, %v10912
      %v10914 = vrot.slane %v10604, 4
      %v10915 = vsel %vm1523, %v10912, %v10914
      %v10916 = vrot.slane %v10606, 4
      %v10917 = vsel %vm1523, %v10914, %v10916
      %v10918 = vrot.slane %v10608, 4
      %v10919 = vsel %vm1523, %v10916, %v10918
      %v10920 = vrot.slane %v10610, 4
      %v10921 = vsel %vm1523, %v10918, %v10920
      %v10922 = vrot.slane %v10612, 4
      %v10923 = vsel %vm1523, %v10920, %v10922
      %v10924 = vrot.slane %v10614, 4
      %v10925 = vsel %vm1523, %v10922, %v10924
      %v10926 = vrot.slane %v10616, 4
      %v10927 = vsel %vm1523, %v10924, %v10926
      %v10928 = vrot.slane %v10618, 4
      %v10929 = vsel %vm1523, %v10926, %v10928
      %v10930 = vrot.slane %v10620, 4
      %v10931 = vsel %vm1523, %v10928, %v10930
      %v10932 = vrot.slane %v10622, 4
      %v10933 = vsel %vm1523, %v10930, %v10932
      %v10934 = vrot.slane %v10624, 4
      %v10935 = vsel %vm1523, %v10932, %v10934
      %v10936 = vrot.slane %v10626, 4
      %v10937 = vsel %vm1523, %v10934, %v10936
      %v10938 = vrot.slane %v10628, 4
      %v10939 = vsel %vm1523, %v10936, %v10938
      %v10940 = vrot.slane %v10630, 4
      %v10941 = vsel %vm1523, %v10938, %v10940
      %10942 = vrot.lane.b32.xlu0 %v1730, 64
      %v10943 = vpop.permute.xlu0 %10942
      %10944 = vrot.lane.b32.xlu0 %v10869, 64
      %v10945 = vpop.permute.xlu0 %10944
      %10946 = vrot.lane.b32.xlu0 %v10871, 64
      %v10947 = vpop.permute.xlu0 %10946
      %10948 = vrot.lane.b32.xlu0 %v10873, 64
      %v10949 = vpop.permute.xlu0 %10948
      %10950 = vrot.lane.b32.xlu0 %v10875, 64
      %v10951 = vpop.permute.xlu0 %10950
      %10952 = vrot.lane.b32.xlu0 %v10877, 64
      %v10953 = vpop.permute.xlu0 %10952
      %10954 = vrot.lane.b32.xlu0 %v10879, 64
      %v10955 = vpop.permute.xlu0 %10954
      %10956 = vrot.lane.b32.xlu0 %v10881, 64
      %v10957 = vpop.permute.xlu0 %10956
      %10958 = vrot.lane.b32.xlu0 %v10883, 64
      %v10959 = vpop.permute.xlu0 %10958
      %10960 = vrot.lane.b32.xlu0 %v10885, 64
      %v10961 = vpop.permute.xlu0 %10960
      %10962 = vrot.lane.b32.xlu0 %v10887, 64
      %v10963 = vpop.permute.xlu0 %10962
      %10964 = vrot.lane.b32.xlu0 %v10889, 64
      %v10965 = vpop.permute.xlu0 %10964
      %10966 = vrot.lane.b32.xlu0 %v10891, 64
      %v10967 = vpop.permute.xlu0 %10966
      %10968 = vrot.lane.b32.xlu0 %v10893, 64
      %v10969 = vpop.permute.xlu0 %10968
      %10970 = vrot.lane.b32.xlu0 %v10895, 64
      %v10971 = vpop.permute.xlu0 %10970
      %10972 = vrot.lane.b32.xlu0 %v10897, 64
      %v10973 = vpop.permute.xlu0 %10972
      %10974 = vrot.lane.b32.xlu0 %v10899, 64
      %v10975 = vpop.permute.xlu0 %10974
      %10976 = vrot.lane.b32.xlu0 %v10901, 64
      %v10977 = vpop.permute.xlu0 %10976
      %10978 = vrot.lane.b32.xlu0 %v10903, 64
      %v10979 = vpop.permute.xlu0 %10978
      %10980 = vrot.lane.b32.xlu0 %v10905, 64
      %v10981 = vpop.permute.xlu0 %10980
      %10982 = vrot.lane.b32.xlu0 %v10907, 64
      %v10983 = vpop.permute.xlu0 %10982
      %10984 = vrot.lane.b32.xlu0 %v10909, 64
      %v10985 = vpop.permute.xlu0 %10984
      %10986 = vrot.lane.b32.xlu0 %v10911, 64
      %v10987 = vpop.permute.xlu0 %10986
      %10988 = vrot.lane.b32.xlu0 %v10913, 64
      %v10989 = vpop.permute.xlu0 %10988
      %10990 = vrot.lane.b32.xlu0 %v10915, 64
      %v10991 = vpop.permute.xlu0 %10990
      %10992 = vrot.lane.b32.xlu0 %v10917, 64
      %v10993 = vpop.permute.xlu0 %10992
      %10994 = vrot.lane.b32.xlu0 %v10919, 64
      %v10995 = vpop.permute.xlu0 %10994
      %10996 = vrot.lane.b32.xlu0 %v10921, 64
      %v10997 = vpop.permute.xlu0 %10996
      %10998 = vrot.lane.b32.xlu0 %v10923, 64
      %v10999 = vpop.permute.xlu0 %10998
      %11000 = vrot.lane.b32.xlu0 %v10925, 64
      %v11001 = vpop.permute.xlu0 %11000
      %11002 = vrot.lane.b32.xlu0 %v10927, 64
      %v11003 = vpop.permute.xlu0 %11002
      %11004 = vrot.lane.b32.xlu0 %v10929, 64
      %v11005 = vpop.permute.xlu0 %11004
      %11006 = vrot.lane.b32.xlu0 %v10931, 64
      %v11007 = vpop.permute.xlu0 %11006
      %11008 = vrot.lane.b32.xlu0 %v10933, 64
      %v11009 = vpop.permute.xlu0 %11008
      %11010 = vrot.lane.b32.xlu0 %v10935, 64
      %v11011 = vpop.permute.xlu0 %11010
      %11012 = vrot.lane.b32.xlu0 %v10937, 64
      %v11013 = vpop.permute.xlu0 %11012
      %11014 = vrot.lane.b32.xlu0 %v10939, 64
      %v11015 = vpop.permute.xlu0 %11014
      %11016 = vrot.lane.b32.xlu0 %v10941, 64
      %v11017 = vpop.permute.xlu0 %11016
      %11018 = vrot.lane.b32.xlu0 %v10940, 64
      %v11019 = vpop.permute.xlu0 %11018
      %v11059 = vrot.slane %v10632, 4
      %v11060 = vsel %vm1523, %v10940, %v11059
      %v11061 = vrot.slane %v10634, 4
      %v11062 = vsel %vm1523, %v11059, %v11061
      %v11063 = vrot.slane %v10636, 4
      %v11064 = vsel %vm1523, %v11061, %v11063
      %v11065 = vrot.slane %v10638, 4
      %v11066 = vsel %vm1523, %v11063, %v11065
      %11067 = vrot.lane.b32.xlu0 %v10871, 96
      %v11068 = vpop.permute.xlu0 %11067
      %11069 = vrot.lane.b32.xlu0 %v10873, 96
      %v11070 = vpop.permute.xlu0 %11069
      %11071 = vrot.lane.b32.xlu0 %v10875, 96
      %v11072 = vpop.permute.xlu0 %11071
      %11073 = vrot.lane.b32.xlu0 %v10877, 96
      %v11074 = vpop.permute.xlu0 %11073
      %11075 = vrot.lane.b32.xlu0 %v10879, 96
      %v11076 = vpop.permute.xlu0 %11075
      %11077 = vrot.lane.b32.xlu0 %v10881, 96
      %v11078 = vpop.permute.xlu0 %11077
      %11079 = vrot.lane.b32.xlu0 %v10883, 96
      %v11080 = vpop.permute.xlu0 %11079
      %11081 = vrot.lane.b32.xlu0 %v10885, 96
      %v11082 = vpop.permute.xlu0 %11081
      %11083 = vrot.lane.b32.xlu0 %v10887, 96
      %v11084 = vpop.permute.xlu0 %11083
      %11085 = vrot.lane.b32.xlu0 %v10889, 96
      %v11086 = vpop.permute.xlu0 %11085
      %11087 = vrot.lane.b32.xlu0 %v10891, 96
      %v11088 = vpop.permute.xlu0 %11087
      %11089 = vrot.lane.b32.xlu0 %v10893, 96
      %v11090 = vpop.permute.xlu0 %11089
      %11091 = vrot.lane.b32.xlu0 %v10895, 96
      %v11092 = vpop.permute.xlu0 %11091
      %11093 = vrot.lane.b32.xlu0 %v10897, 96
      %v11094 = vpop.permute.xlu0 %11093
      %11095 = vrot.lane.b32.xlu0 %v10899, 96
      %v11096 = vpop.permute.xlu0 %11095
      %11097 = vrot.lane.b32.xlu0 %v10901, 96
      %v11098 = vpop.permute.xlu0 %11097
      %11099 = vrot.lane.b32.xlu0 %v10903, 96
      %v11100 = vpop.permute.xlu0 %11099
      %11101 = vrot.lane.b32.xlu0 %v10905, 96
      %v11102 = vpop.permute.xlu0 %11101
      %11103 = vrot.lane.b32.xlu0 %v10907, 96
      %v11104 = vpop.permute.xlu0 %11103
      %11105 = vrot.lane.b32.xlu0 %v10909, 96
      %v11106 = vpop.permute.xlu0 %11105
      %11107 = vrot.lane.b32.xlu0 %v10911, 96
      %v11108 = vpop.permute.xlu0 %11107
      %11109 = vrot.lane.b32.xlu0 %v10913, 96
      %v11110 = vpop.permute.xlu0 %11109
      %11111 = vrot.lane.b32.xlu0 %v10915, 96
      %v11112 = vpop.permute.xlu0 %11111
      %11113 = vrot.lane.b32.xlu0 %v10917, 96
      %v11114 = vpop.permute.xlu0 %11113
      %11115 = vrot.lane.b32.xlu0 %v10919, 96
      %v11116 = vpop.permute.xlu0 %11115
      %11117 = vrot.lane.b32.xlu0 %v10921, 96
      %v11118 = vpop.permute.xlu0 %11117
      %11119 = vrot.lane.b32.xlu0 %v10923, 96
      %v11120 = vpop.permute.xlu0 %11119
      %11121 = vrot.lane.b32.xlu0 %v10925, 96
      %v11122 = vpop.permute.xlu0 %11121
      %11123 = vrot.lane.b32.xlu0 %v10927, 96
      %v11124 = vpop.permute.xlu0 %11123
      %11125 = vrot.lane.b32.xlu0 %v10929, 96
      %v11126 = vpop.permute.xlu0 %11125
      %11127 = vrot.lane.b32.xlu0 %v10931, 96
      %v11128 = vpop.permute.xlu0 %11127
      %11129 = vrot.lane.b32.xlu0 %v10933, 96
      %v11130 = vpop.permute.xlu0 %11129
      %11131 = vrot.lane.b32.xlu0 %v10935, 96
      %v11132 = vpop.permute.xlu0 %11131
      %11133 = vrot.lane.b32.xlu0 %v10937, 96
      %v11134 = vpop.permute.xlu0 %11133
      %11135 = vrot.lane.b32.xlu0 %v10939, 96
      %v11136 = vpop.permute.xlu0 %11135
      %11137 = vrot.lane.b32.xlu0 %v10941, 96
      %v11138 = vpop.permute.xlu0 %11137
      %11139 = vrot.lane.b32.xlu0 %v11060, 96
      %v11140 = vpop.permute.xlu0 %11139
      %11141 = vrot.lane.b32.xlu0 %v11062, 96
      %v11142 = vpop.permute.xlu0 %11141
      %11143 = vrot.lane.b32.xlu0 %v11064, 96
      %v11144 = vpop.permute.xlu0 %11143
      %11145 = vrot.lane.b32.xlu0 %v11066, 96
      %v11146 = vpop.permute.xlu0 %11145
      %11147 = vrot.lane.b32.xlu0 %v11065, 96
      %v11148 = vpop.permute.xlu0 %11147
      %v11191 = vrot.slane %v10677, 6
      %v11192 = vrot.slane %v10560, 6
      %v11193 = vsel %vm2054, %v11191, %v11192
      %v11194 = vrot.slane %v10562, 6
      %v11195 = vsel %vm2054, %v11192, %v11194
      %v11196 = vrot.slane %v10564, 6
      %v11197 = vsel %vm2054, %v11194, %v11196
      %v11198 = vrot.slane %v10566, 6
      %v11199 = vsel %vm2054, %v11196, %v11198
      %v11200 = vrot.slane %v10568, 6
      %v11201 = vsel %vm2054, %v11198, %v11200
      %v11202 = vrot.slane %v10570, 6
      %v11203 = vsel %vm2054, %v11200, %v11202
      %v11204 = vrot.slane %v10572, 6
      %v11205 = vsel %vm2054, %v11202, %v11204
      %v11206 = vrot.slane %v10574, 6
      %v11207 = vsel %vm2054, %v11204, %v11206
      %v11208 = vrot.slane %v10576, 6
      %v11209 = vsel %vm2054, %v11206, %v11208
      %v11210 = vrot.slane %v10578, 6
      %v11211 = vsel %vm2054, %v11208, %v11210
      %v11212 = vrot.slane %v10580, 6
      %v11213 = vsel %vm2054, %v11210, %v11212
      %v11214 = vrot.slane %v10582, 6
      %v11215 = vsel %vm2054, %v11212, %v11214
      %v11216 = vrot.slane %v10584, 6
      %v11217 = vsel %vm2054, %v11214, %v11216
      %v11218 = vrot.slane %v10586, 6
      %v11219 = vsel %vm2054, %v11216, %v11218
      %v11220 = vrot.slane %v10588, 6
      %v11221 = vsel %vm2054, %v11218, %v11220
      %v11222 = vrot.slane %v10590, 6
      %v11223 = vsel %vm2054, %v11220, %v11222
      %v11224 = vrot.slane %v10592, 6
      %v11225 = vsel %vm2054, %v11222, %v11224
      %v11226 = vrot.slane %v10594, 6
      %v11227 = vsel %vm2054, %v11224, %v11226
      %v11228 = vrot.slane %v10596, 6
      %v11229 = vsel %vm2054, %v11226, %v11228
      %v11230 = vrot.slane %v10598, 6
      %v11231 = vsel %vm2054, %v11228, %v11230
      %v11232 = vrot.slane %v10600, 6
      %v11233 = vsel %vm2054, %v11230, %v11232
      %v11234 = vrot.slane %v10602, 6
      %v11235 = vsel %vm2054, %v11232, %v11234
      %v11236 = vrot.slane %v10604, 6
      %v11237 = vsel %vm2054, %v11234, %v11236
      %v11238 = vrot.slane %v10606, 6
      %v11239 = vsel %vm2054, %v11236, %v11238
      %v11240 = vrot.slane %v10608, 6
      %v11241 = vsel %vm2054, %v11238, %v11240
      %v11242 = vrot.slane %v10610, 6
      %v11243 = vsel %vm2054, %v11240, %v11242
      %v11244 = vrot.slane %v10612, 6
      %v11245 = vsel %vm2054, %v11242, %v11244
      %v11246 = vrot.slane %v10614, 6
      %v11247 = vsel %vm2054, %v11244, %v11246
      %v11248 = vrot.slane %v10616, 6
      %v11249 = vsel %vm2054, %v11246, %v11248
      %v11250 = vrot.slane %v10618, 6
      %v11251 = vsel %vm2054, %v11248, %v11250
      %v11252 = vrot.slane %v10620, 6
      %v11253 = vsel %vm2054, %v11250, %v11252
      %v11254 = vrot.slane %v10622, 6
      %v11255 = vsel %vm2054, %v11252, %v11254
      %v11256 = vrot.slane %v10624, 6
      %v11257 = vsel %vm2054, %v11254, %v11256
      %v11258 = vrot.slane %v10626, 6
      %v11259 = vsel %vm2054, %v11256, %v11258
      %v11260 = vrot.slane %v10628, 6
      %v11261 = vsel %vm2054, %v11258, %v11260
      %v11262 = vrot.slane %v10630, 6
      %v11263 = vsel %vm2054, %v11260, %v11262
      %v11264 = vrot.slane %v10632, 6
      %v11265 = vsel %vm2054, %v11262, %v11264
      %v11266 = vrot.slane %v10634, 6
      %v11267 = vsel %vm2054, %v11264, %v11266
      %v11268 = vrot.slane %v10636, 6
      %v11269 = vsel %vm2054, %v11266, %v11268
      %v11270 = vrot.slane %v10638, 6
      %v11271 = vsel %vm2054, %v11268, %v11270
      %v11272 = vrot.slane %v10678, 6
      %v11273 = vsel %vm2054, %v11270, %v11272
      %11315 = vrot.lane.b32.xlu0 %v10560, 32
      %v11316 = vpop.permute.xlu0 %11315
      %11317 = vrot.lane.b32.xlu0 %v10562, 32
      %v11318 = vpop.permute.xlu0 %11317
      %11319 = vrot.lane.b32.xlu0 %v10564, 32
      %v11320 = vpop.permute.xlu0 %11319
      %11321 = vrot.lane.b32.xlu0 %v10566, 32
      %v11322 = vpop.permute.xlu0 %11321
      %11323 = vrot.lane.b32.xlu0 %v10568, 32
      %v11324 = vpop.permute.xlu0 %11323
      %11325 = vrot.lane.b32.xlu0 %v10570, 32
      %v11326 = vpop.permute.xlu0 %11325
      %11327 = vrot.lane.b32.xlu0 %v10572, 32
      %v11328 = vpop.permute.xlu0 %11327
      %11329 = vrot.lane.b32.xlu0 %v10574, 32
      %v11330 = vpop.permute.xlu0 %11329
      %11331 = vrot.lane.b32.xlu0 %v10576, 32
      %v11332 = vpop.permute.xlu0 %11331
      %11333 = vrot.lane.b32.xlu0 %v10578, 32
      %v11334 = vpop.permute.xlu0 %11333
      %11335 = vrot.lane.b32.xlu0 %v10580, 32
      %v11336 = vpop.permute.xlu0 %11335
      %11337 = vrot.lane.b32.xlu0 %v10582, 32
      %v11338 = vpop.permute.xlu0 %11337
      %11339 = vrot.lane.b32.xlu0 %v10584, 32
      %v11340 = vpop.permute.xlu0 %11339
      %11341 = vrot.lane.b32.xlu0 %v10586, 32
      %v11342 = vpop.permute.xlu0 %11341
      %11343 = vrot.lane.b32.xlu0 %v10588, 32
      %v11344 = vpop.permute.xlu0 %11343
      %11345 = vrot.lane.b32.xlu0 %v10590, 32
      %v11346 = vpop.permute.xlu0 %11345
      %11347 = vrot.lane.b32.xlu0 %v10592, 32
      %v11348 = vpop.permute.xlu0 %11347
      %11349 = vrot.lane.b32.xlu0 %v10594, 32
      %v11350 = vpop.permute.xlu0 %11349
      %11351 = vrot.lane.b32.xlu0 %v10596, 32
      %v11352 = vpop.permute.xlu0 %11351
      %11353 = vrot.lane.b32.xlu0 %v10598, 32
      %v11354 = vpop.permute.xlu0 %11353
      %11355 = vrot.lane.b32.xlu0 %v10600, 32
      %v11356 = vpop.permute.xlu0 %11355
      %11357 = vrot.lane.b32.xlu0 %v10602, 32
      %v11358 = vpop.permute.xlu0 %11357
      %11359 = vrot.lane.b32.xlu0 %v10604, 32
      %v11360 = vpop.permute.xlu0 %11359
      %11361 = vrot.lane.b32.xlu0 %v10606, 32
      %v11362 = vpop.permute.xlu0 %11361
      %11363 = vrot.lane.b32.xlu0 %v10608, 32
      %v11364 = vpop.permute.xlu0 %11363
      %11365 = vrot.lane.b32.xlu0 %v10610, 32
      %v11366 = vpop.permute.xlu0 %11365
      %11367 = vrot.lane.b32.xlu0 %v10612, 32
      %v11368 = vpop.permute.xlu0 %11367
      %11369 = vrot.lane.b32.xlu0 %v10614, 32
      %v11370 = vpop.permute.xlu0 %11369
      %11371 = vrot.lane.b32.xlu0 %v10616, 32
      %v11372 = vpop.permute.xlu0 %11371
      %11373 = vrot.lane.b32.xlu0 %v10618, 32
      %v11374 = vpop.permute.xlu0 %11373
      %11375 = vrot.lane.b32.xlu0 %v10620, 32
      %v11376 = vpop.permute.xlu0 %11375
      %11377 = vrot.lane.b32.xlu0 %v10622, 32
      %v11378 = vpop.permute.xlu0 %11377
      %11379 = vrot.lane.b32.xlu0 %v10624, 32
      %v11380 = vpop.permute.xlu0 %11379
      %11381 = vrot.lane.b32.xlu0 %v10626, 32
      %v11382 = vpop.permute.xlu0 %11381
      %11383 = vrot.lane.b32.xlu0 %v10628, 32
      %v11384 = vpop.permute.xlu0 %11383
      %11385 = vrot.lane.b32.xlu0 %v10630, 32
      %v11386 = vpop.permute.xlu0 %11385
      %11387 = vrot.lane.b32.xlu0 %v10632, 32
      %v11388 = vpop.permute.xlu0 %11387
      %11389 = vrot.lane.b32.xlu0 %v10634, 32
      %v11390 = vpop.permute.xlu0 %11389
      %11391 = vrot.lane.b32.xlu0 %v10636, 32
      %v11392 = vpop.permute.xlu0 %11391
      %11393 = vrot.lane.b32.xlu0 %v10638, 32
      %v11394 = vpop.permute.xlu0 %11393
      %11395 = vrot.lane.b32.xlu0 %v10678, 32
      %v11396 = vpop.permute.xlu0 %11395
      %11438 = vrot.lane.b32.xlu0 %v10568, 64
      %v11439 = vpop.permute.xlu0 %11438
      %11440 = vrot.lane.b32.xlu0 %v10570, 64
      %v11441 = vpop.permute.xlu0 %11440
      %11442 = vrot.lane.b32.xlu0 %v10572, 64
      %v11443 = vpop.permute.xlu0 %11442
      %11444 = vrot.lane.b32.xlu0 %v10574, 64
      %v11445 = vpop.permute.xlu0 %11444
      %11446 = vrot.lane.b32.xlu0 %v10576, 64
      %v11447 = vpop.permute.xlu0 %11446
      %11448 = vrot.lane.b32.xlu0 %v10578, 64
      %v11449 = vpop.permute.xlu0 %11448
      %11450 = vrot.lane.b32.xlu0 %v10580, 64
      %v11451 = vpop.permute.xlu0 %11450
      %11452 = vrot.lane.b32.xlu0 %v10582, 64
      %v11453 = vpop.permute.xlu0 %11452
      %11454 = vrot.lane.b32.xlu0 %v10584, 64
      %v11455 = vpop.permute.xlu0 %11454
      %11456 = vrot.lane.b32.xlu0 %v10586, 64
      %v11457 = vpop.permute.xlu0 %11456
      %11458 = vrot.lane.b32.xlu0 %v10588, 64
      %v11459 = vpop.permute.xlu0 %11458
      %11460 = vrot.lane.b32.xlu0 %v10590, 64
      %v11461 = vpop.permute.xlu0 %11460
      %11462 = vrot.lane.b32.xlu0 %v10592, 64
      %v11463 = vpop.permute.xlu0 %11462
      %11464 = vrot.lane.b32.xlu0 %v10594, 64
      %v11465 = vpop.permute.xlu0 %11464
      %11466 = vrot.lane.b32.xlu0 %v10596, 64
      %v11467 = vpop.permute.xlu0 %11466
      %11468 = vrot.lane.b32.xlu0 %v10598, 64
      %v11469 = vpop.permute.xlu0 %11468
      %11470 = vrot.lane.b32.xlu0 %v10600, 64
      %v11471 = vpop.permute.xlu0 %11470
      %11472 = vrot.lane.b32.xlu0 %v10602, 64
      %v11473 = vpop.permute.xlu0 %11472
      %11474 = vrot.lane.b32.xlu0 %v10604, 64
      %v11475 = vpop.permute.xlu0 %11474
      %11476 = vrot.lane.b32.xlu0 %v10606, 64
      %v11477 = vpop.permute.xlu0 %11476
      %11478 = vrot.lane.b32.xlu0 %v10608, 64
      %v11479 = vpop.permute.xlu0 %11478
      %11480 = vrot.lane.b32.xlu0 %v10610, 64
      %v11481 = vpop.permute.xlu0 %11480
      %11482 = vrot.lane.b32.xlu0 %v10612, 64
      %v11483 = vpop.permute.xlu0 %11482
      %11484 = vrot.lane.b32.xlu0 %v10614, 64
      %v11485 = vpop.permute.xlu0 %11484
      %11486 = vrot.lane.b32.xlu0 %v10616, 64
      %v11487 = vpop.permute.xlu0 %11486
      %11488 = vrot.lane.b32.xlu0 %v10618, 64
      %v11489 = vpop.permute.xlu0 %11488
      %11490 = vrot.lane.b32.xlu0 %v10620, 64
      %v11491 = vpop.permute.xlu0 %11490
      %11492 = vrot.lane.b32.xlu0 %v10622, 64
      %v11493 = vpop.permute.xlu0 %11492
      %11494 = vrot.lane.b32.xlu0 %v10624, 64
      %v11495 = vpop.permute.xlu0 %11494
      %11496 = vrot.lane.b32.xlu0 %v10626, 64
      %v11497 = vpop.permute.xlu0 %11496
      %11498 = vrot.lane.b32.xlu0 %v10628, 64
      %v11499 = vpop.permute.xlu0 %11498
      %11500 = vrot.lane.b32.xlu0 %v10630, 64
      %v11501 = vpop.permute.xlu0 %11500
      %11502 = vrot.lane.b32.xlu0 %v10632, 64
      %v11503 = vpop.permute.xlu0 %11502
      %11504 = vrot.lane.b32.xlu0 %v10634, 64
      %v11505 = vpop.permute.xlu0 %11504
      %11506 = vrot.lane.b32.xlu0 %v10636, 64
      %v11507 = vpop.permute.xlu0 %11506
      %11508 = vrot.lane.b32.xlu0 %v10638, 64
      %v11509 = vpop.permute.xlu0 %11508
      %11510 = vrot.lane.b32.xlu0 %v10678, 64
      %v11511 = vpop.permute.xlu0 %11510
      %11512 = vrot.lane.b32.xlu0 0.0, 64
      %v11513 = vpop.permute.xlu0 %11512
      %v11552 = vrot.slane %v10632, 2
      %v11553 = vsel %vm986, %v10752, %v11552
      %v11554 = vrot.slane %v10634, 2
      %v11555 = vsel %vm986, %v11552, %v11554
      %v11556 = vrot.slane %v10636, 2
      %v11557 = vsel %vm986, %v11554, %v11556
      %v11558 = vrot.slane %v10638, 2
      %v11559 = vsel %vm986, %v11556, %v11558
      %v11560 = vrot.slane %v10678, 2
      %v11561 = vsel %vm986, %v11558, %v11560
      %v11562 = vsel %vm986, %v11560, %v987
      %11563 = vrot.lane.b32.xlu0 %v10693, 96
      %v11564 = vpop.permute.xlu0 %11563
      %11565 = vrot.lane.b32.xlu0 %v10695, 96
      %v11566 = vpop.permute.xlu0 %11565
      %11567 = vrot.lane.b32.xlu0 %v10697, 96
      %v11568 = vpop.permute.xlu0 %11567
      %11569 = vrot.lane.b32.xlu0 %v10699, 96
      %v11570 = vpop.permute.xlu0 %11569
      %11571 = vrot.lane.b32.xlu0 %v10701, 96
      %v11572 = vpop.permute.xlu0 %11571
      %11573 = vrot.lane.b32.xlu0 %v10703, 96
      %v11574 = vpop.permute.xlu0 %11573
      %11575 = vrot.lane.b32.xlu0 %v10705, 96
      %v11576 = vpop.permute.xlu0 %11575
      %11577 = vrot.lane.b32.xlu0 %v10707, 96
      %v11578 = vpop.permute.xlu0 %11577
      %11579 = vrot.lane.b32.xlu0 %v10709, 96
      %v11580 = vpop.permute.xlu0 %11579
      %11581 = vrot.lane.b32.xlu0 %v10711, 96
      %v11582 = vpop.permute.xlu0 %11581
      %11583 = vrot.lane.b32.xlu0 %v10713, 96
      %v11584 = vpop.permute.xlu0 %11583
      %11585 = vrot.lane.b32.xlu0 %v10715, 96
      %v11586 = vpop.permute.xlu0 %11585
      %11587 = vrot.lane.b32.xlu0 %v10717, 96
      %v11588 = vpop.permute.xlu0 %11587
      %11589 = vrot.lane.b32.xlu0 %v10719, 96
      %v11590 = vpop.permute.xlu0 %11589
      %11591 = vrot.lane.b32.xlu0 %v10721, 96
      %v11592 = vpop.permute.xlu0 %11591
      %11593 = vrot.lane.b32.xlu0 %v10723, 96
      %v11594 = vpop.permute.xlu0 %11593
      %11595 = vrot.lane.b32.xlu0 %v10725, 96
      %v11596 = vpop.permute.xlu0 %11595
      %11597 = vrot.lane.b32.xlu0 %v10727, 96
      %v11598 = vpop.permute.xlu0 %11597
      %11599 = vrot.lane.b32.xlu0 %v10729, 96
      %v11600 = vpop.permute.xlu0 %11599
      %11601 = vrot.lane.b32.xlu0 %v10731, 96
      %v11602 = vpop.permute.xlu0 %11601
      %11603 = vrot.lane.b32.xlu0 %v10733, 96
      %v11604 = vpop.permute.xlu0 %11603
      %11605 = vrot.lane.b32.xlu0 %v10735, 96
      %v11606 = vpop.permute.xlu0 %11605
      %11607 = vrot.lane.b32.xlu0 %v10737, 96
      %v11608 = vpop.permute.xlu0 %11607
      %11609 = vrot.lane.b32.xlu0 %v10739, 96
      %v11610 = vpop.permute.xlu0 %11609
      %11611 = vrot.lane.b32.xlu0 %v10741, 96
      %v11612 = vpop.permute.xlu0 %11611
      %11613 = vrot.lane.b32.xlu0 %v10743, 96
      %v11614 = vpop.permute.xlu0 %11613
      %11615 = vrot.lane.b32.xlu0 %v10745, 96
      %v11616 = vpop.permute.xlu0 %11615
      %11617 = vrot.lane.b32.xlu0 %v10747, 96
      %v11618 = vpop.permute.xlu0 %11617
      %11619 = vrot.lane.b32.xlu0 %v10749, 96
      %v11620 = vpop.permute.xlu0 %11619
      %11621 = vrot.lane.b32.xlu0 %v10751, 96
      %v11622 = vpop.permute.xlu0 %11621
      %11623 = vrot.lane.b32.xlu0 %v10753, 96
      %v11624 = vpop.permute.xlu0 %11623
      %11625 = vrot.lane.b32.xlu0 %v11553, 96
      %v11626 = vpop.permute.xlu0 %11625
      %11627 = vrot.lane.b32.xlu0 %v11555, 96
      %v11628 = vpop.permute.xlu0 %11627
      %11629 = vrot.lane.b32.xlu0 %v11557, 96
      %v11630 = vpop.permute.xlu0 %11629
      %11631 = vrot.lane.b32.xlu0 %v11559, 96
      %v11632 = vpop.permute.xlu0 %11631
      %11633 = vrot.lane.b32.xlu0 %v11561, 96
      %v11634 = vpop.permute.xlu0 %11633
      %11635 = vrot.lane.b32.xlu0 %v11562, 96
      %v11636 = vpop.permute.xlu0 %11635
      %11637 = vrot.lane.b32.xlu0 %v988, 96
      %v11638 = vpop.permute.xlu0 %11637
      %11639 = vrot.lane.b32.xlu0 %v987, 96
      %v11640 = vpop.permute.xlu0 %11639
      %v11680 = vrot.slane %v10678, 4
      %v11681 = vsel %vm1523, %v11065, %v11680
      %v11682 = vsel %vm1523, %v11680, %v1728
      %v11722 = vsel %vm2549, 0.0, %v3548
      %v11723 = vsel %vm2549, 0.0, %v10755
      %v11724 = vsel %vm2549, %v10677, %v10757
      %v11725 = vsel %vm2549, %v10560, %v10759
      %v11726 = vsel %vm2549, %v10562, %v10761
      %v11727 = vsel %vm2549, %v10564, %v10763
      %v11728 = vsel %vm2549, %v10566, %v10765
      %v11729 = vsel %vm2549, %v10568, %v10767
      %v11730 = vsel %vm2549, %v10570, %v10769
      %v11731 = vsel %vm2549, %v10572, %v10771
      %v11732 = vsel %vm2549, %v10574, %v10773
      %v11733 = vsel %vm2549, %v10576, %v10775
      %v11734 = vsel %vm2549, %v10578, %v10777
      %v11735 = vsel %vm2549, %v10580, %v10779
      %v11736 = vsel %vm2549, %v10582, %v10781
      %v11737 = vsel %vm2549, %v10584, %v10783
      %v11738 = vsel %vm2549, %v10586, %v10785
      %v11739 = vsel %vm2549, %v10588, %v10787
      %v11740 = vsel %vm2549, %v10590, %v10789
      %v11741 = vsel %vm2549, %v10592, %v10791
      %v11742 = vsel %vm2549, %v10594, %v10793
      %v11743 = vsel %vm2549, %v10596, %v10795
      %v11744 = vsel %vm2549, %v10598, %v10797
      %v11745 = vsel %vm2549, %v10600, %v10799
      %v11746 = vsel %vm2549, %v10602, %v10801
      %v11747 = vsel %vm2549, %v10604, %v10803
      %v11748 = vsel %vm2549, %v10606, %v10805
      %v11749 = vsel %vm2549, %v10608, %v10807
      %v11750 = vsel %vm2549, %v10610, %v10809
      %v11751 = vsel %vm2549, %v10612, %v10811
      %v11752 = vsel %vm2549, %v10614, %v10813
      %v11753 = vsel %vm2549, %v10616, %v10815
      %v11754 = vsel %vm2549, %v10618, %v10817
      %v11755 = vsel %vm2549, %v10620, %v10819
      %v11756 = vsel %vm2549, %v10622, %v10821
      %v11757 = vsel %vm2549, %v10624, %v10823
      %v11758 = vsel %vm2549, %v10626, %v10825
      %v11759 = vsel %vm2549, %v10628, %v10827
      %v11760 = vsel %vm2549, %v10630, %v10829
      %v11761 = vsel %vm4770, %v11722, %v10943
      %v11762 = vsel %vm4770, %v11723, %v10945
      %v11763 = vsel %vm4770, %v11724, %v10947
      %v11764 = vsel %vm4770, %v11725, %v10949
      %v11765 = vsel %vm4770, %v11726, %v10951
      %v11766 = vsel %vm4770, %v11727, %v10953
      %v11767 = vsel %vm4770, %v11728, %v10955
      %v11768 = vsel %vm4770, %v11729, %v10957
      %v11769 = vsel %vm4770, %v11730, %v10959
      %v11770 = vsel %vm4770, %v11731, %v10961
      %v11771 = vsel %vm4770, %v11732, %v10963
      %v11772 = vsel %vm4770, %v11733, %v10965
      %v11773 = vsel %vm4770, %v11734, %v10967
      %v11774 = vsel %vm4770, %v11735, %v10969
      %v11775 = vsel %vm4770, %v11736, %v10971
      %v11776 = vsel %vm4770, %v11737, %v10973
      %v11777 = vsel %vm4770, %v11738, %v10975
      %v11778 = vsel %vm4770, %v11739, %v10977
      %v11779 = vsel %vm4770, %v11740, %v10979
      %v11780 = vsel %vm4770, %v11741, %v10981
      %v11781 = vsel %vm4770, %v11742, %v10983
      %v11782 = vsel %vm4770, %v11743, %v10985
      %v11783 = vsel %vm4770, %v11744, %v10987
      %v11784 = vsel %vm4770, %v11745, %v10989
      %v11785 = vsel %vm4770, %v11746, %v10991
      %v11786 = vsel %vm4770, %v11747, %v10993
      %v11787 = vsel %vm4770, %v11748, %v10995
      %v11788 = vsel %vm4770, %v11749, %v10997
      %v11789 = vsel %vm4770, %v11750, %v10999
      %v11790 = vsel %vm4770, %v11751, %v11001
      %v11791 = vsel %vm4770, %v11752, %v11003
      %v11792 = vsel %vm4770, %v11753, %v11005
      %v11793 = vsel %vm4770, %v11754, %v11007
      %v11794 = vsel %vm4770, %v11755, %v11009
      %v11795 = vsel %vm4770, %v11756, %v11011
      %v11796 = vsel %vm4770, %v11757, %v11013
      %v11797 = vsel %vm4770, %v11758, %v11015
      %v11798 = vsel %vm4770, %v11759, %v11017
      %v11799 = vsel %vm4770, %v11760, %v11019
      %v11800 = vsel %vm4854, %v11761, %v11068
      %v11801 = vsel %vm4854, %v11761, %v11070
      %v11802 = vsel %vm4854, %v11761, %v11072
      %v11803 = vsel %vm4854, %v11762, %v11074
      %v11804 = vsel %vm4854, %v11763, %v11076
      %v11805 = vsel %vm4854, %v11764, %v11078
      %v11806 = vsel %vm4854, %v11765, %v11080
      %v11807 = vsel %vm4854, %v11766, %v11082
      %v11808 = vsel %vm4854, %v11767, %v11084
      %v11809 = vsel %vm4854, %v11768, %v11086
      %v11810 = vsel %vm4854, %v11769, %v11088
      %v11811 = vsel %vm4854, %v11770, %v11090
      %v11812 = vsel %vm4854, %v11771, %v11092
      %v11813 = vsel %vm4854, %v11772, %v11094
      %v11814 = vsel %vm4854, %v11773, %v11096
      %v11815 = vsel %vm4854, %v11774, %v11098
      %v11816 = vsel %vm4854, %v11775, %v11100
      %v11817 = vsel %vm4854, %v11776, %v11102
      %v11818 = vsel %vm4854, %v11777, %v11104
      %v11819 = vsel %vm4854, %v11778, %v11106
      %v11820 = vsel %vm4854, %v11779, %v11108
      %v11821 = vsel %vm4854, %v11780, %v11110
      %v11822 = vsel %vm4854, %v11781, %v11112
      %v11823 = vsel %vm4854, %v11782, %v11114
      %v11824 = vsel %vm4854, %v11783, %v11116
      %v11825 = vsel %vm4854, %v11784, %v11118
      %v11826 = vsel %vm4854, %v11785, %v11120
      %v11827 = vsel %vm4854, %v11786, %v11122
      %v11828 = vsel %vm4854, %v11787, %v11124
      %v11829 = vsel %vm4854, %v11788, %v11126
      %v11830 = vsel %vm4854, %v11789, %v11128
      %v11831 = vsel %vm4854, %v11790, %v11130
      %v11832 = vsel %vm4854, %v11791, %v11132
      %v11833 = vsel %vm4854, %v11792, %v11134
      %v11834 = vsel %vm4854, %v11793, %v11136
      %v11835 = vsel %vm4854, %v11794, %v11138
      %v11836 = vsel %vm4854, %v11795, %v11140
      %v11837 = vsel %vm4854, %v11796, %v11142
      %v11838 = vsel %vm4854, %v11797, %v11144
      %v11839 = vsel %vm4854, %v11798, %v11146
      %v11840 = vsel %vm4854, %v11799, %v11148
      %v11841 = vsel %vm2549, %v11193, %v11316
      %v11842 = vsel %vm2549, %v11195, %v11318
      %v11843 = vsel %vm2549, %v11197, %v11320
      %v11844 = vsel %vm2549, %v11199, %v11322
      %v11845 = vsel %vm2549, %v11201, %v11324
      %v11846 = vsel %vm2549, %v11203, %v11326
      %v11847 = vsel %vm2549, %v11205, %v11328
      %v11848 = vsel %vm2549, %v11207, %v11330
      %v11849 = vsel %vm2549, %v11209, %v11332
      %v11850 = vsel %vm2549, %v11211, %v11334
      %v11851 = vsel %vm2549, %v11213, %v11336
      %v11852 = vsel %vm2549, %v11215, %v11338
      %v11853 = vsel %vm2549, %v11217, %v11340
      %v11854 = vsel %vm2549, %v11219, %v11342
      %v11855 = vsel %vm2549, %v11221, %v11344
      %v11856 = vsel %vm2549, %v11223, %v11346
      %v11857 = vsel %vm2549, %v11225, %v11348
      %v11858 = vsel %vm2549, %v11227, %v11350
      %v11859 = vsel %vm2549, %v11229, %v11352
      %v11860 = vsel %vm2549, %v11231, %v11354
      %v11861 = vsel %vm2549, %v11233, %v11356
      %v11862 = vsel %vm2549, %v11235, %v11358
      %v11863 = vsel %vm2549, %v11237, %v11360
      %v11864 = vsel %vm2549, %v11239, %v11362
      %v11865 = vsel %vm2549, %v11241, %v11364
      %v11866 = vsel %vm2549, %v11243, %v11366
      %v11867 = vsel %vm2549, %v11245, %v11368
      %v11868 = vsel %vm2549, %v11247, %v11370
      %v11869 = vsel %vm2549, %v11249, %v11372
      %v11870 = vsel %vm2549, %v11251, %v11374
      %v11871 = vsel %vm2549, %v11253, %v11376
      %v11872 = vsel %vm2549, %v11255, %v11378
      %v11873 = vsel %vm2549, %v11257, %v11380
      %v11874 = vsel %vm2549, %v11259, %v11382
      %v11875 = vsel %vm2549, %v11261, %v11384
      %v11876 = vsel %vm2549, %v11263, %v11386
      %v11877 = vsel %vm2549, %v11265, %v11388
      %v11878 = vsel %vm2549, %v11267, %v11390
      %v11879 = vsel %vm2549, %v11269, %v11392
      %v11880 = vsel %vm2549, %v11271, %v11394
      %v11881 = vsel %vm2549, %v11273, %v11396
      %v11882 = vsel %vm4770, %v11841, %v11439
      %v11883 = vsel %vm4770, %v11842, %v11441
      %v11884 = vsel %vm4770, %v11843, %v11443
      %v11885 = vsel %vm4770, %v11844, %v11445
      %v11886 = vsel %vm4770, %v11845, %v11447
      %v11887 = vsel %vm4770, %v11846, %v11449
      %v11888 = vsel %vm4770, %v11847, %v11451
      %v11889 = vsel %vm4770, %v11848, %v11453
      %v11890 = vsel %vm4770, %v11849, %v11455
      %v11891 = vsel %vm4770, %v11850, %v11457
      %v11892 = vsel %vm4770, %v11851, %v11459
      %v11893 = vsel %vm4770, %v11852, %v11461
      %v11894 = vsel %vm4770, %v11853, %v11463
      %v11895 = vsel %vm4770, %v11854, %v11465
      %v11896 = vsel %vm4770, %v11855, %v11467
      %v11897 = vsel %vm4770, %v11856, %v11469
      %v11898 = vsel %vm4770, %v11857, %v11471
      %v11899 = vsel %vm4770, %v11858, %v11473
      %v11900 = vsel %vm4770, %v11859, %v11475
      %v11901 = vsel %vm4770, %v11860, %v11477
      %v11902 = vsel %vm4770, %v11861, %v11479
      %v11903 = vsel %vm4770, %v11862, %v11481
      %v11904 = vsel %vm4770, %v11863, %v11483
      %v11905 = vsel %vm4770, %v11864, %v11485
      %v11906 = vsel %vm4770, %v11865, %v11487
      %v11907 = vsel %vm4770, %v11866, %v11489
      %v11908 = vsel %vm4770, %v11867, %v11491
      %v11909 = vsel %vm4770, %v11868, %v11493
      %v11910 = vsel %vm4770, %v11869, %v11495
      %v11911 = vsel %vm4770, %v11870, %v11497
      %v11912 = vsel %vm4770, %v11871, %v11499
      %v11913 = vsel %vm4770, %v11872, %v11501
      %v11914 = vsel %vm4770, %v11873, %v11503
      %v11915 = vsel %vm4770, %v11874, %v11505
      %v11916 = vsel %vm4770, %v11875, %v11507
      %v11917 = vsel %vm4770, %v11876, %v11509
      %v11918 = vsel %vm4770, %v11877, %v11511
      %v11919 = vsel %vm4770, %v11878, %v11513
      %v11920 = vsel %vm4770, %v11879, %v11513
      %v11921 = vsel %vm4770, %v11880, %v11513
      %v11922 = vsel %vm4770, %v11881, %v11513
      %v11923 = vsel %vm4854, %v11882, %v11564
      %v11924 = vsel %vm4854, %v11883, %v11566
      %v11925 = vsel %vm4854, %v11884, %v11568
      %v11926 = vsel %vm4854, %v11885, %v11570
      %v11927 = vsel %vm4854, %v11886, %v11572
      %v11928 = vsel %vm4854, %v11887, %v11574
      %v11929 = vsel %vm4854, %v11888, %v11576
      %v11930 = vsel %vm4854, %v11889, %v11578
      %v11931 = vsel %vm4854, %v11890, %v11580
      %v11932 = vsel %vm4854, %v11891, %v11582
      %v11933 = vsel %vm4854, %v11892, %v11584
      %v11934 = vsel %vm4854, %v11893, %v11586
      %v11935 = vsel %vm4854, %v11894, %v11588
      %v11936 = vsel %vm4854, %v11895, %v11590
      %v11937 = vsel %vm4854, %v11896, %v11592
      %v11938 = vsel %vm4854, %v11897, %v11594
      %v11939 = vsel %vm4854, %v11898, %v11596
      %v11940 = vsel %vm4854, %v11899, %v11598
      %v11941 = vsel %vm4854, %v11900, %v11600
      %v11942 = vsel %vm4854, %v11901, %v11602
      %v11943 = vsel %vm4854, %v11902, %v11604
      %v11944 = vsel %vm4854, %v11903, %v11606
      %v11945 = vsel %vm4854, %v11904, %v11608
      %v11946 = vsel %vm4854, %v11905, %v11610
      %v11947 = vsel %vm4854, %v11906, %v11612
      %v11948 = vsel %vm4854, %v11907, %v11614
      %v11949 = vsel %vm4854, %v11908, %v11616
      %v11950 = vsel %vm4854, %v11909, %v11618
      %v11951 = vsel %vm4854, %v11910, %v11620
      %v11952 = vsel %vm4854, %v11911, %v11622
      %v11953 = vsel %vm4854, %v11912, %v11624
      %v11954 = vsel %vm4854, %v11913, %v11626
      %v11955 = vsel %vm4854, %v11914, %v11628
      %v11956 = vsel %vm4854, %v11915, %v11630
      %v11957 = vsel %vm4854, %v11916, %v11632
      %v11958 = vsel %vm4854, %v11917, %v11634
      %v11959 = vsel %vm4854, %v11918, %v11636
      %v11960 = vsel %vm4854, %v11919, %v11638
      %v11961 = vsel %vm4854, %v11920, %v11638
      %v11962 = vsel %vm4854, %v11921, %v11638
      %v11963 = vsel %vm4854, %v11922, %v11640
      %v11964 = vpack.c.bf16 %v11801, %v11800
      %v11965 = vpack.c.bf16 %v11924, %v11923
      %v11966 = vpack.c.bf16 %v10883, %v10881
      %v11967 = vpack.c.bf16 %v11803, %v11802
      %v11968 = vpack.c.bf16 %v11926, %v11925
      %v11969 = vpack.c.bf16 %v10887, %v10885
      %v11970 = vpack.c.bf16 %v11805, %v11804
      %v11971 = vpack.c.bf16 %v11928, %v11927
      %v11972 = vpack.c.bf16 %v10891, %v10889
      %v11973 = vpack.c.bf16 %v11807, %v11806
      %v11974 = vpack.c.bf16 %v11930, %v11929
      %v11975 = vpack.c.bf16 %v10895, %v10893
      %v11976 = vpack.c.bf16 %v11809, %v11808
      %v11977 = vpack.c.bf16 %v11932, %v11931
      %v11978 = vpack.c.bf16 %v10899, %v10897
      %v11979 = vpack.c.bf16 %v11811, %v11810
      %v11980 = vpack.c.bf16 %v11934, %v11933
      %v11981 = vpack.c.bf16 %v10903, %v10901
      %v11982 = vpack.c.bf16 %v11813, %v11812
      %v11983 = vpack.c.bf16 %v11936, %v11935
      %v11984 = vpack.c.bf16 %v10907, %v10905
      %v11985 = vpack.c.bf16 %v11815, %v11814
      %v11986 = vpack.c.bf16 %v11938, %v11937
      %v11987 = vpack.c.bf16 %v10911, %v10909
      %v11988 = vpack.c.bf16 %v11817, %v11816
      %v11989 = vpack.c.bf16 %v11940, %v11939
      %v11990 = vpack.c.bf16 %v10915, %v10913
      %v11991 = vpack.c.bf16 %v11819, %v11818
      %v11992 = vpack.c.bf16 %v11942, %v11941
      %v11993 = vpack.c.bf16 %v10919, %v10917
      %v11994 = vpack.c.bf16 %v11821, %v11820
      %v11995 = vpack.c.bf16 %v11944, %v11943
      %v11996 = vpack.c.bf16 %v10923, %v10921
      %v11997 = vpack.c.bf16 %v11823, %v11822
      %v11998 = vpack.c.bf16 %v11946, %v11945
      %v11999 = vpack.c.bf16 %v10927, %v10925
      %v12000 = vpack.c.bf16 %v11825, %v11824
      %v12001 = vpack.c.bf16 %v11948, %v11947
      %v12002 = vpack.c.bf16 %v10931, %v10929
      %v12003 = vpack.c.bf16 %v11827, %v11826
      %v12004 = vpack.c.bf16 %v11950, %v11949
      %v12005 = vpack.c.bf16 %v10935, %v10933
      %v12006 = vpack.c.bf16 %v11829, %v11828
      %v12007 = vpack.c.bf16 %v11952, %v11951
      %v12008 = vpack.c.bf16 %v10939, %v10937
      %v12009 = vpack.c.bf16 %v11831, %v11830
      %v12010 = vpack.c.bf16 %v11954, %v11953
      %v12011 = vpack.c.bf16 %v11060, %v10941
      %v12012 = vpack.c.bf16 %v11833, %v11832
      %v12013 = vpack.c.bf16 %v11956, %v11955
      %v12014 = vpack.c.bf16 %v11064, %v11062
      %v12015 = vpack.c.bf16 %v11835, %v11834
      %v12016 = vpack.c.bf16 %v11958, %v11957
      %v12017 = vpack.c.bf16 %v11681, %v11066
      %v12018 = vpack.c.bf16 %v11837, %v11836
      %v12019 = vpack.c.bf16 %v11960, %v11959
      %v12020 = vpack.c.bf16 %v1730, %v11682
      %v12021 = vpack.c.bf16 %v11839, %v11838
      %v12022 = vpack.c.bf16 %v11962, %v11961
      %v12023 = vpack.c.bf16 %v1730, %v1730
      %v12024 = vpack.c.bf16 %v11840, %v11840
      %v12025 = vpack.c.bf16 %v11963, %v11963
      %v12026 = vpack.c.bf16 %v1728, %v1728
      %v12027 = vld [vmem:[%s11] sm:$0xf]
      %v12028 = vld [vmem:[%s11 + $0x4] sm:$0xf]
      %v12029 = vld [vmem:[%s11 + $0x8] sm:$0xf]
      %v12030 = vld [vmem:[%s11 + $0xc] sm:$0xf]
      %v12031 = vld [vmem:[%s11 + $0x10] sm:$0xf]
      %v12032 = vld [vmem:[%s11 + $0x14] sm:$0xf]
      %v12033 = vld [vmem:[%s11 + $0x18] sm:$0xf]
      %v12034 = vld [vmem:[%s11 + $0x1c] sm:$0xf]
      %v12035 = vld [vmem:[%s11 + $0x20] sm:$0xf]
      %v12036 = vld [vmem:[%s11 + $0x24] sm:$0xf]
      %v12037 = vld [vmem:[%s11 + $0x28] sm:$0xf]
      %v12038 = vld [vmem:[%s11 + $0x2c] sm:$0xf]
      %v12039 = vld [vmem:[%s11 + $0x30] sm:$0xf]
      %v12040 = vld [vmem:[%s11 + $0x34] sm:$0xf]
      %v12041 = vld [vmem:[%s11 + $0x38] sm:$0xf]
      %v12042 = vld [vmem:[%s11 + $0x3c] sm:$0xf]
      %v12043 = vld [vmem:[%s11 + $0x40] sm:$0xf]
      %v12044 = vld [vmem:[%s11 + $0x44] sm:$0xf]
      %v12045 = vld [vmem:[%s11 + $0x48] sm:$0xf]
      %v12046 = vld [vmem:[%s11 + $0x4c] sm:$0xf]
      %v12047 = vld [vmem:[%s11 + $0x50] sm:$0xf]
      %v12048 = vld [vmem:[%s11 + $0x54] sm:$0xf]
      %v12049 = vld [vmem:[%s11 + $0x58] sm:$0xf]
      %v12050 = vld [vmem:[%s11 + $0x5c] sm:$0xf]
      %v12051 = vld [vmem:[%s11 + $0x60] sm:$0xf]
      %v12052 = vld [vmem:[%s11 + $0x64] sm:$0xf]
      %v12053 = vld [vmem:[%s11 + $0x68] sm:$0xf]
      %v12054 = vld [vmem:[%s11 + $0x6c] sm:$0xf]
      %v12055 = vld [vmem:[%s11 + $0x70] sm:$0xf]
      %v12056 = vld [vmem:[%s11 + $0x74] sm:$0xf]
      %v12057 = vld [vmem:[%s11 + $0x78] sm:$0xf]
      %v12058 = vld [vmem:[%s11 + $0x7c] sm:$0xf]
      %v12059 = vld [vmem:[%s11 + $0x80] sm:$0xf]
      %v12060 = vld [vmem:[%s11 + $0x84] sm:$0xf]
      %v12061 = vld [vmem:[%s11 + $0x88] sm:$0xf]
      %v12062 = vld [vmem:[%s11 + $0x8c] sm:$0xf]
      %v12063 = vld [vmem:[%s12] sm:$0x1]
      %v12065 = vperm.slane %v12063, 0
      %v12103 = vunpack.c.l.b16 %v12027
      %v12104 = vunpack.c.l.b16 %v12028
      %v12105 = vunpack.c.l.b16 %v12029
      %v12106 = vunpack.c.l.b16 %v12030
      %v12107 = vunpack.c.l.b16 %v12031
      %v12108 = vunpack.c.l.b16 %v12032
      %v12109 = vunpack.c.l.b16 %v12033
      %v12110 = vunpack.c.l.b16 %v12034
      %v12111 = vunpack.c.l.b16 %v12035
      %v12112 = vunpack.c.l.b16 %v12036
      %v12113 = vunpack.c.l.b16 %v12037
      %v12114 = vunpack.c.l.b16 %v12038
      %v12115 = vunpack.c.l.b16 %v12039
      %v12116 = vunpack.c.l.b16 %v12040
      %v12117 = vunpack.c.l.b16 %v12041
      %v12118 = vunpack.c.l.b16 %v12042
      %v12119 = vunpack.c.l.b16 %v12043
      %v12120 = vunpack.c.l.b16 %v12044
      %v12121 = vunpack.c.l.b16 %v12045
      %v12122 = vunpack.c.l.b16 %v12046
      %v12123 = vunpack.c.l.b16 %v12047
      %v12124 = vunpack.c.l.b16 %v12048
      %v12125 = vunpack.c.l.b16 %v12049
      %v12126 = vunpack.c.l.b16 %v12050
      %v12127 = vunpack.c.l.b16 %v12051
      %v12128 = vunpack.c.l.b16 %v12052
      %v12129 = vunpack.c.l.b16 %v12053
      %v12130 = vunpack.c.l.b16 %v12054
      %v12131 = vunpack.c.l.b16 %v12055
      %v12132 = vunpack.c.l.b16 %v12056
      %v12133 = vunpack.c.l.b16 %v12057
      %v12134 = vunpack.c.l.b16 %v12058
      %v12135 = vunpack.c.l.b16 %v12059
      %v12136 = vunpack.c.l.b16 %v12060
      %v12137 = vunpack.c.l.b16 %v12061
      %v12138 = vunpack.c.l.b16 %v12062
      %v12139 = vpack.c.b16 %v12104, %v12103
      %v12140 = vpack.c.b16 %v12106, %v12105
      %v12141 = vpack.c.b16 %v12108, %v12107
      %v12142 = vpack.c.b16 %v12110, %v12109
      %v12143 = vpack.c.b16 %v12112, %v12111
      %v12144 = vpack.c.b16 %v12114, %v12113
      %v12145 = vpack.c.b16 %v12116, %v12115
      %v12146 = vpack.c.b16 %v12118, %v12117
      %v12147 = vpack.c.b16 %v12120, %v12119
      %v12148 = vpack.c.b16 %v12122, %v12121
      %v12149 = vpack.c.b16 %v12124, %v12123
      %v12150 = vpack.c.b16 %v12126, %v12125
      %v12151 = vpack.c.b16 %v12128, %v12127
      %v12152 = vpack.c.b16 %v12130, %v12129
      %v12153 = vpack.c.b16 %v12132, %v12131
      %v12154 = vpack.c.b16 %v12134, %v12133
      %v12155 = vpack.c.b16 %v12136, %v12135
      %v12156 = vpack.c.b16 %v12138, %v12137
      %v12176 = vsel %vm2549, %v11966, 0
      %v12179 = vsel %vm2549, %v11969, 0
      %v12182 = vsel %vm2549, %v11972, 0
      %v12185 = vsel %vm2549, %v11975, 0
      %v12188 = vsel %vm2549, %v11978, 0
      %v12191 = vsel %vm2549, %v11981, 0
      %v12194 = vsel %vm2549, %v11984, 0
      %v12197 = vsel %vm2549, %v11987, 0
      %v12200 = vsel %vm2549, %v11990, 0
      %v12203 = vsel %vm2549, %v11993, 0
      %v12206 = vsel %vm2549, %v11996, 0
      %v12209 = vsel %vm2549, %v11999, 0
      %v12212 = vsel %vm2549, %v12002, 0
      %v12215 = vsel %vm2549, %v12005, 0
      %v12218 = vsel %vm2549, %v12008, 0
      %v12221 = vsel %vm2549, %v12011, 0
      %v12224 = vsel %vm2549, %v12014, 0
      %v12227 = vsel %vm2549, %v12017, 0
      %v12230 = vsel %vm2549, %v12020, 0
      %v12233 = vsel %vm2549, %v12023, 0
      %v12236 = vsel %vm2549, %v12026, 0
      %12238 = vmatpush.bf16.msra.mxu0 %v12146
      %12239 = vmatpush.bf16.msra.mxu0 %v12145
      %12240 = vmatpush.bf16.msra.mxu0 %v12144
      %12241 = vmatpush.bf16.msra.mxu0 %v12143
      %12242 = vmatpush.bf16.msra.mxu0 %v12142
      %12243 = vmatpush.bf16.msra.mxu0 %v12141
      %12244 = vmatpush.bf16.msra.mxu0 %v12140
      %12245 = vmatpush.bf16.msra.mxu0 %v12139
      %12246 = vmatmul.bf16.gmra.mxu0 %v11964
      %v12247 = vpop.f32.mrf.mxu0
      %v12248 = vadd.f32 %v12065, %v12247
      %v12249 = vpop.f32.mrf.mxu0
      %v12250 = vadd.f32 %v12065, %v12249
      %12251 = vmatmul.bf16.gmra.mxu0 %v11967
      %v12252 = vpop.f32.mrf.mxu0
      %v12253 = vadd.f32 %v12065, %v12252
      %v12254 = vpop.f32.mrf.mxu0
      %v12255 = vadd.f32 %v12065, %v12254
      %12256 = vmatmul.bf16.gmra.mxu0 %v11970
      %v12257 = vpop.f32.mrf.mxu0
      %v12258 = vadd.f32 %v12065, %v12257
      %v12259 = vpop.f32.mrf.mxu0
      %v12260 = vadd.f32 %v12065, %v12259
      %12261 = vmatmul.bf16.gmra.mxu0 %v11973
      %v12262 = vpop.f32.mrf.mxu0
      %v12263 = vadd.f32 %v12065, %v12262
      %v12264 = vpop.f32.mrf.mxu0
      %v12265 = vadd.f32 %v12065, %v12264
      %12266 = vmatmul.bf16.gmra.mxu0 %v11976
      %v12267 = vpop.f32.mrf.mxu0
      %v12268 = vadd.f32 %v12065, %v12267
      %v12269 = vpop.f32.mrf.mxu0
      %v12270 = vadd.f32 %v12065, %v12269
      %12271 = vmatmul.bf16.gmra.mxu0 %v11979
      %v12272 = vpop.f32.mrf.mxu0
      %v12273 = vadd.f32 %v12065, %v12272
      %v12274 = vpop.f32.mrf.mxu0
      %v12275 = vadd.f32 %v12065, %v12274
      %12276 = vmatmul.bf16.gmra.mxu0 %v11982
      %v12277 = vpop.f32.mrf.mxu0
      %v12278 = vadd.f32 %v12065, %v12277
      %v12279 = vpop.f32.mrf.mxu0
      %v12280 = vadd.f32 %v12065, %v12279
      %12281 = vmatmul.bf16.gmra.mxu0 %v11985
      %v12282 = vpop.f32.mrf.mxu0
      %v12283 = vadd.f32 %v12065, %v12282
      %v12284 = vpop.f32.mrf.mxu0
      %v12285 = vadd.f32 %v12065, %v12284
      %12286 = vmatmul.bf16.gmra.mxu0 %v11988
      %v12287 = vpop.f32.mrf.mxu0
      %v12288 = vadd.f32 %v12065, %v12287
      %v12289 = vpop.f32.mrf.mxu0
      %v12290 = vadd.f32 %v12065, %v12289
      %12291 = vmatmul.bf16.gmra.mxu0 %v11991
      %v12292 = vpop.f32.mrf.mxu0
      %v12293 = vadd.f32 %v12065, %v12292
      %v12294 = vpop.f32.mrf.mxu0
      %v12295 = vadd.f32 %v12065, %v12294
      %12296 = vmatmul.bf16.gmra.mxu0 %v11994
      %v12297 = vpop.f32.mrf.mxu0
      %v12298 = vadd.f32 %v12065, %v12297
      %v12299 = vpop.f32.mrf.mxu0
      %v12300 = vadd.f32 %v12065, %v12299
      %12301 = vmatmul.bf16.gmra.mxu0 %v11997
      %v12302 = vpop.f32.mrf.mxu0
      %v12303 = vadd.f32 %v12065, %v12302
      %v12304 = vpop.f32.mrf.mxu0
      %v12305 = vadd.f32 %v12065, %v12304
      %12306 = vmatmul.bf16.gmra.mxu0 %v12000
      %v12307 = vpop.f32.mrf.mxu0
      %v12308 = vadd.f32 %v12065, %v12307
      %v12309 = vpop.f32.mrf.mxu0
      %v12310 = vadd.f32 %v12065, %v12309
      %12311 = vmatmul.bf16.gmra.mxu0 %v12003
      %v12312 = vpop.f32.mrf.mxu0
      %v12313 = vadd.f32 %v12065, %v12312
      %v12314 = vpop.f32.mrf.mxu0
      %v12315 = vadd.f32 %v12065, %v12314
      %12316 = vmatmul.bf16.gmra.mxu0 %v12006
      %v12317 = vpop.f32.mrf.mxu0
      %v12318 = vadd.f32 %v12065, %v12317
      %v12319 = vpop.f32.mrf.mxu0
      %v12320 = vadd.f32 %v12065, %v12319
      %12321 = vmatmul.bf16.gmra.mxu0 %v12009
      %v12322 = vpop.f32.mrf.mxu0
      %v12323 = vadd.f32 %v12065, %v12322
      %v12324 = vpop.f32.mrf.mxu0
      %v12325 = vadd.f32 %v12065, %v12324
      %12326 = vmatmul.bf16.gmra.mxu0 %v12012
      %v12327 = vpop.f32.mrf.mxu0
      %v12328 = vadd.f32 %v12065, %v12327
      %v12329 = vpop.f32.mrf.mxu0
      %v12330 = vadd.f32 %v12065, %v12329
      %12331 = vmatmul.bf16.gmra.mxu0 %v12015
      %v12332 = vpop.f32.mrf.mxu0
      %v12333 = vadd.f32 %v12065, %v12332
      %v12334 = vpop.f32.mrf.mxu0
      %v12335 = vadd.f32 %v12065, %v12334
      %12336 = vmatmul.bf16.gmra.mxu0 %v12018
      %v12337 = vpop.f32.mrf.mxu0
      %v12338 = vadd.f32 %v12065, %v12337
      %v12339 = vpop.f32.mrf.mxu0
      %v12340 = vadd.f32 %v12065, %v12339
      %12341 = vmatmul.bf16.gmra.mxu0 %v12021
      %v12342 = vpop.f32.mrf.mxu0
      %v12343 = vadd.f32 %v12065, %v12342
      %v12344 = vpop.f32.mrf.mxu0
      %v12345 = vadd.f32 %v12065, %v12344
      %12346 = vmatmul.bf16.gmra.mxu0 %v12024
      %v12347 = vpop.f32.mrf.mxu0
      %v12348 = vadd.f32 %v12065, %v12347
      %v12349 = vpop.f32.mrf.mxu0
      %12350 = vdwg.mxu0
      %12351 = vmatpush.bf16.msra.mxu0 %v12154
      %12352 = vmatpush.bf16.msra.mxu0 %v12153
      %12353 = vmatpush.bf16.msra.mxu0 %v12152
      %12354 = vmatpush.bf16.msra.mxu0 %v12151
      %12355 = vmatpush.bf16.msra.mxu0 %v12150
      %12356 = vmatpush.bf16.msra.mxu0 %v12149
      %12357 = vmatpush.bf16.msra.mxu0 %v12148
      %12358 = vmatpush.bf16.msra.mxu0 %v12147
      %12359 = vmatmul.bf16.gmra.mxu0 %v11965
      %v12360 = vpop.f32.mrf.mxu0
      %v12361 = vadd.f32 %v12248, %v12360
      %v12362 = vpop.f32.mrf.mxu0
      %v12363 = vadd.f32 %v12250, %v12362
      %12364 = vmatmul.bf16.gmra.mxu0 %v11968
      %v12365 = vpop.f32.mrf.mxu0
      %v12366 = vadd.f32 %v12253, %v12365
      %v12367 = vpop.f32.mrf.mxu0
      %v12368 = vadd.f32 %v12255, %v12367
      %12369 = vmatmul.bf16.gmra.mxu0 %v11971
      %v12370 = vpop.f32.mrf.mxu0
      %v12371 = vadd.f32 %v12258, %v12370
      %v12372 = vpop.f32.mrf.mxu0
      %v12373 = vadd.f32 %v12260, %v12372
      %12374 = vmatmul.bf16.gmra.mxu0 %v11974
      %v12375 = vpop.f32.mrf.mxu0
      %v12376 = vadd.f32 %v12263, %v12375
      %v12377 = vpop.f32.mrf.mxu0
      %v12378 = vadd.f32 %v12265, %v12377
      %12379 = vmatmul.bf16.gmra.mxu0 %v11977
      %v12380 = vpop.f32.mrf.mxu0
      %v12381 = vadd.f32 %v12268, %v12380
      %v12382 = vpop.f32.mrf.mxu0
      %v12383 = vadd.f32 %v12270, %v12382
      %12384 = vmatmul.bf16.gmra.mxu0 %v11980
      %v12385 = vpop.f32.mrf.mxu0
      %v12386 = vadd.f32 %v12273, %v12385
      %v12387 = vpop.f32.mrf.mxu0
      %v12388 = vadd.f32 %v12275, %v12387
      %12389 = vmatmul.bf16.gmra.mxu0 %v11983
      %v12390 = vpop.f32.mrf.mxu0
      %v12391 = vadd.f32 %v12278, %v12390
      %v12392 = vpop.f32.mrf.mxu0
      %v12393 = vadd.f32 %v12280, %v12392
      %12394 = vmatmul.bf16.gmra.mxu0 %v11986
      %v12395 = vpop.f32.mrf.mxu0
      %v12396 = vadd.f32 %v12283, %v12395
      %v12397 = vpop.f32.mrf.mxu0
      %v12398 = vadd.f32 %v12285, %v12397
      %12399 = vmatmul.bf16.gmra.mxu0 %v11989
      %v12400 = vpop.f32.mrf.mxu0
      %v12401 = vadd.f32 %v12288, %v12400
      %v12402 = vpop.f32.mrf.mxu0
      %v12403 = vadd.f32 %v12290, %v12402
      %12404 = vmatmul.bf16.gmra.mxu0 %v11992
      %v12405 = vpop.f32.mrf.mxu0
      %v12406 = vadd.f32 %v12293, %v12405
      %v12407 = vpop.f32.mrf.mxu0
      %v12408 = vadd.f32 %v12295, %v12407
      %12409 = vmatmul.bf16.gmra.mxu0 %v11995
      %v12410 = vpop.f32.mrf.mxu0
      %v12411 = vadd.f32 %v12298, %v12410
      %v12412 = vpop.f32.mrf.mxu0
      %v12413 = vadd.f32 %v12300, %v12412
      %12414 = vmatmul.bf16.gmra.mxu0 %v11998
      %v12415 = vpop.f32.mrf.mxu0
      %v12416 = vadd.f32 %v12303, %v12415
      %v12417 = vpop.f32.mrf.mxu0
      %v12418 = vadd.f32 %v12305, %v12417
      %12419 = vmatmul.bf16.gmra.mxu0 %v12001
      %v12420 = vpop.f32.mrf.mxu0
      %v12421 = vadd.f32 %v12308, %v12420
      %v12422 = vpop.f32.mrf.mxu0
      %v12423 = vadd.f32 %v12310, %v12422
      %12424 = vmatmul.bf16.gmra.mxu0 %v12004
      %v12425 = vpop.f32.mrf.mxu0
      %v12426 = vadd.f32 %v12313, %v12425
      %v12427 = vpop.f32.mrf.mxu0
      %v12428 = vadd.f32 %v12315, %v12427
      %12429 = vmatmul.bf16.gmra.mxu0 %v12007
      %v12430 = vpop.f32.mrf.mxu0
      %v12431 = vadd.f32 %v12318, %v12430
      %v12432 = vpop.f32.mrf.mxu0
      %v12433 = vadd.f32 %v12320, %v12432
      %12434 = vmatmul.bf16.gmra.mxu0 %v12010
      %v12435 = vpop.f32.mrf.mxu0
      %v12436 = vadd.f32 %v12323, %v12435
      %v12437 = vpop.f32.mrf.mxu0
      %v12438 = vadd.f32 %v12325, %v12437
      %12439 = vmatmul.bf16.gmra.mxu0 %v12013
      %v12440 = vpop.f32.mrf.mxu0
      %v12441 = vadd.f32 %v12328, %v12440
      %v12442 = vpop.f32.mrf.mxu0
      %v12443 = vadd.f32 %v12330, %v12442
      %12444 = vmatmul.bf16.gmra.mxu0 %v12016
      %v12445 = vpop.f32.mrf.mxu0
      %v12446 = vadd.f32 %v12333, %v12445
      %v12447 = vpop.f32.mrf.mxu0
      %v12448 = vadd.f32 %v12335, %v12447
      %12449 = vmatmul.bf16.gmra.mxu0 %v12019
      %v12450 = vpop.f32.mrf.mxu0
      %v12451 = vadd.f32 %v12338, %v12450
      %v12452 = vpop.f32.mrf.mxu0
      %v12453 = vadd.f32 %v12340, %v12452
      %12454 = vmatmul.bf16.gmra.mxu0 %v12022
      %v12455 = vpop.f32.mrf.mxu0
      %v12456 = vadd.f32 %v12343, %v12455
      %v12457 = vpop.f32.mrf.mxu0
      %v12458 = vadd.f32 %v12345, %v12457
      %12459 = vmatmul.bf16.gmra.mxu0 %v12025
      %v12460 = vpop.f32.mrf.mxu0
      %v12461 = vadd.f32 %v12348, %v12460
      %v12462 = vpop.f32.mrf.mxu0
      %12463 = vdwg.mxu0
      %12464 = vmatpush.bf16.msra.mxu0 0
      %12465 = vmatpush.bf16.msra.mxu0 0
      %12466 = vmatpush.bf16.msra.mxu0 0
      %12467 = vmatpush.bf16.msra.mxu0 0
      %12468 = vmatpush.bf16.msra.mxu0 0
      %12469 = vmatpush.bf16.msra.mxu0 0
      %12470 = vmatpush.bf16.msra.mxu0 %v12156
      %12471 = vmatpush.bf16.msra.mxu0 %v12155
      %12472 = vmatmul.bf16.gmra.mxu0 %v12176
      %v12473 = vpop.f32.mrf.mxu0
      %v12474 = vadd.f32 %v12361, %v12473
      %v12475 = vpop.f32.mrf.mxu0
      %v12476 = vadd.f32 %v12363, %v12475
      %12477 = vmatmul.bf16.gmra.mxu0 %v12179
      %v12478 = vpop.f32.mrf.mxu0
      %v12479 = vadd.f32 %v12366, %v12478
      %v12480 = vpop.f32.mrf.mxu0
      %v12481 = vadd.f32 %v12368, %v12480
      %12482 = vmatmul.bf16.gmra.mxu0 %v12182
      %v12483 = vpop.f32.mrf.mxu0
      %v12484 = vadd.f32 %v12371, %v12483
      %v12485 = vpop.f32.mrf.mxu0
      %v12486 = vadd.f32 %v12373, %v12485
      %12487 = vmatmul.bf16.gmra.mxu0 %v12185
      %v12488 = vpop.f32.mrf.mxu0
      %v12489 = vadd.f32 %v12376, %v12488
      %v12490 = vpop.f32.mrf.mxu0
      %v12491 = vadd.f32 %v12378, %v12490
      %12492 = vmatmul.bf16.gmra.mxu0 %v12188
      %v12493 = vpop.f32.mrf.mxu0
      %v12494 = vadd.f32 %v12381, %v12493
      %v12495 = vpop.f32.mrf.mxu0
      %v12496 = vadd.f32 %v12383, %v12495
      %12497 = vmatmul.bf16.gmra.mxu0 %v12191
      %v12498 = vpop.f32.mrf.mxu0
      %v12499 = vadd.f32 %v12386, %v12498
      %v12500 = vpop.f32.mrf.mxu0
      %v12501 = vadd.f32 %v12388, %v12500
      %12502 = vmatmul.bf16.gmra.mxu0 %v12194
      %v12503 = vpop.f32.mrf.mxu0
      %v12504 = vadd.f32 %v12391, %v12503
      %v12505 = vpop.f32.mrf.mxu0
      %v12506 = vadd.f32 %v12393, %v12505
      %12507 = vmatmul.bf16.gmra.mxu0 %v12197
      %v12508 = vpop.f32.mrf.mxu0
      %v12509 = vadd.f32 %v12396, %v12508
      %v12510 = vpop.f32.mrf.mxu0
      %v12511 = vadd.f32 %v12398, %v12510
      %12512 = vmatmul.bf16.gmra.mxu0 %v12200
      %v12513 = vpop.f32.mrf.mxu0
      %v12514 = vadd.f32 %v12401, %v12513
      %v12515 = vpop.f32.mrf.mxu0
      %v12516 = vadd.f32 %v12403, %v12515
      %12517 = vmatmul.bf16.gmra.mxu0 %v12203
      %v12518 = vpop.f32.mrf.mxu0
      %v12519 = vadd.f32 %v12406, %v12518
      %v12520 = vpop.f32.mrf.mxu0
      %v12521 = vadd.f32 %v12408, %v12520
      %12522 = vmatmul.bf16.gmra.mxu0 %v12206
      %v12523 = vpop.f32.mrf.mxu0
      %v12524 = vadd.f32 %v12411, %v12523
      %v12525 = vpop.f32.mrf.mxu0
      %v12526 = vadd.f32 %v12413, %v12525
      %12527 = vmatmul.bf16.gmra.mxu0 %v12209
      %v12528 = vpop.f32.mrf.mxu0
      %v12529 = vadd.f32 %v12416, %v12528
      %v12530 = vpop.f32.mrf.mxu0
      %v12531 = vadd.f32 %v12418, %v12530
      %12532 = vmatmul.bf16.gmra.mxu0 %v12212
      %v12533 = vpop.f32.mrf.mxu0
      %v12534 = vadd.f32 %v12421, %v12533
      %v12535 = vpop.f32.mrf.mxu0
      %v12536 = vadd.f32 %v12423, %v12535
      %12537 = vmatmul.bf16.gmra.mxu0 %v12215
      %v12538 = vpop.f32.mrf.mxu0
      %v12539 = vadd.f32 %v12426, %v12538
      %v12540 = vpop.f32.mrf.mxu0
      %v12541 = vadd.f32 %v12428, %v12540
      %12542 = vmatmul.bf16.gmra.mxu0 %v12218
      %v12543 = vpop.f32.mrf.mxu0
      %v12544 = vadd.f32 %v12431, %v12543
      %v12545 = vpop.f32.mrf.mxu0
      %v12546 = vadd.f32 %v12433, %v12545
      %12547 = vmatmul.bf16.gmra.mxu0 %v12221
      %v12548 = vpop.f32.mrf.mxu0
      %v12549 = vadd.f32 %v12436, %v12548
      %v12550 = vpop.f32.mrf.mxu0
      %v12551 = vadd.f32 %v12438, %v12550
      %12552 = vmatmul.bf16.gmra.mxu0 %v12224
      %v12553 = vpop.f32.mrf.mxu0
      %v12554 = vadd.f32 %v12441, %v12553
      %v12555 = vpop.f32.mrf.mxu0
      %v12556 = vadd.f32 %v12443, %v12555
      %12557 = vmatmul.bf16.gmra.mxu0 %v12227
      %v12558 = vpop.f32.mrf.mxu0
      %v12559 = vadd.f32 %v12446, %v12558
      %v12560 = vpop.f32.mrf.mxu0
      %v12561 = vadd.f32 %v12448, %v12560
      %12562 = vmatmul.bf16.gmra.mxu0 %v12230
      %v12563 = vpop.f32.mrf.mxu0
      %v12564 = vadd.f32 %v12451, %v12563
      %v12565 = vpop.f32.mrf.mxu0
      %v12566 = vadd.f32 %v12453, %v12565
      %12567 = vmatmul.bf16.gmra.mxu0 %v12233
      %v12568 = vpop.f32.mrf.mxu0
      %v12569 = vadd.f32 %v12456, %v12568
      %v12570 = vpop.f32.mrf.mxu0
      %v12571 = vadd.f32 %v12458, %v12570
      %12572 = vmatmul.bf16.gmra.mxu0 %v12236
      %v12573 = vpop.f32.mrf.mxu0
      %v12574 = vadd.f32 %v12461, %v12573
      %v12575 = vpop.f32.mrf.mxu0
      %12576 = vdwg.mxu0
      %v12577 = vadd.f32 %v12474, %v8179
      %v12578 = vadd.f32 %v12476, %v8180
      %v12579 = vadd.f32 %v12479, %v8181
      %v12580 = vadd.f32 %v12481, %v8182
      %v12581 = vadd.f32 %v12484, %v8183
      %v12582 = vadd.f32 %v12486, %v8184
      %v12583 = vadd.f32 %v12489, %v8185
      %v12584 = vadd.f32 %v12491, %v8186
      %v12585 = vadd.f32 %v12494, %v8187
      %v12586 = vadd.f32 %v12496, %v8188
      %v12587 = vadd.f32 %v12499, %v8189
      %v12588 = vadd.f32 %v12501, %v8190
      %v12589 = vadd.f32 %v12504, %v8191
      %v12590 = vadd.f32 %v12506, %v8192
      %v12591 = vadd.f32 %v12509, %v8193
      %v12592 = vadd.f32 %v12511, %v8194
      %v12593 = vadd.f32 %v12514, %v8195
      %v12594 = vadd.f32 %v12516, %v8196
      %v12595 = vadd.f32 %v12519, %v8197
      %v12596 = vadd.f32 %v12521, %v8198
      %v12597 = vadd.f32 %v12524, %v8199
      %v12598 = vadd.f32 %v12526, %v8200
      %v12599 = vadd.f32 %v12529, %v8201
      %v12600 = vadd.f32 %v12531, %v8202
      %v12601 = vadd.f32 %v12534, %v8203
      %v12602 = vadd.f32 %v12536, %v8204
      %v12603 = vadd.f32 %v12539, %v8205
      %v12604 = vadd.f32 %v12541, %v8206
      %v12605 = vadd.f32 %v12544, %v8207
      %v12606 = vadd.f32 %v12546, %v8208
      %v12607 = vadd.f32 %v12549, %v8209
      %v12608 = vadd.f32 %v12551, %v8210
      %v12609 = vadd.f32 %v12554, %v8211
      %v12610 = vadd.f32 %v12556, %v8212
      %v12611 = vadd.f32 %v12559, %v8213
      %v12612 = vadd.f32 %v12561, %v8214
      %v12613 = vadd.f32 %v12564, %v8215
      %v12614 = vadd.f32 %v12566, %v8216
      %v12615 = vadd.f32 %v12569, %v8217
      %v12616 = vadd.f32 %v12571, %v8218
      %v12617 = vadd.f32 %v12574, %v8219
      %v12618 = vmax.f32 %v12577, 0.0
      %v12619 = vmax.f32 %v12578, 0.0
      %v12620 = vmax.f32 %v12579, 0.0
      %v12621 = vmax.f32 %v12580, 0.0
      %v12622 = vmax.f32 %v12581, 0.0
      %v12623 = vmax.f32 %v12582, 0.0
      %v12624 = vmax.f32 %v12583, 0.0
      %v12625 = vmax.f32 %v12584, 0.0
      %v12626 = vmax.f32 %v12585, 0.0
      %v12627 = vmax.f32 %v12586, 0.0
      %v12628 = vmax.f32 %v12587, 0.0
      %v12629 = vmax.f32 %v12588, 0.0
      %v12630 = vmax.f32 %v12589, 0.0
      %v12631 = vmax.f32 %v12590, 0.0
      %v12632 = vmax.f32 %v12591, 0.0
      %v12633 = vmax.f32 %v12592, 0.0
      %v12634 = vmax.f32 %v12593, 0.0
      %v12635 = vmax.f32 %v12594, 0.0
      %v12636 = vmax.f32 %v12595, 0.0
      %v12637 = vmax.f32 %v12596, 0.0
      %v12638 = vmax.f32 %v12597, 0.0
      %v12639 = vmax.f32 %v12598, 0.0
      %v12640 = vmax.f32 %v12599, 0.0
      %v12641 = vmax.f32 %v12600, 0.0
      %v12642 = vmax.f32 %v12601, 0.0
      %v12643 = vmax.f32 %v12602, 0.0
      %v12644 = vmax.f32 %v12603, 0.0
      %v12645 = vmax.f32 %v12604, 0.0
      %v12646 = vmax.f32 %v12605, 0.0
      %v12647 = vmax.f32 %v12606, 0.0
      %v12648 = vmax.f32 %v12607, 0.0
      %v12649 = vmax.f32 %v12608, 0.0
      %v12650 = vmax.f32 %v12609, 0.0
      %v12651 = vmax.f32 %v12610, 0.0
      %v12652 = vmax.f32 %v12611, 0.0
      %v12653 = vmax.f32 %v12612, 0.0
      %v12654 = vmax.f32 %v12613, 0.0
      %v12655 = vmax.f32 %v12614, 0.0
      %v12656 = vmax.f32 %v12615, 0.0
      %v12657 = vmax.f32 %v12616, 0.0
      %v12658 = vmax.f32 %v12617, 0.0
      %v12659 = vmul.f32 %v12618, %v7977
      %v12660 = vmul.f32 %v12619, %v7982
      %v12661 = vmul.f32 %v12620, %v7987
      %v12662 = vmul.f32 %v12621, %v7992
      %v12663 = vmul.f32 %v12622, %v7997
      %v12664 = vmul.f32 %v12623, %v8002
      %v12665 = vmul.f32 %v12624, %v8007
      %v12666 = vmul.f32 %v12625, %v8012
      %v12667 = vmul.f32 %v12626, %v8017
      %v12668 = vmul.f32 %v12627, %v8022
      %v12669 = vmul.f32 %v12628, %v8027
      %v12670 = vmul.f32 %v12629, %v8032
      %v12671 = vmul.f32 %v12630, %v8037
      %v12672 = vmul.f32 %v12631, %v8042
      %v12673 = vmul.f32 %v12632, %v8047
      %v12674 = vmul.f32 %v12633, %v8052
      %v12675 = vmul.f32 %v12634, %v8057
      %v12676 = vmul.f32 %v12635, %v8062
      %v12677 = vmul.f32 %v12636, %v8067
      %v12678 = vmul.f32 %v12637, %v8072
      %v12679 = vmul.f32 %v12638, %v8077
      %v12680 = vmul.f32 %v12639, %v8082
      %v12681 = vmul.f32 %v12640, %v8087
      %v12682 = vmul.f32 %v12641, %v8092
      %v12683 = vmul.f32 %v12642, %v8097
      %v12684 = vmul.f32 %v12643, %v8102
      %v12685 = vmul.f32 %v12644, %v8107
      %v12686 = vmul.f32 %v12645, %v8112
      %v12687 = vmul.f32 %v12646, %v8117
      %v12688 = vmul.f32 %v12647, %v8122
      %v12689 = vmul.f32 %v12648, %v8127
      %v12690 = vmul.f32 %v12649, %v8132
      %v12691 = vmul.f32 %v12650, %v8137
      %v12692 = vmul.f32 %v12651, %v8142
      %v12693 = vmul.f32 %v12652, %v8147
      %v12694 = vmul.f32 %v12653, %v8152
      %v12695 = vmul.f32 %v12654, %v8157
      %v12696 = vmul.f32 %v12655, %v8162
      %v12697 = vmul.f32 %v12656, %v8167
      %v12698 = vmul.f32 %v12657, %v8172
      %v12699 = vmul.f32 %v12658, %v8177
      %v12700 = vsel %vm2549, %v12659, 0.0
      %v12701 = vsel %vm2549, %v12660, 0.0
      %v12702 = vadd.f32 %v12700, %v12701
      %v12703 = vsel %vm2549, %v12661, 0.0
      %v12704 = vadd.f32 %v12702, %v12703
      %v12705 = vsel %vm2549, %v12662, 0.0
      %v12706 = vadd.f32 %v12704, %v12705
      %v12707 = vsel %vm2549, %v12663, 0.0
      %v12708 = vadd.f32 %v12706, %v12707
      %v12709 = vsel %vm2549, %v12664, 0.0
      %v12710 = vadd.f32 %v12708, %v12709
      %v12711 = vsel %vm2549, %v12665, 0.0
      %v12712 = vadd.f32 %v12710, %v12711
      %v12713 = vsel %vm2549, %v12666, 0.0
      %v12714 = vadd.f32 %v12712, %v12713
      %v12715 = vsel %vm2549, %v12667, 0.0
      %v12716 = vadd.f32 %v12714, %v12715
      %v12717 = vsel %vm2549, %v12668, 0.0
      %v12718 = vadd.f32 %v12716, %v12717
      %v12719 = vsel %vm2549, %v12669, 0.0
      %v12720 = vadd.f32 %v12718, %v12719
      %v12721 = vsel %vm2549, %v12670, 0.0
      %v12722 = vadd.f32 %v12720, %v12721
      %v12723 = vsel %vm2549, %v12671, 0.0
      %v12724 = vadd.f32 %v12722, %v12723
      %v12725 = vsel %vm2549, %v12672, 0.0
      %v12726 = vadd.f32 %v12724, %v12725
      %v12727 = vsel %vm2549, %v12673, 0.0
      %v12728 = vadd.f32 %v12726, %v12727
      %v12729 = vsel %vm2549, %v12674, 0.0
      %v12730 = vadd.f32 %v12728, %v12729
      %v12731 = vsel %vm2549, %v12675, 0.0
      %v12732 = vadd.f32 %v12730, %v12731
      %v12733 = vsel %vm2549, %v12676, 0.0
      %v12734 = vadd.f32 %v12732, %v12733
      %v12735 = vsel %vm2549, %v12677, 0.0
      %v12736 = vadd.f32 %v12734, %v12735
      %v12737 = vsel %vm2549, %v12678, 0.0
      %v12738 = vadd.f32 %v12736, %v12737
      %v12739 = vsel %vm2549, %v12679, 0.0
      %v12740 = vadd.f32 %v12738, %v12739
      %v12741 = vsel %vm2549, %v12680, 0.0
      %v12742 = vadd.f32 %v12740, %v12741
      %v12743 = vsel %vm2549, %v12681, 0.0
      %v12744 = vadd.f32 %v12742, %v12743
      %v12745 = vsel %vm2549, %v12682, 0.0
      %v12746 = vadd.f32 %v12744, %v12745
      %v12747 = vsel %vm2549, %v12683, 0.0
      %v12748 = vadd.f32 %v12746, %v12747
      %v12749 = vsel %vm2549, %v12684, 0.0
      %v12750 = vadd.f32 %v12748, %v12749
      %v12751 = vsel %vm2549, %v12685, 0.0
      %v12752 = vadd.f32 %v12750, %v12751
      %v12753 = vsel %vm2549, %v12686, 0.0
      %v12754 = vadd.f32 %v12752, %v12753
      %v12755 = vsel %vm2549, %v12687, 0.0
      %v12756 = vadd.f32 %v12754, %v12755
      %v12757 = vsel %vm2549, %v12688, 0.0
      %v12758 = vadd.f32 %v12756, %v12757
      %v12759 = vsel %vm2549, %v12689, 0.0
      %v12760 = vadd.f32 %v12758, %v12759
      %v12761 = vsel %vm2549, %v12690, 0.0
      %v12762 = vadd.f32 %v12760, %v12761
      %v12763 = vsel %vm2549, %v12691, 0.0
      %v12764 = vadd.f32 %v12762, %v12763
      %v12765 = vsel %vm2549, %v12692, 0.0
      %v12766 = vadd.f32 %v12764, %v12765
      %v12767 = vsel %vm2549, %v12693, 0.0
      %v12768 = vadd.f32 %v12766, %v12767
      %v12769 = vsel %vm2549, %v12694, 0.0
      %v12770 = vadd.f32 %v12768, %v12769
      %v12771 = vsel %vm2549, %v12695, 0.0
      %v12772 = vadd.f32 %v12770, %v12771
      %v12773 = vsel %vm2549, %v12696, 0.0
      %v12774 = vadd.f32 %v12772, %v12773
      %v12775 = vsel %vm2549, %v12697, 0.0
      %v12776 = vadd.f32 %v12774, %v12775
      %v12777 = vsel %vm2549, %v12698, 0.0
      %v12778 = vadd.f32 %v12776, %v12777
      %vm12779 = vcmask 257024
      %v12780 = vsel %vm12779, %v12699, 0.0
      %v12781 = vadd.f32 %v12778, %v12780
      %v12782 = vrot.slane %v12781, 4
      %v12783 = vadd.f32 %v12781, %v12782
      %v12784 = vrot.slane %v12783, 2
      %v12785 = vadd.f32 %v12783, %v12784
      %v12786 = vrot.slane %v12785, 1
      %v12787 = vadd.f32 %v12785, %v12786
      %v12788 = vmul.f32 %v12787, 0.015625
      %vm12789 = vcmask 253952
      %12790 = vst.msk [vmem:[%s490] sm:$0x1] %vm12789, %v12788
      %p12791 = scmp.lt.s32.totalorder %s26, 1
      %s12792 = scalar_select %p12791, %s26, 1
      %s12793 = scalar_lea.vmem %s15, %s12792
      // Predicated region
      $region81: #{my_resnet_forward.1} parent=79 // pred_check
        %p12794 = pneg %p364
      $region82: #{my_resnet_forward.1} parent=79 // pred_check_branch
        %12796 = sbr.rel (%p12794) target = $region84
      $region83: #{my_resnet_forward.1} parent=79 // pred_region
        _
      $region84: #{my_resnet_forward.1} parent=79 // pred_fallthru
        _
    $region80: #{my_resnet_forward.1} parent=5 // pred_fallthru
      _
    %p12797 = scmp.le.s32.totalorder 2, %s21
    // Predicated region
    $region85: #{my_resnet_forward.1} parent=5 // pred_check
      %p12798 = pneg %p12797
    $region86: #{my_resnet_forward.1} parent=5 // pred_check_branch
      %12800 = sbr.rel (%p12798) target = $region88
    $region87: #{my_resnet_forward.1} parent=5 // pred_region
      %s12801 = ssub.s32 %s21, 2
      // Predicated region
      $region89: #{my_resnet_forward.1} parent=87 // pred_check
        %p12802 = pneg %p370
      $region90: #{my_resnet_forward.1} parent=87 // pred_check_branch
        %12804 = sbr.rel (%p12802) target = $region92
      $region91: #{my_resnet_forward.1} parent=87 // pred_region
        %p12805 = scmp.lt.s32.totalorder %s27, 1
        %s12806 = scalar_select %p12805, %s27, 1
        %s12807 = scalar_lea.vmem %s15, %s12806
      $region92: #{my_resnet_forward.1} parent=87 // pred_fallthru
        _
    $region88: #{my_resnet_forward.1} parent=5 // pred_fallthru
      _
  $region6: #{my_resnet_forward.1} parent=0 // loop_footer
    %s25 = sadd.s32 1, %s21
  $region7: #{my_resnet_forward.1} parent=0 // loop_footer_branch
    %20 = sbr.rel target = $region3
  $region8: #{my_resnet_forward.1} parent=0 // loop_exit
    _

</llo_original>
